<compile_context>
chip_gen: v7x
topology: tpu7x:2x2x1
jax: 0.10.0
libtpu: 0.0.40
codegen_flags: <defaults>
</compile_context>

<pallas_src>
import jax
import jax.numpy as jnp
import numpy as np
from jax import lax
from jax.experimental import pallas as pl
from jax.experimental.pallas import tpu as pltpu

EPS = 1e-5  # BatchNorm eps

NC1, NC2 = 3, 4          # class1 / class2
NC_PAD = 8               # per-batch logits padded to 8 lanes: [FTI(3), FSI(4), 0]

# Per-head torch Conv1d configs: (cin, cout, kernel, stride, padding)
TRUNK_CFG = [(1, 16, 12, 2, 5), (16, 16, 12, 2, 5), (16, 24, 9, 2, 4),
             (24, 24, 9, 2, 4), (24, 32, 6, 2, 2)]
HEAD_CFG = [(32, 32, 6, 2, 2), (32, 64, 3, 2, 1)]

# Kernel-side layer chain with the two heads merged along channels.
KERNEL_LAYERS = TRUNK_CFG + [(32, 64, 6, 2, 2), (64, 128, 3, 2, 1)]


# ---------------------------------------------------------------------------
# Parameters (deterministic, synthetic) — torch layout
# ---------------------------------------------------------------------------
def init_conv_layer(key, cin, cout, k, stride, padding):
    k1, k2, k3, k4, k5, k6 = jax.random.split(key, 6)
    w = jax.random.normal(k1, (cout, cin, k), jnp.float32) / np.sqrt(cin * k)
    b = 0.05 * jax.random.normal(k2, (cout,), jnp.float32)
    gamma = 1.0 + 0.1 * jax.random.normal(k3, (cout,), jnp.float32)
    beta = 0.1 * jax.random.normal(k4, (cout,), jnp.float32)
    mean = 0.1 * jax.random.normal(k5, (cout,), jnp.float32)
    var = 1.0 + 0.1 * jnp.abs(jax.random.normal(k6, (cout,), jnp.float32))
    return dict(w=w, b=b, gamma=gamma, beta=beta, mean=mean, var=var,
                stride=stride, padding=padding)


def init_linear(key, cin, cout):
    k1, k2 = jax.random.split(key)
    w = jax.random.normal(k1, (cout, cin), jnp.float32) / np.sqrt(cin)
    b = 0.05 * jax.random.normal(k2, (cout,), jnp.float32)
    return dict(w=w, b=b)


def init_params(key):
    ks = jax.random.split(key, 11)
    trunk = [init_conv_layer(ks[i], *c) for i, c in enumerate(TRUNK_CFG)]
    fti_convs = [init_conv_layer(ks[5 + i], *c) for i, c in enumerate(HEAD_CFG)]
    fsi_convs = [init_conv_layer(ks[7 + i], *c) for i, c in enumerate(HEAD_CFG)]
    fti_lin = init_linear(ks[9], 64, NC1)
    fsi_lin = init_linear(ks[10], 64, NC2)
    return dict(trunk=trunk, fti_convs=fti_convs, fsi_convs=fsi_convs,
                fti_lin=fti_lin, fsi_lin=fsi_lin)


# ---------------------------------------------------------------------------
# One-time weight preparation: fold BN, build (K*Cin, Cout) im2col weights,
# merge the FTI/FSI heads.  All weights are batch independent.
# ---------------------------------------------------------------------------
def _fold_bn(p):
    # eval-mode BN applied to (conv + bias), folded into a per-channel affine
    a = p["gamma"] / jnp.sqrt(p["var"] + EPS)
    return a, a * (p["b"] - p["mean"]) + p["beta"]


def _conv_mat(w_torch):
    """torch (Cout, Cin, K) -> (K*Cin, Cout), row order = im2col lane order k*Cin + c."""
    co, ci, k = w_torch.shape
    return jnp.transpose(w_torch, (2, 1, 0)).reshape(k * ci, co)


def _layer_entry(w_torch, scale, shift, mxu_dtype):
    co = w_torch.shape[0]
    return dict(w=_conv_mat(w_torch).astype(mxu_dtype),
                scale=scale.reshape(1, co).astype(jnp.float32),
                shift=shift.reshape(1, co).astype(jnp.float32))


def prepare_params(params, mxu_dtype=jnp.bfloat16):
    """Build the MXU-ready matrices consumed by the fused kernel (runs once)."""
    layers = []
    for p in params["trunk"]:
        s, sh = _fold_bn(p)
        layers.append(_layer_entry(p["w"], s, sh, mxu_dtype))

    # Head conv 1: both heads read the same trunk features -> stack along Cout.
    pf, ps = params["fti_convs"][0], params["fsi_convs"][0]
    sf, shf = _fold_bn(pf)
    ss, shs = _fold_bn(ps)
    w_m = jnp.concatenate([pf["w"], ps["w"]], axis=0)        # (64, 32, 6)
    layers.append(_layer_entry(w_m, jnp.concatenate([sf, ss]),
                               jnp.concatenate([shf, shs]), mxu_dtype))

    # Head conv 2: channels are now [FTI32 | FSI32] -> 2-way block-diag over heads.
    pf, ps = params["fti_convs"][1], params["fsi_convs"][1]
    sf, shf = _fold_bn(pf)
    ss, shs = _fold_bn(ps)
    co, ci, kk = pf["w"].shape                               # (64, 32, 3)
    w_m = jnp.zeros((2 * co, 2 * ci, kk), jnp.float32)
    w_m = w_m.at[:co, :ci, :].set(pf["w"]).at[co:, ci:, :].set(ps["w"])
    layers.append(_layer_entry(w_m, jnp.concatenate([sf, ss]),
                               jnp.concatenate([shf, shs]), mxu_dtype))

    # AdaptiveAvgPool1d(1) + both Linear heads packed into one (128, NC_PAD) matrix.
    wf, bf = params["fti_lin"]["w"], params["fti_lin"]["b"]  # (3, 64), (3,)
    ws, bs = params["fsi_lin"]["w"], params["fsi_lin"]["b"]  # (4, 64), (4,)
    feat = 2 * co                                            # 128 pooled features
    w_head = jnp.zeros((feat, NC_PAD), jnp.float32)
    w_head = w_head.at[:co, :NC1].set(wf.T).at[co:, NC1:NC1 + NC2].set(ws.T)
    b_head = jnp.zeros((1, NC_PAD), jnp.float32)
    b_head = b_head.at[0, :NC1].set(bf).at[0, NC1:NC1 + NC2].set(bs)
    return dict(layers=layers, lin_w=w_head.astype(mxu_dtype), lin_b=b_head)


# ---------------------------------------------------------------------------
# Fused forward: one grid-less Pallas kernel for the whole network
# ---------------------------------------------------------------------------
@jax.jit
def mt1dcnn_forward(x_ncl, prep):
    B, cin0, L = x_ncl.shape
    assert cin0 == 1
    # Batch lives in the sublane (row / M) dimension throughout: (B*length, channels).
    x_rows = jnp.transpose(x_ncl, (0, 2, 1)).reshape(B * L, 1)

    # Static per-layer geometry (Python ints under jit).
    geoms = []
    cur = L
    for (ci, co, k, st, pd) in KERNEL_LAYERS:
        lpad = cur + 2 * pd
        lout = (lpad - k) // st + 1
        # Strided VMEM reads have no runtime OOB check -> prove bounds statically.
        assert lout >= 1 and (k - 1) + (lout - 1) * st < lpad
        geoms.append(dict(ci=ci, co=co, k=k, st=st, pd=pd,
                          lin=cur, lpad=lpad, lout=lout))
        cur = lout
    n_layers = len(geoms)

    def kernel(*refs):
        x_ref = refs[0]
        lyr = refs[1:1 + 3 * n_layers]
        lin_w_ref = refs[1 + 3 * n_layers]
        lin_b_ref = refs[2 + 3 * n_layers]
        o_ref = refs[3 + 3 * n_layers]
        pad_refs = refs[4 + 3 * n_layers:4 + 4 * n_layers]
        col_refs = refs[4 + 4 * n_layers:]
        mxu_dtype = lin_w_ref.dtype

        x_val = x_ref[...]                                   # (B*L, 1) f32
        for li, g in enumerate(geoms):
            w_ref, s_ref, sh_ref = lyr[3 * li], lyr[3 * li + 1], lyr[3 * li + 2]
            pad_ref, col_ref = pad_refs[li], col_refs[li]
            ci, k, st, pd = g["ci"], g["k"], g["st"], g["pd"]
            lin, lpad, lout = g["lin"], g["lpad"], g["lout"]

            for b in range(B):
                base = b * lpad
                # Zero only the pad rows; the interior is overwritten right below.
                if pd > 0:
                    pad_ref[base:base + pd, :] = jnp.zeros((pd, ci), jnp.float32)
                    pad_ref[base + pd + lin:base + lpad, :] = jnp.zeros(
                        (lpad - pd - lin, ci), jnp.float32)
                pad_ref[base + pd:base + pd + lin, :] = x_val[b * lin:(b + 1) * lin, :]

                # im2col: the K taps are laid side by side in the lane dimension so
                # the whole layer becomes a single MXU matmul (contraction K*Cin).
                for kk in range(k):
                    col_ref[b * lout:(b + 1) * lout, kk * ci:(kk + 1) * ci] = (
                        pad_ref[pl.ds(base + kk, lout, stride=st), :])

            # One matmul per layer: (B*Lout, K*Cin) @ (K*Cin, Cout), f32 accumulate,
            # fused eval-mode BatchNorm affine + ReLU epilogue in f32.
            y = jnp.dot(col_ref[...].astype(mxu_dtype), w_ref[...],
                        preferred_element_type=jnp.float32)
            x_val = jnp.maximum(y * s_ref[...] + sh_ref[...], 0.0)

        # AdaptiveAvgPool1d(1) per batch row-block, then the merged FTI/FSI Linear.
        lh = geoms[-1]["lout"]
        pooled = jnp.concatenate(
            [jnp.mean(x_val[b * lh:(b + 1) * lh, :], axis=0, keepdims=True)
             for b in range(B)], axis=0)                     # (B, 128)
        o_ref[...] = (jnp.dot(pooled.astype(mxu_dtype), lin_w_ref[...],
                              preferred_element_type=jnp.float32) + lin_b_ref[...])

    inputs = [x_rows]
    for e in prep["layers"]:
        inputs += [e["w"], e["scale"], e["shift"]]
    inputs += [prep["lin_w"], prep["lin_b"]]

    out = pl.pallas_call(
        kernel,
        out_shape=jax.ShapeDtypeStruct((B, NC_PAD), jnp.float32),
        # Grid-less: every weight and activation is VMEM-resident for the whole
        # forward (< 1 MiB total at these shapes).
        scratch_shapes=(
            [pltpu.VMEM((B * g["lpad"], g["ci"]), jnp.float32) for g in geoms]
            + [pltpu.VMEM((B * g["lout"], g["k"] * g["ci"]), jnp.float32)
               for g in geoms]),
    )(*inputs)

    return out[:, :NC1], out[:, NC1:NC1 + NC2]


# ---------------------------------------------------------------------------
# Pure-JAX reference (original per-head parameters, torch semantics)
# ---------------------------------------------------------------------------
def mt1dcnn_reference(x_ncl, params):
    def conv(p, x):
        y = lax.conv_general_dilated(
            x, p["w"], (p["stride"],), [(p["padding"], p["padding"])],
            dimension_numbers=("NCH", "OIH", "NCH"),
            precision=lax.Precision.HIGHEST)
        y = y + p["b"][None, :, None]
        y = (p["gamma"][None, :, None]
             * (y - p["mean"][None, :, None])
             / jnp.sqrt(p["var"][None, :, None] + EPS)
             + p["beta"][None, :, None])
        return jnp.maximum(y, 0.0)

    x = x_ncl
    for p in params["trunk"]:
        x = conv(p, x)

    def head(xh, convs, linp):
        for p in convs:
            xh = conv(p, xh)
        pooled = jnp.mean(xh, axis=2)                        # AdaptiveAvgPool1d(1)
        return jnp.dot(pooled, linp["w"].T,
                       precision=lax.Precision.HIGHEST) + linp["b"]

    return (head(x, params["fti_convs"], params["fti_lin"]),
            head(x, params["fsi_convs"], params["fsi_lin"]))


if __name__ == "__main__":
    B, L = 2, 256  # trunk length 256 -> 8; head length 8 -> 2 -> pooled to 1
    x = jax.random.normal(jax.random.PRNGKey(0), (B, 1, L), dtype=jnp.float32)
    params = init_params(jax.random.PRNGKey(1))
    r1, r2 = mt1dcnn_reference(x, params)

    # 1) f32 MXU operands: tight-tolerance layout / indexing correctness guard.
    y1, y2 = mt1dcnn_forward(x, prepare_params(params, jnp.float32))
    jax.block_until_ready((y1, y2))
    np.testing.assert_allclose(np.asarray(y1), np.asarray(r1), rtol=1e-3, atol=1e-3)
    np.testing.assert_allclose(np.asarray(y2), np.asarray(r2), rtol=1e-3, atol=1e-3)

    # 2) bfloat16 MXU operands (f32 accumulate): the production-default fast path
    #    on v5e / v6e / v7x (MXU is bf16-native on all three generations).
    z1, z2 = mt1dcnn_forward(x, prepare_params(params, jnp.bfloat16))
    jax.block_until_ready((z1, z2))
    assert z1.shape == (B, NC1) and z2.shape == (B, NC2)
    np.testing.assert_allclose(np.asarray(z1), np.asarray(r1), rtol=3e-2, atol=3e-2)
    np.testing.assert_allclose(np.asarray(z2), np.asarray(r2), rtol=3e-2, atol=3e-2)
    print("KERNEL_OK")
</pallas_src>

<mosaic_0001>
module attributes {stable_mosaic.version = 11 : i64} {
  func.func @kernel(%arg0: memref<512x1xf32, #tpu.memory_space<vmem>>, %arg1: memref<12x16xf32, #tpu.memory_space<vmem>>, %arg2: memref<1x16xf32, #tpu.memory_space<vmem>>, %arg3: memref<1x16xf32, #tpu.memory_space<vmem>>, %arg4: memref<192x16xf32, #tpu.memory_space<vmem>>, %arg5: memref<1x16xf32, #tpu.memory_space<vmem>>, %arg6: memref<1x16xf32, #tpu.memory_space<vmem>>, %arg7: memref<144x24xf32, #tpu.memory_space<vmem>>, %arg8: memref<1x24xf32, #tpu.memory_space<vmem>>, %arg9: memref<1x24xf32, #tpu.memory_space<vmem>>, %arg10: memref<216x24xf32, #tpu.memory_space<vmem>>, %arg11: memref<1x24xf32, #tpu.memory_space<vmem>>, %arg12: memref<1x24xf32, #tpu.memory_space<vmem>>, %arg13: memref<144x32xf32, #tpu.memory_space<vmem>>, %arg14: memref<1x32xf32, #tpu.memory_space<vmem>>, %arg15: memref<1x32xf32, #tpu.memory_space<vmem>>, %arg16: memref<192x64xf32, #tpu.memory_space<vmem>>, %arg17: memref<1x64xf32, #tpu.memory_space<vmem>>, %arg18: memref<1x64xf32, #tpu.memory_space<vmem>>, %arg19: memref<192x128xf32, #tpu.memory_space<vmem>>, %arg20: memref<1x128xf32, #tpu.memory_space<vmem>>, %arg21: memref<1x128xf32, #tpu.memory_space<vmem>>, %arg22: memref<128x8xf32, #tpu.memory_space<vmem>>, %arg23: memref<1x8xf32, #tpu.memory_space<vmem>>, %arg24: memref<2x8xf32, #tpu.memory_space<vmem>>, %arg25: memref<532x1xf32, #tpu.memory_space<vmem>>, %arg26: memref<276x16xf32, #tpu.memory_space<vmem>>, %arg27: memref<144x16xf32, #tpu.memory_space<vmem>>, %arg28: memref<80x24xf32, #tpu.memory_space<vmem>>, %arg29: memref<40x24xf32, #tpu.memory_space<vmem>>, %arg30: memref<24x32xf32, #tpu.memory_space<vmem>>, %arg31: memref<12x64xf32, #tpu.memory_space<vmem>>, %arg32: memref<256x12xf32, #tpu.memory_space<vmem>>, %arg33: memref<128x192xf32, #tpu.memory_space<vmem>>, %arg34: memref<64x144xf32, #tpu.memory_space<vmem>>, %arg35: memref<32x216xf32, #tpu.memory_space<vmem>>, %arg36: memref<16x144xf32, #tpu.memory_space<vmem>>, %arg37: memref<8x192xf32, #tpu.memory_space<vmem>>, %arg38: memref<4x192xf32, #tpu.memory_space<vmem>>) attributes {dimension_semantics = [], scalar_prefetch = 0 : i64, scratch_operands = 14 : i64, tpu.core_type = #tpu.core_type<tc>} {
    %c0 = arith.constant 0 : index
    %c0_0 = arith.constant 0 : index
    %0 = vector.load %arg0[%c0, %c0_0] : memref<512x1xf32, #tpu.memory_space<vmem>>, vector<512x1xf32>
    %cst = arith.constant 0.000000e+00 : f32
    %1 = vector.broadcast %cst : f32 to vector<5x1xf32>
    %c0_1 = arith.constant 0 : index
    %c0_2 = arith.constant 0 : index
    %2 = vector.load %arg25[%c0_1, %c0_2] : memref<532x1xf32, #tpu.memory_space<vmem>>, vector<5x1xf32>
    tpu.vector_store %arg25[%c0_1, %c0_2], %1 {strides = array<i32>} : memref<532x1xf32, #tpu.memory_space<vmem>>, vector<5x1xf32>,
    %cst_3 = arith.constant 0.000000e+00 : f32
    %3 = vector.broadcast %cst_3 : f32 to vector<5x1xf32>
    %c261 = arith.constant 261 : index
    %c0_4 = arith.constant 0 : index
    %4 = vector.load %arg25[%c261, %c0_4] : memref<532x1xf32, #tpu.memory_space<vmem>>, vector<5x1xf32>
    tpu.vector_store %arg25[%c261, %c0_4], %3 {strides = array<i32>} : memref<532x1xf32, #tpu.memory_space<vmem>>, vector<5x1xf32>,
    %5 = vector.extract_strided_slice %0 {offsets = [0, 0], sizes = [256, 1], strides = [1, 1]} : vector<512x1xf32> to vector<256x1xf32>
    %c5 = arith.constant 5 : index
    %c0_5 = arith.constant 0 : index
    %6 = vector.load %arg25[%c5, %c0_5] : memref<532x1xf32, #tpu.memory_space<vmem>>, vector<256x1xf32>
    tpu.vector_store %arg25[%c5, %c0_5], %5 {strides = array<i32>} : memref<532x1xf32, #tpu.memory_space<vmem>>, vector<256x1xf32>,
    %c0_6 = arith.constant 0 : index
    %c0_7 = arith.constant 0 : index
    %7 = tpu.strided_load %arg25[%c0_6, %c0_7] {strides = array<i32: 2, 1>} : memref<532x1xf32, #tpu.memory_space<vmem>>, vector<128x1xf32>
    %c0_8 = arith.constant 0 : index
    %c0_9 = arith.constant 0 : index
    %8 = vector.load %arg32[%c0_8, %c0_9] : memref<256x12xf32, #tpu.memory_space<vmem>>, vector<128x1xf32>
    tpu.vector_store %arg32[%c0_8, %c0_9], %7 {strides = array<i32>} : memref<256x12xf32, #tpu.memory_space<vmem>>, vector<128x1xf32>,
    %c1 = arith.constant 1 : index
    %c0_10 = arith.constant 0 : index
    %9 = tpu.strided_load %arg25[%c1, %c0_10] {strides = array<i32: 2, 1>} : memref<532x1xf32, #tpu.memory_space<vmem>>, vector<128x1xf32>
    %c0_11 = arith.constant 0 : index
    %c1_12 = arith.constant 1 : index
    %10 = vector.load %arg32[%c0_11, %c1_12] : memref<256x12xf32, #tpu.memory_space<vmem>>, vector<128x1xf32>
    tpu.vector_store %arg32[%c0_11, %c1_12], %9 {strides = array<i32>} : memref<256x12xf32, #tpu.memory_space<vmem>>, vector<128x1xf32>,
    %c2 = arith.constant 2 : index
    %c0_13 = arith.constant 0 : index
    %11 = tpu.strided_load %arg25[%c2, %c0_13] {strides = array<i32: 2, 1>} : memref<532x1xf32, #tpu.memory_space<vmem>>, vector<128x1xf32>
    %c0_14 = arith.constant 0 : index
    %c2_15 = arith.constant 2 : index
    %12 = vector.load %arg32[%c0_14, %c2_15] : memref<256x12xf32, #tpu.memory_space<vmem>>, vector<128x1xf32>
    tpu.vector_store %arg32[%c0_14, %c2_15], %11 {strides = array<i32>} : memref<256x12xf32, #tpu.memory_space<vmem>>, vector<128x1xf32>,
    %c3 = arith.constant 3 : index
    %c0_16 = arith.constant 0 : index
    %13 = tpu.strided_load %arg25[%c3, %c0_16] {strides = array<i32: 2, 1>} : memref<532x1xf32, #tpu.memory_space<vmem>>, vector<128x1xf32>
    %c0_17 = arith.constant 0 : index
    %c3_18 = arith.constant 3 : index
    %14 = vector.load %arg32[%c0_17, %c3_18] : memref<256x12xf32, #tpu.memory_space<vmem>>, vector<128x1xf32>
    tpu.vector_store %arg32[%c0_17, %c3_18], %13 {strides = array<i32>} : memref<256x12xf32, #tpu.memory_space<vmem>>, vector<128x1xf32>,
    %c4 = arith.constant 4 : index
    %c0_19 = arith.constant 0 : index
    %15 = tpu.strided_load %arg25[%c4, %c0_19] {strides = array<i32: 2, 1>} : memref<532x1xf32, #tpu.memory_space<vmem>>, vector<128x1xf32>
    %c0_20 = arith.constant 0 : index
    %c4_21 = arith.constant 4 : index
    %16 = vector.load %arg32[%c0_20, %c4_21] : memref<256x12xf32, #tpu.memory_space<vmem>>, vector<128x1xf32>
    tpu.vector_store %arg32[%c0_20, %c4_21], %15 {strides = array<i32>} : memref<256x12xf32, #tpu.memory_space<vmem>>, vector<128x1xf32>,
    %c5_22 = arith.constant 5 : index
    %c0_23 = arith.constant 0 : index
    %17 = tpu.strided_load %arg25[%c5_22, %c0_23] {strides = array<i32: 2, 1>} : memref<532x1xf32, #tpu.memory_space<vmem>>, vector<128x1xf32>
    %c0_24 = arith.constant 0 : index
    %c5_25 = arith.constant 5 : index
    %18 = vector.load %arg32[%c0_24, %c5_25] : memref<256x12xf32, #tpu.memory_space<vmem>>, vector<128x1xf32>
    tpu.vector_store %arg32[%c0_24, %c5_25], %17 {strides = array<i32>} : memref<256x12xf32, #tpu.memory_space<vmem>>, vector<128x1xf32>,
    %c6 = arith.constant 6 : index
    %c0_26 = arith.constant 0 : index
    %19 = tpu.strided_load %arg25[%c6, %c0_26] {strides = array<i32: 2, 1>} : memref<532x1xf32, #tpu.memory_space<vmem>>, vector<128x1xf32>
    %c0_27 = arith.constant 0 : index
    %c6_28 = arith.constant 6 : index
    %20 = vector.load %arg32[%c0_27, %c6_28] : memref<256x12xf32, #tpu.memory_space<vmem>>, vector<128x1xf32>
    tpu.vector_store %arg32[%c0_27, %c6_28], %19 {strides = array<i32>} : memref<256x12xf32, #tpu.memory_space<vmem>>, vector<128x1xf32>,
    %c7 = arith.constant 7 : index
    %c0_29 = arith.constant 0 : index
    %21 = tpu.strided_load %arg25[%c7, %c0_29] {strides = array<i32: 2, 1>} : memref<532x1xf32, #tpu.memory_space<vmem>>, vector<128x1xf32>
    %c0_30 = arith.constant 0 : index
    %c7_31 = arith.constant 7 : index
    %22 = vector.load %arg32[%c0_30, %c7_31] : memref<256x12xf32, #tpu.memory_space<vmem>>, vector<128x1xf32>
    tpu.vector_store %arg32[%c0_30, %c7_31], %21 {strides = array<i32>} : memref<256x12xf32, #tpu.memory_space<vmem>>, vector<128x1xf32>,
    %c8 = arith.constant 8 : index
    %c0_32 = arith.constant 0 : index
    %23 = tpu.strided_load %arg25[%c8, %c0_32] {strides = array<i32: 2, 1>} : memref<532x1xf32, #tpu.memory_space<vmem>>, vector<128x1xf32>
    %c0_33 = arith.constant 0 : index
    %c8_34 = arith.constant 8 : index
    %24 = vector.load %arg32[%c0_33, %c8_34] : memref<256x12xf32, #tpu.memory_space<vmem>>, vector<128x1xf32>
    tpu.vector_store %arg32[%c0_33, %c8_34], %23 {strides = array<i32>} : memref<256x12xf32, #tpu.memory_space<vmem>>, vector<128x1xf32>,
    %c9 = arith.constant 9 : index
    %c0_35 = arith.constant 0 : index
    %25 = tpu.strided_load %arg25[%c9, %c0_35] {strides = array<i32: 2, 1>} : memref<532x1xf32, #tpu.memory_space<vmem>>, vector<128x1xf32>
    %c0_36 = arith.constant 0 : index
    %c9_37 = arith.constant 9 : index
    %26 = vector.load %arg32[%c0_36, %c9_37] : memref<256x12xf32, #tpu.memory_space<vmem>>, vector<128x1xf32>
    tpu.vector_store %arg32[%c0_36, %c9_37], %25 {strides = array<i32>} : memref<256x12xf32, #tpu.memory_space<vmem>>, vector<128x1xf32>,
    %c10 = arith.constant 10 : index
    %c0_38 = arith.constant 0 : index
    %27 = tpu.strided_load %arg25[%c10, %c0_38] {strides = array<i32: 2, 1>} : memref<532x1xf32, #tpu.memory_space<vmem>>, vector<128x1xf32>
    %c0_39 = arith.constant 0 : index
    %c10_40 = arith.constant 10 : index
    %28 = vector.load %arg32[%c0_39, %c10_40] : memref<256x12xf32, #tpu.memory_space<vmem>>, vector<128x1xf32>
    tpu.vector_store %arg32[%c0_39, %c10_40], %27 {strides = array<i32>} : memref<256x12xf32, #tpu.memory_space<vmem>>, vector<128x1xf32>,
    %c11 = arith.constant 11 : index
    %c0_41 = arith.constant 0 : index
    %29 = tpu.strided_load %arg25[%c11, %c0_41] {strides = array<i32: 2, 1>} : memref<532x1xf32, #tpu.memory_space<vmem>>, vector<128x1xf32>
    %c0_42 = arith.constant 0 : index
    %c11_43 = arith.constant 11 : index
    %30 = vector.load %arg32[%c0_42, %c11_43] : memref<256x12xf32, #tpu.memory_space<vmem>>, vector<128x1xf32>
    tpu.vector_store %arg32[%c0_42, %c11_43], %29 {strides = array<i32>} : memref<256x12xf32, #tpu.memory_space<vmem>>, vector<128x1xf32>,
    %cst_44 = arith.constant 0.000000e+00 : f32
    %31 = vector.broadcast %cst_44 : f32 to vector<5x1xf32>
    %c266 = arith.constant 266 : index
    %c0_45 = arith.constant 0 : index
    %32 = vector.load %arg25[%c266, %c0_45] : memref<532x1xf32, #tpu.memory_space<vmem>>, vector<5x1xf32>
    tpu.vector_store %arg25[%c266, %c0_45], %31 {strides = array<i32>} : memref<532x1xf32, #tpu.memory_space<vmem>>, vector<5x1xf32>,
    %cst_46 = arith.constant 0.000000e+00 : f32
    %33 = vector.broadcast %cst_46 : f32 to vector<5x1xf32>
    %c527 = arith.constant 527 : index
    %c0_47 = arith.constant 0 : index
    %34 = vector.load %arg25[%c527, %c0_47] : memref<532x1xf32, #tpu.memory_space<vmem>>, vector<5x1xf32>
    tpu.vector_store %arg25[%c527, %c0_47], %33 {strides = array<i32>} : memref<532x1xf32, #tpu.memory_space<vmem>>, vector<5x1xf32>,
    %35 = vector.extract_strided_slice %0 {offsets = [256, 0], sizes = [256, 1], strides = [1, 1]} : vector<512x1xf32> to vector<256x1xf32>
    %c271 = arith.constant 271 : index
    %c0_48 = arith.constant 0 : index
    %36 = vector.load %arg25[%c271, %c0_48] : memref<532x1xf32, #tpu.memory_space<vmem>>, vector<256x1xf32>
    tpu.vector_store %arg25[%c271, %c0_48], %35 {strides = array<i32>} : memref<532x1xf32, #tpu.memory_space<vmem>>, vector<256x1xf32>,
    %c266_49 = arith.constant 266 : index
    %c0_50 = arith.constant 0 : index
    %37 = tpu.strided_load %arg25[%c266_49, %c0_50] {strides = array<i32: 2, 1>} : memref<532x1xf32, #tpu.memory_space<vmem>>, vector<128x1xf32>
    %c128 = arith.constant 128 : index
    %c0_51 = arith.constant 0 : index
    %38 = vector.load %arg32[%c128, %c0_51] : memref<256x12xf32, #tpu.memory_space<vmem>>, vector<128x1xf32>
    tpu.vector_store %arg32[%c128, %c0_51], %37 {strides = array<i32>} : memref<256x12xf32, #tpu.memory_space<vmem>>, vector<128x1xf32>,
    %c267 = arith.constant 267 : index
    %c0_52 = arith.constant 0 : index
    %39 = tpu.strided_load %arg25[%c267, %c0_52] {strides = array<i32: 2, 1>} : memref<532x1xf32, #tpu.memory_space<vmem>>, vector<128x1xf32>
    %c128_53 = arith.constant 128 : index
    %c1_54 = arith.constant 1 : index
    %40 = vector.load %arg32[%c128_53, %c1_54] : memref<256x12xf32, #tpu.memory_space<vmem>>, vector<128x1xf32>
    tpu.vector_store %arg32[%c128_53, %c1_54], %39 {strides = array<i32>} : memref<256x12xf32, #tpu.memory_space<vmem>>, vector<128x1xf32>,
    %c268 = arith.constant 268 : index
    %c0_55 = arith.constant 0 : index
    %41 = tpu.strided_load %arg25[%c268, %c0_55] {strides = array<i32: 2, 1>} : memref<532x1xf32, #tpu.memory_space<vmem>>, vector<128x1xf32>
    %c128_56 = arith.constant 128 : index
    %c2_57 = arith.constant 2 : index
    %42 = vector.load %arg32[%c128_56, %c2_57] : memref<256x12xf32, #tpu.memory_space<vmem>>, vector<128x1xf32>
    tpu.vector_store %arg32[%c128_56, %c2_57], %41 {strides = array<i32>} : memref<256x12xf32, #tpu.memory_space<vmem>>, vector<128x1xf32>,
    %c269 = arith.constant 269 : index
    %c0_58 = arith.constant 0 : index
    %43 = tpu.strided_load %arg25[%c269, %c0_58] {strides = array<i32: 2, 1>} : memref<532x1xf32, #tpu.memory_space<vmem>>, vector<128x1xf32>
    %c128_59 = arith.constant 128 : index
    %c3_60 = arith.constant 3 : index
    %44 = vector.load %arg32[%c128_59, %c3_60] : memref<256x12xf32, #tpu.memory_space<vmem>>, vector<128x1xf32>
    tpu.vector_store %arg32[%c128_59, %c3_60], %43 {strides = array<i32>} : memref<256x12xf32, #tpu.memory_space<vmem>>, vector<128x1xf32>,
    %c270 = arith.constant 270 : index
    %c0_61 = arith.constant 0 : index
    %45 = tpu.strided_load %arg25[%c270, %c0_61] {strides = array<i32: 2, 1>} : memref<532x1xf32, #tpu.memory_space<vmem>>, vector<128x1xf32>
    %c128_62 = arith.constant 128 : index
    %c4_63 = arith.constant 4 : index
    %46 = vector.load %arg32[%c128_62, %c4_63] : memref<256x12xf32, #tpu.memory_space<vmem>>, vector<128x1xf32>
    tpu.vector_store %arg32[%c128_62, %c4_63], %45 {strides = array<i32>} : memref<256x12xf32, #tpu.memory_space<vmem>>, vector<128x1xf32>,
    %c271_64 = arith.constant 271 : index
    %c0_65 = arith.constant 0 : index
    %47 = tpu.strided_load %arg25[%c271_64, %c0_65] {strides = array<i32: 2, 1>} : memref<532x1xf32, #tpu.memory_space<vmem>>, vector<128x1xf32>
    %c128_66 = arith.constant 128 : index
    %c5_67 = arith.constant 5 : index
    %48 = vector.load %arg32[%c128_66, %c5_67] : memref<256x12xf32, #tpu.memory_space<vmem>>, vector<128x1xf32>
    tpu.vector_store %arg32[%c128_66, %c5_67], %47 {strides = array<i32>} : memref<256x12xf32, #tpu.memory_space<vmem>>, vector<128x1xf32>,
    %c272 = arith.constant 272 : index
    %c0_68 = arith.constant 0 : index
    %49 = tpu.strided_load %arg25[%c272, %c0_68] {strides = array<i32: 2, 1>} : memref<532x1xf32, #tpu.memory_space<vmem>>, vector<128x1xf32>
    %c128_69 = arith.constant 128 : index
    %c6_70 = arith.constant 6 : index
    %50 = vector.load %arg32[%c128_69, %c6_70] : memref<256x12xf32, #tpu.memory_space<vmem>>, vector<128x1xf32>
    tpu.vector_store %arg32[%c128_69, %c6_70], %49 {strides = array<i32>} : memref<256x12xf32, #tpu.memory_space<vmem>>, vector<128x1xf32>,
    %c273 = arith.constant 273 : index
    %c0_71 = arith.constant 0 : index
    %51 = tpu.strided_load %arg25[%c273, %c0_71] {strides = array<i32: 2, 1>} : memref<532x1xf32, #tpu.memory_space<vmem>>, vector<128x1xf32>
    %c128_72 = arith.constant 128 : index
    %c7_73 = arith.constant 7 : index
    %52 = vector.load %arg32[%c128_72, %c7_73] : memref<256x12xf32, #tpu.memory_space<vmem>>, vector<128x1xf32>
    tpu.vector_store %arg32[%c128_72, %c7_73], %51 {strides = array<i32>} : memref<256x12xf32, #tpu.memory_space<vmem>>, vector<128x1xf32>,
    %c274 = arith.constant 274 : index
    %c0_74 = arith.constant 0 : index
    %53 = tpu.strided_load %arg25[%c274, %c0_74] {strides = array<i32: 2, 1>} : memref<532x1xf32, #tpu.memory_space<vmem>>, vector<128x1xf32>
    %c128_75 = arith.constant 128 : index
    %c8_76 = arith.constant 8 : index
    %54 = vector.load %arg32[%c128_75, %c8_76] : memref<256x12xf32, #tpu.memory_space<vmem>>, vector<128x1xf32>
    tpu.vector_store %arg32[%c128_75, %c8_76], %53 {strides = array<i32>} : memref<256x12xf32, #tpu.memory_space<vmem>>, vector<128x1xf32>,
    %c275 = arith.constant 275 : index
    %c0_77 = arith.constant 0 : index
    %55 = tpu.strided_load %arg25[%c275, %c0_77] {strides = array<i32: 2, 1>} : memref<532x1xf32, #tpu.memory_space<vmem>>, vector<128x1xf32>
    %c128_78 = arith.constant 128 : index
    %c9_79 = arith.constant 9 : index
    %56 = vector.load %arg32[%c128_78, %c9_79] : memref<256x12xf32, #tpu.memory_space<vmem>>, vector<128x1xf32>
    tpu.vector_store %arg32[%c128_78, %c9_79], %55 {strides = array<i32>} : memref<256x12xf32, #tpu.memory_space<vmem>>, vector<128x1xf32>,
    %c276 = arith.constant 276 : index
    %c0_80 = arith.constant 0 : index
    %57 = tpu.strided_load %arg25[%c276, %c0_80] {strides = array<i32: 2, 1>} : memref<532x1xf32, #tpu.memory_space<vmem>>, vector<128x1xf32>
    %c128_81 = arith.constant 128 : index
    %c10_82 = arith.constant 10 : index
    %58 = vector.load %arg32[%c128_81, %c10_82] : memref<256x12xf32, #tpu.memory_space<vmem>>, vector<128x1xf32>
    tpu.vector_store %arg32[%c128_81, %c10_82], %57 {strides = array<i32>} : memref<256x12xf32, #tpu.memory_space<vmem>>, vector<128x1xf32>,
    %c277 = arith.constant 277 : index
    %c0_83 = arith.constant 0 : index
    %59 = tpu.strided_load %arg25[%c277, %c0_83] {strides = array<i32: 2, 1>} : memref<532x1xf32, #tpu.memory_space<vmem>>, vector<128x1xf32>
    %c128_84 = arith.constant 128 : index
    %c11_85 = arith.constant 11 : index
    %60 = vector.load %arg32[%c128_84, %c11_85] : memref<256x12xf32, #tpu.memory_space<vmem>>, vector<128x1xf32>
    tpu.vector_store %arg32[%c128_84, %c11_85], %59 {strides = array<i32>} : memref<256x12xf32, #tpu.memory_space<vmem>>, vector<128x1xf32>,
    %c0_86 = arith.constant 0 : index
    %c0_87 = arith.constant 0 : index
    %61 = vector.load %arg32[%c0_86, %c0_87] : memref<256x12xf32, #tpu.memory_space<vmem>>, vector<256x12xf32>
    %c0_88 = arith.constant 0 : index
    %c0_89 = arith.constant 0 : index
    %62 = vector.load %arg1[%c0_88, %c0_89] : memref<12x16xf32, #tpu.memory_space<vmem>>, vector<12x16xf32>
    %cst_90 = arith.constant dense<0.000000e+00> : vector<256x16xf32>
    %63 = tpu.matmul %61, %62, %cst_90 {dimension_numbers = #tpu.dot_dimension_numbers<[1], [0], [0], [1], [0, 0, 1, 1], [], []>} : vector<256x12xf32>, vector<12x16xf32>, vector<256x16xf32> -> vector<256x16xf32>
    %c0_91 = arith.constant 0 : index
    %c0_92 = arith.constant 0 : index
    %64 = vector.load %arg2[%c0_91, %c0_92] : memref<1x16xf32, #tpu.memory_space<vmem>>, vector<1x16xf32>
    %65 = vector.broadcast %64 : vector<1x16xf32> to vector<256x16xf32>
    %66 = arith.mulf %63, %65 : vector<256x16xf32>
    %c0_93 = arith.constant 0 : index
    %c0_94 = arith.constant 0 : index
    %67 = vector.load %arg3[%c0_93, %c0_94] : memref<1x16xf32, #tpu.memory_space<vmem>>, vector<1x16xf32>
    %68 = vector.broadcast %67 : vector<1x16xf32> to vector<256x16xf32>
    %69 = arith.addf %66, %68 : vector<256x16xf32>
    %cst_95 = arith.constant 0.000000e+00 : f32
    %70 = vector.broadcast %cst_95 : f32 to vector<256x16xf32>
    %71 = arith.maximumf %69, %70 : vector<256x16xf32>
    %cst_96 = arith.constant 0.000000e+00 : f32
    %72 = vector.broadcast %cst_96 : f32 to vector<5x16xf32>
    %c0_97 = arith.constant 0 : index
    %c0_98 = arith.constant 0 : index
    %73 = vector.load %arg26[%c0_97, %c0_98] : memref<276x16xf32, #tpu.memory_space<vmem>>, vector<5x16xf32>
    tpu.vector_store %arg26[%c0_97, %c0_98], %72 {strides = array<i32>} : memref<276x16xf32, #tpu.memory_space<vmem>>, vector<5x16xf32>,
    %cst_99 = arith.constant 0.000000e+00 : f32
    %74 = vector.broadcast %cst_99 : f32 to vector<5x16xf32>
    %c133 = arith.constant 133 : index
    %c0_100 = arith.constant 0 : index
    %75 = vector.load %arg26[%c133, %c0_100] : memref<276x16xf32, #tpu.memory_space<vmem>>, vector<5x16xf32>
    tpu.vector_store %arg26[%c133, %c0_100], %74 {strides = array<i32>} : memref<276x16xf32, #tpu.memory_space<vmem>>, vector<5x16xf32>,
    %76 = vector.extract_strided_slice %71 {offsets = [0, 0], sizes = [128, 16], strides = [1, 1]} : vector<256x16xf32> to vector<128x16xf32>
    %c5_101 = arith.constant 5 : index
    %c0_102 = arith.constant 0 : index
    %77 = vector.load %arg26[%c5_101, %c0_102] : memref<276x16xf32, #tpu.memory_space<vmem>>, vector<128x16xf32>
    tpu.vector_store %arg26[%c5_101, %c0_102], %76 {strides = array<i32>} : memref<276x16xf32, #tpu.memory_space<vmem>>, vector<128x16xf32>,
    %c0_103 = arith.constant 0 : index
    %c0_104 = arith.constant 0 : index
    %78 = tpu.strided_load %arg26[%c0_103, %c0_104] {strides = array<i32: 2, 1>} : memref<276x16xf32, #tpu.memory_space<vmem>>, vector<64x16xf32>
    %c0_105 = arith.constant 0 : index
    %c0_106 = arith.constant 0 : index
    %79 = vector.load %arg33[%c0_105, %c0_106] : memref<128x192xf32, #tpu.memory_space<vmem>>, vector<64x16xf32>
    tpu.vector_store %arg33[%c0_105, %c0_106], %78 {strides = array<i32>} : memref<128x192xf32, #tpu.memory_space<vmem>>, vector<64x16xf32>,
    %c1_107 = arith.constant 1 : index
    %c0_108 = arith.constant 0 : index
    %80 = tpu.strided_load %arg26[%c1_107, %c0_108] {strides = array<i32: 2, 1>} : memref<276x16xf32, #tpu.memory_space<vmem>>, vector<64x16xf32>
    %c0_109 = arith.constant 0 : index
    %c16 = arith.constant 16 : index
    %81 = vector.load %arg33[%c0_109, %c16] : memref<128x192xf32, #tpu.memory_space<vmem>>, vector<64x16xf32>
    tpu.vector_store %arg33[%c0_109, %c16], %80 {strides = array<i32>} : memref<128x192xf32, #tpu.memory_space<vmem>>, vector<64x16xf32>,
    %c2_110 = arith.constant 2 : index
    %c0_111 = arith.constant 0 : index
    %82 = tpu.strided_load %arg26[%c2_110, %c0_111] {strides = array<i32: 2, 1>} : memref<276x16xf32, #tpu.memory_space<vmem>>, vector<64x16xf32>
    %c0_112 = arith.constant 0 : index
    %c32 = arith.constant 32 : index
    %83 = vector.load %arg33[%c0_112, %c32] : memref<128x192xf32, #tpu.memory_space<vmem>>, vector<64x16xf32>
    tpu.vector_store %arg33[%c0_112, %c32], %82 {strides = array<i32>} : memref<128x192xf32, #tpu.memory_space<vmem>>, vector<64x16xf32>,
    %c3_113 = arith.constant 3 : index
    %c0_114 = arith.constant 0 : index
    %84 = tpu.strided_load %arg26[%c3_113, %c0_114] {strides = array<i32: 2, 1>} : memref<276x16xf32, #tpu.memory_space<vmem>>, vector<64x16xf32>
    %c0_115 = arith.constant 0 : index
    %c48 = arith.constant 48 : index
    %85 = vector.load %arg33[%c0_115, %c48] : memref<128x192xf32, #tpu.memory_space<vmem>>, vector<64x16xf32>
    tpu.vector_store %arg33[%c0_115, %c48], %84 {strides = array<i32>} : memref<128x192xf32, #tpu.memory_space<vmem>>, vector<64x16xf32>,
    %c4_116 = arith.constant 4 : index
    %c0_117 = arith.constant 0 : index
    %86 = tpu.strided_load %arg26[%c4_116, %c0_117] {strides = array<i32: 2, 1>} : memref<276x16xf32, #tpu.memory_space<vmem>>, vector<64x16xf32>
    %c0_118 = arith.constant 0 : index
    %c64 = arith.constant 64 : index
    %87 = vector.load %arg33[%c0_118, %c64] : memref<128x192xf32, #tpu.memory_space<vmem>>, vector<64x16xf32>
    tpu.vector_store %arg33[%c0_118, %c64], %86 {strides = array<i32>} : memref<128x192xf32, #tpu.memory_space<vmem>>, vector<64x16xf32>,
    %c5_119 = arith.constant 5 : index
    %c0_120 = arith.constant 0 : index
    %88 = tpu.strided_load %arg26[%c5_119, %c0_120] {strides = array<i32: 2, 1>} : memref<276x16xf32, #tpu.memory_space<vmem>>, vector<64x16xf32>
    %c0_121 = arith.constant 0 : index
    %c80 = arith.constant 80 : index
    %89 = vector.load %arg33[%c0_121, %c80] : memref<128x192xf32, #tpu.memory_space<vmem>>, vector<64x16xf32>
    tpu.vector_store %arg33[%c0_121, %c80], %88 {strides = array<i32>} : memref<128x192xf32, #tpu.memory_space<vmem>>, vector<64x16xf32>,
    %c6_122 = arith.constant 6 : index
    %c0_123 = arith.constant 0 : index
    %90 = tpu.strided_load %arg26[%c6_122, %c0_123] {strides = array<i32: 2, 1>} : memref<276x16xf32, #tpu.memory_space<vmem>>, vector<64x16xf32>
    %c0_124 = arith.constant 0 : index
    %c96 = arith.constant 96 : index
    %91 = vector.load %arg33[%c0_124, %c96] : memref<128x192xf32, #tpu.memory_space<vmem>>, vector<64x16xf32>
    tpu.vector_store %arg33[%c0_124, %c96], %90 {strides = array<i32>} : memref<128x192xf32, #tpu.memory_space<vmem>>, vector<64x16xf32>,
    %c7_125 = arith.constant 7 : index
    %c0_126 = arith.constant 0 : index
    %92 = tpu.strided_load %arg26[%c7_125, %c0_126] {strides = array<i32: 2, 1>} : memref<276x16xf32, #tpu.memory_space<vmem>>, vector<64x16xf32>
    %c0_127 = arith.constant 0 : index
    %c112 = arith.constant 112 : index
    %93 = vector.load %arg33[%c0_127, %c112] : memref<128x192xf32, #tpu.memory_space<vmem>>, vector<64x16xf32>
    tpu.vector_store %arg33[%c0_127, %c112], %92 {strides = array<i32>} : memref<128x192xf32, #tpu.memory_space<vmem>>, vector<64x16xf32>,
    %c8_128 = arith.constant 8 : index
    %c0_129 = arith.constant 0 : index
    %94 = tpu.strided_load %arg26[%c8_128, %c0_129] {strides = array<i32: 2, 1>} : memref<276x16xf32, #tpu.memory_space<vmem>>, vector<64x16xf32>
    %c0_130 = arith.constant 0 : index
    %c128_131 = arith.constant 128 : index
    %95 = vector.load %arg33[%c0_130, %c128_131] : memref<128x192xf32, #tpu.memory_space<vmem>>, vector<64x16xf32>
    tpu.vector_store %arg33[%c0_130, %c128_131], %94 {strides = array<i32>} : memref<128x192xf32, #tpu.memory_space<vmem>>, vector<64x16xf32>,
    %c9_132 = arith.constant 9 : index
    %c0_133 = arith.constant 0 : index
    %96 = tpu.strided_load %arg26[%c9_132, %c0_133] {strides = array<i32: 2, 1>} : memref<276x16xf32, #tpu.memory_space<vmem>>, vector<64x16xf32>
    %c0_134 = arith.constant 0 : index
    %c144 = arith.constant 144 : index
    %97 = vector.load %arg33[%c0_134, %c144] : memref<128x192xf32, #tpu.memory_space<vmem>>, vector<64x16xf32>
    tpu.vector_store %arg33[%c0_134, %c144], %96 {strides = array<i32>} : memref<128x192xf32, #tpu.memory_space<vmem>>, vector<64x16xf32>,
    %c10_135 = arith.constant 10 : index
    %c0_136 = arith.constant 0 : index
    %98 = tpu.strided_load %arg26[%c10_135, %c0_136] {strides = array<i32: 2, 1>} : memref<276x16xf32, #tpu.memory_space<vmem>>, vector<64x16xf32>
    %c0_137 = arith.constant 0 : index
    %c160 = arith.constant 160 : index
    %99 = vector.load %arg33[%c0_137, %c160] : memref<128x192xf32, #tpu.memory_space<vmem>>, vector<64x16xf32>
    tpu.vector_store %arg33[%c0_137, %c160], %98 {strides = array<i32>} : memref<128x192xf32, #tpu.memory_space<vmem>>, vector<64x16xf32>,
    %c11_138 = arith.constant 11 : index
    %c0_139 = arith.constant 0 : index
    %100 = tpu.strided_load %arg26[%c11_138, %c0_139] {strides = array<i32: 2, 1>} : memref<276x16xf32, #tpu.memory_space<vmem>>, vector<64x16xf32>
    %c0_140 = arith.constant 0 : index
    %c176 = arith.constant 176 : index
    %101 = vector.load %arg33[%c0_140, %c176] : memref<128x192xf32, #tpu.memory_space<vmem>>, vector<64x16xf32>
    tpu.vector_store %arg33[%c0_140, %c176], %100 {strides = array<i32>} : memref<128x192xf32, #tpu.memory_space<vmem>>, vector<64x16xf32>,
    %cst_141 = arith.constant 0.000000e+00 : f32
    %102 = vector.broadcast %cst_141 : f32 to vector<5x16xf32>
    %c138 = arith.constant 138 : index
    %c0_142 = arith.constant 0 : index
    %103 = vector.load %arg26[%c138, %c0_142] : memref<276x16xf32, #tpu.memory_space<vmem>>, vector<5x16xf32>
    tpu.vector_store %arg26[%c138, %c0_142], %102 {strides = array<i32>} : memref<276x16xf32, #tpu.memory_space<vmem>>, vector<5x16xf32>,
    %cst_143 = arith.constant 0.000000e+00 : f32
    %104 = vector.broadcast %cst_143 : f32 to vector<5x16xf32>
    %c271_144 = arith.constant 271 : index
    %c0_145 = arith.constant 0 : index
    %105 = vector.load %arg26[%c271_144, %c0_145] : memref<276x16xf32, #tpu.memory_space<vmem>>, vector<5x16xf32>
    tpu.vector_store %arg26[%c271_144, %c0_145], %104 {strides = array<i32>} : memref<276x16xf32, #tpu.memory_space<vmem>>, vector<5x16xf32>,
    %106 = vector.extract_strided_slice %71 {offsets = [128, 0], sizes = [128, 16], strides = [1, 1]} : vector<256x16xf32> to vector<128x16xf32>
    %c143 = arith.constant 143 : index
    %c0_146 = arith.constant 0 : index
    %107 = vector.load %arg26[%c143, %c0_146] : memref<276x16xf32, #tpu.memory_space<vmem>>, vector<128x16xf32>
    tpu.vector_store %arg26[%c143, %c0_146], %106 {strides = array<i32>} : memref<276x16xf32, #tpu.memory_space<vmem>>, vector<128x16xf32>,
    %c138_147 = arith.constant 138 : index
    %c0_148 = arith.constant 0 : index
    %108 = tpu.strided_load %arg26[%c138_147, %c0_148] {strides = array<i32: 2, 1>} : memref<276x16xf32, #tpu.memory_space<vmem>>, vector<64x16xf32>
    %c64_149 = arith.constant 64 : index
    %c0_150 = arith.constant 0 : index
    %109 = vector.load %arg33[%c64_149, %c0_150] : memref<128x192xf32, #tpu.memory_space<vmem>>, vector<64x16xf32>
    tpu.vector_store %arg33[%c64_149, %c0_150], %108 {strides = array<i32>} : memref<128x192xf32, #tpu.memory_space<vmem>>, vector<64x16xf32>,
    %c139 = arith.constant 139 : index
    %c0_151 = arith.constant 0 : index
    %110 = tpu.strided_load %arg26[%c139, %c0_151] {strides = array<i32: 2, 1>} : memref<276x16xf32, #tpu.memory_space<vmem>>, vector<64x16xf32>
    %c64_152 = arith.constant 64 : index
    %c16_153 = arith.constant 16 : index
    %111 = vector.load %arg33[%c64_152, %c16_153] : memref<128x192xf32, #tpu.memory_space<vmem>>, vector<64x16xf32>
    tpu.vector_store %arg33[%c64_152, %c16_153], %110 {strides = array<i32>} : memref<128x192xf32, #tpu.memory_space<vmem>>, vector<64x16xf32>,
    %c140 = arith.constant 140 : index
    %c0_154 = arith.constant 0 : index
    %112 = tpu.strided_load %arg26[%c140, %c0_154] {strides = array<i32: 2, 1>} : memref<276x16xf32, #tpu.memory_space<vmem>>, vector<64x16xf32>
    %c64_155 = arith.constant 64 : index
    %c32_156 = arith.constant 32 : index
    %113 = vector.load %arg33[%c64_155, %c32_156] : memref<128x192xf32, #tpu.memory_space<vmem>>, vector<64x16xf32>
    tpu.vector_store %arg33[%c64_155, %c32_156], %112 {strides = array<i32>} : memref<128x192xf32, #tpu.memory_space<vmem>>, vector<64x16xf32>,
    %c141 = arith.constant 141 : index
    %c0_157 = arith.constant 0 : index
    %114 = tpu.strided_load %arg26[%c141, %c0_157] {strides = array<i32: 2, 1>} : memref<276x16xf32, #tpu.memory_space<vmem>>, vector<64x16xf32>
    %c64_158 = arith.constant 64 : index
    %c48_159 = arith.constant 48 : index
    %115 = vector.load %arg33[%c64_158, %c48_159] : memref<128x192xf32, #tpu.memory_space<vmem>>, vector<64x16xf32>
    tpu.vector_store %arg33[%c64_158, %c48_159], %114 {strides = array<i32>} : memref<128x192xf32, #tpu.memory_space<vmem>>, vector<64x16xf32>,
    %c142 = arith.constant 142 : index
    %c0_160 = arith.constant 0 : index
    %116 = tpu.strided_load %arg26[%c142, %c0_160] {strides = array<i32: 2, 1>} : memref<276x16xf32, #tpu.memory_space<vmem>>, vector<64x16xf32>
    %c64_161 = arith.constant 64 : index
    %c64_162 = arith.constant 64 : index
    %117 = vector.load %arg33[%c64_161, %c64_162] : memref<128x192xf32, #tpu.memory_space<vmem>>, vector<64x16xf32>
    tpu.vector_store %arg33[%c64_161, %c64_162], %116 {strides = array<i32>} : memref<128x192xf32, #tpu.memory_space<vmem>>, vector<64x16xf32>,
    %c143_163 = arith.constant 143 : index
    %c0_164 = arith.constant 0 : index
    %118 = tpu.strided_load %arg26[%c143_163, %c0_164] {strides = array<i32: 2, 1>} : memref<276x16xf32, #tpu.memory_space<vmem>>, vector<64x16xf32>
    %c64_165 = arith.constant 64 : index
    %c80_166 = arith.constant 80 : index
    %119 = vector.load %arg33[%c64_165, %c80_166] : memref<128x192xf32, #tpu.memory_space<vmem>>, vector<64x16xf32>
    tpu.vector_store %arg33[%c64_165, %c80_166], %118 {strides = array<i32>} : memref<128x192xf32, #tpu.memory_space<vmem>>, vector<64x16xf32>,
    %c144_167 = arith.constant 144 : index
    %c0_168 = arith.constant 0 : index
    %120 = tpu.strided_load %arg26[%c144_167, %c0_168] {strides = array<i32: 2, 1>} : memref<276x16xf32, #tpu.memory_space<vmem>>, vector<64x16xf32>
    %c64_169 = arith.constant 64 : index
    %c96_170 = arith.constant 96 : index
    %121 = vector.load %arg33[%c64_169, %c96_170] : memref<128x192xf32, #tpu.memory_space<vmem>>, vector<64x16xf32>
    tpu.vector_store %arg33[%c64_169, %c96_170], %120 {strides = array<i32>} : memref<128x192xf32, #tpu.memory_space<vmem>>, vector<64x16xf32>,
    %c145 = arith.constant 145 : index
    %c0_171 = arith.constant 0 : index
    %122 = tpu.strided_load %arg26[%c145, %c0_171] {strides = array<i32: 2, 1>} : memref<276x16xf32, #tpu.memory_space<vmem>>, vector<64x16xf32>
    %c64_172 = arith.constant 64 : index
    %c112_173 = arith.constant 112 : index
    %123 = vector.load %arg33[%c64_172, %c112_173] : memref<128x192xf32, #tpu.memory_space<vmem>>, vector<64x16xf32>
    tpu.vector_store %arg33[%c64_172, %c112_173], %122 {strides = array<i32>} : memref<128x192xf32, #tpu.memory_space<vmem>>, vector<64x16xf32>,
    %c146 = arith.constant 146 : index
    %c0_174 = arith.constant 0 : index
    %124 = tpu.strided_load %arg26[%c146, %c0_174] {strides = array<i32: 2, 1>} : memref<276x16xf32, #tpu.memory_space<vmem>>, vector<64x16xf32>
    %c64_175 = arith.constant 64 : index
    %c128_176 = arith.constant 128 : index
    %125 = vector.load %arg33[%c64_175, %c128_176] : memref<128x192xf32, #tpu.memory_space<vmem>>, vector<64x16xf32>
    tpu.vector_store %arg33[%c64_175, %c128_176], %124 {strides = array<i32>} : memref<128x192xf32, #tpu.memory_space<vmem>>, vector<64x16xf32>,
    %c147 = arith.constant 147 : index
    %c0_177 = arith.constant 0 : index
    %126 = tpu.strided_load %arg26[%c147, %c0_177] {strides = array<i32: 2, 1>} : memref<276x16xf32, #tpu.memory_space<vmem>>, vector<64x16xf32>
    %c64_178 = arith.constant 64 : index
    %c144_179 = arith.constant 144 : index
    %127 = vector.load %arg33[%c64_178, %c144_179] : memref<128x192xf32, #tpu.memory_space<vmem>>, vector<64x16xf32>
    tpu.vector_store %arg33[%c64_178, %c144_179], %126 {strides = array<i32>} : memref<128x192xf32, #tpu.memory_space<vmem>>, vector<64x16xf32>,
    %c148 = arith.constant 148 : index
    %c0_180 = arith.constant 0 : index
    %128 = tpu.strided_load %arg26[%c148, %c0_180] {strides = array<i32: 2, 1>} : memref<276x16xf32, #tpu.memory_space<vmem>>, vector<64x16xf32>
    %c64_181 = arith.constant 64 : index
    %c160_182 = arith.constant 160 : index
    %129 = vector.load %arg33[%c64_181, %c160_182] : memref<128x192xf32, #tpu.memory_space<vmem>>, vector<64x16xf32>
    tpu.vector_store %arg33[%c64_181, %c160_182], %128 {strides = array<i32>} : memref<128x192xf32, #tpu.memory_space<vmem>>, vector<64x16xf32>,
    %c149 = arith.constant 149 : index
    %c0_183 = arith.constant 0 : index
    %130 = tpu.strided_load %arg26[%c149, %c0_183] {strides = array<i32: 2, 1>} : memref<276x16xf32, #tpu.memory_space<vmem>>, vector<64x16xf32>
    %c64_184 = arith.constant 64 : index
    %c176_185 = arith.constant 176 : index
    %131 = vector.load %arg33[%c64_184, %c176_185] : memref<128x192xf32, #tpu.memory_space<vmem>>, vector<64x16xf32>
    tpu.vector_store %arg33[%c64_184, %c176_185], %130 {strides = array<i32>} : memref<128x192xf32, #tpu.memory_space<vmem>>, vector<64x16xf32>,
    %c0_186 = arith.constant 0 : index
    %c0_187 = arith.constant 0 : index
    %132 = vector.load %arg33[%c0_186, %c0_187] : memref<128x192xf32, #tpu.memory_space<vmem>>, vector<128x192xf32>
    %c0_188 = arith.constant 0 : index
    %c0_189 = arith.constant 0 : index
    %133 = vector.load %arg4[%c0_188, %c0_189] : memref<192x16xf32, #tpu.memory_space<vmem>>, vector<192x16xf32>
    %cst_190 = arith.constant dense<0.000000e+00> : vector<128x16xf32>
    %134 = tpu.matmul %132, %133, %cst_190 {dimension_numbers = #tpu.dot_dimension_numbers<[1], [0], [0], [1], [0, 0, 1, 1], [], []>} : vector<128x192xf32>, vector<192x16xf32>, vector<128x16xf32> -> vector<128x16xf32>
    %c0_191 = arith.constant 0 : index
    %c0_192 = arith.constant 0 : index
    %135 = vector.load %arg5[%c0_191, %c0_192] : memref<1x16xf32, #tpu.memory_space<vmem>>, vector<1x16xf32>
    %136 = vector.broadcast %135 : vector<1x16xf32> to vector<128x16xf32>
    %137 = arith.mulf %134, %136 : vector<128x16xf32>
    %c0_193 = arith.constant 0 : index
    %c0_194 = arith.constant 0 : index
    %138 = vector.load %arg6[%c0_193, %c0_194] : memref<1x16xf32, #tpu.memory_space<vmem>>, vector<1x16xf32>
    %139 = vector.broadcast %138 : vector<1x16xf32> to vector<128x16xf32>
    %140 = arith.addf %137, %139 : vector<128x16xf32>
    %cst_195 = arith.constant 0.000000e+00 : f32
    %141 = vector.broadcast %cst_195 : f32 to vector<128x16xf32>
    %142 = arith.maximumf %140, %141 : vector<128x16xf32>
    %cst_196 = arith.constant 0.000000e+00 : f32
    %143 = vector.broadcast %cst_196 : f32 to vector<4x16xf32>
    %c0_197 = arith.constant 0 : index
    %c0_198 = arith.constant 0 : index
    %144 = vector.load %arg27[%c0_197, %c0_198] : memref<144x16xf32, #tpu.memory_space<vmem>>, vector<4x16xf32>
    tpu.vector_store %arg27[%c0_197, %c0_198], %143 {strides = array<i32>} : memref<144x16xf32, #tpu.memory_space<vmem>>, vector<4x16xf32>,
    %cst_199 = arith.constant 0.000000e+00 : f32
    %145 = vector.broadcast %cst_199 : f32 to vector<4x16xf32>
    %c68 = arith.constant 68 : index
    %c0_200 = arith.constant 0 : index
    %146 = vector.load %arg27[%c68, %c0_200] : memref<144x16xf32, #tpu.memory_space<vmem>>, vector<4x16xf32>
    tpu.vector_store %arg27[%c68, %c0_200], %145 {strides = array<i32>} : memref<144x16xf32, #tpu.memory_space<vmem>>, vector<4x16xf32>,
    %147 = vector.extract_strided_slice %142 {offsets = [0, 0], sizes = [64, 16], strides = [1, 1]} : vector<128x16xf32> to vector<64x16xf32>
    %c4_201 = arith.constant 4 : index
    %c0_202 = arith.constant 0 : index
    %148 = vector.load %arg27[%c4_201, %c0_202] : memref<144x16xf32, #tpu.memory_space<vmem>>, vector<64x16xf32>
    tpu.vector_store %arg27[%c4_201, %c0_202], %147 {strides = array<i32>} : memref<144x16xf32, #tpu.memory_space<vmem>>, vector<64x16xf32>,
    %c0_203 = arith.constant 0 : index
    %c0_204 = arith.constant 0 : index
    %149 = tpu.strided_load %arg27[%c0_203, %c0_204] {strides = array<i32: 2, 1>} : memref<144x16xf32, #tpu.memory_space<vmem>>, vector<32x16xf32>
    %c0_205 = arith.constant 0 : index
    %c0_206 = arith.constant 0 : index
    %150 = vector.load %arg34[%c0_205, %c0_206] : memref<64x144xf32, #tpu.memory_space<vmem>>, vector<32x16xf32>
    tpu.vector_store %arg34[%c0_205, %c0_206], %149 {strides = array<i32>} : memref<64x144xf32, #tpu.memory_space<vmem>>, vector<32x16xf32>,
    %c1_207 = arith.constant 1 : index
    %c0_208 = arith.constant 0 : index
    %151 = tpu.strided_load %arg27[%c1_207, %c0_208] {strides = array<i32: 2, 1>} : memref<144x16xf32, #tpu.memory_space<vmem>>, vector<32x16xf32>
    %c0_209 = arith.constant 0 : index
    %c16_210 = arith.constant 16 : index
    %152 = vector.load %arg34[%c0_209, %c16_210] : memref<64x144xf32, #tpu.memory_space<vmem>>, vector<32x16xf32>
    tpu.vector_store %arg34[%c0_209, %c16_210], %151 {strides = array<i32>} : memref<64x144xf32, #tpu.memory_space<vmem>>, vector<32x16xf32>,
    %c2_211 = arith.constant 2 : index
    %c0_212 = arith.constant 0 : index
    %153 = tpu.strided_load %arg27[%c2_211, %c0_212] {strides = array<i32: 2, 1>} : memref<144x16xf32, #tpu.memory_space<vmem>>, vector<32x16xf32>
    %c0_213 = arith.constant 0 : index
    %c32_214 = arith.constant 32 : index
    %154 = vector.load %arg34[%c0_213, %c32_214] : memref<64x144xf32, #tpu.memory_space<vmem>>, vector<32x16xf32>
    tpu.vector_store %arg34[%c0_213, %c32_214], %153 {strides = array<i32>} : memref<64x144xf32, #tpu.memory_space<vmem>>, vector<32x16xf32>,
    %c3_215 = arith.constant 3 : index
    %c0_216 = arith.constant 0 : index
    %155 = tpu.strided_load %arg27[%c3_215, %c0_216] {strides = array<i32: 2, 1>} : memref<144x16xf32, #tpu.memory_space<vmem>>, vector<32x16xf32>
    %c0_217 = arith.constant 0 : index
    %c48_218 = arith.constant 48 : index
    %156 = vector.load %arg34[%c0_217, %c48_218] : memref<64x144xf32, #tpu.memory_space<vmem>>, vector<32x16xf32>
    tpu.vector_store %arg34[%c0_217, %c48_218], %155 {strides = array<i32>} : memref<64x144xf32, #tpu.memory_space<vmem>>, vector<32x16xf32>,
    %c4_219 = arith.constant 4 : index
    %c0_220 = arith.constant 0 : index
    %157 = tpu.strided_load %arg27[%c4_219, %c0_220] {strides = array<i32: 2, 1>} : memref<144x16xf32, #tpu.memory_space<vmem>>, vector<32x16xf32>
    %c0_221 = arith.constant 0 : index
    %c64_222 = arith.constant 64 : index
    %158 = vector.load %arg34[%c0_221, %c64_222] : memref<64x144xf32, #tpu.memory_space<vmem>>, vector<32x16xf32>
    tpu.vector_store %arg34[%c0_221, %c64_222], %157 {strides = array<i32>} : memref<64x144xf32, #tpu.memory_space<vmem>>, vector<32x16xf32>,
    %c5_223 = arith.constant 5 : index
    %c0_224 = arith.constant 0 : index
    %159 = tpu.strided_load %arg27[%c5_223, %c0_224] {strides = array<i32: 2, 1>} : memref<144x16xf32, #tpu.memory_space<vmem>>, vector<32x16xf32>
    %c0_225 = arith.constant 0 : index
    %c80_226 = arith.constant 80 : index
    %160 = vector.load %arg34[%c0_225, %c80_226] : memref<64x144xf32, #tpu.memory_space<vmem>>, vector<32x16xf32>
    tpu.vector_store %arg34[%c0_225, %c80_226], %159 {strides = array<i32>} : memref<64x144xf32, #tpu.memory_space<vmem>>, vector<32x16xf32>,
    %c6_227 = arith.constant 6 : index
    %c0_228 = arith.constant 0 : index
    %161 = tpu.strided_load %arg27[%c6_227, %c0_228] {strides = array<i32: 2, 1>} : memref<144x16xf32, #tpu.memory_space<vmem>>, vector<32x16xf32>
    %c0_229 = arith.constant 0 : index
    %c96_230 = arith.constant 96 : index
    %162 = vector.load %arg34[%c0_229, %c96_230] : memref<64x144xf32, #tpu.memory_space<vmem>>, vector<32x16xf32>
    tpu.vector_store %arg34[%c0_229, %c96_230], %161 {strides = array<i32>} : memref<64x144xf32, #tpu.memory_space<vmem>>, vector<32x16xf32>,
    %c7_231 = arith.constant 7 : index
    %c0_232 = arith.constant 0 : index
    %163 = tpu.strided_load %arg27[%c7_231, %c0_232] {strides = array<i32: 2, 1>} : memref<144x16xf32, #tpu.memory_space<vmem>>, vector<32x16xf32>
    %c0_233 = arith.constant 0 : index
    %c112_234 = arith.constant 112 : index
    %164 = vector.load %arg34[%c0_233, %c112_234] : memref<64x144xf32, #tpu.memory_space<vmem>>, vector<32x16xf32>
    tpu.vector_store %arg34[%c0_233, %c112_234], %163 {strides = array<i32>} : memref<64x144xf32, #tpu.memory_space<vmem>>, vector<32x16xf32>,
    %c8_235 = arith.constant 8 : index
    %c0_236 = arith.constant 0 : index
    %165 = tpu.strided_load %arg27[%c8_235, %c0_236] {strides = array<i32: 2, 1>} : memref<144x16xf32, #tpu.memory_space<vmem>>, vector<32x16xf32>
    %c0_237 = arith.constant 0 : index
    %c128_238 = arith.constant 128 : index
    %166 = vector.load %arg34[%c0_237, %c128_238] : memref<64x144xf32, #tpu.memory_space<vmem>>, vector<32x16xf32>
    tpu.vector_store %arg34[%c0_237, %c128_238], %165 {strides = array<i32>} : memref<64x144xf32, #tpu.memory_space<vmem>>, vector<32x16xf32>,
    %cst_239 = arith.constant 0.000000e+00 : f32
    %167 = vector.broadcast %cst_239 : f32 to vector<4x16xf32>
    %c72 = arith.constant 72 : index
    %c0_240 = arith.constant 0 : index
    %168 = vector.load %arg27[%c72, %c0_240] : memref<144x16xf32, #tpu.memory_space<vmem>>, vector<4x16xf32>
    tpu.vector_store %arg27[%c72, %c0_240], %167 {strides = array<i32>} : memref<144x16xf32, #tpu.memory_space<vmem>>, vector<4x16xf32>,
    %cst_241 = arith.constant 0.000000e+00 : f32
    %169 = vector.broadcast %cst_241 : f32 to vector<4x16xf32>
    %c140_242 = arith.constant 140 : index
    %c0_243 = arith.constant 0 : index
    %170 = vector.load %arg27[%c140_242, %c0_243] : memref<144x16xf32, #tpu.memory_space<vmem>>, vector<4x16xf32>
    tpu.vector_store %arg27[%c140_242, %c0_243], %169 {strides = array<i32>} : memref<144x16xf32, #tpu.memory_space<vmem>>, vector<4x16xf32>,
    %171 = vector.extract_strided_slice %142 {offsets = [64, 0], sizes = [64, 16], strides = [1, 1]} : vector<128x16xf32> to vector<64x16xf32>
    %c76 = arith.constant 76 : index
    %c0_244 = arith.constant 0 : index
    %172 = vector.load %arg27[%c76, %c0_244] : memref<144x16xf32, #tpu.memory_space<vmem>>, vector<64x16xf32>
    tpu.vector_store %arg27[%c76, %c0_244], %171 {strides = array<i32>} : memref<144x16xf32, #tpu.memory_space<vmem>>, vector<64x16xf32>,
    %c72_245 = arith.constant 72 : index
    %c0_246 = arith.constant 0 : index
    %173 = tpu.strided_load %arg27[%c72_245, %c0_246] {strides = array<i32: 2, 1>} : memref<144x16xf32, #tpu.memory_space<vmem>>, vector<32x16xf32>
    %c32_247 = arith.constant 32 : index
    %c0_248 = arith.constant 0 : index
    %174 = vector.load %arg34[%c32_247, %c0_248] : memref<64x144xf32, #tpu.memory_space<vmem>>, vector<32x16xf32>
    tpu.vector_store %arg34[%c32_247, %c0_248], %173 {strides = array<i32>} : memref<64x144xf32, #tpu.memory_space<vmem>>, vector<32x16xf32>,
    %c73 = arith.constant 73 : index
    %c0_249 = arith.constant 0 : index
    %175 = tpu.strided_load %arg27[%c73, %c0_249] {strides = array<i32: 2, 1>} : memref<144x16xf32, #tpu.memory_space<vmem>>, vector<32x16xf32>
    %c32_250 = arith.constant 32 : index
    %c16_251 = arith.constant 16 : index
    %176 = vector.load %arg34[%c32_250, %c16_251] : memref<64x144xf32, #tpu.memory_space<vmem>>, vector<32x16xf32>
    tpu.vector_store %arg34[%c32_250, %c16_251], %175 {strides = array<i32>} : memref<64x144xf32, #tpu.memory_space<vmem>>, vector<32x16xf32>,
    %c74 = arith.constant 74 : index
    %c0_252 = arith.constant 0 : index
    %177 = tpu.strided_load %arg27[%c74, %c0_252] {strides = array<i32: 2, 1>} : memref<144x16xf32, #tpu.memory_space<vmem>>, vector<32x16xf32>
    %c32_253 = arith.constant 32 : index
    %c32_254 = arith.constant 32 : index
    %178 = vector.load %arg34[%c32_253, %c32_254] : memref<64x144xf32, #tpu.memory_space<vmem>>, vector<32x16xf32>
    tpu.vector_store %arg34[%c32_253, %c32_254], %177 {strides = array<i32>} : memref<64x144xf32, #tpu.memory_space<vmem>>, vector<32x16xf32>,
    %c75 = arith.constant 75 : index
    %c0_255 = arith.constant 0 : index
    %179 = tpu.strided_load %arg27[%c75, %c0_255] {strides = array<i32: 2, 1>} : memref<144x16xf32, #tpu.memory_space<vmem>>, vector<32x16xf32>
    %c32_256 = arith.constant 32 : index
    %c48_257 = arith.constant 48 : index
    %180 = vector.load %arg34[%c32_256, %c48_257] : memref<64x144xf32, #tpu.memory_space<vmem>>, vector<32x16xf32>
    tpu.vector_store %arg34[%c32_256, %c48_257], %179 {strides = array<i32>} : memref<64x144xf32, #tpu.memory_space<vmem>>, vector<32x16xf32>,
    %c76_258 = arith.constant 76 : index
    %c0_259 = arith.constant 0 : index
    %181 = tpu.strided_load %arg27[%c76_258, %c0_259] {strides = array<i32: 2, 1>} : memref<144x16xf32, #tpu.memory_space<vmem>>, vector<32x16xf32>
    %c32_260 = arith.constant 32 : index
    %c64_261 = arith.constant 64 : index
    %182 = vector.load %arg34[%c32_260, %c64_261] : memref<64x144xf32, #tpu.memory_space<vmem>>, vector<32x16xf32>
    tpu.vector_store %arg34[%c32_260, %c64_261], %181 {strides = array<i32>} : memref<64x144xf32, #tpu.memory_space<vmem>>, vector<32x16xf32>,
    %c77 = arith.constant 77 : index
    %c0_262 = arith.constant 0 : index
    %183 = tpu.strided_load %arg27[%c77, %c0_262] {strides = array<i32: 2, 1>} : memref<144x16xf32, #tpu.memory_space<vmem>>, vector<32x16xf32>
    %c32_263 = arith.constant 32 : index
    %c80_264 = arith.constant 80 : index
    %184 = vector.load %arg34[%c32_263, %c80_264] : memref<64x144xf32, #tpu.memory_space<vmem>>, vector<32x16xf32>
    tpu.vector_store %arg34[%c32_263, %c80_264], %183 {strides = array<i32>} : memref<64x144xf32, #tpu.memory_space<vmem>>, vector<32x16xf32>,
    %c78 = arith.constant 78 : index
    %c0_265 = arith.constant 0 : index
    %185 = tpu.strided_load %arg27[%c78, %c0_265] {strides = array<i32: 2, 1>} : memref<144x16xf32, #tpu.memory_space<vmem>>, vector<32x16xf32>
    %c32_266 = arith.constant 32 : index
    %c96_267 = arith.constant 96 : index
    %186 = vector.load %arg34[%c32_266, %c96_267] : memref<64x144xf32, #tpu.memory_space<vmem>>, vector<32x16xf32>
    tpu.vector_store %arg34[%c32_266, %c96_267], %185 {strides = array<i32>} : memref<64x144xf32, #tpu.memory_space<vmem>>, vector<32x16xf32>,
    %c79 = arith.constant 79 : index
    %c0_268 = arith.constant 0 : index
    %187 = tpu.strided_load %arg27[%c79, %c0_268] {strides = array<i32: 2, 1>} : memref<144x16xf32, #tpu.memory_space<vmem>>, vector<32x16xf32>
    %c32_269 = arith.constant 32 : index
    %c112_270 = arith.constant 112 : index
    %188 = vector.load %arg34[%c32_269, %c112_270] : memref<64x144xf32, #tpu.memory_space<vmem>>, vector<32x16xf32>
    tpu.vector_store %arg34[%c32_269, %c112_270], %187 {strides = array<i32>} : memref<64x144xf32, #tpu.memory_space<vmem>>, vector<32x16xf32>,
    %c80_271 = arith.constant 80 : index
    %c0_272 = arith.constant 0 : index
    %189 = tpu.strided_load %arg27[%c80_271, %c0_272] {strides = array<i32: 2, 1>} : memref<144x16xf32, #tpu.memory_space<vmem>>, vector<32x16xf32>
    %c32_273 = arith.constant 32 : index
    %c128_274 = arith.constant 128 : index
    %190 = vector.load %arg34[%c32_273, %c128_274] : memref<64x144xf32, #tpu.memory_space<vmem>>, vector<32x16xf32>
    tpu.vector_store %arg34[%c32_273, %c128_274], %189 {strides = array<i32>} : memref<64x144xf32, #tpu.memory_space<vmem>>, vector<32x16xf32>,
    %c0_275 = arith.constant 0 : index
    %c0_276 = arith.constant 0 : index
    %191 = vector.load %arg34[%c0_275, %c0_276] : memref<64x144xf32, #tpu.memory_space<vmem>>, vector<64x144xf32>
    %c0_277 = arith.constant 0 : index
    %c0_278 = arith.constant 0 : index
    %192 = vector.load %arg7[%c0_277, %c0_278] : memref<144x24xf32, #tpu.memory_space<vmem>>, vector<144x24xf32>
    %cst_279 = arith.constant dense<0.000000e+00> : vector<64x24xf32>
    %193 = tpu.matmul %191, %192, %cst_279 {dimension_numbers = #tpu.dot_dimension_numbers<[1], [0], [0], [1], [0, 0, 1, 1], [], []>} : vector<64x144xf32>, vector<144x24xf32>, vector<64x24xf32> -> vector<64x24xf32>
    %c0_280 = arith.constant 0 : index
    %c0_281 = arith.constant 0 : index
    %194 = vector.load %arg8[%c0_280, %c0_281] : memref<1x24xf32, #tpu.memory_space<vmem>>, vector<1x24xf32>
    %195 = vector.broadcast %194 : vector<1x24xf32> to vector<64x24xf32>
    %196 = arith.mulf %193, %195 : vector<64x24xf32>
    %c0_282 = arith.constant 0 : index
    %c0_283 = arith.constant 0 : index
    %197 = vector.load %arg9[%c0_282, %c0_283] : memref<1x24xf32, #tpu.memory_space<vmem>>, vector<1x24xf32>
    %198 = vector.broadcast %197 : vector<1x24xf32> to vector<64x24xf32>
    %199 = arith.addf %196, %198 : vector<64x24xf32>
    %cst_284 = arith.constant 0.000000e+00 : f32
    %200 = vector.broadcast %cst_284 : f32 to vector<64x24xf32>
    %201 = arith.maximumf %199, %200 : vector<64x24xf32>
    %cst_285 = arith.constant 0.000000e+00 : f32
    %202 = vector.broadcast %cst_285 : f32 to vector<4x24xf32>
    %c0_286 = arith.constant 0 : index
    %c0_287 = arith.constant 0 : index
    %203 = vector.load %arg28[%c0_286, %c0_287] : memref<80x24xf32, #tpu.memory_space<vmem>>, vector<4x24xf32>
    tpu.vector_store %arg28[%c0_286, %c0_287], %202 {strides = array<i32>} : memref<80x24xf32, #tpu.memory_space<vmem>>, vector<4x24xf32>,
    %cst_288 = arith.constant 0.000000e+00 : f32
    %204 = vector.broadcast %cst_288 : f32 to vector<4x24xf32>
    %c36 = arith.constant 36 : index
    %c0_289 = arith.constant 0 : index
    %205 = vector.load %arg28[%c36, %c0_289] : memref<80x24xf32, #tpu.memory_space<vmem>>, vector<4x24xf32>
    tpu.vector_store %arg28[%c36, %c0_289], %204 {strides = array<i32>} : memref<80x24xf32, #tpu.memory_space<vmem>>, vector<4x24xf32>,
    %206 = vector.extract_strided_slice %201 {offsets = [0, 0], sizes = [32, 24], strides = [1, 1]} : vector<64x24xf32> to vector<32x24xf32>
    %c4_290 = arith.constant 4 : index
    %c0_291 = arith.constant 0 : index
    %207 = vector.load %arg28[%c4_290, %c0_291] : memref<80x24xf32, #tpu.memory_space<vmem>>, vector<32x24xf32>
    tpu.vector_store %arg28[%c4_290, %c0_291], %206 {strides = array<i32>} : memref<80x24xf32, #tpu.memory_space<vmem>>, vector<32x24xf32>,
    %c0_292 = arith.constant 0 : index
    %c0_293 = arith.constant 0 : index
    %208 = tpu.strided_load %arg28[%c0_292, %c0_293] {strides = array<i32: 2, 1>} : memref<80x24xf32, #tpu.memory_space<vmem>>, vector<16x24xf32>
    %c0_294 = arith.constant 0 : index
    %c0_295 = arith.constant 0 : index
    %209 = vector.load %arg35[%c0_294, %c0_295] : memref<32x216xf32, #tpu.memory_space<vmem>>, vector<16x24xf32>
    tpu.vector_store %arg35[%c0_294, %c0_295], %208 {strides = array<i32>} : memref<32x216xf32, #tpu.memory_space<vmem>>, vector<16x24xf32>,
    %c1_296 = arith.constant 1 : index
    %c0_297 = arith.constant 0 : index
    %210 = tpu.strided_load %arg28[%c1_296, %c0_297] {strides = array<i32: 2, 1>} : memref<80x24xf32, #tpu.memory_space<vmem>>, vector<16x24xf32>
    %c0_298 = arith.constant 0 : index
    %c24 = arith.constant 24 : index
    %211 = vector.load %arg35[%c0_298, %c24] : memref<32x216xf32, #tpu.memory_space<vmem>>, vector<16x24xf32>
    tpu.vector_store %arg35[%c0_298, %c24], %210 {strides = array<i32>} : memref<32x216xf32, #tpu.memory_space<vmem>>, vector<16x24xf32>,
    %c2_299 = arith.constant 2 : index
    %c0_300 = arith.constant 0 : index
    %212 = tpu.strided_load %arg28[%c2_299, %c0_300] {strides = array<i32: 2, 1>} : memref<80x24xf32, #tpu.memory_space<vmem>>, vector<16x24xf32>
    %c0_301 = arith.constant 0 : index
    %c48_302 = arith.constant 48 : index
    %213 = vector.load %arg35[%c0_301, %c48_302] : memref<32x216xf32, #tpu.memory_space<vmem>>, vector<16x24xf32>
    tpu.vector_store %arg35[%c0_301, %c48_302], %212 {strides = array<i32>} : memref<32x216xf32, #tpu.memory_space<vmem>>, vector<16x24xf32>,
    %c3_303 = arith.constant 3 : index
    %c0_304 = arith.constant 0 : index
    %214 = tpu.strided_load %arg28[%c3_303, %c0_304] {strides = array<i32: 2, 1>} : memref<80x24xf32, #tpu.memory_space<vmem>>, vector<16x24xf32>
    %c0_305 = arith.constant 0 : index
    %c72_306 = arith.constant 72 : index
    %215 = vector.load %arg35[%c0_305, %c72_306] : memref<32x216xf32, #tpu.memory_space<vmem>>, vector<16x24xf32>
    tpu.vector_store %arg35[%c0_305, %c72_306], %214 {strides = array<i32>} : memref<32x216xf32, #tpu.memory_space<vmem>>, vector<16x24xf32>,
    %c4_307 = arith.constant 4 : index
    %c0_308 = arith.constant 0 : index
    %216 = tpu.strided_load %arg28[%c4_307, %c0_308] {strides = array<i32: 2, 1>} : memref<80x24xf32, #tpu.memory_space<vmem>>, vector<16x24xf32>
    %c0_309 = arith.constant 0 : index
    %c96_310 = arith.constant 96 : index
    %217 = vector.load %arg35[%c0_309, %c96_310] : memref<32x216xf32, #tpu.memory_space<vmem>>, vector<16x24xf32>
    tpu.vector_store %arg35[%c0_309, %c96_310], %216 {strides = array<i32>} : memref<32x216xf32, #tpu.memory_space<vmem>>, vector<16x24xf32>,
    %c5_311 = arith.constant 5 : index
    %c0_312 = arith.constant 0 : index
    %218 = tpu.strided_load %arg28[%c5_311, %c0_312] {strides = array<i32: 2, 1>} : memref<80x24xf32, #tpu.memory_space<vmem>>, vector<16x24xf32>
    %c0_313 = arith.constant 0 : index
    %c120 = arith.constant 120 : index
    %219 = vector.load %arg35[%c0_313, %c120] : memref<32x216xf32, #tpu.memory_space<vmem>>, vector<16x24xf32>
    tpu.vector_store %arg35[%c0_313, %c120], %218 {strides = array<i32>} : memref<32x216xf32, #tpu.memory_space<vmem>>, vector<16x24xf32>,
    %c6_314 = arith.constant 6 : index
    %c0_315 = arith.constant 0 : index
    %220 = tpu.strided_load %arg28[%c6_314, %c0_315] {strides = array<i32: 2, 1>} : memref<80x24xf32, #tpu.memory_space<vmem>>, vector<16x24xf32>
    %c0_316 = arith.constant 0 : index
    %c144_317 = arith.constant 144 : index
    %221 = vector.load %arg35[%c0_316, %c144_317] : memref<32x216xf32, #tpu.memory_space<vmem>>, vector<16x24xf32>
    tpu.vector_store %arg35[%c0_316, %c144_317], %220 {strides = array<i32>} : memref<32x216xf32, #tpu.memory_space<vmem>>, vector<16x24xf32>,
    %c7_318 = arith.constant 7 : index
    %c0_319 = arith.constant 0 : index
    %222 = tpu.strided_load %arg28[%c7_318, %c0_319] {strides = array<i32: 2, 1>} : memref<80x24xf32, #tpu.memory_space<vmem>>, vector<16x24xf32>
    %c0_320 = arith.constant 0 : index
    %c168 = arith.constant 168 : index
    %223 = vector.load %arg35[%c0_320, %c168] : memref<32x216xf32, #tpu.memory_space<vmem>>, vector<16x24xf32>
    tpu.vector_store %arg35[%c0_320, %c168], %222 {strides = array<i32>} : memref<32x216xf32, #tpu.memory_space<vmem>>, vector<16x24xf32>,
    %c8_321 = arith.constant 8 : index
    %c0_322 = arith.constant 0 : index
    %224 = tpu.strided_load %arg28[%c8_321, %c0_322] {strides = array<i32: 2, 1>} : memref<80x24xf32, #tpu.memory_space<vmem>>, vector<16x24xf32>
    %c0_323 = arith.constant 0 : index
    %c192 = arith.constant 192 : index
    %225 = vector.load %arg35[%c0_323, %c192] : memref<32x216xf32, #tpu.memory_space<vmem>>, vector<16x24xf32>
    tpu.vector_store %arg35[%c0_323, %c192], %224 {strides = array<i32>} : memref<32x216xf32, #tpu.memory_space<vmem>>, vector<16x24xf32>,
    %cst_324 = arith.constant 0.000000e+00 : f32
    %226 = vector.broadcast %cst_324 : f32 to vector<4x24xf32>
    %c40 = arith.constant 40 : index
    %c0_325 = arith.constant 0 : index
    %227 = vector.load %arg28[%c40, %c0_325] : memref<80x24xf32, #tpu.memory_space<vmem>>, vector<4x24xf32>
    tpu.vector_store %arg28[%c40, %c0_325], %226 {strides = array<i32>} : memref<80x24xf32, #tpu.memory_space<vmem>>, vector<4x24xf32>,
    %cst_326 = arith.constant 0.000000e+00 : f32
    %228 = vector.broadcast %cst_326 : f32 to vector<4x24xf32>
    %c76_327 = arith.constant 76 : index
    %c0_328 = arith.constant 0 : index
    %229 = vector.load %arg28[%c76_327, %c0_328] : memref<80x24xf32, #tpu.memory_space<vmem>>, vector<4x24xf32>
    tpu.vector_store %arg28[%c76_327, %c0_328], %228 {strides = array<i32>} : memref<80x24xf32, #tpu.memory_space<vmem>>, vector<4x24xf32>,
    %230 = vector.extract_strided_slice %201 {offsets = [32, 0], sizes = [32, 24], strides = [1, 1]} : vector<64x24xf32> to vector<32x24xf32>
    %c44 = arith.constant 44 : index
    %c0_329 = arith.constant 0 : index
    %231 = vector.load %arg28[%c44, %c0_329] : memref<80x24xf32, #tpu.memory_space<vmem>>, vector<32x24xf32>
    tpu.vector_store %arg28[%c44, %c0_329], %230 {strides = array<i32>} : memref<80x24xf32, #tpu.memory_space<vmem>>, vector<32x24xf32>,
    %c40_330 = arith.constant 40 : index
    %c0_331 = arith.constant 0 : index
    %232 = tpu.strided_load %arg28[%c40_330, %c0_331] {strides = array<i32: 2, 1>} : memref<80x24xf32, #tpu.memory_space<vmem>>, vector<16x24xf32>
    %c16_332 = arith.constant 16 : index
    %c0_333 = arith.constant 0 : index
    %233 = vector.load %arg35[%c16_332, %c0_333] : memref<32x216xf32, #tpu.memory_space<vmem>>, vector<16x24xf32>
    tpu.vector_store %arg35[%c16_332, %c0_333], %232 {strides = array<i32>} : memref<32x216xf32, #tpu.memory_space<vmem>>, vector<16x24xf32>,
    %c41 = arith.constant 41 : index
    %c0_334 = arith.constant 0 : index
    %234 = tpu.strided_load %arg28[%c41, %c0_334] {strides = array<i32: 2, 1>} : memref<80x24xf32, #tpu.memory_space<vmem>>, vector<16x24xf32>
    %c16_335 = arith.constant 16 : index
    %c24_336 = arith.constant 24 : index
    %235 = vector.load %arg35[%c16_335, %c24_336] : memref<32x216xf32, #tpu.memory_space<vmem>>, vector<16x24xf32>
    tpu.vector_store %arg35[%c16_335, %c24_336], %234 {strides = array<i32>} : memref<32x216xf32, #tpu.memory_space<vmem>>, vector<16x24xf32>,
    %c42 = arith.constant 42 : index
    %c0_337 = arith.constant 0 : index
    %236 = tpu.strided_load %arg28[%c42, %c0_337] {strides = array<i32: 2, 1>} : memref<80x24xf32, #tpu.memory_space<vmem>>, vector<16x24xf32>
    %c16_338 = arith.constant 16 : index
    %c48_339 = arith.constant 48 : index
    %237 = vector.load %arg35[%c16_338, %c48_339] : memref<32x216xf32, #tpu.memory_space<vmem>>, vector<16x24xf32>
    tpu.vector_store %arg35[%c16_338, %c48_339], %236 {strides = array<i32>} : memref<32x216xf32, #tpu.memory_space<vmem>>, vector<16x24xf32>,
    %c43 = arith.constant 43 : index
    %c0_340 = arith.constant 0 : index
    %238 = tpu.strided_load %arg28[%c43, %c0_340] {strides = array<i32: 2, 1>} : memref<80x24xf32, #tpu.memory_space<vmem>>, vector<16x24xf32>
    %c16_341 = arith.constant 16 : index
    %c72_342 = arith.constant 72 : index
    %239 = vector.load %arg35[%c16_341, %c72_342] : memref<32x216xf32, #tpu.memory_space<vmem>>, vector<16x24xf32>
    tpu.vector_store %arg35[%c16_341, %c72_342], %238 {strides = array<i32>} : memref<32x216xf32, #tpu.memory_space<vmem>>, vector<16x24xf32>,
    %c44_343 = arith.constant 44 : index
    %c0_344 = arith.constant 0 : index
    %240 = tpu.strided_load %arg28[%c44_343, %c0_344] {strides = array<i32: 2, 1>} : memref<80x24xf32, #tpu.memory_space<vmem>>, vector<16x24xf32>
    %c16_345 = arith.constant 16 : index
    %c96_346 = arith.constant 96 : index
    %241 = vector.load %arg35[%c16_345, %c96_346] : memref<32x216xf32, #tpu.memory_space<vmem>>, vector<16x24xf32>
    tpu.vector_store %arg35[%c16_345, %c96_346], %240 {strides = array<i32>} : memref<32x216xf32, #tpu.memory_space<vmem>>, vector<16x24xf32>,
    %c45 = arith.constant 45 : index
    %c0_347 = arith.constant 0 : index
    %242 = tpu.strided_load %arg28[%c45, %c0_347] {strides = array<i32: 2, 1>} : memref<80x24xf32, #tpu.memory_space<vmem>>, vector<16x24xf32>
    %c16_348 = arith.constant 16 : index
    %c120_349 = arith.constant 120 : index
    %243 = vector.load %arg35[%c16_348, %c120_349] : memref<32x216xf32, #tpu.memory_space<vmem>>, vector<16x24xf32>
    tpu.vector_store %arg35[%c16_348, %c120_349], %242 {strides = array<i32>} : memref<32x216xf32, #tpu.memory_space<vmem>>, vector<16x24xf32>,
    %c46 = arith.constant 46 : index
    %c0_350 = arith.constant 0 : index
    %244 = tpu.strided_load %arg28[%c46, %c0_350] {strides = array<i32: 2, 1>} : memref<80x24xf32, #tpu.memory_space<vmem>>, vector<16x24xf32>
    %c16_351 = arith.constant 16 : index
    %c144_352 = arith.constant 144 : index
    %245 = vector.load %arg35[%c16_351, %c144_352] : memref<32x216xf32, #tpu.memory_space<vmem>>, vector<16x24xf32>
    tpu.vector_store %arg35[%c16_351, %c144_352], %244 {strides = array<i32>} : memref<32x216xf32, #tpu.memory_space<vmem>>, vector<16x24xf32>,
    %c47 = arith.constant 47 : index
    %c0_353 = arith.constant 0 : index
    %246 = tpu.strided_load %arg28[%c47, %c0_353] {strides = array<i32: 2, 1>} : memref<80x24xf32, #tpu.memory_space<vmem>>, vector<16x24xf32>
    %c16_354 = arith.constant 16 : index
    %c168_355 = arith.constant 168 : index
    %247 = vector.load %arg35[%c16_354, %c168_355] : memref<32x216xf32, #tpu.memory_space<vmem>>, vector<16x24xf32>
    tpu.vector_store %arg35[%c16_354, %c168_355], %246 {strides = array<i32>} : memref<32x216xf32, #tpu.memory_space<vmem>>, vector<16x24xf32>,
    %c48_356 = arith.constant 48 : index
    %c0_357 = arith.constant 0 : index
    %248 = tpu.strided_load %arg28[%c48_356, %c0_357] {strides = array<i32: 2, 1>} : memref<80x24xf32, #tpu.memory_space<vmem>>, vector<16x24xf32>
    %c16_358 = arith.constant 16 : index
    %c192_359 = arith.constant 192 : index
    %249 = vector.load %arg35[%c16_358, %c192_359] : memref<32x216xf32, #tpu.memory_space<vmem>>, vector<16x24xf32>
    tpu.vector_store %arg35[%c16_358, %c192_359], %248 {strides = array<i32>} : memref<32x216xf32, #tpu.memory_space<vmem>>, vector<16x24xf32>,
    %c0_360 = arith.constant 0 : index
    %c0_361 = arith.constant 0 : index
    %250 = vector.load %arg35[%c0_360, %c0_361] : memref<32x216xf32, #tpu.memory_space<vmem>>, vector<32x216xf32>
    %c0_362 = arith.constant 0 : index
    %c0_363 = arith.constant 0 : index
    %251 = vector.load %arg10[%c0_362, %c0_363] : memref<216x24xf32, #tpu.memory_space<vmem>>, vector<216x24xf32>
    %cst_364 = arith.constant dense<0.000000e+00> : vector<32x24xf32>
    %252 = tpu.matmul %250, %251, %cst_364 {dimension_numbers = #tpu.dot_dimension_numbers<[1], [0], [0], [1], [0, 0, 1, 1], [], []>} : vector<32x216xf32>, vector<216x24xf32>, vector<32x24xf32> -> vector<32x24xf32>
    %c0_365 = arith.constant 0 : index
    %c0_366 = arith.constant 0 : index
    %253 = vector.load %arg11[%c0_365, %c0_366] : memref<1x24xf32, #tpu.memory_space<vmem>>, vector<1x24xf32>
    %254 = vector.broadcast %253 : vector<1x24xf32> to vector<32x24xf32>
    %255 = arith.mulf %252, %254 : vector<32x24xf32>
    %c0_367 = arith.constant 0 : index
    %c0_368 = arith.constant 0 : index
    %256 = vector.load %arg12[%c0_367, %c0_368] : memref<1x24xf32, #tpu.memory_space<vmem>>, vector<1x24xf32>
    %257 = vector.broadcast %256 : vector<1x24xf32> to vector<32x24xf32>
    %258 = arith.addf %255, %257 : vector<32x24xf32>
    %cst_369 = arith.constant 0.000000e+00 : f32
    %259 = vector.broadcast %cst_369 : f32 to vector<32x24xf32>
    %260 = arith.maximumf %258, %259 : vector<32x24xf32>
    %cst_370 = arith.constant 0.000000e+00 : f32
    %261 = vector.broadcast %cst_370 : f32 to vector<2x24xf32>
    %c0_371 = arith.constant 0 : index
    %c0_372 = arith.constant 0 : index
    %262 = vector.load %arg29[%c0_371, %c0_372] : memref<40x24xf32, #tpu.memory_space<vmem>>, vector<2x24xf32>
    tpu.vector_store %arg29[%c0_371, %c0_372], %261 {strides = array<i32>} : memref<40x24xf32, #tpu.memory_space<vmem>>, vector<2x24xf32>,
    %cst_373 = arith.constant 0.000000e+00 : f32
    %263 = vector.broadcast %cst_373 : f32 to vector<2x24xf32>
    %c18 = arith.constant 18 : index
    %c0_374 = arith.constant 0 : index
    %264 = vector.load %arg29[%c18, %c0_374] : memref<40x24xf32, #tpu.memory_space<vmem>>, vector<2x24xf32>
    tpu.vector_store %arg29[%c18, %c0_374], %263 {strides = array<i32>} : memref<40x24xf32, #tpu.memory_space<vmem>>, vector<2x24xf32>,
    %265 = vector.extract_strided_slice %260 {offsets = [0, 0], sizes = [16, 24], strides = [1, 1]} : vector<32x24xf32> to vector<16x24xf32>
    %c2_375 = arith.constant 2 : index
    %c0_376 = arith.constant 0 : index
    %266 = vector.load %arg29[%c2_375, %c0_376] : memref<40x24xf32, #tpu.memory_space<vmem>>, vector<16x24xf32>
    tpu.vector_store %arg29[%c2_375, %c0_376], %265 {strides = array<i32>} : memref<40x24xf32, #tpu.memory_space<vmem>>, vector<16x24xf32>,
    %c0_377 = arith.constant 0 : index
    %c0_378 = arith.constant 0 : index
    %267 = tpu.strided_load %arg29[%c0_377, %c0_378] {strides = array<i32: 2, 1>} : memref<40x24xf32, #tpu.memory_space<vmem>>, vector<8x24xf32>
    %c0_379 = arith.constant 0 : index
    %c0_380 = arith.constant 0 : index
    %268 = vector.load %arg36[%c0_379, %c0_380] : memref<16x144xf32, #tpu.memory_space<vmem>>, vector<8x24xf32>
    tpu.vector_store %arg36[%c0_379, %c0_380], %267 {strides = array<i32>} : memref<16x144xf32, #tpu.memory_space<vmem>>, vector<8x24xf32>,
    %c1_381 = arith.constant 1 : index
    %c0_382 = arith.constant 0 : index
    %269 = tpu.strided_load %arg29[%c1_381, %c0_382] {strides = array<i32: 2, 1>} : memref<40x24xf32, #tpu.memory_space<vmem>>, vector<8x24xf32>
    %c0_383 = arith.constant 0 : index
    %c24_384 = arith.constant 24 : index
    %270 = vector.load %arg36[%c0_383, %c24_384] : memref<16x144xf32, #tpu.memory_space<vmem>>, vector<8x24xf32>
    tpu.vector_store %arg36[%c0_383, %c24_384], %269 {strides = array<i32>} : memref<16x144xf32, #tpu.memory_space<vmem>>, vector<8x24xf32>,
    %c2_385 = arith.constant 2 : index
    %c0_386 = arith.constant 0 : index
    %271 = tpu.strided_load %arg29[%c2_385, %c0_386] {strides = array<i32: 2, 1>} : memref<40x24xf32, #tpu.memory_space<vmem>>, vector<8x24xf32>
    %c0_387 = arith.constant 0 : index
    %c48_388 = arith.constant 48 : index
    %272 = vector.load %arg36[%c0_387, %c48_388] : memref<16x144xf32, #tpu.memory_space<vmem>>, vector<8x24xf32>
    tpu.vector_store %arg36[%c0_387, %c48_388], %271 {strides = array<i32>} : memref<16x144xf32, #tpu.memory_space<vmem>>, vector<8x24xf32>,
    %c3_389 = arith.constant 3 : index
    %c0_390 = arith.constant 0 : index
    %273 = tpu.strided_load %arg29[%c3_389, %c0_390] {strides = array<i32: 2, 1>} : memref<40x24xf32, #tpu.memory_space<vmem>>, vector<8x24xf32>
    %c0_391 = arith.constant 0 : index
    %c72_392 = arith.constant 72 : index
    %274 = vector.load %arg36[%c0_391, %c72_392] : memref<16x144xf32, #tpu.memory_space<vmem>>, vector<8x24xf32>
    tpu.vector_store %arg36[%c0_391, %c72_392], %273 {strides = array<i32>} : memref<16x144xf32, #tpu.memory_space<vmem>>, vector<8x24xf32>,
    %c4_393 = arith.constant 4 : index
    %c0_394 = arith.constant 0 : index
    %275 = tpu.strided_load %arg29[%c4_393, %c0_394] {strides = array<i32: 2, 1>} : memref<40x24xf32, #tpu.memory_space<vmem>>, vector<8x24xf32>
    %c0_395 = arith.constant 0 : index
    %c96_396 = arith.constant 96 : index
    %276 = vector.load %arg36[%c0_395, %c96_396] : memref<16x144xf32, #tpu.memory_space<vmem>>, vector<8x24xf32>
    tpu.vector_store %arg36[%c0_395, %c96_396], %275 {strides = array<i32>} : memref<16x144xf32, #tpu.memory_space<vmem>>, vector<8x24xf32>,
    %c5_397 = arith.constant 5 : index
    %c0_398 = arith.constant 0 : index
    %277 = tpu.strided_load %arg29[%c5_397, %c0_398] {strides = array<i32: 2, 1>} : memref<40x24xf32, #tpu.memory_space<vmem>>, vector<8x24xf32>
    %c0_399 = arith.constant 0 : index
    %c120_400 = arith.constant 120 : index
    %278 = vector.load %arg36[%c0_399, %c120_400] : memref<16x144xf32, #tpu.memory_space<vmem>>, vector<8x24xf32>
    tpu.vector_store %arg36[%c0_399, %c120_400], %277 {strides = array<i32>} : memref<16x144xf32, #tpu.memory_space<vmem>>, vector<8x24xf32>,
    %cst_401 = arith.constant 0.000000e+00 : f32
    %279 = vector.broadcast %cst_401 : f32 to vector<2x24xf32>
    %c20 = arith.constant 20 : index
    %c0_402 = arith.constant 0 : index
    %280 = vector.load %arg29[%c20, %c0_402] : memref<40x24xf32, #tpu.memory_space<vmem>>, vector<2x24xf32>
    tpu.vector_store %arg29[%c20, %c0_402], %279 {strides = array<i32>} : memref<40x24xf32, #tpu.memory_space<vmem>>, vector<2x24xf32>,
    %cst_403 = arith.constant 0.000000e+00 : f32
    %281 = vector.broadcast %cst_403 : f32 to vector<2x24xf32>
    %c38 = arith.constant 38 : index
    %c0_404 = arith.constant 0 : index
    %282 = vector.load %arg29[%c38, %c0_404] : memref<40x24xf32, #tpu.memory_space<vmem>>, vector<2x24xf32>
    tpu.vector_store %arg29[%c38, %c0_404], %281 {strides = array<i32>} : memref<40x24xf32, #tpu.memory_space<vmem>>, vector<2x24xf32>,
    %283 = vector.extract_strided_slice %260 {offsets = [16, 0], sizes = [16, 24], strides = [1, 1]} : vector<32x24xf32> to vector<16x24xf32>
    %c22 = arith.constant 22 : index
    %c0_405 = arith.constant 0 : index
    %284 = vector.load %arg29[%c22, %c0_405] : memref<40x24xf32, #tpu.memory_space<vmem>>, vector<16x24xf32>
    tpu.vector_store %arg29[%c22, %c0_405], %283 {strides = array<i32>} : memref<40x24xf32, #tpu.memory_space<vmem>>, vector<16x24xf32>,
    %c20_406 = arith.constant 20 : index
    %c0_407 = arith.constant 0 : index
    %285 = tpu.strided_load %arg29[%c20_406, %c0_407] {strides = array<i32: 2, 1>} : memref<40x24xf32, #tpu.memory_space<vmem>>, vector<8x24xf32>
    %c8_408 = arith.constant 8 : index
    %c0_409 = arith.constant 0 : index
    %286 = vector.load %arg36[%c8_408, %c0_409] : memref<16x144xf32, #tpu.memory_space<vmem>>, vector<8x24xf32>
    tpu.vector_store %arg36[%c8_408, %c0_409], %285 {strides = array<i32>} : memref<16x144xf32, #tpu.memory_space<vmem>>, vector<8x24xf32>,
    %c21 = arith.constant 21 : index
    %c0_410 = arith.constant 0 : index
    %287 = tpu.strided_load %arg29[%c21, %c0_410] {strides = array<i32: 2, 1>} : memref<40x24xf32, #tpu.memory_space<vmem>>, vector<8x24xf32>
    %c8_411 = arith.constant 8 : index
    %c24_412 = arith.constant 24 : index
    %288 = vector.load %arg36[%c8_411, %c24_412] : memref<16x144xf32, #tpu.memory_space<vmem>>, vector<8x24xf32>
    tpu.vector_store %arg36[%c8_411, %c24_412], %287 {strides = array<i32>} : memref<16x144xf32, #tpu.memory_space<vmem>>, vector<8x24xf32>,
    %c22_413 = arith.constant 22 : index
    %c0_414 = arith.constant 0 : index
    %289 = tpu.strided_load %arg29[%c22_413, %c0_414] {strides = array<i32: 2, 1>} : memref<40x24xf32, #tpu.memory_space<vmem>>, vector<8x24xf32>
    %c8_415 = arith.constant 8 : index
    %c48_416 = arith.constant 48 : index
    %290 = vector.load %arg36[%c8_415, %c48_416] : memref<16x144xf32, #tpu.memory_space<vmem>>, vector<8x24xf32>
    tpu.vector_store %arg36[%c8_415, %c48_416], %289 {strides = array<i32>} : memref<16x144xf32, #tpu.memory_space<vmem>>, vector<8x24xf32>,
    %c23 = arith.constant 23 : index
    %c0_417 = arith.constant 0 : index
    %291 = tpu.strided_load %arg29[%c23, %c0_417] {strides = array<i32: 2, 1>} : memref<40x24xf32, #tpu.memory_space<vmem>>, vector<8x24xf32>
    %c8_418 = arith.constant 8 : index
    %c72_419 = arith.constant 72 : index
    %292 = vector.load %arg36[%c8_418, %c72_419] : memref<16x144xf32, #tpu.memory_space<vmem>>, vector<8x24xf32>
    tpu.vector_store %arg36[%c8_418, %c72_419], %291 {strides = array<i32>} : memref<16x144xf32, #tpu.memory_space<vmem>>, vector<8x24xf32>,
    %c24_420 = arith.constant 24 : index
    %c0_421 = arith.constant 0 : index
    %293 = tpu.strided_load %arg29[%c24_420, %c0_421] {strides = array<i32: 2, 1>} : memref<40x24xf32, #tpu.memory_space<vmem>>, vector<8x24xf32>
    %c8_422 = arith.constant 8 : index
    %c96_423 = arith.constant 96 : index
    %294 = vector.load %arg36[%c8_422, %c96_423] : memref<16x144xf32, #tpu.memory_space<vmem>>, vector<8x24xf32>
    tpu.vector_store %arg36[%c8_422, %c96_423], %293 {strides = array<i32>} : memref<16x144xf32, #tpu.memory_space<vmem>>, vector<8x24xf32>,
    %c25 = arith.constant 25 : index
    %c0_424 = arith.constant 0 : index
    %295 = tpu.strided_load %arg29[%c25, %c0_424] {strides = array<i32: 2, 1>} : memref<40x24xf32, #tpu.memory_space<vmem>>, vector<8x24xf32>
    %c8_425 = arith.constant 8 : index
    %c120_426 = arith.constant 120 : index
    %296 = vector.load %arg36[%c8_425, %c120_426] : memref<16x144xf32, #tpu.memory_space<vmem>>, vector<8x24xf32>
    tpu.vector_store %arg36[%c8_425, %c120_426], %295 {strides = array<i32>} : memref<16x144xf32, #tpu.memory_space<vmem>>, vector<8x24xf32>,
    %c0_427 = arith.constant 0 : index
    %c0_428 = arith.constant 0 : index
    %297 = vector.load %arg36[%c0_427, %c0_428] : memref<16x144xf32, #tpu.memory_space<vmem>>, vector<16x144xf32>
    %c0_429 = arith.constant 0 : index
    %c0_430 = arith.constant 0 : index
    %298 = vector.load %arg13[%c0_429, %c0_430] : memref<144x32xf32, #tpu.memory_space<vmem>>, vector<144x32xf32>
    %cst_431 = arith.constant dense<0.000000e+00> : vector<16x32xf32>
    %299 = tpu.matmul %297, %298, %cst_431 {dimension_numbers = #tpu.dot_dimension_numbers<[1], [0], [0], [1], [0, 0, 1, 1], [], []>} : vector<16x144xf32>, vector<144x32xf32>, vector<16x32xf32> -> vector<16x32xf32>
    %c0_432 = arith.constant 0 : index
    %c0_433 = arith.constant 0 : index
    %300 = vector.load %arg14[%c0_432, %c0_433] : memref<1x32xf32, #tpu.memory_space<vmem>>, vector<1x32xf32>
    %301 = vector.broadcast %300 : vector<1x32xf32> to vector<16x32xf32>
    %302 = arith.mulf %299, %301 : vector<16x32xf32>
    %c0_434 = arith.constant 0 : index
    %c0_435 = arith.constant 0 : index
    %303 = vector.load %arg15[%c0_434, %c0_435] : memref<1x32xf32, #tpu.memory_space<vmem>>, vector<1x32xf32>
    %304 = vector.broadcast %303 : vector<1x32xf32> to vector<16x32xf32>
    %305 = arith.addf %302, %304 : vector<16x32xf32>
    %cst_436 = arith.constant 0.000000e+00 : f32
    %306 = vector.broadcast %cst_436 : f32 to vector<16x32xf32>
    %307 = arith.maximumf %305, %306 : vector<16x32xf32>
    %cst_437 = arith.constant 0.000000e+00 : f32
    %308 = vector.broadcast %cst_437 : f32 to vector<2x32xf32>
    %c0_438 = arith.constant 0 : index
    %c0_439 = arith.constant 0 : index
    %309 = vector.load %arg30[%c0_438, %c0_439] : memref<24x32xf32, #tpu.memory_space<vmem>>, vector<2x32xf32>
    tpu.vector_store %arg30[%c0_438, %c0_439], %308 {strides = array<i32>} : memref<24x32xf32, #tpu.memory_space<vmem>>, vector<2x32xf32>,
    %cst_440 = arith.constant 0.000000e+00 : f32
    %310 = vector.broadcast %cst_440 : f32 to vector<2x32xf32>
    %c10_441 = arith.constant 10 : index
    %c0_442 = arith.constant 0 : index
    %311 = vector.load %arg30[%c10_441, %c0_442] : memref<24x32xf32, #tpu.memory_space<vmem>>, vector<2x32xf32>
    tpu.vector_store %arg30[%c10_441, %c0_442], %310 {strides = array<i32>} : memref<24x32xf32, #tpu.memory_space<vmem>>, vector<2x32xf32>,
    %312 = vector.extract_strided_slice %307 {offsets = [0, 0], sizes = [8, 32], strides = [1, 1]} : vector<16x32xf32> to vector<8x32xf32>
    %c2_443 = arith.constant 2 : index
    %c0_444 = arith.constant 0 : index
    %313 = vector.load %arg30[%c2_443, %c0_444] : memref<24x32xf32, #tpu.memory_space<vmem>>, vector<8x32xf32>
    tpu.vector_store %arg30[%c2_443, %c0_444], %312 {strides = array<i32>} : memref<24x32xf32, #tpu.memory_space<vmem>>, vector<8x32xf32>,
    %c0_445 = arith.constant 0 : index
    %c0_446 = arith.constant 0 : index
    %314 = tpu.strided_load %arg30[%c0_445, %c0_446] {strides = array<i32: 2, 1>} : memref<24x32xf32, #tpu.memory_space<vmem>>, vector<4x32xf32>
    %c0_447 = arith.constant 0 : index
    %c0_448 = arith.constant 0 : index
    %315 = vector.load %arg37[%c0_447, %c0_448] : memref<8x192xf32, #tpu.memory_space<vmem>>, vector<4x32xf32>
    tpu.vector_store %arg37[%c0_447, %c0_448], %314 {strides = array<i32>} : memref<8x192xf32, #tpu.memory_space<vmem>>, vector<4x32xf32>,
    %c1_449 = arith.constant 1 : index
    %c0_450 = arith.constant 0 : index
    %316 = tpu.strided_load %arg30[%c1_449, %c0_450] {strides = array<i32: 2, 1>} : memref<24x32xf32, #tpu.memory_space<vmem>>, vector<4x32xf32>
    %c0_451 = arith.constant 0 : index
    %c32_452 = arith.constant 32 : index
    %317 = vector.load %arg37[%c0_451, %c32_452] : memref<8x192xf32, #tpu.memory_space<vmem>>, vector<4x32xf32>
    tpu.vector_store %arg37[%c0_451, %c32_452], %316 {strides = array<i32>} : memref<8x192xf32, #tpu.memory_space<vmem>>, vector<4x32xf32>,
    %c2_453 = arith.constant 2 : index
    %c0_454 = arith.constant 0 : index
    %318 = tpu.strided_load %arg30[%c2_453, %c0_454] {strides = array<i32: 2, 1>} : memref<24x32xf32, #tpu.memory_space<vmem>>, vector<4x32xf32>
    %c0_455 = arith.constant 0 : index
    %c64_456 = arith.constant 64 : index
    %319 = vector.load %arg37[%c0_455, %c64_456] : memref<8x192xf32, #tpu.memory_space<vmem>>, vector<4x32xf32>
    tpu.vector_store %arg37[%c0_455, %c64_456], %318 {strides = array<i32>} : memref<8x192xf32, #tpu.memory_space<vmem>>, vector<4x32xf32>,
    %c3_457 = arith.constant 3 : index
    %c0_458 = arith.constant 0 : index
    %320 = tpu.strided_load %arg30[%c3_457, %c0_458] {strides = array<i32: 2, 1>} : memref<24x32xf32, #tpu.memory_space<vmem>>, vector<4x32xf32>
    %c0_459 = arith.constant 0 : index
    %c96_460 = arith.constant 96 : index
    %321 = vector.load %arg37[%c0_459, %c96_460] : memref<8x192xf32, #tpu.memory_space<vmem>>, vector<4x32xf32>
    tpu.vector_store %arg37[%c0_459, %c96_460], %320 {strides = array<i32>} : memref<8x192xf32, #tpu.memory_space<vmem>>, vector<4x32xf32>,
    %c4_461 = arith.constant 4 : index
    %c0_462 = arith.constant 0 : index
    %322 = tpu.strided_load %arg30[%c4_461, %c0_462] {strides = array<i32: 2, 1>} : memref<24x32xf32, #tpu.memory_space<vmem>>, vector<4x32xf32>
    %c0_463 = arith.constant 0 : index
    %c128_464 = arith.constant 128 : index
    %323 = vector.load %arg37[%c0_463, %c128_464] : memref<8x192xf32, #tpu.memory_space<vmem>>, vector<4x32xf32>
    tpu.vector_store %arg37[%c0_463, %c128_464], %322 {strides = array<i32>} : memref<8x192xf32, #tpu.memory_space<vmem>>, vector<4x32xf32>,
    %c5_465 = arith.constant 5 : index
    %c0_466 = arith.constant 0 : index
    %324 = tpu.strided_load %arg30[%c5_465, %c0_466] {strides = array<i32: 2, 1>} : memref<24x32xf32, #tpu.memory_space<vmem>>, vector<4x32xf32>
    %c0_467 = arith.constant 0 : index
    %c160_468 = arith.constant 160 : index
    %325 = vector.load %arg37[%c0_467, %c160_468] : memref<8x192xf32, #tpu.memory_space<vmem>>, vector<4x32xf32>
    tpu.vector_store %arg37[%c0_467, %c160_468], %324 {strides = array<i32>} : memref<8x192xf32, #tpu.memory_space<vmem>>, vector<4x32xf32>,
    %cst_469 = arith.constant 0.000000e+00 : f32
    %326 = vector.broadcast %cst_469 : f32 to vector<2x32xf32>
    %c12 = arith.constant 12 : index
    %c0_470 = arith.constant 0 : index
    %327 = vector.load %arg30[%c12, %c0_470] : memref<24x32xf32, #tpu.memory_space<vmem>>, vector<2x32xf32>
    tpu.vector_store %arg30[%c12, %c0_470], %326 {strides = array<i32>} : memref<24x32xf32, #tpu.memory_space<vmem>>, vector<2x32xf32>,
    %cst_471 = arith.constant 0.000000e+00 : f32
    %328 = vector.broadcast %cst_471 : f32 to vector<2x32xf32>
    %c22_472 = arith.constant 22 : index
    %c0_473 = arith.constant 0 : index
    %329 = vector.load %arg30[%c22_472, %c0_473] : memref<24x32xf32, #tpu.memory_space<vmem>>, vector<2x32xf32>
    tpu.vector_store %arg30[%c22_472, %c0_473], %328 {strides = array<i32>} : memref<24x32xf32, #tpu.memory_space<vmem>>, vector<2x32xf32>,
    %330 = vector.extract_strided_slice %307 {offsets = [8, 0], sizes = [8, 32], strides = [1, 1]} : vector<16x32xf32> to vector<8x32xf32>
    %c14 = arith.constant 14 : index
    %c0_474 = arith.constant 0 : index
    %331 = vector.load %arg30[%c14, %c0_474] : memref<24x32xf32, #tpu.memory_space<vmem>>, vector<8x32xf32>
    tpu.vector_store %arg30[%c14, %c0_474], %330 {strides = array<i32>} : memref<24x32xf32, #tpu.memory_space<vmem>>, vector<8x32xf32>,
    %c12_475 = arith.constant 12 : index
    %c0_476 = arith.constant 0 : index
    %332 = tpu.strided_load %arg30[%c12_475, %c0_476] {strides = array<i32: 2, 1>} : memref<24x32xf32, #tpu.memory_space<vmem>>, vector<4x32xf32>
    %c4_477 = arith.constant 4 : index
    %c0_478 = arith.constant 0 : index
    %333 = vector.load %arg37[%c4_477, %c0_478] : memref<8x192xf32, #tpu.memory_space<vmem>>, vector<4x32xf32>
    tpu.vector_store %arg37[%c4_477, %c0_478], %332 {strides = array<i32>} : memref<8x192xf32, #tpu.memory_space<vmem>>, vector<4x32xf32>,
    %c13 = arith.constant 13 : index
    %c0_479 = arith.constant 0 : index
    %334 = tpu.strided_load %arg30[%c13, %c0_479] {strides = array<i32: 2, 1>} : memref<24x32xf32, #tpu.memory_space<vmem>>, vector<4x32xf32>
    %c4_480 = arith.constant 4 : index
    %c32_481 = arith.constant 32 : index
    %335 = vector.load %arg37[%c4_480, %c32_481] : memref<8x192xf32, #tpu.memory_space<vmem>>, vector<4x32xf32>
    tpu.vector_store %arg37[%c4_480, %c32_481], %334 {strides = array<i32>} : memref<8x192xf32, #tpu.memory_space<vmem>>, vector<4x32xf32>,
    %c14_482 = arith.constant 14 : index
    %c0_483 = arith.constant 0 : index
    %336 = tpu.strided_load %arg30[%c14_482, %c0_483] {strides = array<i32: 2, 1>} : memref<24x32xf32, #tpu.memory_space<vmem>>, vector<4x32xf32>
    %c4_484 = arith.constant 4 : index
    %c64_485 = arith.constant 64 : index
    %337 = vector.load %arg37[%c4_484, %c64_485] : memref<8x192xf32, #tpu.memory_space<vmem>>, vector<4x32xf32>
    tpu.vector_store %arg37[%c4_484, %c64_485], %336 {strides = array<i32>} : memref<8x192xf32, #tpu.memory_space<vmem>>, vector<4x32xf32>,
    %c15 = arith.constant 15 : index
    %c0_486 = arith.constant 0 : index
    %338 = tpu.strided_load %arg30[%c15, %c0_486] {strides = array<i32: 2, 1>} : memref<24x32xf32, #tpu.memory_space<vmem>>, vector<4x32xf32>
    %c4_487 = arith.constant 4 : index
    %c96_488 = arith.constant 96 : index
    %339 = vector.load %arg37[%c4_487, %c96_488] : memref<8x192xf32, #tpu.memory_space<vmem>>, vector<4x32xf32>
    tpu.vector_store %arg37[%c4_487, %c96_488], %338 {strides = array<i32>} : memref<8x192xf32, #tpu.memory_space<vmem>>, vector<4x32xf32>,
    %c16_489 = arith.constant 16 : index
    %c0_490 = arith.constant 0 : index
    %340 = tpu.strided_load %arg30[%c16_489, %c0_490] {strides = array<i32: 2, 1>} : memref<24x32xf32, #tpu.memory_space<vmem>>, vector<4x32xf32>
    %c4_491 = arith.constant 4 : index
    %c128_492 = arith.constant 128 : index
    %341 = vector.load %arg37[%c4_491, %c128_492] : memref<8x192xf32, #tpu.memory_space<vmem>>, vector<4x32xf32>
    tpu.vector_store %arg37[%c4_491, %c128_492], %340 {strides = array<i32>} : memref<8x192xf32, #tpu.memory_space<vmem>>, vector<4x32xf32>,
    %c17 = arith.constant 17 : index
    %c0_493 = arith.constant 0 : index
    %342 = tpu.strided_load %arg30[%c17, %c0_493] {strides = array<i32: 2, 1>} : memref<24x32xf32, #tpu.memory_space<vmem>>, vector<4x32xf32>
    %c4_494 = arith.constant 4 : index
    %c160_495 = arith.constant 160 : index
    %343 = vector.load %arg37[%c4_494, %c160_495] : memref<8x192xf32, #tpu.memory_space<vmem>>, vector<4x32xf32>
    tpu.vector_store %arg37[%c4_494, %c160_495], %342 {strides = array<i32>} : memref<8x192xf32, #tpu.memory_space<vmem>>, vector<4x32xf32>,
    %c0_496 = arith.constant 0 : index
    %c0_497 = arith.constant 0 : index
    %344 = vector.load %arg37[%c0_496, %c0_497] : memref<8x192xf32, #tpu.memory_space<vmem>>, vector<8x192xf32>
    %c0_498 = arith.constant 0 : index
    %c0_499 = arith.constant 0 : index
    %345 = vector.load %arg16[%c0_498, %c0_499] : memref<192x64xf32, #tpu.memory_space<vmem>>, vector<192x64xf32>
    %cst_500 = arith.constant dense<0.000000e+00> : vector<8x64xf32>
    %346 = tpu.matmul %344, %345, %cst_500 {dimension_numbers = #tpu.dot_dimension_numbers<[1], [0], [0], [1], [0, 0, 1, 1], [], []>} : vector<8x192xf32>, vector<192x64xf32>, vector<8x64xf32> -> vector<8x64xf32>
    %c0_501 = arith.constant 0 : index
    %c0_502 = arith.constant 0 : index
    %347 = vector.load %arg17[%c0_501, %c0_502] : memref<1x64xf32, #tpu.memory_space<vmem>>, vector<1x64xf32>
    %348 = vector.broadcast %347 : vector<1x64xf32> to vector<8x64xf32>
    %349 = arith.mulf %346, %348 : vector<8x64xf32>
    %c0_503 = arith.constant 0 : index
    %c0_504 = arith.constant 0 : index
    %350 = vector.load %arg18[%c0_503, %c0_504] : memref<1x64xf32, #tpu.memory_space<vmem>>, vector<1x64xf32>
    %351 = vector.broadcast %350 : vector<1x64xf32> to vector<8x64xf32>
    %352 = arith.addf %349, %351 : vector<8x64xf32>
    %cst_505 = arith.constant 0.000000e+00 : f32
    %353 = vector.broadcast %cst_505 : f32 to vector<8x64xf32>
    %354 = arith.maximumf %352, %353 : vector<8x64xf32>
    %cst_506 = arith.constant 0.000000e+00 : f32
    %355 = vector.broadcast %cst_506 : f32 to vector<1x64xf32>
    %c0_507 = arith.constant 0 : index
    %c0_508 = arith.constant 0 : index
    %356 = vector.load %arg31[%c0_507, %c0_508] : memref<12x64xf32, #tpu.memory_space<vmem>>, vector<1x64xf32>
    tpu.vector_store %arg31[%c0_507, %c0_508], %355 {strides = array<i32>} : memref<12x64xf32, #tpu.memory_space<vmem>>, vector<1x64xf32>,
    %cst_509 = arith.constant 0.000000e+00 : f32
    %357 = vector.broadcast %cst_509 : f32 to vector<1x64xf32>
    %c5_510 = arith.constant 5 : index
    %c0_511 = arith.constant 0 : index
    %358 = vector.load %arg31[%c5_510, %c0_511] : memref<12x64xf32, #tpu.memory_space<vmem>>, vector<1x64xf32>
    tpu.vector_store %arg31[%c5_510, %c0_511], %357 {strides = array<i32>} : memref<12x64xf32, #tpu.memory_space<vmem>>, vector<1x64xf32>,
    %359 = vector.extract_strided_slice %354 {offsets = [0, 0], sizes = [4, 64], strides = [1, 1]} : vector<8x64xf32> to vector<4x64xf32>
    %c1_512 = arith.constant 1 : index
    %c0_513 = arith.constant 0 : index
    %360 = vector.load %arg31[%c1_512, %c0_513] : memref<12x64xf32, #tpu.memory_space<vmem>>, vector<4x64xf32>
    tpu.vector_store %arg31[%c1_512, %c0_513], %359 {strides = array<i32>} : memref<12x64xf32, #tpu.memory_space<vmem>>, vector<4x64xf32>,
    %c0_514 = arith.constant 0 : index
    %c0_515 = arith.constant 0 : index
    %361 = tpu.strided_load %arg31[%c0_514, %c0_515] {strides = array<i32: 2, 1>} : memref<12x64xf32, #tpu.memory_space<vmem>>, vector<2x64xf32>
    %c0_516 = arith.constant 0 : index
    %c0_517 = arith.constant 0 : index
    %362 = vector.load %arg38[%c0_516, %c0_517] : memref<4x192xf32, #tpu.memory_space<vmem>>, vector<2x64xf32>
    tpu.vector_store %arg38[%c0_516, %c0_517], %361 {strides = array<i32>} : memref<4x192xf32, #tpu.memory_space<vmem>>, vector<2x64xf32>,
    %c1_518 = arith.constant 1 : index
    %c0_519 = arith.constant 0 : index
    %363 = tpu.strided_load %arg31[%c1_518, %c0_519] {strides = array<i32: 2, 1>} : memref<12x64xf32, #tpu.memory_space<vmem>>, vector<2x64xf32>
    %c0_520 = arith.constant 0 : index
    %c64_521 = arith.constant 64 : index
    %364 = vector.load %arg38[%c0_520, %c64_521] : memref<4x192xf32, #tpu.memory_space<vmem>>, vector<2x64xf32>
    tpu.vector_store %arg38[%c0_520, %c64_521], %363 {strides = array<i32>} : memref<4x192xf32, #tpu.memory_space<vmem>>, vector<2x64xf32>,
    %c2_522 = arith.constant 2 : index
    %c0_523 = arith.constant 0 : index
    %365 = tpu.strided_load %arg31[%c2_522, %c0_523] {strides = array<i32: 2, 1>} : memref<12x64xf32, #tpu.memory_space<vmem>>, vector<2x64xf32>
    %c0_524 = arith.constant 0 : index
    %c128_525 = arith.constant 128 : index
    %366 = vector.load %arg38[%c0_524, %c128_525] : memref<4x192xf32, #tpu.memory_space<vmem>>, vector<2x64xf32>
    tpu.vector_store %arg38[%c0_524, %c128_525], %365 {strides = array<i32>} : memref<4x192xf32, #tpu.memory_space<vmem>>, vector<2x64xf32>,
    %cst_526 = arith.constant 0.000000e+00 : f32
    %367 = vector.broadcast %cst_526 : f32 to vector<1x64xf32>
    %c6_527 = arith.constant 6 : index
    %c0_528 = arith.constant 0 : index
    %368 = vector.load %arg31[%c6_527, %c0_528] : memref<12x64xf32, #tpu.memory_space<vmem>>, vector<1x64xf32>
    tpu.vector_store %arg31[%c6_527, %c0_528], %367 {strides = array<i32>} : memref<12x64xf32, #tpu.memory_space<vmem>>, vector<1x64xf32>,
    %cst_529 = arith.constant 0.000000e+00 : f32
    %369 = vector.broadcast %cst_529 : f32 to vector<1x64xf32>
    %c11_530 = arith.constant 11 : index
    %c0_531 = arith.constant 0 : index
    %370 = vector.load %arg31[%c11_530, %c0_531] : memref<12x64xf32, #tpu.memory_space<vmem>>, vector<1x64xf32>
    tpu.vector_store %arg31[%c11_530, %c0_531], %369 {strides = array<i32>} : memref<12x64xf32, #tpu.memory_space<vmem>>, vector<1x64xf32>,
    %371 = vector.extract_strided_slice %354 {offsets = [4, 0], sizes = [4, 64], strides = [1, 1]} : vector<8x64xf32> to vector<4x64xf32>
    %c7_532 = arith.constant 7 : index
    %c0_533 = arith.constant 0 : index
    %372 = vector.load %arg31[%c7_532, %c0_533] : memref<12x64xf32, #tpu.memory_space<vmem>>, vector<4x64xf32>
    tpu.vector_store %arg31[%c7_532, %c0_533], %371 {strides = array<i32>} : memref<12x64xf32, #tpu.memory_space<vmem>>, vector<4x64xf32>,
    %c6_534 = arith.constant 6 : index
    %c0_535 = arith.constant 0 : index
    %373 = tpu.strided_load %arg31[%c6_534, %c0_535] {strides = array<i32: 2, 1>} : memref<12x64xf32, #tpu.memory_space<vmem>>, vector<2x64xf32>
    %c2_536 = arith.constant 2 : index
    %c0_537 = arith.constant 0 : index
    %374 = vector.load %arg38[%c2_536, %c0_537] : memref<4x192xf32, #tpu.memory_space<vmem>>, vector<2x64xf32>
    tpu.vector_store %arg38[%c2_536, %c0_537], %373 {strides = array<i32>} : memref<4x192xf32, #tpu.memory_space<vmem>>, vector<2x64xf32>,
    %c7_538 = arith.constant 7 : index
    %c0_539 = arith.constant 0 : index
    %375 = tpu.strided_load %arg31[%c7_538, %c0_539] {strides = array<i32: 2, 1>} : memref<12x64xf32, #tpu.memory_space<vmem>>, vector<2x64xf32>
    %c2_540 = arith.constant 2 : index
    %c64_541 = arith.constant 64 : index
    %376 = vector.load %arg38[%c2_540, %c64_541] : memref<4x192xf32, #tpu.memory_space<vmem>>, vector<2x64xf32>
    tpu.vector_store %arg38[%c2_540, %c64_541], %375 {strides = array<i32>} : memref<4x192xf32, #tpu.memory_space<vmem>>, vector<2x64xf32>,
    %c8_542 = arith.constant 8 : index
    %c0_543 = arith.constant 0 : index
    %377 = tpu.strided_load %arg31[%c8_542, %c0_543] {strides = array<i32: 2, 1>} : memref<12x64xf32, #tpu.memory_space<vmem>>, vector<2x64xf32>
    %c2_544 = arith.constant 2 : index
    %c128_545 = arith.constant 128 : index
    %378 = vector.load %arg38[%c2_544, %c128_545] : memref<4x192xf32, #tpu.memory_space<vmem>>, vector<2x64xf32>
    tpu.vector_store %arg38[%c2_544, %c128_545], %377 {strides = array<i32>} : memref<4x192xf32, #tpu.memory_space<vmem>>, vector<2x64xf32>,
    %c0_546 = arith.constant 0 : index
    %c0_547 = arith.constant 0 : index
    %379 = vector.load %arg38[%c0_546, %c0_547] : memref<4x192xf32, #tpu.memory_space<vmem>>, vector<4x192xf32>
    %c0_548 = arith.constant 0 : index
    %c0_549 = arith.constant 0 : index
    %380 = vector.load %arg19[%c0_548, %c0_549] : memref<192x128xf32, #tpu.memory_space<vmem>>, vector<192x128xf32>
    %cst_550 = arith.constant dense<0.000000e+00> : vector<4x128xf32>
    %381 = tpu.matmul %379, %380, %cst_550 {dimension_numbers = #tpu.dot_dimension_numbers<[1], [0], [0], [1], [0, 0, 1, 1], [], []>} : vector<4x192xf32>, vector<192x128xf32>, vector<4x128xf32> -> vector<4x128xf32>
    %c0_551 = arith.constant 0 : index
    %c0_552 = arith.constant 0 : index
    %382 = vector.load %arg20[%c0_551, %c0_552] : memref<1x128xf32, #tpu.memory_space<vmem>>, vector<1x128xf32>
    %383 = vector.broadcast %382 : vector<1x128xf32> to vector<4x128xf32>
    %384 = arith.mulf %381, %383 : vector<4x128xf32>
    %c0_553 = arith.constant 0 : index
    %c0_554 = arith.constant 0 : index
    %385 = vector.load %arg21[%c0_553, %c0_554] : memref<1x128xf32, #tpu.memory_space<vmem>>, vector<1x128xf32>
    %386 = vector.broadcast %385 : vector<1x128xf32> to vector<4x128xf32>
    %387 = arith.addf %384, %386 : vector<4x128xf32>
    %cst_555 = arith.constant 0.000000e+00 : f32
    %388 = vector.broadcast %cst_555 : f32 to vector<4x128xf32>
    %389 = arith.maximumf %387, %388 : vector<4x128xf32>
    %390 = vector.extract_strided_slice %389 {offsets = [0, 0], sizes = [2, 128], strides = [1, 1]} : vector<4x128xf32> to vector<2x128xf32>
    %cst_556 = arith.constant dense<0.000000e+00> : vector<128xf32>
    %391 = vector.multi_reduction <add>, %390, %cst_556 [0] : vector<2x128xf32> to vector<128xf32>
    %392 = vector.shape_cast %391 : vector<128xf32> to vector<1x128xf32>
    %cst_557 = arith.constant 2.000000e+00 : f32
    %393 = vector.broadcast %cst_557 : f32 to vector<1x128xf32>
    %394 = arith.divf %392, %393 : vector<1x128xf32>
    %395 = vector.extract_strided_slice %389 {offsets = [2, 0], sizes = [2, 128], strides = [1, 1]} : vector<4x128xf32> to vector<2x128xf32>
    %cst_558 = arith.constant dense<0.000000e+00> : vector<128xf32>
    %396 = vector.multi_reduction <add>, %395, %cst_558 [0] : vector<2x128xf32> to vector<128xf32>
    %397 = vector.shape_cast %396 : vector<128xf32> to vector<1x128xf32>
    %cst_559 = arith.constant 2.000000e+00 : f32
    %398 = vector.broadcast %cst_559 : f32 to vector<1x128xf32>
    %399 = arith.divf %397, %398 : vector<1x128xf32>
    %400 = tpu.concatenate %394, %399 in 0 : vector<1x128xf32>, vector<1x128xf32> -> vector<2x128xf32>
    %c0_560 = arith.constant 0 : index
    %c0_561 = arith.constant 0 : index
    %401 = vector.load %arg22[%c0_560, %c0_561] : memref<128x8xf32, #tpu.memory_space<vmem>>, vector<128x8xf32>
    %cst_562 = arith.constant dense<0.000000e+00> : vector<2x8xf32>
    %402 = tpu.matmul %400, %401, %cst_562 {dimension_numbers = #tpu.dot_dimension_numbers<[1], [0], [0], [1], [0, 0, 1, 1], [], []>} : vector<2x128xf32>, vector<128x8xf32>, vector<2x8xf32> -> vector<2x8xf32>
    %c0_563 = arith.constant 0 : index
    %c0_564 = arith.constant 0 : index
    %403 = vector.load %arg23[%c0_563, %c0_564] : memref<1x8xf32, #tpu.memory_space<vmem>>, vector<1x8xf32>
    %404 = vector.broadcast %403 : vector<1x8xf32> to vector<2x8xf32>
    %405 = arith.addf %402, %404 : vector<2x8xf32>
    %c0_565 = arith.constant 0 : index
    %c0_566 = arith.constant 0 : index
    %406 = vector.load %arg24[%c0_565, %c0_566] : memref<2x8xf32, #tpu.memory_space<vmem>>, vector<2x8xf32>
    tpu.vector_store %arg24[%c0_565, %c0_566], %405 {strides = array<i32>} : memref<2x8xf32, #tpu.memory_space<vmem>>, vector<2x8xf32>,
    return
  }
}

</mosaic_0001>

<llo_original>
// kernel: mt1dcnn_forward.1
$region0: #{mt1dcnn_forward.1}
  #allocation0 [shape = 'u32[]', space=smem, size = 0x4, offset = 0x4, fixed_abs, tag = 'smem constant byte address 0x4 - core index']
  #allocation1 [shape = 'u32[144,128]{1,0:T(1,128)}', space=vmem, size = 0x12000, scoped, tag = 'internal scratch']
  #allocation2 [shape = 'f32[532,1]{1,0:T(8,128)}', space=vmem, size = 0x43000, scoped, tag = 'scratch operand']
  #allocation3 [shape = 'f32[276,16]{1,0:T(8,128)}', space=vmem, size = 0x23000, scoped, tag = 'scratch operand']
  #allocation4 [shape = 'f32[144,16]{1,0:T(8,128)}', space=vmem, size = 0x12000, scoped, tag = 'scratch operand']
  #allocation5 [shape = 'f32[80,24]{1,0:T(8,128)}', space=vmem, size = 0xa000, scoped, tag = 'scratch operand']
  #allocation6 [shape = 'f32[40,24]{1,0:T(8,128)}', space=vmem, size = 0x5000, scoped, tag = 'scratch operand']
  #allocation7 [shape = 'f32[24,32]{1,0:T(8,128)}', space=vmem, size = 0x3000, scoped, tag = 'scratch operand']
  #allocation8 [shape = 'f32[12,64]{1,0:T(8,128)}', space=vmem, size = 0x2000, scoped, tag = 'scratch operand']
  #allocation9 [shape = 'f32[256,12]{1,0:T(8,128)}', space=vmem, size = 0x20000, scoped, tag = 'scratch operand']
  #allocation10 [shape = 'f32[128,192]{1,0:T(8,128)}', space=vmem, size = 0x20000, scoped, tag = 'scratch operand']
  #allocation11 [shape = 'f32[64,144]{1,0:T(8,128)}', space=vmem, size = 0x10000, scoped, tag = 'scratch operand']
  #allocation12 [shape = 'f32[32,216]{1,0:T(8,128)}', space=vmem, size = 0x8000, scoped, tag = 'scratch operand']
  #allocation13 [shape = 'f32[16,144]{1,0:T(8,128)}', space=vmem, size = 0x4000, scoped, tag = 'scratch operand']
  #allocation14 [shape = 'f32[8,192]{1,0:T(8,128)}', space=vmem, size = 0x2000, scoped, tag = 'scratch operand']
  #allocation15 [shape = 'f32[4,192]{1,0:T(4,128)}', space=vmem, size = 0x1000, scoped, tag = 'scratch operand']
  %s0 = inlined_call_operand.vmem [shape: f32[512,1], index: 0, kind: input, shape index: {}]
  %s1 = inlined_call_operand.vmem [shape: f32[12,16], index: 1, kind: input, shape index: {}]
  %s2 = inlined_call_operand.vmem [shape: f32[1,16], index: 2, kind: input, shape index: {}]
  %s3 = inlined_call_operand.vmem [shape: f32[1,16], index: 3, kind: input, shape index: {}]
  %s4 = inlined_call_operand.vmem [shape: f32[192,16], index: 4, kind: input, shape index: {}]
  %s5 = inlined_call_operand.vmem [shape: f32[1,16], index: 5, kind: input, shape index: {}]
  %s6 = inlined_call_operand.vmem [shape: f32[1,16], index: 6, kind: input, shape index: {}]
  %s7 = inlined_call_operand.vmem [shape: f32[144,24], index: 7, kind: input, shape index: {}]
  %s8 = inlined_call_operand.vmem [shape: f32[1,24], index: 8, kind: input, shape index: {}]
  %s9 = inlined_call_operand.vmem [shape: f32[1,24], index: 9, kind: input, shape index: {}]
  %s10 = inlined_call_operand.vmem [shape: f32[216,24], index: 10, kind: input, shape index: {}]
  %s11 = inlined_call_operand.vmem [shape: f32[1,24], index: 11, kind: input, shape index: {}]
  %s12 = inlined_call_operand.vmem [shape: f32[1,24], index: 12, kind: input, shape index: {}]
  %s13 = inlined_call_operand.vmem [shape: f32[144,32], index: 13, kind: input, shape index: {}]
  %s14 = inlined_call_operand.vmem [shape: f32[1,32], index: 14, kind: input, shape index: {}]
  %s15 = inlined_call_operand.vmem [shape: f32[1,32], index: 15, kind: input, shape index: {}]
  %s16 = inlined_call_operand.vmem [shape: f32[192,64], index: 16, kind: input, shape index: {}]
  %s17 = inlined_call_operand.vmem [shape: f32[1,64], index: 17, kind: input, shape index: {}]
  %s18 = inlined_call_operand.vmem [shape: f32[1,64], index: 18, kind: input, shape index: {}]
  %s19 = inlined_call_operand.vmem [shape: f32[192,128], index: 19, kind: input, shape index: {}]
  %s20 = inlined_call_operand.vmem [shape: f32[1,128], index: 20, kind: input, shape index: {}]
  %s21 = inlined_call_operand.vmem [shape: f32[1,128], index: 21, kind: input, shape index: {}]
  %s22 = inlined_call_operand.vmem [shape: f32[128,8], index: 22, kind: input, shape index: {}]
  %s23 = inlined_call_operand.vmem [shape: f32[1,8], index: 23, kind: input, shape index: {}]
  %s24 = inlined_call_operand.vmem [shape: f32[2,8], index: 24, kind: output, shape index: {}]
  %s25 = sld [smem:[#allocation0]]
  $region106: #{mt1dcnn_forward.1} parent=0
    _
  %s27 = ssub.s32 1, %s25
  %s28 = scalar_select 0, %s27, %s25
  // Predicated region
  $region2: #{mt1dcnn_forward.1} parent=0 // pred_check
    _
  $region3: #{mt1dcnn_forward.1} parent=0 // pred_check_branch
    %30 = sbr.rel (0) target = $region5
  $region4: #{mt1dcnn_forward.1} parent=0 // pred_region
    _
  $region5: #{mt1dcnn_forward.1} parent=0 // pred_fallthru
    _
  // Predicated region
  $region6: #{mt1dcnn_forward.1} parent=0 // pred_check
    _
  $region7: #{mt1dcnn_forward.1} parent=0 // pred_check_branch
    %32 = sbr.rel (0) target = $region9
  $region8: #{mt1dcnn_forward.1} parent=0 // pred_region
    _
  $region9: #{mt1dcnn_forward.1} parent=0 // pred_fallthru
    _
  // Predicated region
  $region10: #{mt1dcnn_forward.1} parent=0 // pred_check
    _
  $region11: #{mt1dcnn_forward.1} parent=0 // pred_check_branch
    %34 = sbr.rel (0) target = $region13
  $region12: #{mt1dcnn_forward.1} parent=0 // pred_region
    _
  $region13: #{mt1dcnn_forward.1} parent=0 // pred_fallthru
    _
  // Predicated region
  $region14: #{mt1dcnn_forward.1} parent=0 // pred_check
    _
  $region15: #{mt1dcnn_forward.1} parent=0 // pred_check_branch
    %36 = sbr.rel (0) target = $region17
  $region16: #{mt1dcnn_forward.1} parent=0 // pred_region
    _
  $region17: #{mt1dcnn_forward.1} parent=0 // pred_fallthru
    _
  // Predicated region
  $region18: #{mt1dcnn_forward.1} parent=0 // pred_check
    _
  $region19: #{mt1dcnn_forward.1} parent=0 // pred_check_branch
    %38 = sbr.rel (0) target = $region21
  $region20: #{mt1dcnn_forward.1} parent=0 // pred_region
    _
  $region21: #{mt1dcnn_forward.1} parent=0 // pred_fallthru
    _
  // Predicated region
  $region22: #{mt1dcnn_forward.1} parent=0 // pred_check
    _
  $region23: #{mt1dcnn_forward.1} parent=0 // pred_check_branch
    %40 = sbr.rel (0) target = $region25
  $region24: #{mt1dcnn_forward.1} parent=0 // pred_region
    _
  $region25: #{mt1dcnn_forward.1} parent=0 // pred_fallthru
    _
  // Predicated region
  $region26: #{mt1dcnn_forward.1} parent=0 // pred_check
    _
  $region27: #{mt1dcnn_forward.1} parent=0 // pred_check_branch
    %42 = sbr.rel (0) target = $region29
  $region28: #{mt1dcnn_forward.1} parent=0 // pred_region
    _
  $region29: #{mt1dcnn_forward.1} parent=0 // pred_fallthru
    _
  // Predicated region
  $region30: #{mt1dcnn_forward.1} parent=0 // pred_check
    _
  $region31: #{mt1dcnn_forward.1} parent=0 // pred_check_branch
    %44 = sbr.rel (0) target = $region33
  $region32: #{mt1dcnn_forward.1} parent=0 // pred_region
    _
  $region33: #{mt1dcnn_forward.1} parent=0 // pred_fallthru
    _
  // Predicated region
  $region34: #{mt1dcnn_forward.1} parent=0 // pred_check
    _
  $region35: #{mt1dcnn_forward.1} parent=0 // pred_check_branch
    %46 = sbr.rel (0) target = $region37
  $region36: #{mt1dcnn_forward.1} parent=0 // pred_region
    _
  $region37: #{mt1dcnn_forward.1} parent=0 // pred_fallthru
    _
  // Predicated region
  $region38: #{mt1dcnn_forward.1} parent=0 // pred_check
    _
  $region39: #{mt1dcnn_forward.1} parent=0 // pred_check_branch
    %48 = sbr.rel (0) target = $region41
  $region40: #{mt1dcnn_forward.1} parent=0 // pred_region
    _
  $region41: #{mt1dcnn_forward.1} parent=0 // pred_fallthru
    _
  // Predicated region
  $region42: #{mt1dcnn_forward.1} parent=0 // pred_check
    _
  $region43: #{mt1dcnn_forward.1} parent=0 // pred_check_branch
    %50 = sbr.rel (0) target = $region45
  $region44: #{mt1dcnn_forward.1} parent=0 // pred_region
    _
  $region45: #{mt1dcnn_forward.1} parent=0 // pred_fallthru
    _
  // Predicated region
  $region46: #{mt1dcnn_forward.1} parent=0 // pred_check
    _
  $region47: #{mt1dcnn_forward.1} parent=0 // pred_check_branch
    %52 = sbr.rel (0) target = $region49
  $region48: #{mt1dcnn_forward.1} parent=0 // pred_region
    _
  $region49: #{mt1dcnn_forward.1} parent=0 // pred_fallthru
    _
  // Predicated region
  $region50: #{mt1dcnn_forward.1} parent=0 // pred_check
    _
  $region51: #{mt1dcnn_forward.1} parent=0 // pred_check_branch
    %54 = sbr.rel (0) target = $region53
  $region52: #{mt1dcnn_forward.1} parent=0 // pred_region
    _
  $region53: #{mt1dcnn_forward.1} parent=0 // pred_fallthru
    _
  // Predicated region
  $region54: #{mt1dcnn_forward.1} parent=0 // pred_check
    _
  $region55: #{mt1dcnn_forward.1} parent=0 // pred_check_branch
    %56 = sbr.rel (0) target = $region57
  $region56: #{mt1dcnn_forward.1} parent=0 // pred_region
    _
  $region57: #{mt1dcnn_forward.1} parent=0 // pred_fallthru
    _
  // Predicated region
  $region58: #{mt1dcnn_forward.1} parent=0 // pred_check
    _
  $region59: #{mt1dcnn_forward.1} parent=0 // pred_check_branch
    %58 = sbr.rel (0) target = $region61
  $region60: #{mt1dcnn_forward.1} parent=0 // pred_region
    _
  $region61: #{mt1dcnn_forward.1} parent=0 // pred_fallthru
    _
  // Predicated region
  $region62: #{mt1dcnn_forward.1} parent=0 // pred_check
    _
  $region63: #{mt1dcnn_forward.1} parent=0 // pred_check_branch
    %60 = sbr.rel (0) target = $region65
  $region64: #{mt1dcnn_forward.1} parent=0 // pred_region
    _
  $region65: #{mt1dcnn_forward.1} parent=0 // pred_fallthru
    _
  // Predicated region
  $region66: #{mt1dcnn_forward.1} parent=0 // pred_check
    _
  $region67: #{mt1dcnn_forward.1} parent=0 // pred_check_branch
    %62 = sbr.rel (0) target = $region69
  $region68: #{mt1dcnn_forward.1} parent=0 // pred_region
    _
  $region69: #{mt1dcnn_forward.1} parent=0 // pred_fallthru
    _
  // Predicated region
  $region70: #{mt1dcnn_forward.1} parent=0 // pred_check
    _
  $region71: #{mt1dcnn_forward.1} parent=0 // pred_check_branch
    %64 = sbr.rel (0) target = $region73
  $region72: #{mt1dcnn_forward.1} parent=0 // pred_region
    _
  $region73: #{mt1dcnn_forward.1} parent=0 // pred_fallthru
    _
  // Predicated region
  $region74: #{mt1dcnn_forward.1} parent=0 // pred_check
    _
  $region75: #{mt1dcnn_forward.1} parent=0 // pred_check_branch
    %66 = sbr.rel (0) target = $region77
  $region76: #{mt1dcnn_forward.1} parent=0 // pred_region
    _
  $region77: #{mt1dcnn_forward.1} parent=0 // pred_fallthru
    _
  // Predicated region
  $region78: #{mt1dcnn_forward.1} parent=0 // pred_check
    _
  $region79: #{mt1dcnn_forward.1} parent=0 // pred_check_branch
    %68 = sbr.rel (0) target = $region81
  $region80: #{mt1dcnn_forward.1} parent=0 // pred_region
    _
  $region81: #{mt1dcnn_forward.1} parent=0 // pred_fallthru
    _
  // Predicated region
  $region82: #{mt1dcnn_forward.1} parent=0 // pred_check
    _
  $region83: #{mt1dcnn_forward.1} parent=0 // pred_check_branch
    %70 = sbr.rel (0) target = $region85
  $region84: #{mt1dcnn_forward.1} parent=0 // pred_region
    _
  $region85: #{mt1dcnn_forward.1} parent=0 // pred_fallthru
    _
  // Predicated region
  $region86: #{mt1dcnn_forward.1} parent=0 // pred_check
    _
  $region87: #{mt1dcnn_forward.1} parent=0 // pred_check_branch
    %72 = sbr.rel (0) target = $region89
  $region88: #{mt1dcnn_forward.1} parent=0 // pred_region
    _
  $region89: #{mt1dcnn_forward.1} parent=0 // pred_fallthru
    _
  // Predicated region
  $region90: #{mt1dcnn_forward.1} parent=0 // pred_check
    _
  $region91: #{mt1dcnn_forward.1} parent=0 // pred_check_branch
    %74 = sbr.rel (0) target = $region93
  $region92: #{mt1dcnn_forward.1} parent=0 // pred_region
    _
  $region93: #{mt1dcnn_forward.1} parent=0 // pred_fallthru
    _
  // Predicated region
  $region94: #{mt1dcnn_forward.1} parent=0 // pred_check
    _
  $region95: #{mt1dcnn_forward.1} parent=0 // pred_check_branch
    %76 = sbr.rel (0) target = $region97
  $region96: #{mt1dcnn_forward.1} parent=0 // pred_region
    _
  $region97: #{mt1dcnn_forward.1} parent=0 // pred_fallthru
    _
  %v77 = vld [vmem:[%s0] sm:$0xff]
  %v78 = vld [vmem:[%s0 + $0x8] sm:$0xff]
  %v79 = vld [vmem:[%s0 + $0x10] sm:$0xff]
  %v80 = vld [vmem:[%s0 + $0x18] sm:$0xff]
  %v81 = vld [vmem:[%s0 + $0x20] sm:$0xff]
  %v82 = vld [vmem:[%s0 + $0x28] sm:$0xff]
  %v83 = vld [vmem:[%s0 + $0x30] sm:$0xff]
  %v84 = vld [vmem:[%s0 + $0x38] sm:$0xff]
  %v85 = vld [vmem:[%s0 + $0x40] sm:$0xff]
  %v86 = vld [vmem:[%s0 + $0x48] sm:$0xff]
  %v87 = vld [vmem:[%s0 + $0x50] sm:$0xff]
  %v88 = vld [vmem:[%s0 + $0x58] sm:$0xff]
  %v89 = vld [vmem:[%s0 + $0x60] sm:$0xff]
  %v90 = vld [vmem:[%s0 + $0x68] sm:$0xff]
  %v91 = vld [vmem:[%s0 + $0x70] sm:$0xff]
  %v92 = vld [vmem:[%s0 + $0x78] sm:$0xff]
  %v93 = vld [vmem:[%s0 + $0x80] sm:$0xff]
  %v94 = vld [vmem:[%s0 + $0x88] sm:$0xff]
  %v95 = vld [vmem:[%s0 + $0x90] sm:$0xff]
  %v96 = vld [vmem:[%s0 + $0x98] sm:$0xff]
  %v97 = vld [vmem:[%s0 + $0xa0] sm:$0xff]
  %v98 = vld [vmem:[%s0 + $0xa8] sm:$0xff]
  %v99 = vld [vmem:[%s0 + $0xb0] sm:$0xff]
  %v100 = vld [vmem:[%s0 + $0xb8] sm:$0xff]
  %v101 = vld [vmem:[%s0 + $0xc0] sm:$0xff]
  %v102 = vld [vmem:[%s0 + $0xc8] sm:$0xff]
  %v103 = vld [vmem:[%s0 + $0xd0] sm:$0xff]
  %v104 = vld [vmem:[%s0 + $0xd8] sm:$0xff]
  %v105 = vld [vmem:[%s0 + $0xe0] sm:$0xff]
  %v106 = vld [vmem:[%s0 + $0xe8] sm:$0xff]
  %v107 = vld [vmem:[%s0 + $0xf0] sm:$0xff]
  %v108 = vld [vmem:[%s0 + $0xf8] sm:$0xff]
  %v109 = vld [vmem:[%s0 + $0x100] sm:$0xff]
  %v110 = vld [vmem:[%s0 + $0x108] sm:$0xff]
  %v111 = vld [vmem:[%s0 + $0x110] sm:$0xff]
  %v112 = vld [vmem:[%s0 + $0x118] sm:$0xff]
  %v113 = vld [vmem:[%s0 + $0x120] sm:$0xff]
  %v114 = vld [vmem:[%s0 + $0x128] sm:$0xff]
  %v115 = vld [vmem:[%s0 + $0x130] sm:$0xff]
  %v116 = vld [vmem:[%s0 + $0x138] sm:$0xff]
  %v117 = vld [vmem:[%s0 + $0x140] sm:$0xff]
  %v118 = vld [vmem:[%s0 + $0x148] sm:$0xff]
  %v119 = vld [vmem:[%s0 + $0x150] sm:$0xff]
  %v120 = vld [vmem:[%s0 + $0x158] sm:$0xff]
  %v121 = vld [vmem:[%s0 + $0x160] sm:$0xff]
  %v122 = vld [vmem:[%s0 + $0x168] sm:$0xff]
  %v123 = vld [vmem:[%s0 + $0x170] sm:$0xff]
  %v124 = vld [vmem:[%s0 + $0x178] sm:$0xff]
  %v125 = vld [vmem:[%s0 + $0x180] sm:$0xff]
  %v126 = vld [vmem:[%s0 + $0x188] sm:$0xff]
  %v127 = vld [vmem:[%s0 + $0x190] sm:$0xff]
  %v128 = vld [vmem:[%s0 + $0x198] sm:$0xff]
  %v129 = vld [vmem:[%s0 + $0x1a0] sm:$0xff]
  %v130 = vld [vmem:[%s0 + $0x1a8] sm:$0xff]
  %v131 = vld [vmem:[%s0 + $0x1b0] sm:$0xff]
  %v132 = vld [vmem:[%s0 + $0x1b8] sm:$0xff]
  %v133 = vld [vmem:[%s0 + $0x1c0] sm:$0xff]
  %v134 = vld [vmem:[%s0 + $0x1c8] sm:$0xff]
  %v135 = vld [vmem:[%s0 + $0x1d0] sm:$0xff]
  %v136 = vld [vmem:[%s0 + $0x1d8] sm:$0xff]
  %v137 = vld [vmem:[%s0 + $0x1e0] sm:$0xff]
  %v138 = vld [vmem:[%s0 + $0x1e8] sm:$0xff]
  %v139 = vld [vmem:[%s0 + $0x1f0] sm:$0xff]
  %v140 = vld [vmem:[%s0 + $0x1f8] sm:$0xff]
  %vm141 = vcmask 4096
  %142 = vst.msk [vmem:[#allocation2] sm:$0x1f] %vm141, 0.0
  %143 = vst.msk [vmem:[#allocation2 + $0x105] sm:$0x1f] %vm141, 0.0
  %vm144 = vcmask 7168
  %145 = vst.msk [vmem:[#allocation2 + $0x5] sm:$0xff] %vm144, %v77
  %146 = vst.msk [vmem:[#allocation2 + $0xd] sm:$0xff] %vm144, %v78
  %147 = vst.msk [vmem:[#allocation2 + $0x15] sm:$0xff] %vm144, %v79
  %148 = vst.msk [vmem:[#allocation2 + $0x1d] sm:$0xff] %vm144, %v80
  %149 = vst.msk [vmem:[#allocation2 + $0x25] sm:$0xff] %vm144, %v81
  %150 = vst.msk [vmem:[#allocation2 + $0x2d] sm:$0xff] %vm144, %v82
  %151 = vst.msk [vmem:[#allocation2 + $0x35] sm:$0xff] %vm144, %v83
  %152 = vst.msk [vmem:[#allocation2 + $0x3d] sm:$0xff] %vm144, %v84
  %153 = vst.msk [vmem:[#allocation2 + $0x45] sm:$0xff] %vm144, %v85
  %154 = vst.msk [vmem:[#allocation2 + $0x4d] sm:$0xff] %vm144, %v86
  %155 = vst.msk [vmem:[#allocation2 + $0x55] sm:$0xff] %vm144, %v87
  %156 = vst.msk [vmem:[#allocation2 + $0x5d] sm:$0xff] %vm144, %v88
  %157 = vst.msk [vmem:[#allocation2 + $0x65] sm:$0xff] %vm144, %v89
  %158 = vst.msk [vmem:[#allocation2 + $0x6d] sm:$0xff] %vm144, %v90
  %159 = vst.msk [vmem:[#allocation2 + $0x75] sm:$0xff] %vm144, %v91
  %160 = vst.msk [vmem:[#allocation2 + $0x7d] sm:$0xff] %vm144, %v92
  %161 = vst.msk [vmem:[#allocation2 + $0x85] sm:$0xff] %vm144, %v93
  %162 = vst.msk [vmem:[#allocation2 + $0x8d] sm:$0xff] %vm144, %v94
  %163 = vst.msk [vmem:[#allocation2 + $0x95] sm:$0xff] %vm144, %v95
  %164 = vst.msk [vmem:[#allocation2 + $0x9d] sm:$0xff] %vm144, %v96
  %165 = vst.msk [vmem:[#allocation2 + $0xa5] sm:$0xff] %vm144, %v97
  %166 = vst.msk [vmem:[#allocation2 + $0xad] sm:$0xff] %vm144, %v98
  %167 = vst.msk [vmem:[#allocation2 + $0xb5] sm:$0xff] %vm144, %v99
  %168 = vst.msk [vmem:[#allocation2 + $0xbd] sm:$0xff] %vm144, %v100
  %169 = vst.msk [vmem:[#allocation2 + $0xc5] sm:$0xff] %vm144, %v101
  %170 = vst.msk [vmem:[#allocation2 + $0xcd] sm:$0xff] %vm144, %v102
  %171 = vst.msk [vmem:[#allocation2 + $0xd5] sm:$0xff] %vm144, %v103
  %172 = vst.msk [vmem:[#allocation2 + $0xdd] sm:$0xff] %vm144, %v104
  %173 = vst.msk [vmem:[#allocation2 + $0xe5] sm:$0xff] %vm144, %v105
  %174 = vst.msk [vmem:[#allocation2 + $0xed] sm:$0xff] %vm144, %v106
  %175 = vst.msk [vmem:[#allocation2 + $0xf5] sm:$0xff] %vm144, %v107
  %176 = vst.msk [vmem:[#allocation2 + $0xfd] sm:$0xff] %vm144, %v108
  %v177 = vld [vmem:[#allocation2] ss:$2 sm:$0xff]
  %s178 = scalar_lea.vmem [#allocation2], 16
  %v179 = vld [vmem:[%s178] ss:$2 sm:$0xff]
  %s180 = scalar_lea.vmem [#allocation2], 32
  %v181 = vld [vmem:[%s180] ss:$2 sm:$0xff]
  %s182 = scalar_lea.vmem [#allocation2], 48
  %v183 = vld [vmem:[%s182] ss:$2 sm:$0xff]
  %s184 = scalar_lea.vmem [#allocation2], 64
  %v185 = vld [vmem:[%s184] ss:$2 sm:$0xff]
  %s186 = scalar_lea.vmem [#allocation2], 80
  %v187 = vld [vmem:[%s186] ss:$2 sm:$0xff]
  %s188 = scalar_lea.vmem [#allocation2], 96
  %v189 = vld [vmem:[%s188] ss:$2 sm:$0xff]
  %s190 = scalar_lea.vmem [#allocation2], 112
  %v191 = vld [vmem:[%s190] ss:$2 sm:$0xff]
  %s192 = scalar_lea.vmem [#allocation2], 128
  %v193 = vld [vmem:[%s192] ss:$2 sm:$0xff]
  %s194 = scalar_lea.vmem [#allocation2], 144
  %v195 = vld [vmem:[%s194] ss:$2 sm:$0xff]
  %s196 = scalar_lea.vmem [#allocation2], 160
  %v197 = vld [vmem:[%s196] ss:$2 sm:$0xff]
  %s198 = scalar_lea.vmem [#allocation2], 176
  %v199 = vld [vmem:[%s198] ss:$2 sm:$0xff]
  %s200 = scalar_lea.vmem [#allocation2], 192
  %v201 = vld [vmem:[%s200] ss:$2 sm:$0xff]
  %s202 = scalar_lea.vmem [#allocation2], 208
  %v203 = vld [vmem:[%s202] ss:$2 sm:$0xff]
  %s204 = scalar_lea.vmem [#allocation2], 224
  %v205 = vld [vmem:[%s204] ss:$2 sm:$0xff]
  %s206 = scalar_lea.vmem [#allocation2], 240
  %v207 = vld [vmem:[%s206] ss:$2 sm:$0xff]
  %208 = vst.msk [vmem:[#allocation9] sm:$0xff] %vm144, %v177
  %209 = vst.msk [vmem:[#allocation9 + $0x8] sm:$0xff] %vm144, %v179
  %210 = vst.msk [vmem:[#allocation9 + $0x10] sm:$0xff] %vm144, %v181
  %211 = vst.msk [vmem:[#allocation9 + $0x18] sm:$0xff] %vm144, %v183
  %212 = vst.msk [vmem:[#allocation9 + $0x20] sm:$0xff] %vm144, %v185
  %213 = vst.msk [vmem:[#allocation9 + $0x28] sm:$0xff] %vm144, %v187
  %214 = vst.msk [vmem:[#allocation9 + $0x30] sm:$0xff] %vm144, %v189
  %215 = vst.msk [vmem:[#allocation9 + $0x38] sm:$0xff] %vm144, %v191
  %216 = vst.msk [vmem:[#allocation9 + $0x40] sm:$0xff] %vm144, %v193
  %217 = vst.msk [vmem:[#allocation9 + $0x48] sm:$0xff] %vm144, %v195
  %218 = vst.msk [vmem:[#allocation9 + $0x50] sm:$0xff] %vm144, %v197
  %219 = vst.msk [vmem:[#allocation9 + $0x58] sm:$0xff] %vm144, %v199
  %220 = vst.msk [vmem:[#allocation9 + $0x60] sm:$0xff] %vm144, %v201
  %221 = vst.msk [vmem:[#allocation9 + $0x68] sm:$0xff] %vm144, %v203
  %222 = vst.msk [vmem:[#allocation9 + $0x70] sm:$0xff] %vm144, %v205
  %223 = vst.msk [vmem:[#allocation9 + $0x78] sm:$0xff] %vm144, %v207
  %s224 = scalar_lea.vmem [#allocation2], 1
  %v225 = vld [vmem:[%s224] ss:$2 sm:$0xff]
  %s226 = scalar_lea.vmem [#allocation2], 17
  %v227 = vld [vmem:[%s226] ss:$2 sm:$0xff]
  %s228 = scalar_lea.vmem [#allocation2], 33
  %v229 = vld [vmem:[%s228] ss:$2 sm:$0xff]
  %s230 = scalar_lea.vmem [#allocation2], 49
  %v231 = vld [vmem:[%s230] ss:$2 sm:$0xff]
  %s232 = scalar_lea.vmem [#allocation2], 65
  %v233 = vld [vmem:[%s232] ss:$2 sm:$0xff]
  %s234 = scalar_lea.vmem [#allocation2], 81
  %v235 = vld [vmem:[%s234] ss:$2 sm:$0xff]
  %s236 = scalar_lea.vmem [#allocation2], 97
  %v237 = vld [vmem:[%s236] ss:$2 sm:$0xff]
  %s238 = scalar_lea.vmem [#allocation2], 113
  %v239 = vld [vmem:[%s238] ss:$2 sm:$0xff]
  %s240 = scalar_lea.vmem [#allocation2], 129
  %v241 = vld [vmem:[%s240] ss:$2 sm:$0xff]
  %s242 = scalar_lea.vmem [#allocation2], 145
  %v243 = vld [vmem:[%s242] ss:$2 sm:$0xff]
  %s244 = scalar_lea.vmem [#allocation2], 161
  %v245 = vld [vmem:[%s244] ss:$2 sm:$0xff]
  %s246 = scalar_lea.vmem [#allocation2], 177
  %v247 = vld [vmem:[%s246] ss:$2 sm:$0xff]
  %s248 = scalar_lea.vmem [#allocation2], 193
  %v249 = vld [vmem:[%s248] ss:$2 sm:$0xff]
  %s250 = scalar_lea.vmem [#allocation2], 209
  %v251 = vld [vmem:[%s250] ss:$2 sm:$0xff]
  %s252 = scalar_lea.vmem [#allocation2], 225
  %v253 = vld [vmem:[%s252] ss:$2 sm:$0xff]
  %s254 = scalar_lea.vmem [#allocation2], 241
  %v255 = vld [vmem:[%s254] ss:$2 sm:$0xff]
  %272 = vrot.lane.b32.xlu0 %v225, 1
  %v273 = vpop.permute.xlu0 %272
  %274 = vrot.lane.b32.xlu0 %v227, 1
  %v275 = vpop.permute.xlu0 %274
  %276 = vrot.lane.b32.xlu0 %v229, 1
  %v277 = vpop.permute.xlu0 %276
  %278 = vrot.lane.b32.xlu0 %v231, 1
  %v279 = vpop.permute.xlu0 %278
  %280 = vrot.lane.b32.xlu0 %v233, 1
  %v281 = vpop.permute.xlu0 %280
  %282 = vrot.lane.b32.xlu0 %v235, 1
  %v283 = vpop.permute.xlu0 %282
  %284 = vrot.lane.b32.xlu0 %v237, 1
  %v285 = vpop.permute.xlu0 %284
  %286 = vrot.lane.b32.xlu0 %v239, 1
  %v287 = vpop.permute.xlu0 %286
  %288 = vrot.lane.b32.xlu0 %v241, 1
  %v289 = vpop.permute.xlu0 %288
  %290 = vrot.lane.b32.xlu0 %v243, 1
  %v291 = vpop.permute.xlu0 %290
  %292 = vrot.lane.b32.xlu0 %v245, 1
  %v293 = vpop.permute.xlu0 %292
  %294 = vrot.lane.b32.xlu0 %v247, 1
  %v295 = vpop.permute.xlu0 %294
  %296 = vrot.lane.b32.xlu0 %v249, 1
  %v297 = vpop.permute.xlu0 %296
  %298 = vrot.lane.b32.xlu0 %v251, 1
  %v299 = vpop.permute.xlu0 %298
  %300 = vrot.lane.b32.xlu0 %v253, 1
  %v301 = vpop.permute.xlu0 %300
  %302 = vrot.lane.b32.xlu0 %v255, 1
  %v303 = vpop.permute.xlu0 %302
  %vm320 = vcmask 15368
  %321 = vst.msk [vmem:[#allocation9] sm:$0xff] %vm320, %v273
  %322 = vst.msk [vmem:[#allocation9 + $0x8] sm:$0xff] %vm320, %v275
  %323 = vst.msk [vmem:[#allocation9 + $0x10] sm:$0xff] %vm320, %v277
  %324 = vst.msk [vmem:[#allocation9 + $0x18] sm:$0xff] %vm320, %v279
  %325 = vst.msk [vmem:[#allocation9 + $0x20] sm:$0xff] %vm320, %v281
  %326 = vst.msk [vmem:[#allocation9 + $0x28] sm:$0xff] %vm320, %v283
  %327 = vst.msk [vmem:[#allocation9 + $0x30] sm:$0xff] %vm320, %v285
  %328 = vst.msk [vmem:[#allocation9 + $0x38] sm:$0xff] %vm320, %v287
  %329 = vst.msk [vmem:[#allocation9 + $0x40] sm:$0xff] %vm320, %v289
  %330 = vst.msk [vmem:[#allocation9 + $0x48] sm:$0xff] %vm320, %v291
  %331 = vst.msk [vmem:[#allocation9 + $0x50] sm:$0xff] %vm320, %v293
  %332 = vst.msk [vmem:[#allocation9 + $0x58] sm:$0xff] %vm320, %v295
  %333 = vst.msk [vmem:[#allocation9 + $0x60] sm:$0xff] %vm320, %v297
  %334 = vst.msk [vmem:[#allocation9 + $0x68] sm:$0xff] %vm320, %v299
  %335 = vst.msk [vmem:[#allocation9 + $0x70] sm:$0xff] %vm320, %v301
  %336 = vst.msk [vmem:[#allocation9 + $0x78] sm:$0xff] %vm320, %v303
  %s337 = scalar_lea.vmem [#allocation2], 2
  %v338 = vld [vmem:[%s337] ss:$2 sm:$0xff]
  %s339 = scalar_lea.vmem [#allocation2], 18
  %v340 = vld [vmem:[%s339] ss:$2 sm:$0xff]
  %s341 = scalar_lea.vmem [#allocation2], 34
  %v342 = vld [vmem:[%s341] ss:$2 sm:$0xff]
  %s343 = scalar_lea.vmem [#allocation2], 50
  %v344 = vld [vmem:[%s343] ss:$2 sm:$0xff]
  %s345 = scalar_lea.vmem [#allocation2], 66
  %v346 = vld [vmem:[%s345] ss:$2 sm:$0xff]
  %s347 = scalar_lea.vmem [#allocation2], 82
  %v348 = vld [vmem:[%s347] ss:$2 sm:$0xff]
  %s349 = scalar_lea.vmem [#allocation2], 98
  %v350 = vld [vmem:[%s349] ss:$2 sm:$0xff]
  %s351 = scalar_lea.vmem [#allocation2], 114
  %v352 = vld [vmem:[%s351] ss:$2 sm:$0xff]
  %s353 = scalar_lea.vmem [#allocation2], 130
  %v354 = vld [vmem:[%s353] ss:$2 sm:$0xff]
  %s355 = scalar_lea.vmem [#allocation2], 146
  %v356 = vld [vmem:[%s355] ss:$2 sm:$0xff]
  %s357 = scalar_lea.vmem [#allocation2], 162
  %v358 = vld [vmem:[%s357] ss:$2 sm:$0xff]
  %s359 = scalar_lea.vmem [#allocation2], 178
  %v360 = vld [vmem:[%s359] ss:$2 sm:$0xff]
  %s361 = scalar_lea.vmem [#allocation2], 194
  %v362 = vld [vmem:[%s361] ss:$2 sm:$0xff]
  %s363 = scalar_lea.vmem [#allocation2], 210
  %v364 = vld [vmem:[%s363] ss:$2 sm:$0xff]
  %s365 = scalar_lea.vmem [#allocation2], 226
  %v366 = vld [vmem:[%s365] ss:$2 sm:$0xff]
  %s367 = scalar_lea.vmem [#allocation2], 242
  %v368 = vld [vmem:[%s367] ss:$2 sm:$0xff]
  %385 = vrot.lane.b32.xlu0 %v338, 2
  %v386 = vpop.permute.xlu0 %385
  %387 = vrot.lane.b32.xlu0 %v340, 2
  %v388 = vpop.permute.xlu0 %387
  %389 = vrot.lane.b32.xlu0 %v342, 2
  %v390 = vpop.permute.xlu0 %389
  %391 = vrot.lane.b32.xlu0 %v344, 2
  %v392 = vpop.permute.xlu0 %391
  %393 = vrot.lane.b32.xlu0 %v346, 2
  %v394 = vpop.permute.xlu0 %393
  %395 = vrot.lane.b32.xlu0 %v348, 2
  %v396 = vpop.permute.xlu0 %395
  %397 = vrot.lane.b32.xlu0 %v350, 2
  %v398 = vpop.permute.xlu0 %397
  %399 = vrot.lane.b32.xlu0 %v352, 2
  %v400 = vpop.permute.xlu0 %399
  %401 = vrot.lane.b32.xlu0 %v354, 2
  %v402 = vpop.permute.xlu0 %401
  %403 = vrot.lane.b32.xlu0 %v356, 2
  %v404 = vpop.permute.xlu0 %403
  %405 = vrot.lane.b32.xlu0 %v358, 2
  %v406 = vpop.permute.xlu0 %405
  %407 = vrot.lane.b32.xlu0 %v360, 2
  %v408 = vpop.permute.xlu0 %407
  %409 = vrot.lane.b32.xlu0 %v362, 2
  %v410 = vpop.permute.xlu0 %409
  %411 = vrot.lane.b32.xlu0 %v364, 2
  %v412 = vpop.permute.xlu0 %411
  %413 = vrot.lane.b32.xlu0 %v366, 2
  %v414 = vpop.permute.xlu0 %413
  %415 = vrot.lane.b32.xlu0 %v368, 2
  %v416 = vpop.permute.xlu0 %415
  %vm433 = vcmask 23568
  %434 = vst.msk [vmem:[#allocation9] sm:$0xff] %vm433, %v386
  %435 = vst.msk [vmem:[#allocation9 + $0x8] sm:$0xff] %vm433, %v388
  %436 = vst.msk [vmem:[#allocation9 + $0x10] sm:$0xff] %vm433, %v390
  %437 = vst.msk [vmem:[#allocation9 + $0x18] sm:$0xff] %vm433, %v392
  %438 = vst.msk [vmem:[#allocation9 + $0x20] sm:$0xff] %vm433, %v394
  %439 = vst.msk [vmem:[#allocation9 + $0x28] sm:$0xff] %vm433, %v396
  %440 = vst.msk [vmem:[#allocation9 + $0x30] sm:$0xff] %vm433, %v398
  %441 = vst.msk [vmem:[#allocation9 + $0x38] sm:$0xff] %vm433, %v400
  %442 = vst.msk [vmem:[#allocation9 + $0x40] sm:$0xff] %vm433, %v402
  %443 = vst.msk [vmem:[#allocation9 + $0x48] sm:$0xff] %vm433, %v404
  %444 = vst.msk [vmem:[#allocation9 + $0x50] sm:$0xff] %vm433, %v406
  %445 = vst.msk [vmem:[#allocation9 + $0x58] sm:$0xff] %vm433, %v408
  %446 = vst.msk [vmem:[#allocation9 + $0x60] sm:$0xff] %vm433, %v410
  %447 = vst.msk [vmem:[#allocation9 + $0x68] sm:$0xff] %vm433, %v412
  %448 = vst.msk [vmem:[#allocation9 + $0x70] sm:$0xff] %vm433, %v414
  %449 = vst.msk [vmem:[#allocation9 + $0x78] sm:$0xff] %vm433, %v416
  %s450 = scalar_lea.vmem [#allocation2], 3
  %v451 = vld [vmem:[%s450] ss:$2 sm:$0xff]
  %s452 = scalar_lea.vmem [#allocation2], 19
  %v453 = vld [vmem:[%s452] ss:$2 sm:$0xff]
  %s454 = scalar_lea.vmem [#allocation2], 35
  %v455 = vld [vmem:[%s454] ss:$2 sm:$0xff]
  %s456 = scalar_lea.vmem [#allocation2], 51
  %v457 = vld [vmem:[%s456] ss:$2 sm:$0xff]
  %s458 = scalar_lea.vmem [#allocation2], 67
  %v459 = vld [vmem:[%s458] ss:$2 sm:$0xff]
  %s460 = scalar_lea.vmem [#allocation2], 83
  %v461 = vld [vmem:[%s460] ss:$2 sm:$0xff]
  %s462 = scalar_lea.vmem [#allocation2], 99
  %v463 = vld [vmem:[%s462] ss:$2 sm:$0xff]
  %s464 = scalar_lea.vmem [#allocation2], 115
  %v465 = vld [vmem:[%s464] ss:$2 sm:$0xff]
  %s466 = scalar_lea.vmem [#allocation2], 131
  %v467 = vld [vmem:[%s466] ss:$2 sm:$0xff]
  %s468 = scalar_lea.vmem [#allocation2], 147
  %v469 = vld [vmem:[%s468] ss:$2 sm:$0xff]
  %s470 = scalar_lea.vmem [#allocation2], 163
  %v471 = vld [vmem:[%s470] ss:$2 sm:$0xff]
  %s472 = scalar_lea.vmem [#allocation2], 179
  %v473 = vld [vmem:[%s472] ss:$2 sm:$0xff]
  %s474 = scalar_lea.vmem [#allocation2], 195
  %v475 = vld [vmem:[%s474] ss:$2 sm:$0xff]
  %s476 = scalar_lea.vmem [#allocation2], 211
  %v477 = vld [vmem:[%s476] ss:$2 sm:$0xff]
  %s478 = scalar_lea.vmem [#allocation2], 227
  %v479 = vld [vmem:[%s478] ss:$2 sm:$0xff]
  %s480 = scalar_lea.vmem [#allocation2], 243
  %v481 = vld [vmem:[%s480] ss:$2 sm:$0xff]
  %498 = vrot.lane.b32.xlu0 %v451, 3
  %v499 = vpop.permute.xlu0 %498
  %500 = vrot.lane.b32.xlu0 %v453, 3
  %v501 = vpop.permute.xlu0 %500
  %502 = vrot.lane.b32.xlu0 %v455, 3
  %v503 = vpop.permute.xlu0 %502
  %504 = vrot.lane.b32.xlu0 %v457, 3
  %v505 = vpop.permute.xlu0 %504
  %506 = vrot.lane.b32.xlu0 %v459, 3
  %v507 = vpop.permute.xlu0 %506
  %508 = vrot.lane.b32.xlu0 %v461, 3
  %v509 = vpop.permute.xlu0 %508
  %510 = vrot.lane.b32.xlu0 %v463, 3
  %v511 = vpop.permute.xlu0 %510
  %512 = vrot.lane.b32.xlu0 %v465, 3
  %v513 = vpop.permute.xlu0 %512
  %514 = vrot.lane.b32.xlu0 %v467, 3
  %v515 = vpop.permute.xlu0 %514
  %516 = vrot.lane.b32.xlu0 %v469, 3
  %v517 = vpop.permute.xlu0 %516
  %518 = vrot.lane.b32.xlu0 %v471, 3
  %v519 = vpop.permute.xlu0 %518
  %520 = vrot.lane.b32.xlu0 %v473, 3
  %v521 = vpop.permute.xlu0 %520
  %522 = vrot.lane.b32.xlu0 %v475, 3
  %v523 = vpop.permute.xlu0 %522
  %524 = vrot.lane.b32.xlu0 %v477, 3
  %v525 = vpop.permute.xlu0 %524
  %526 = vrot.lane.b32.xlu0 %v479, 3
  %v527 = vpop.permute.xlu0 %526
  %528 = vrot.lane.b32.xlu0 %v481, 3
  %v529 = vpop.permute.xlu0 %528
  %vm546 = vcmask 31768
  %547 = vst.msk [vmem:[#allocation9] sm:$0xff] %vm546, %v499
  %548 = vst.msk [vmem:[#allocation9 + $0x8] sm:$0xff] %vm546, %v501
  %549 = vst.msk [vmem:[#allocation9 + $0x10] sm:$0xff] %vm546, %v503
  %550 = vst.msk [vmem:[#allocation9 + $0x18] sm:$0xff] %vm546, %v505
  %551 = vst.msk [vmem:[#allocation9 + $0x20] sm:$0xff] %vm546, %v507
  %552 = vst.msk [vmem:[#allocation9 + $0x28] sm:$0xff] %vm546, %v509
  %553 = vst.msk [vmem:[#allocation9 + $0x30] sm:$0xff] %vm546, %v511
  %554 = vst.msk [vmem:[#allocation9 + $0x38] sm:$0xff] %vm546, %v513
  %555 = vst.msk [vmem:[#allocation9 + $0x40] sm:$0xff] %vm546, %v515
  %556 = vst.msk [vmem:[#allocation9 + $0x48] sm:$0xff] %vm546, %v517
  %557 = vst.msk [vmem:[#allocation9 + $0x50] sm:$0xff] %vm546, %v519
  %558 = vst.msk [vmem:[#allocation9 + $0x58] sm:$0xff] %vm546, %v521
  %559 = vst.msk [vmem:[#allocation9 + $0x60] sm:$0xff] %vm546, %v523
  %560 = vst.msk [vmem:[#allocation9 + $0x68] sm:$0xff] %vm546, %v525
  %561 = vst.msk [vmem:[#allocation9 + $0x70] sm:$0xff] %vm546, %v527
  %562 = vst.msk [vmem:[#allocation9 + $0x78] sm:$0xff] %vm546, %v529
  %s563 = scalar_lea.vmem [#allocation2], 4
  %v564 = vld [vmem:[%s563] ss:$2 sm:$0xff]
  %s565 = scalar_lea.vmem [#allocation2], 20
  %v566 = vld [vmem:[%s565] ss:$2 sm:$0xff]
  %s567 = scalar_lea.vmem [#allocation2], 36
  %v568 = vld [vmem:[%s567] ss:$2 sm:$0xff]
  %s569 = scalar_lea.vmem [#allocation2], 52
  %v570 = vld [vmem:[%s569] ss:$2 sm:$0xff]
  %s571 = scalar_lea.vmem [#allocation2], 68
  %v572 = vld [vmem:[%s571] ss:$2 sm:$0xff]
  %s573 = scalar_lea.vmem [#allocation2], 84
  %v574 = vld [vmem:[%s573] ss:$2 sm:$0xff]
  %s575 = scalar_lea.vmem [#allocation2], 100
  %v576 = vld [vmem:[%s575] ss:$2 sm:$0xff]
  %s577 = scalar_lea.vmem [#allocation2], 116
  %v578 = vld [vmem:[%s577] ss:$2 sm:$0xff]
  %s579 = scalar_lea.vmem [#allocation2], 132
  %v580 = vld [vmem:[%s579] ss:$2 sm:$0xff]
  %s581 = scalar_lea.vmem [#allocation2], 148
  %v582 = vld [vmem:[%s581] ss:$2 sm:$0xff]
  %s583 = scalar_lea.vmem [#allocation2], 164
  %v584 = vld [vmem:[%s583] ss:$2 sm:$0xff]
  %s585 = scalar_lea.vmem [#allocation2], 180
  %v586 = vld [vmem:[%s585] ss:$2 sm:$0xff]
  %s587 = scalar_lea.vmem [#allocation2], 196
  %v588 = vld [vmem:[%s587] ss:$2 sm:$0xff]
  %s589 = scalar_lea.vmem [#allocation2], 212
  %v590 = vld [vmem:[%s589] ss:$2 sm:$0xff]
  %s591 = scalar_lea.vmem [#allocation2], 228
  %v592 = vld [vmem:[%s591] ss:$2 sm:$0xff]
  %s593 = scalar_lea.vmem [#allocation2], 244
  %v594 = vld [vmem:[%s593] ss:$2 sm:$0xff]
  %611 = vrot.lane.b32.xlu0 %v564, 4
  %v612 = vpop.permute.xlu0 %611
  %613 = vrot.lane.b32.xlu0 %v566, 4
  %v614 = vpop.permute.xlu0 %613
  %615 = vrot.lane.b32.xlu0 %v568, 4
  %v616 = vpop.permute.xlu0 %615
  %617 = vrot.lane.b32.xlu0 %v570, 4
  %v618 = vpop.permute.xlu0 %617
  %619 = vrot.lane.b32.xlu0 %v572, 4
  %v620 = vpop.permute.xlu0 %619
  %621 = vrot.lane.b32.xlu0 %v574, 4
  %v622 = vpop.permute.xlu0 %621
  %623 = vrot.lane.b32.xlu0 %v576, 4
  %v624 = vpop.permute.xlu0 %623
  %625 = vrot.lane.b32.xlu0 %v578, 4
  %v626 = vpop.permute.xlu0 %625
  %627 = vrot.lane.b32.xlu0 %v580, 4
  %v628 = vpop.permute.xlu0 %627
  %629 = vrot.lane.b32.xlu0 %v582, 4
  %v630 = vpop.permute.xlu0 %629
  %631 = vrot.lane.b32.xlu0 %v584, 4
  %v632 = vpop.permute.xlu0 %631
  %633 = vrot.lane.b32.xlu0 %v586, 4
  %v634 = vpop.permute.xlu0 %633
  %635 = vrot.lane.b32.xlu0 %v588, 4
  %v636 = vpop.permute.xlu0 %635
  %637 = vrot.lane.b32.xlu0 %v590, 4
  %v638 = vpop.permute.xlu0 %637
  %639 = vrot.lane.b32.xlu0 %v592, 4
  %v640 = vpop.permute.xlu0 %639
  %641 = vrot.lane.b32.xlu0 %v594, 4
  %v642 = vpop.permute.xlu0 %641
  %vm659 = vcmask 39968
  %660 = vst.msk [vmem:[#allocation9] sm:$0xff] %vm659, %v612
  %661 = vst.msk [vmem:[#allocation9 + $0x8] sm:$0xff] %vm659, %v614
  %662 = vst.msk [vmem:[#allocation9 + $0x10] sm:$0xff] %vm659, %v616
  %663 = vst.msk [vmem:[#allocation9 + $0x18] sm:$0xff] %vm659, %v618
  %664 = vst.msk [vmem:[#allocation9 + $0x20] sm:$0xff] %vm659, %v620
  %665 = vst.msk [vmem:[#allocation9 + $0x28] sm:$0xff] %vm659, %v622
  %666 = vst.msk [vmem:[#allocation9 + $0x30] sm:$0xff] %vm659, %v624
  %667 = vst.msk [vmem:[#allocation9 + $0x38] sm:$0xff] %vm659, %v626
  %668 = vst.msk [vmem:[#allocation9 + $0x40] sm:$0xff] %vm659, %v628
  %669 = vst.msk [vmem:[#allocation9 + $0x48] sm:$0xff] %vm659, %v630
  %670 = vst.msk [vmem:[#allocation9 + $0x50] sm:$0xff] %vm659, %v632
  %671 = vst.msk [vmem:[#allocation9 + $0x58] sm:$0xff] %vm659, %v634
  %672 = vst.msk [vmem:[#allocation9 + $0x60] sm:$0xff] %vm659, %v636
  %673 = vst.msk [vmem:[#allocation9 + $0x68] sm:$0xff] %vm659, %v638
  %674 = vst.msk [vmem:[#allocation9 + $0x70] sm:$0xff] %vm659, %v640
  %675 = vst.msk [vmem:[#allocation9 + $0x78] sm:$0xff] %vm659, %v642
  %s676 = scalar_lea.vmem [#allocation2], 5
  %v677 = vld [vmem:[%s676] ss:$2 sm:$0xff]
  %s678 = scalar_lea.vmem [#allocation2], 21
  %v679 = vld [vmem:[%s678] ss:$2 sm:$0xff]
  %s680 = scalar_lea.vmem [#allocation2], 37
  %v681 = vld [vmem:[%s680] ss:$2 sm:$0xff]
  %s682 = scalar_lea.vmem [#allocation2], 53
  %v683 = vld [vmem:[%s682] ss:$2 sm:$0xff]
  %s684 = scalar_lea.vmem [#allocation2], 69
  %v685 = vld [vmem:[%s684] ss:$2 sm:$0xff]
  %s686 = scalar_lea.vmem [#allocation2], 85
  %v687 = vld [vmem:[%s686] ss:$2 sm:$0xff]
  %s688 = scalar_lea.vmem [#allocation2], 101
  %v689 = vld [vmem:[%s688] ss:$2 sm:$0xff]
  %s690 = scalar_lea.vmem [#allocation2], 117
  %v691 = vld [vmem:[%s690] ss:$2 sm:$0xff]
  %s692 = scalar_lea.vmem [#allocation2], 133
  %v693 = vld [vmem:[%s692] ss:$2 sm:$0xff]
  %s694 = scalar_lea.vmem [#allocation2], 149
  %v695 = vld [vmem:[%s694] ss:$2 sm:$0xff]
  %s696 = scalar_lea.vmem [#allocation2], 165
  %v697 = vld [vmem:[%s696] ss:$2 sm:$0xff]
  %s698 = scalar_lea.vmem [#allocation2], 181
  %v699 = vld [vmem:[%s698] ss:$2 sm:$0xff]
  %s700 = scalar_lea.vmem [#allocation2], 197
  %v701 = vld [vmem:[%s700] ss:$2 sm:$0xff]
  %s702 = scalar_lea.vmem [#allocation2], 213
  %v703 = vld [vmem:[%s702] ss:$2 sm:$0xff]
  %s704 = scalar_lea.vmem [#allocation2], 229
  %v705 = vld [vmem:[%s704] ss:$2 sm:$0xff]
  %s706 = scalar_lea.vmem [#allocation2], 245
  %v707 = vld [vmem:[%s706] ss:$2 sm:$0xff]
  %724 = vrot.lane.b32.xlu0 %v677, 5
  %v725 = vpop.permute.xlu0 %724
  %726 = vrot.lane.b32.xlu0 %v679, 5
  %v727 = vpop.permute.xlu0 %726
  %728 = vrot.lane.b32.xlu0 %v681, 5
  %v729 = vpop.permute.xlu0 %728
  %730 = vrot.lane.b32.xlu0 %v683, 5
  %v731 = vpop.permute.xlu0 %730
  %732 = vrot.lane.b32.xlu0 %v685, 5
  %v733 = vpop.permute.xlu0 %732
  %734 = vrot.lane.b32.xlu0 %v687, 5
  %v735 = vpop.permute.xlu0 %734
  %736 = vrot.lane.b32.xlu0 %v689, 5
  %v737 = vpop.permute.xlu0 %736
  %738 = vrot.lane.b32.xlu0 %v691, 5
  %v739 = vpop.permute.xlu0 %738
  %740 = vrot.lane.b32.xlu0 %v693, 5
  %v741 = vpop.permute.xlu0 %740
  %742 = vrot.lane.b32.xlu0 %v695, 5
  %v743 = vpop.permute.xlu0 %742
  %744 = vrot.lane.b32.xlu0 %v697, 5
  %v745 = vpop.permute.xlu0 %744
  %746 = vrot.lane.b32.xlu0 %v699, 5
  %v747 = vpop.permute.xlu0 %746
  %748 = vrot.lane.b32.xlu0 %v701, 5
  %v749 = vpop.permute.xlu0 %748
  %750 = vrot.lane.b32.xlu0 %v703, 5
  %v751 = vpop.permute.xlu0 %750
  %752 = vrot.lane.b32.xlu0 %v705, 5
  %v753 = vpop.permute.xlu0 %752
  %754 = vrot.lane.b32.xlu0 %v707, 5
  %v755 = vpop.permute.xlu0 %754
  %vm772 = vcmask 48168
  %773 = vst.msk [vmem:[#allocation9] sm:$0xff] %vm772, %v725
  %774 = vst.msk [vmem:[#allocation9 + $0x8] sm:$0xff] %vm772, %v727
  %775 = vst.msk [vmem:[#allocation9 + $0x10] sm:$0xff] %vm772, %v729
  %776 = vst.msk [vmem:[#allocation9 + $0x18] sm:$0xff] %vm772, %v731
  %777 = vst.msk [vmem:[#allocation9 + $0x20] sm:$0xff] %vm772, %v733
  %778 = vst.msk [vmem:[#allocation9 + $0x28] sm:$0xff] %vm772, %v735
  %779 = vst.msk [vmem:[#allocation9 + $0x30] sm:$0xff] %vm772, %v737
  %780 = vst.msk [vmem:[#allocation9 + $0x38] sm:$0xff] %vm772, %v739
  %781 = vst.msk [vmem:[#allocation9 + $0x40] sm:$0xff] %vm772, %v741
  %782 = vst.msk [vmem:[#allocation9 + $0x48] sm:$0xff] %vm772, %v743
  %783 = vst.msk [vmem:[#allocation9 + $0x50] sm:$0xff] %vm772, %v745
  %784 = vst.msk [vmem:[#allocation9 + $0x58] sm:$0xff] %vm772, %v747
  %785 = vst.msk [vmem:[#allocation9 + $0x60] sm:$0xff] %vm772, %v749
  %786 = vst.msk [vmem:[#allocation9 + $0x68] sm:$0xff] %vm772, %v751
  %787 = vst.msk [vmem:[#allocation9 + $0x70] sm:$0xff] %vm772, %v753
  %788 = vst.msk [vmem:[#allocation9 + $0x78] sm:$0xff] %vm772, %v755
  %s789 = scalar_lea.vmem [#allocation2], 6
  %v790 = vld [vmem:[%s789] ss:$2 sm:$0xff]
  %s791 = scalar_lea.vmem [#allocation2], 22
  %v792 = vld [vmem:[%s791] ss:$2 sm:$0xff]
  %s793 = scalar_lea.vmem [#allocation2], 38
  %v794 = vld [vmem:[%s793] ss:$2 sm:$0xff]
  %s795 = scalar_lea.vmem [#allocation2], 54
  %v796 = vld [vmem:[%s795] ss:$2 sm:$0xff]
  %s797 = scalar_lea.vmem [#allocation2], 70
  %v798 = vld [vmem:[%s797] ss:$2 sm:$0xff]
  %s799 = scalar_lea.vmem [#allocation2], 86
  %v800 = vld [vmem:[%s799] ss:$2 sm:$0xff]
  %s801 = scalar_lea.vmem [#allocation2], 102
  %v802 = vld [vmem:[%s801] ss:$2 sm:$0xff]
  %s803 = scalar_lea.vmem [#allocation2], 118
  %v804 = vld [vmem:[%s803] ss:$2 sm:$0xff]
  %s805 = scalar_lea.vmem [#allocation2], 134
  %v806 = vld [vmem:[%s805] ss:$2 sm:$0xff]
  %s807 = scalar_lea.vmem [#allocation2], 150
  %v808 = vld [vmem:[%s807] ss:$2 sm:$0xff]
  %s809 = scalar_lea.vmem [#allocation2], 166
  %v810 = vld [vmem:[%s809] ss:$2 sm:$0xff]
  %s811 = scalar_lea.vmem [#allocation2], 182
  %v812 = vld [vmem:[%s811] ss:$2 sm:$0xff]
  %s813 = scalar_lea.vmem [#allocation2], 198
  %v814 = vld [vmem:[%s813] ss:$2 sm:$0xff]
  %s815 = scalar_lea.vmem [#allocation2], 214
  %v816 = vld [vmem:[%s815] ss:$2 sm:$0xff]
  %s817 = scalar_lea.vmem [#allocation2], 230
  %v818 = vld [vmem:[%s817] ss:$2 sm:$0xff]
  %s819 = scalar_lea.vmem [#allocation2], 246
  %v820 = vld [vmem:[%s819] ss:$2 sm:$0xff]
  %837 = vrot.lane.b32.xlu0 %v790, 6
  %v838 = vpop.permute.xlu0 %837
  %839 = vrot.lane.b32.xlu0 %v792, 6
  %v840 = vpop.permute.xlu0 %839
  %841 = vrot.lane.b32.xlu0 %v794, 6
  %v842 = vpop.permute.xlu0 %841
  %843 = vrot.lane.b32.xlu0 %v796, 6
  %v844 = vpop.permute.xlu0 %843
  %845 = vrot.lane.b32.xlu0 %v798, 6
  %v846 = vpop.permute.xlu0 %845
  %847 = vrot.lane.b32.xlu0 %v800, 6
  %v848 = vpop.permute.xlu0 %847
  %849 = vrot.lane.b32.xlu0 %v802, 6
  %v850 = vpop.permute.xlu0 %849
  %851 = vrot.lane.b32.xlu0 %v804, 6
  %v852 = vpop.permute.xlu0 %851
  %853 = vrot.lane.b32.xlu0 %v806, 6
  %v854 = vpop.permute.xlu0 %853
  %855 = vrot.lane.b32.xlu0 %v808, 6
  %v856 = vpop.permute.xlu0 %855
  %857 = vrot.lane.b32.xlu0 %v810, 6
  %v858 = vpop.permute.xlu0 %857
  %859 = vrot.lane.b32.xlu0 %v812, 6
  %v860 = vpop.permute.xlu0 %859
  %861 = vrot.lane.b32.xlu0 %v814, 6
  %v862 = vpop.permute.xlu0 %861
  %863 = vrot.lane.b32.xlu0 %v816, 6
  %v864 = vpop.permute.xlu0 %863
  %865 = vrot.lane.b32.xlu0 %v818, 6
  %v866 = vpop.permute.xlu0 %865
  %867 = vrot.lane.b32.xlu0 %v820, 6
  %v868 = vpop.permute.xlu0 %867
  %vm885 = vcmask 56368
  %886 = vst.msk [vmem:[#allocation9] sm:$0xff] %vm885, %v838
  %887 = vst.msk [vmem:[#allocation9 + $0x8] sm:$0xff] %vm885, %v840
  %888 = vst.msk [vmem:[#allocation9 + $0x10] sm:$0xff] %vm885, %v842
  %889 = vst.msk [vmem:[#allocation9 + $0x18] sm:$0xff] %vm885, %v844
  %890 = vst.msk [vmem:[#allocation9 + $0x20] sm:$0xff] %vm885, %v846
  %891 = vst.msk [vmem:[#allocation9 + $0x28] sm:$0xff] %vm885, %v848
  %892 = vst.msk [vmem:[#allocation9 + $0x30] sm:$0xff] %vm885, %v850
  %893 = vst.msk [vmem:[#allocation9 + $0x38] sm:$0xff] %vm885, %v852
  %894 = vst.msk [vmem:[#allocation9 + $0x40] sm:$0xff] %vm885, %v854
  %895 = vst.msk [vmem:[#allocation9 + $0x48] sm:$0xff] %vm885, %v856
  %896 = vst.msk [vmem:[#allocation9 + $0x50] sm:$0xff] %vm885, %v858
  %897 = vst.msk [vmem:[#allocation9 + $0x58] sm:$0xff] %vm885, %v860
  %898 = vst.msk [vmem:[#allocation9 + $0x60] sm:$0xff] %vm885, %v862
  %899 = vst.msk [vmem:[#allocation9 + $0x68] sm:$0xff] %vm885, %v864
  %900 = vst.msk [vmem:[#allocation9 + $0x70] sm:$0xff] %vm885, %v866
  %901 = vst.msk [vmem:[#allocation9 + $0x78] sm:$0xff] %vm885, %v868
  %s902 = scalar_lea.vmem [#allocation2], 7
  %v903 = vld [vmem:[%s902] ss:$2 sm:$0xff]
  %s904 = scalar_lea.vmem [#allocation2], 23
  %v905 = vld [vmem:[%s904] ss:$2 sm:$0xff]
  %s906 = scalar_lea.vmem [#allocation2], 39
  %v907 = vld [vmem:[%s906] ss:$2 sm:$0xff]
  %s908 = scalar_lea.vmem [#allocation2], 55
  %v909 = vld [vmem:[%s908] ss:$2 sm:$0xff]
  %s910 = scalar_lea.vmem [#allocation2], 71
  %v911 = vld [vmem:[%s910] ss:$2 sm:$0xff]
  %s912 = scalar_lea.vmem [#allocation2], 87
  %v913 = vld [vmem:[%s912] ss:$2 sm:$0xff]
  %s914 = scalar_lea.vmem [#allocation2], 103
  %v915 = vld [vmem:[%s914] ss:$2 sm:$0xff]
  %s916 = scalar_lea.vmem [#allocation2], 119
  %v917 = vld [vmem:[%s916] ss:$2 sm:$0xff]
  %s918 = scalar_lea.vmem [#allocation2], 135
  %v919 = vld [vmem:[%s918] ss:$2 sm:$0xff]
  %s920 = scalar_lea.vmem [#allocation2], 151
  %v921 = vld [vmem:[%s920] ss:$2 sm:$0xff]
  %s922 = scalar_lea.vmem [#allocation2], 167
  %v923 = vld [vmem:[%s922] ss:$2 sm:$0xff]
  %s924 = scalar_lea.vmem [#allocation2], 183
  %v925 = vld [vmem:[%s924] ss:$2 sm:$0xff]
  %s926 = scalar_lea.vmem [#allocation2], 199
  %v927 = vld [vmem:[%s926] ss:$2 sm:$0xff]
  %s928 = scalar_lea.vmem [#allocation2], 215
  %v929 = vld [vmem:[%s928] ss:$2 sm:$0xff]
  %s930 = scalar_lea.vmem [#allocation2], 231
  %v931 = vld [vmem:[%s930] ss:$2 sm:$0xff]
  %s932 = scalar_lea.vmem [#allocation2], 247
  %v933 = vld [vmem:[%s932] ss:$2 sm:$0xff]
  %950 = vrot.lane.b32.xlu0 %v903, 7
  %v951 = vpop.permute.xlu0 %950
  %952 = vrot.lane.b32.xlu0 %v905, 7
  %v953 = vpop.permute.xlu0 %952
  %954 = vrot.lane.b32.xlu0 %v907, 7
  %v955 = vpop.permute.xlu0 %954
  %956 = vrot.lane.b32.xlu0 %v909, 7
  %v957 = vpop.permute.xlu0 %956
  %958 = vrot.lane.b32.xlu0 %v911, 7
  %v959 = vpop.permute.xlu0 %958
  %960 = vrot.lane.b32.xlu0 %v913, 7
  %v961 = vpop.permute.xlu0 %960
  %962 = vrot.lane.b32.xlu0 %v915, 7
  %v963 = vpop.permute.xlu0 %962
  %964 = vrot.lane.b32.xlu0 %v917, 7
  %v965 = vpop.permute.xlu0 %964
  %966 = vrot.lane.b32.xlu0 %v919, 7
  %v967 = vpop.permute.xlu0 %966
  %968 = vrot.lane.b32.xlu0 %v921, 7
  %v969 = vpop.permute.xlu0 %968
  %970 = vrot.lane.b32.xlu0 %v923, 7
  %v971 = vpop.permute.xlu0 %970
  %972 = vrot.lane.b32.xlu0 %v925, 7
  %v973 = vpop.permute.xlu0 %972
  %974 = vrot.lane.b32.xlu0 %v927, 7
  %v975 = vpop.permute.xlu0 %974
  %976 = vrot.lane.b32.xlu0 %v929, 7
  %v977 = vpop.permute.xlu0 %976
  %978 = vrot.lane.b32.xlu0 %v931, 7
  %v979 = vpop.permute.xlu0 %978
  %980 = vrot.lane.b32.xlu0 %v933, 7
  %v981 = vpop.permute.xlu0 %980
  %vm998 = vcmask 64568
  %999 = vst.msk [vmem:[#allocation9] sm:$0xff] %vm998, %v951
  %1000 = vst.msk [vmem:[#allocation9 + $0x8] sm:$0xff] %vm998, %v953
  %1001 = vst.msk [vmem:[#allocation9 + $0x10] sm:$0xff] %vm998, %v955
  %1002 = vst.msk [vmem:[#allocation9 + $0x18] sm:$0xff] %vm998, %v957
  %1003 = vst.msk [vmem:[#allocation9 + $0x20] sm:$0xff] %vm998, %v959
  %1004 = vst.msk [vmem:[#allocation9 + $0x28] sm:$0xff] %vm998, %v961
  %1005 = vst.msk [vmem:[#allocation9 + $0x30] sm:$0xff] %vm998, %v963
  %1006 = vst.msk [vmem:[#allocation9 + $0x38] sm:$0xff] %vm998, %v965
  %1007 = vst.msk [vmem:[#allocation9 + $0x40] sm:$0xff] %vm998, %v967
  %1008 = vst.msk [vmem:[#allocation9 + $0x48] sm:$0xff] %vm998, %v969
  %1009 = vst.msk [vmem:[#allocation9 + $0x50] sm:$0xff] %vm998, %v971
  %1010 = vst.msk [vmem:[#allocation9 + $0x58] sm:$0xff] %vm998, %v973
  %1011 = vst.msk [vmem:[#allocation9 + $0x60] sm:$0xff] %vm998, %v975
  %1012 = vst.msk [vmem:[#allocation9 + $0x68] sm:$0xff] %vm998, %v977
  %1013 = vst.msk [vmem:[#allocation9 + $0x70] sm:$0xff] %vm998, %v979
  %1014 = vst.msk [vmem:[#allocation9 + $0x78] sm:$0xff] %vm998, %v981
  %s1015 = scalar_lea.vmem [#allocation2], 8
  %v1016 = vld [vmem:[%s1015] ss:$2 sm:$0xff]
  %s1017 = scalar_lea.vmem [#allocation2], 24
  %v1018 = vld [vmem:[%s1017] ss:$2 sm:$0xff]
  %s1019 = scalar_lea.vmem [#allocation2], 40
  %v1020 = vld [vmem:[%s1019] ss:$2 sm:$0xff]
  %s1021 = scalar_lea.vmem [#allocation2], 56
  %v1022 = vld [vmem:[%s1021] ss:$2 sm:$0xff]
  %s1023 = scalar_lea.vmem [#allocation2], 72
  %v1024 = vld [vmem:[%s1023] ss:$2 sm:$0xff]
  %s1025 = scalar_lea.vmem [#allocation2], 88
  %v1026 = vld [vmem:[%s1025] ss:$2 sm:$0xff]
  %s1027 = scalar_lea.vmem [#allocation2], 104
  %v1028 = vld [vmem:[%s1027] ss:$2 sm:$0xff]
  %s1029 = scalar_lea.vmem [#allocation2], 120
  %v1030 = vld [vmem:[%s1029] ss:$2 sm:$0xff]
  %s1031 = scalar_lea.vmem [#allocation2], 136
  %v1032 = vld [vmem:[%s1031] ss:$2 sm:$0xff]
  %s1033 = scalar_lea.vmem [#allocation2], 152
  %v1034 = vld [vmem:[%s1033] ss:$2 sm:$0xff]
  %s1035 = scalar_lea.vmem [#allocation2], 168
  %v1036 = vld [vmem:[%s1035] ss:$2 sm:$0xff]
  %s1037 = scalar_lea.vmem [#allocation2], 184
  %v1038 = vld [vmem:[%s1037] ss:$2 sm:$0xff]
  %s1039 = scalar_lea.vmem [#allocation2], 200
  %v1040 = vld [vmem:[%s1039] ss:$2 sm:$0xff]
  %s1041 = scalar_lea.vmem [#allocation2], 216
  %v1042 = vld [vmem:[%s1041] ss:$2 sm:$0xff]
  %s1043 = scalar_lea.vmem [#allocation2], 232
  %v1044 = vld [vmem:[%s1043] ss:$2 sm:$0xff]
  %s1045 = scalar_lea.vmem [#allocation2], 248
  %v1046 = vld [vmem:[%s1045] ss:$2 sm:$0xff]
  %1063 = vrot.lane.b32.xlu0 %v1016, 8
  %v1064 = vpop.permute.xlu0 %1063
  %1065 = vrot.lane.b32.xlu0 %v1018, 8
  %v1066 = vpop.permute.xlu0 %1065
  %1067 = vrot.lane.b32.xlu0 %v1020, 8
  %v1068 = vpop.permute.xlu0 %1067
  %1069 = vrot.lane.b32.xlu0 %v1022, 8
  %v1070 = vpop.permute.xlu0 %1069
  %1071 = vrot.lane.b32.xlu0 %v1024, 8
  %v1072 = vpop.permute.xlu0 %1071
  %1073 = vrot.lane.b32.xlu0 %v1026, 8
  %v1074 = vpop.permute.xlu0 %1073
  %1075 = vrot.lane.b32.xlu0 %v1028, 8
  %v1076 = vpop.permute.xlu0 %1075
  %1077 = vrot.lane.b32.xlu0 %v1030, 8
  %v1078 = vpop.permute.xlu0 %1077
  %1079 = vrot.lane.b32.xlu0 %v1032, 8
  %v1080 = vpop.permute.xlu0 %1079
  %1081 = vrot.lane.b32.xlu0 %v1034, 8
  %v1082 = vpop.permute.xlu0 %1081
  %1083 = vrot.lane.b32.xlu0 %v1036, 8
  %v1084 = vpop.permute.xlu0 %1083
  %1085 = vrot.lane.b32.xlu0 %v1038, 8
  %v1086 = vpop.permute.xlu0 %1085
  %1087 = vrot.lane.b32.xlu0 %v1040, 8
  %v1088 = vpop.permute.xlu0 %1087
  %1089 = vrot.lane.b32.xlu0 %v1042, 8
  %v1090 = vpop.permute.xlu0 %1089
  %1091 = vrot.lane.b32.xlu0 %v1044, 8
  %v1092 = vpop.permute.xlu0 %1091
  %1093 = vrot.lane.b32.xlu0 %v1046, 8
  %v1094 = vpop.permute.xlu0 %1093
  %vm1111 = vcmask 72768
  %1112 = vst.msk [vmem:[#allocation9] sm:$0xff] %vm1111, %v1064
  %1113 = vst.msk [vmem:[#allocation9 + $0x8] sm:$0xff] %vm1111, %v1066
  %1114 = vst.msk [vmem:[#allocation9 + $0x10] sm:$0xff] %vm1111, %v1068
  %1115 = vst.msk [vmem:[#allocation9 + $0x18] sm:$0xff] %vm1111, %v1070
  %1116 = vst.msk [vmem:[#allocation9 + $0x20] sm:$0xff] %vm1111, %v1072
  %1117 = vst.msk [vmem:[#allocation9 + $0x28] sm:$0xff] %vm1111, %v1074
  %1118 = vst.msk [vmem:[#allocation9 + $0x30] sm:$0xff] %vm1111, %v1076
  %1119 = vst.msk [vmem:[#allocation9 + $0x38] sm:$0xff] %vm1111, %v1078
  %1120 = vst.msk [vmem:[#allocation9 + $0x40] sm:$0xff] %vm1111, %v1080
  %1121 = vst.msk [vmem:[#allocation9 + $0x48] sm:$0xff] %vm1111, %v1082
  %1122 = vst.msk [vmem:[#allocation9 + $0x50] sm:$0xff] %vm1111, %v1084
  %1123 = vst.msk [vmem:[#allocation9 + $0x58] sm:$0xff] %vm1111, %v1086
  %1124 = vst.msk [vmem:[#allocation9 + $0x60] sm:$0xff] %vm1111, %v1088
  %1125 = vst.msk [vmem:[#allocation9 + $0x68] sm:$0xff] %vm1111, %v1090
  %1126 = vst.msk [vmem:[#allocation9 + $0x70] sm:$0xff] %vm1111, %v1092
  %1127 = vst.msk [vmem:[#allocation9 + $0x78] sm:$0xff] %vm1111, %v1094
  %s1128 = scalar_lea.vmem [#allocation2], 9
  %v1129 = vld [vmem:[%s1128] ss:$2 sm:$0xff]
  %s1130 = scalar_lea.vmem [#allocation2], 25
  %v1131 = vld [vmem:[%s1130] ss:$2 sm:$0xff]
  %s1132 = scalar_lea.vmem [#allocation2], 41
  %v1133 = vld [vmem:[%s1132] ss:$2 sm:$0xff]
  %s1134 = scalar_lea.vmem [#allocation2], 57
  %v1135 = vld [vmem:[%s1134] ss:$2 sm:$0xff]
  %s1136 = scalar_lea.vmem [#allocation2], 73
  %v1137 = vld [vmem:[%s1136] ss:$2 sm:$0xff]
  %s1138 = scalar_lea.vmem [#allocation2], 89
  %v1139 = vld [vmem:[%s1138] ss:$2 sm:$0xff]
  %s1140 = scalar_lea.vmem [#allocation2], 105
  %v1141 = vld [vmem:[%s1140] ss:$2 sm:$0xff]
  %s1142 = scalar_lea.vmem [#allocation2], 121
  %v1143 = vld [vmem:[%s1142] ss:$2 sm:$0xff]
  %s1144 = scalar_lea.vmem [#allocation2], 137
  %v1145 = vld [vmem:[%s1144] ss:$2 sm:$0xff]
  %s1146 = scalar_lea.vmem [#allocation2], 153
  %v1147 = vld [vmem:[%s1146] ss:$2 sm:$0xff]
  %s1148 = scalar_lea.vmem [#allocation2], 169
  %v1149 = vld [vmem:[%s1148] ss:$2 sm:$0xff]
  %s1150 = scalar_lea.vmem [#allocation2], 185
  %v1151 = vld [vmem:[%s1150] ss:$2 sm:$0xff]
  %s1152 = scalar_lea.vmem [#allocation2], 201
  %v1153 = vld [vmem:[%s1152] ss:$2 sm:$0xff]
  %s1154 = scalar_lea.vmem [#allocation2], 217
  %v1155 = vld [vmem:[%s1154] ss:$2 sm:$0xff]
  %s1156 = scalar_lea.vmem [#allocation2], 233
  %v1157 = vld [vmem:[%s1156] ss:$2 sm:$0xff]
  %s1158 = scalar_lea.vmem [#allocation2], 249
  %v1159 = vld [vmem:[%s1158] ss:$2 sm:$0xff]
  %1176 = vrot.lane.b32.xlu0 %v1129, 9
  %v1177 = vpop.permute.xlu0 %1176
  %1178 = vrot.lane.b32.xlu0 %v1131, 9
  %v1179 = vpop.permute.xlu0 %1178
  %1180 = vrot.lane.b32.xlu0 %v1133, 9
  %v1181 = vpop.permute.xlu0 %1180
  %1182 = vrot.lane.b32.xlu0 %v1135, 9
  %v1183 = vpop.permute.xlu0 %1182
  %1184 = vrot.lane.b32.xlu0 %v1137, 9
  %v1185 = vpop.permute.xlu0 %1184
  %1186 = vrot.lane.b32.xlu0 %v1139, 9
  %v1187 = vpop.permute.xlu0 %1186
  %1188 = vrot.lane.b32.xlu0 %v1141, 9
  %v1189 = vpop.permute.xlu0 %1188
  %1190 = vrot.lane.b32.xlu0 %v1143, 9
  %v1191 = vpop.permute.xlu0 %1190
  %1192 = vrot.lane.b32.xlu0 %v1145, 9
  %v1193 = vpop.permute.xlu0 %1192
  %1194 = vrot.lane.b32.xlu0 %v1147, 9
  %v1195 = vpop.permute.xlu0 %1194
  %1196 = vrot.lane.b32.xlu0 %v1149, 9
  %v1197 = vpop.permute.xlu0 %1196
  %1198 = vrot.lane.b32.xlu0 %v1151, 9
  %v1199 = vpop.permute.xlu0 %1198
  %1200 = vrot.lane.b32.xlu0 %v1153, 9
  %v1201 = vpop.permute.xlu0 %1200
  %1202 = vrot.lane.b32.xlu0 %v1155, 9
  %v1203 = vpop.permute.xlu0 %1202
  %1204 = vrot.lane.b32.xlu0 %v1157, 9
  %v1205 = vpop.permute.xlu0 %1204
  %1206 = vrot.lane.b32.xlu0 %v1159, 9
  %v1207 = vpop.permute.xlu0 %1206
  %vm1224 = vcmask 80968
  %1225 = vst.msk [vmem:[#allocation9] sm:$0xff] %vm1224, %v1177
  %1226 = vst.msk [vmem:[#allocation9 + $0x8] sm:$0xff] %vm1224, %v1179
  %1227 = vst.msk [vmem:[#allocation9 + $0x10] sm:$0xff] %vm1224, %v1181
  %1228 = vst.msk [vmem:[#allocation9 + $0x18] sm:$0xff] %vm1224, %v1183
  %1229 = vst.msk [vmem:[#allocation9 + $0x20] sm:$0xff] %vm1224, %v1185
  %1230 = vst.msk [vmem:[#allocation9 + $0x28] sm:$0xff] %vm1224, %v1187
  %1231 = vst.msk [vmem:[#allocation9 + $0x30] sm:$0xff] %vm1224, %v1189
  %1232 = vst.msk [vmem:[#allocation9 + $0x38] sm:$0xff] %vm1224, %v1191
  %1233 = vst.msk [vmem:[#allocation9 + $0x40] sm:$0xff] %vm1224, %v1193
  %1234 = vst.msk [vmem:[#allocation9 + $0x48] sm:$0xff] %vm1224, %v1195
  %1235 = vst.msk [vmem:[#allocation9 + $0x50] sm:$0xff] %vm1224, %v1197
  %1236 = vst.msk [vmem:[#allocation9 + $0x58] sm:$0xff] %vm1224, %v1199
  %1237 = vst.msk [vmem:[#allocation9 + $0x60] sm:$0xff] %vm1224, %v1201
  %1238 = vst.msk [vmem:[#allocation9 + $0x68] sm:$0xff] %vm1224, %v1203
  %1239 = vst.msk [vmem:[#allocation9 + $0x70] sm:$0xff] %vm1224, %v1205
  %1240 = vst.msk [vmem:[#allocation9 + $0x78] sm:$0xff] %vm1224, %v1207
  %s1241 = scalar_lea.vmem [#allocation2], 10
  %v1242 = vld [vmem:[%s1241] ss:$2 sm:$0xff]
  %s1243 = scalar_lea.vmem [#allocation2], 26
  %v1244 = vld [vmem:[%s1243] ss:$2 sm:$0xff]
  %s1245 = scalar_lea.vmem [#allocation2], 42
  %v1246 = vld [vmem:[%s1245] ss:$2 sm:$0xff]
  %s1247 = scalar_lea.vmem [#allocation2], 58
  %v1248 = vld [vmem:[%s1247] ss:$2 sm:$0xff]
  %s1249 = scalar_lea.vmem [#allocation2], 74
  %v1250 = vld [vmem:[%s1249] ss:$2 sm:$0xff]
  %s1251 = scalar_lea.vmem [#allocation2], 90
  %v1252 = vld [vmem:[%s1251] ss:$2 sm:$0xff]
  %s1253 = scalar_lea.vmem [#allocation2], 106
  %v1254 = vld [vmem:[%s1253] ss:$2 sm:$0xff]
  %s1255 = scalar_lea.vmem [#allocation2], 122
  %v1256 = vld [vmem:[%s1255] ss:$2 sm:$0xff]
  %s1257 = scalar_lea.vmem [#allocation2], 138
  %v1258 = vld [vmem:[%s1257] ss:$2 sm:$0xff]
  %s1259 = scalar_lea.vmem [#allocation2], 154
  %v1260 = vld [vmem:[%s1259] ss:$2 sm:$0xff]
  %s1261 = scalar_lea.vmem [#allocation2], 170
  %v1262 = vld [vmem:[%s1261] ss:$2 sm:$0xff]
  %s1263 = scalar_lea.vmem [#allocation2], 186
  %v1264 = vld [vmem:[%s1263] ss:$2 sm:$0xff]
  %s1265 = scalar_lea.vmem [#allocation2], 202
  %v1266 = vld [vmem:[%s1265] ss:$2 sm:$0xff]
  %s1267 = scalar_lea.vmem [#allocation2], 218
  %v1268 = vld [vmem:[%s1267] ss:$2 sm:$0xff]
  %s1269 = scalar_lea.vmem [#allocation2], 234
  %v1270 = vld [vmem:[%s1269] ss:$2 sm:$0xff]
  %s1271 = scalar_lea.vmem [#allocation2], 250
  %v1272 = vld [vmem:[%s1271] ss:$2 sm:$0xff]
  %1289 = vrot.lane.b32.xlu0 %v1242, 10
  %v1290 = vpop.permute.xlu0 %1289
  %1291 = vrot.lane.b32.xlu0 %v1244, 10
  %v1292 = vpop.permute.xlu0 %1291
  %1293 = vrot.lane.b32.xlu0 %v1246, 10
  %v1294 = vpop.permute.xlu0 %1293
  %1295 = vrot.lane.b32.xlu0 %v1248, 10
  %v1296 = vpop.permute.xlu0 %1295
  %1297 = vrot.lane.b32.xlu0 %v1250, 10
  %v1298 = vpop.permute.xlu0 %1297
  %1299 = vrot.lane.b32.xlu0 %v1252, 10
  %v1300 = vpop.permute.xlu0 %1299
  %1301 = vrot.lane.b32.xlu0 %v1254, 10
  %v1302 = vpop.permute.xlu0 %1301
  %1303 = vrot.lane.b32.xlu0 %v1256, 10
  %v1304 = vpop.permute.xlu0 %1303
  %1305 = vrot.lane.b32.xlu0 %v1258, 10
  %v1306 = vpop.permute.xlu0 %1305
  %1307 = vrot.lane.b32.xlu0 %v1260, 10
  %v1308 = vpop.permute.xlu0 %1307
  %1309 = vrot.lane.b32.xlu0 %v1262, 10
  %v1310 = vpop.permute.xlu0 %1309
  %1311 = vrot.lane.b32.xlu0 %v1264, 10
  %v1312 = vpop.permute.xlu0 %1311
  %1313 = vrot.lane.b32.xlu0 %v1266, 10
  %v1314 = vpop.permute.xlu0 %1313
  %1315 = vrot.lane.b32.xlu0 %v1268, 10
  %v1316 = vpop.permute.xlu0 %1315
  %1317 = vrot.lane.b32.xlu0 %v1270, 10
  %v1318 = vpop.permute.xlu0 %1317
  %1319 = vrot.lane.b32.xlu0 %v1272, 10
  %v1320 = vpop.permute.xlu0 %1319
  %vm1337 = vcmask 89168
  %1338 = vst.msk [vmem:[#allocation9] sm:$0xff] %vm1337, %v1290
  %1339 = vst.msk [vmem:[#allocation9 + $0x8] sm:$0xff] %vm1337, %v1292
  %1340 = vst.msk [vmem:[#allocation9 + $0x10] sm:$0xff] %vm1337, %v1294
  %1341 = vst.msk [vmem:[#allocation9 + $0x18] sm:$0xff] %vm1337, %v1296
  %1342 = vst.msk [vmem:[#allocation9 + $0x20] sm:$0xff] %vm1337, %v1298
  %1343 = vst.msk [vmem:[#allocation9 + $0x28] sm:$0xff] %vm1337, %v1300
  %1344 = vst.msk [vmem:[#allocation9 + $0x30] sm:$0xff] %vm1337, %v1302
  %1345 = vst.msk [vmem:[#allocation9 + $0x38] sm:$0xff] %vm1337, %v1304
  %1346 = vst.msk [vmem:[#allocation9 + $0x40] sm:$0xff] %vm1337, %v1306
  %1347 = vst.msk [vmem:[#allocation9 + $0x48] sm:$0xff] %vm1337, %v1308
  %1348 = vst.msk [vmem:[#allocation9 + $0x50] sm:$0xff] %vm1337, %v1310
  %1349 = vst.msk [vmem:[#allocation9 + $0x58] sm:$0xff] %vm1337, %v1312
  %1350 = vst.msk [vmem:[#allocation9 + $0x60] sm:$0xff] %vm1337, %v1314
  %1351 = vst.msk [vmem:[#allocation9 + $0x68] sm:$0xff] %vm1337, %v1316
  %1352 = vst.msk [vmem:[#allocation9 + $0x70] sm:$0xff] %vm1337, %v1318
  %1353 = vst.msk [vmem:[#allocation9 + $0x78] sm:$0xff] %vm1337, %v1320
  %s1354 = scalar_lea.vmem [#allocation2], 11
  %v1355 = vld [vmem:[%s1354] ss:$2 sm:$0xff]
  %s1356 = scalar_lea.vmem [#allocation2], 27
  %v1357 = vld [vmem:[%s1356] ss:$2 sm:$0xff]
  %s1358 = scalar_lea.vmem [#allocation2], 43
  %v1359 = vld [vmem:[%s1358] ss:$2 sm:$0xff]
  %s1360 = scalar_lea.vmem [#allocation2], 59
  %v1361 = vld [vmem:[%s1360] ss:$2 sm:$0xff]
  %s1362 = scalar_lea.vmem [#allocation2], 75
  %v1363 = vld [vmem:[%s1362] ss:$2 sm:$0xff]
  %s1364 = scalar_lea.vmem [#allocation2], 91
  %v1365 = vld [vmem:[%s1364] ss:$2 sm:$0xff]
  %s1366 = scalar_lea.vmem [#allocation2], 107
  %v1367 = vld [vmem:[%s1366] ss:$2 sm:$0xff]
  %s1368 = scalar_lea.vmem [#allocation2], 123
  %v1369 = vld [vmem:[%s1368] ss:$2 sm:$0xff]
  %s1370 = scalar_lea.vmem [#allocation2], 139
  %v1371 = vld [vmem:[%s1370] ss:$2 sm:$0xff]
  %s1372 = scalar_lea.vmem [#allocation2], 155
  %v1373 = vld [vmem:[%s1372] ss:$2 sm:$0xff]
  %s1374 = scalar_lea.vmem [#allocation2], 171
  %v1375 = vld [vmem:[%s1374] ss:$2 sm:$0xff]
  %s1376 = scalar_lea.vmem [#allocation2], 187
  %v1377 = vld [vmem:[%s1376] ss:$2 sm:$0xff]
  %s1378 = scalar_lea.vmem [#allocation2], 203
  %v1379 = vld [vmem:[%s1378] ss:$2 sm:$0xff]
  %s1380 = scalar_lea.vmem [#allocation2], 219
  %v1381 = vld [vmem:[%s1380] ss:$2 sm:$0xff]
  %s1382 = scalar_lea.vmem [#allocation2], 235
  %v1383 = vld [vmem:[%s1382] ss:$2 sm:$0xff]
  %s1384 = scalar_lea.vmem [#allocation2], 251
  %v1385 = vld [vmem:[%s1384] ss:$2 sm:$0xff]
  %1402 = vrot.lane.b32.xlu0 %v1355, 11
  %v1403 = vpop.permute.xlu0 %1402
  %1404 = vrot.lane.b32.xlu0 %v1357, 11
  %v1405 = vpop.permute.xlu0 %1404
  %1406 = vrot.lane.b32.xlu0 %v1359, 11
  %v1407 = vpop.permute.xlu0 %1406
  %1408 = vrot.lane.b32.xlu0 %v1361, 11
  %v1409 = vpop.permute.xlu0 %1408
  %1410 = vrot.lane.b32.xlu0 %v1363, 11
  %v1411 = vpop.permute.xlu0 %1410
  %1412 = vrot.lane.b32.xlu0 %v1365, 11
  %v1413 = vpop.permute.xlu0 %1412
  %1414 = vrot.lane.b32.xlu0 %v1367, 11
  %v1415 = vpop.permute.xlu0 %1414
  %1416 = vrot.lane.b32.xlu0 %v1369, 11
  %v1417 = vpop.permute.xlu0 %1416
  %1418 = vrot.lane.b32.xlu0 %v1371, 11
  %v1419 = vpop.permute.xlu0 %1418
  %1420 = vrot.lane.b32.xlu0 %v1373, 11
  %v1421 = vpop.permute.xlu0 %1420
  %1422 = vrot.lane.b32.xlu0 %v1375, 11
  %v1423 = vpop.permute.xlu0 %1422
  %1424 = vrot.lane.b32.xlu0 %v1377, 11
  %v1425 = vpop.permute.xlu0 %1424
  %1426 = vrot.lane.b32.xlu0 %v1379, 11
  %v1427 = vpop.permute.xlu0 %1426
  %1428 = vrot.lane.b32.xlu0 %v1381, 11
  %v1429 = vpop.permute.xlu0 %1428
  %1430 = vrot.lane.b32.xlu0 %v1383, 11
  %v1431 = vpop.permute.xlu0 %1430
  %1432 = vrot.lane.b32.xlu0 %v1385, 11
  %v1433 = vpop.permute.xlu0 %1432
  %vm1450 = vcmask 97368
  %1451 = vst.msk [vmem:[#allocation9] sm:$0xff] %vm1450, %v1403
  %1452 = vst.msk [vmem:[#allocation9 + $0x8] sm:$0xff] %vm1450, %v1405
  %1453 = vst.msk [vmem:[#allocation9 + $0x10] sm:$0xff] %vm1450, %v1407
  %1454 = vst.msk [vmem:[#allocation9 + $0x18] sm:$0xff] %vm1450, %v1409
  %1455 = vst.msk [vmem:[#allocation9 + $0x20] sm:$0xff] %vm1450, %v1411
  %1456 = vst.msk [vmem:[#allocation9 + $0x28] sm:$0xff] %vm1450, %v1413
  %1457 = vst.msk [vmem:[#allocation9 + $0x30] sm:$0xff] %vm1450, %v1415
  %1458 = vst.msk [vmem:[#allocation9 + $0x38] sm:$0xff] %vm1450, %v1417
  %1459 = vst.msk [vmem:[#allocation9 + $0x40] sm:$0xff] %vm1450, %v1419
  %1460 = vst.msk [vmem:[#allocation9 + $0x48] sm:$0xff] %vm1450, %v1421
  %1461 = vst.msk [vmem:[#allocation9 + $0x50] sm:$0xff] %vm1450, %v1423
  %1462 = vst.msk [vmem:[#allocation9 + $0x58] sm:$0xff] %vm1450, %v1425
  %1463 = vst.msk [vmem:[#allocation9 + $0x60] sm:$0xff] %vm1450, %v1427
  %1464 = vst.msk [vmem:[#allocation9 + $0x68] sm:$0xff] %vm1450, %v1429
  %1465 = vst.msk [vmem:[#allocation9 + $0x70] sm:$0xff] %vm1450, %v1431
  %1466 = vst.msk [vmem:[#allocation9 + $0x78] sm:$0xff] %vm1450, %v1433
  %1467 = vst.msk [vmem:[#allocation2 + $0x10a] sm:$0x1f] %vm141, 0.0
  %1468 = vst.msk [vmem:[#allocation2 + $0x20f] sm:$0x1f] %vm141, 0.0
  %1469 = vst.msk [vmem:[#allocation2 + $0x10f] sm:$0xff] %vm144, %v109
  %1470 = vst.msk [vmem:[#allocation2 + $0x117] sm:$0xff] %vm144, %v110
  %1471 = vst.msk [vmem:[#allocation2 + $0x11f] sm:$0xff] %vm144, %v111
  %1472 = vst.msk [vmem:[#allocation2 + $0x127] sm:$0xff] %vm144, %v112
  %1473 = vst.msk [vmem:[#allocation2 + $0x12f] sm:$0xff] %vm144, %v113
  %1474 = vst.msk [vmem:[#allocation2 + $0x137] sm:$0xff] %vm144, %v114
  %1475 = vst.msk [vmem:[#allocation2 + $0x13f] sm:$0xff] %vm144, %v115
  %1476 = vst.msk [vmem:[#allocation2 + $0x147] sm:$0xff] %vm144, %v116
  %1477 = vst.msk [vmem:[#allocation2 + $0x14f] sm:$0xff] %vm144, %v117
  %1478 = vst.msk [vmem:[#allocation2 + $0x157] sm:$0xff] %vm144, %v118
  %1479 = vst.msk [vmem:[#allocation2 + $0x15f] sm:$0xff] %vm144, %v119
  %1480 = vst.msk [vmem:[#allocation2 + $0x167] sm:$0xff] %vm144, %v120
  %1481 = vst.msk [vmem:[#allocation2 + $0x16f] sm:$0xff] %vm144, %v121
  %1482 = vst.msk [vmem:[#allocation2 + $0x177] sm:$0xff] %vm144, %v122
  %1483 = vst.msk [vmem:[#allocation2 + $0x17f] sm:$0xff] %vm144, %v123
  %1484 = vst.msk [vmem:[#allocation2 + $0x187] sm:$0xff] %vm144, %v124
  %1485 = vst.msk [vmem:[#allocation2 + $0x18f] sm:$0xff] %vm144, %v125
  %1486 = vst.msk [vmem:[#allocation2 + $0x197] sm:$0xff] %vm144, %v126
  %1487 = vst.msk [vmem:[#allocation2 + $0x19f] sm:$0xff] %vm144, %v127
  %1488 = vst.msk [vmem:[#allocation2 + $0x1a7] sm:$0xff] %vm144, %v128
  %1489 = vst.msk [vmem:[#allocation2 + $0x1af] sm:$0xff] %vm144, %v129
  %1490 = vst.msk [vmem:[#allocation2 + $0x1b7] sm:$0xff] %vm144, %v130
  %1491 = vst.msk [vmem:[#allocation2 + $0x1bf] sm:$0xff] %vm144, %v131
  %1492 = vst.msk [vmem:[#allocation2 + $0x1c7] sm:$0xff] %vm144, %v132
  %1493 = vst.msk [vmem:[#allocation2 + $0x1cf] sm:$0xff] %vm144, %v133
  %1494 = vst.msk [vmem:[#allocation2 + $0x1d7] sm:$0xff] %vm144, %v134
  %1495 = vst.msk [vmem:[#allocation2 + $0x1df] sm:$0xff] %vm144, %v135
  %1496 = vst.msk [vmem:[#allocation2 + $0x1e7] sm:$0xff] %vm144, %v136
  %1497 = vst.msk [vmem:[#allocation2 + $0x1ef] sm:$0xff] %vm144, %v137
  %1498 = vst.msk [vmem:[#allocation2 + $0x1f7] sm:$0xff] %vm144, %v138
  %1499 = vst.msk [vmem:[#allocation2 + $0x1ff] sm:$0xff] %vm144, %v139
  %1500 = vst.msk [vmem:[#allocation2 + $0x207] sm:$0xff] %vm144, %v140
  %s1501 = scalar_lea.vmem [#allocation2], 266
  %v1502 = vld [vmem:[%s1501] ss:$2 sm:$0xff]
  %s1503 = scalar_lea.vmem [#allocation2], 282
  %v1504 = vld [vmem:[%s1503] ss:$2 sm:$0xff]
  %s1505 = scalar_lea.vmem [#allocation2], 298
  %v1506 = vld [vmem:[%s1505] ss:$2 sm:$0xff]
  %s1507 = scalar_lea.vmem [#allocation2], 314
  %v1508 = vld [vmem:[%s1507] ss:$2 sm:$0xff]
  %s1509 = scalar_lea.vmem [#allocation2], 330
  %v1510 = vld [vmem:[%s1509] ss:$2 sm:$0xff]
  %s1511 = scalar_lea.vmem [#allocation2], 346
  %v1512 = vld [vmem:[%s1511] ss:$2 sm:$0xff]
  %s1513 = scalar_lea.vmem [#allocation2], 362
  %v1514 = vld [vmem:[%s1513] ss:$2 sm:$0xff]
  %s1515 = scalar_lea.vmem [#allocation2], 378
  %v1516 = vld [vmem:[%s1515] ss:$2 sm:$0xff]
  %s1517 = scalar_lea.vmem [#allocation2], 394
  %v1518 = vld [vmem:[%s1517] ss:$2 sm:$0xff]
  %s1519 = scalar_lea.vmem [#allocation2], 410
  %v1520 = vld [vmem:[%s1519] ss:$2 sm:$0xff]
  %s1521 = scalar_lea.vmem [#allocation2], 426
  %v1522 = vld [vmem:[%s1521] ss:$2 sm:$0xff]
  %s1523 = scalar_lea.vmem [#allocation2], 442
  %v1524 = vld [vmem:[%s1523] ss:$2 sm:$0xff]
  %s1525 = scalar_lea.vmem [#allocation2], 458
  %v1526 = vld [vmem:[%s1525] ss:$2 sm:$0xff]
  %s1527 = scalar_lea.vmem [#allocation2], 474
  %v1528 = vld [vmem:[%s1527] ss:$2 sm:$0xff]
  %s1529 = scalar_lea.vmem [#allocation2], 490
  %v1530 = vld [vmem:[%s1529] ss:$2 sm:$0xff]
  %s1531 = scalar_lea.vmem [#allocation2], 506
  %v1532 = vld [vmem:[%s1531] ss:$2 sm:$0xff]
  %1533 = vst.msk [vmem:[#allocation9 + $0x80] sm:$0xff] %vm144, %v1502
  %1534 = vst.msk [vmem:[#allocation9 + $0x88] sm:$0xff] %vm144, %v1504
  %1535 = vst.msk [vmem:[#allocation9 + $0x90] sm:$0xff] %vm144, %v1506
  %1536 = vst.msk [vmem:[#allocation9 + $0x98] sm:$0xff] %vm144, %v1508
  %1537 = vst.msk [vmem:[#allocation9 + $0xa0] sm:$0xff] %vm144, %v1510
  %1538 = vst.msk [vmem:[#allocation9 + $0xa8] sm:$0xff] %vm144, %v1512
  %1539 = vst.msk [vmem:[#allocation9 + $0xb0] sm:$0xff] %vm144, %v1514
  %1540 = vst.msk [vmem:[#allocation9 + $0xb8] sm:$0xff] %vm144, %v1516
  %1541 = vst.msk [vmem:[#allocation9 + $0xc0] sm:$0xff] %vm144, %v1518
  %1542 = vst.msk [vmem:[#allocation9 + $0xc8] sm:$0xff] %vm144, %v1520
  %1543 = vst.msk [vmem:[#allocation9 + $0xd0] sm:$0xff] %vm144, %v1522
  %1544 = vst.msk [vmem:[#allocation9 + $0xd8] sm:$0xff] %vm144, %v1524
  %1545 = vst.msk [vmem:[#allocation9 + $0xe0] sm:$0xff] %vm144, %v1526
  %1546 = vst.msk [vmem:[#allocation9 + $0xe8] sm:$0xff] %vm144, %v1528
  %1547 = vst.msk [vmem:[#allocation9 + $0xf0] sm:$0xff] %vm144, %v1530
  %1548 = vst.msk [vmem:[#allocation9 + $0xf8] sm:$0xff] %vm144, %v1532
  %s1549 = scalar_lea.vmem [#allocation2], 267
  %v1550 = vld [vmem:[%s1549] ss:$2 sm:$0xff]
  %s1551 = scalar_lea.vmem [#allocation2], 283
  %v1552 = vld [vmem:[%s1551] ss:$2 sm:$0xff]
  %s1553 = scalar_lea.vmem [#allocation2], 299
  %v1554 = vld [vmem:[%s1553] ss:$2 sm:$0xff]
  %s1555 = scalar_lea.vmem [#allocation2], 315
  %v1556 = vld [vmem:[%s1555] ss:$2 sm:$0xff]
  %s1557 = scalar_lea.vmem [#allocation2], 331
  %v1558 = vld [vmem:[%s1557] ss:$2 sm:$0xff]
  %s1559 = scalar_lea.vmem [#allocation2], 347
  %v1560 = vld [vmem:[%s1559] ss:$2 sm:$0xff]
  %s1561 = scalar_lea.vmem [#allocation2], 363
  %v1562 = vld [vmem:[%s1561] ss:$2 sm:$0xff]
  %s1563 = scalar_lea.vmem [#allocation2], 379
  %v1564 = vld [vmem:[%s1563] ss:$2 sm:$0xff]
  %s1565 = scalar_lea.vmem [#allocation2], 395
  %v1566 = vld [vmem:[%s1565] ss:$2 sm:$0xff]
  %s1567 = scalar_lea.vmem [#allocation2], 411
  %v1568 = vld [vmem:[%s1567] ss:$2 sm:$0xff]
  %s1569 = scalar_lea.vmem [#allocation2], 427
  %v1570 = vld [vmem:[%s1569] ss:$2 sm:$0xff]
  %s1571 = scalar_lea.vmem [#allocation2], 443
  %v1572 = vld [vmem:[%s1571] ss:$2 sm:$0xff]
  %s1573 = scalar_lea.vmem [#allocation2], 459
  %v1574 = vld [vmem:[%s1573] ss:$2 sm:$0xff]
  %s1575 = scalar_lea.vmem [#allocation2], 475
  %v1576 = vld [vmem:[%s1575] ss:$2 sm:$0xff]
  %s1577 = scalar_lea.vmem [#allocation2], 491
  %v1578 = vld [vmem:[%s1577] ss:$2 sm:$0xff]
  %s1579 = scalar_lea.vmem [#allocation2], 507
  %v1580 = vld [vmem:[%s1579] ss:$2 sm:$0xff]
  %1597 = vrot.lane.b32.xlu0 %v1550, 1
  %v1598 = vpop.permute.xlu0 %1597
  %1599 = vrot.lane.b32.xlu0 %v1552, 1
  %v1600 = vpop.permute.xlu0 %1599
  %1601 = vrot.lane.b32.xlu0 %v1554, 1
  %v1602 = vpop.permute.xlu0 %1601
  %1603 = vrot.lane.b32.xlu0 %v1556, 1
  %v1604 = vpop.permute.xlu0 %1603
  %1605 = vrot.lane.b32.xlu0 %v1558, 1
  %v1606 = vpop.permute.xlu0 %1605
  %1607 = vrot.lane.b32.xlu0 %v1560, 1
  %v1608 = vpop.permute.xlu0 %1607
  %1609 = vrot.lane.b32.xlu0 %v1562, 1
  %v1610 = vpop.permute.xlu0 %1609
  %1611 = vrot.lane.b32.xlu0 %v1564, 1
  %v1612 = vpop.permute.xlu0 %1611
  %1613 = vrot.lane.b32.xlu0 %v1566, 1
  %v1614 = vpop.permute.xlu0 %1613
  %1615 = vrot.lane.b32.xlu0 %v1568, 1
  %v1616 = vpop.permute.xlu0 %1615
  %1617 = vrot.lane.b32.xlu0 %v1570, 1
  %v1618 = vpop.permute.xlu0 %1617
  %1619 = vrot.lane.b32.xlu0 %v1572, 1
  %v1620 = vpop.permute.xlu0 %1619
  %1621 = vrot.lane.b32.xlu0 %v1574, 1
  %v1622 = vpop.permute.xlu0 %1621
  %1623 = vrot.lane.b32.xlu0 %v1576, 1
  %v1624 = vpop.permute.xlu0 %1623
  %1625 = vrot.lane.b32.xlu0 %v1578, 1
  %v1626 = vpop.permute.xlu0 %1625
  %1627 = vrot.lane.b32.xlu0 %v1580, 1
  %v1628 = vpop.permute.xlu0 %1627
  %1645 = vst.msk [vmem:[#allocation9 + $0x80] sm:$0xff] %vm320, %v1598
  %1646 = vst.msk [vmem:[#allocation9 + $0x88] sm:$0xff] %vm320, %v1600
  %1647 = vst.msk [vmem:[#allocation9 + $0x90] sm:$0xff] %vm320, %v1602
  %1648 = vst.msk [vmem:[#allocation9 + $0x98] sm:$0xff] %vm320, %v1604
  %1649 = vst.msk [vmem:[#allocation9 + $0xa0] sm:$0xff] %vm320, %v1606
  %1650 = vst.msk [vmem:[#allocation9 + $0xa8] sm:$0xff] %vm320, %v1608
  %1651 = vst.msk [vmem:[#allocation9 + $0xb0] sm:$0xff] %vm320, %v1610
  %1652 = vst.msk [vmem:[#allocation9 + $0xb8] sm:$0xff] %vm320, %v1612
  %1653 = vst.msk [vmem:[#allocation9 + $0xc0] sm:$0xff] %vm320, %v1614
  %1654 = vst.msk [vmem:[#allocation9 + $0xc8] sm:$0xff] %vm320, %v1616
  %1655 = vst.msk [vmem:[#allocation9 + $0xd0] sm:$0xff] %vm320, %v1618
  %1656 = vst.msk [vmem:[#allocation9 + $0xd8] sm:$0xff] %vm320, %v1620
  %1657 = vst.msk [vmem:[#allocation9 + $0xe0] sm:$0xff] %vm320, %v1622
  %1658 = vst.msk [vmem:[#allocation9 + $0xe8] sm:$0xff] %vm320, %v1624
  %1659 = vst.msk [vmem:[#allocation9 + $0xf0] sm:$0xff] %vm320, %v1626
  %1660 = vst.msk [vmem:[#allocation9 + $0xf8] sm:$0xff] %vm320, %v1628
  %s1661 = scalar_lea.vmem [#allocation2], 268
  %v1662 = vld [vmem:[%s1661] ss:$2 sm:$0xff]
  %s1663 = scalar_lea.vmem [#allocation2], 284
  %v1664 = vld [vmem:[%s1663] ss:$2 sm:$0xff]
  %s1665 = scalar_lea.vmem [#allocation2], 300
  %v1666 = vld [vmem:[%s1665] ss:$2 sm:$0xff]
  %s1667 = scalar_lea.vmem [#allocation2], 316
  %v1668 = vld [vmem:[%s1667] ss:$2 sm:$0xff]
  %s1669 = scalar_lea.vmem [#allocation2], 332
  %v1670 = vld [vmem:[%s1669] ss:$2 sm:$0xff]
  %s1671 = scalar_lea.vmem [#allocation2], 348
  %v1672 = vld [vmem:[%s1671] ss:$2 sm:$0xff]
  %s1673 = scalar_lea.vmem [#allocation2], 364
  %v1674 = vld [vmem:[%s1673] ss:$2 sm:$0xff]
  %s1675 = scalar_lea.vmem [#allocation2], 380
  %v1676 = vld [vmem:[%s1675] ss:$2 sm:$0xff]
  %s1677 = scalar_lea.vmem [#allocation2], 396
  %v1678 = vld [vmem:[%s1677] ss:$2 sm:$0xff]
  %s1679 = scalar_lea.vmem [#allocation2], 412
  %v1680 = vld [vmem:[%s1679] ss:$2 sm:$0xff]
  %s1681 = scalar_lea.vmem [#allocation2], 428
  %v1682 = vld [vmem:[%s1681] ss:$2 sm:$0xff]
  %s1683 = scalar_lea.vmem [#allocation2], 444
  %v1684 = vld [vmem:[%s1683] ss:$2 sm:$0xff]
  %s1685 = scalar_lea.vmem [#allocation2], 460
  %v1686 = vld [vmem:[%s1685] ss:$2 sm:$0xff]
  %s1687 = scalar_lea.vmem [#allocation2], 476
  %v1688 = vld [vmem:[%s1687] ss:$2 sm:$0xff]
  %s1689 = scalar_lea.vmem [#allocation2], 492
  %v1690 = vld [vmem:[%s1689] ss:$2 sm:$0xff]
  %s1691 = scalar_lea.vmem [#allocation2], 508
  %v1692 = vld [vmem:[%s1691] ss:$2 sm:$0xff]
  %1709 = vrot.lane.b32.xlu0 %v1662, 2
  %v1710 = vpop.permute.xlu0 %1709
  %1711 = vrot.lane.b32.xlu0 %v1664, 2
  %v1712 = vpop.permute.xlu0 %1711
  %1713 = vrot.lane.b32.xlu0 %v1666, 2
  %v1714 = vpop.permute.xlu0 %1713
  %1715 = vrot.lane.b32.xlu0 %v1668, 2
  %v1716 = vpop.permute.xlu0 %1715
  %1717 = vrot.lane.b32.xlu0 %v1670, 2
  %v1718 = vpop.permute.xlu0 %1717
  %1719 = vrot.lane.b32.xlu0 %v1672, 2
  %v1720 = vpop.permute.xlu0 %1719
  %1721 = vrot.lane.b32.xlu0 %v1674, 2
  %v1722 = vpop.permute.xlu0 %1721
  %1723 = vrot.lane.b32.xlu0 %v1676, 2
  %v1724 = vpop.permute.xlu0 %1723
  %1725 = vrot.lane.b32.xlu0 %v1678, 2
  %v1726 = vpop.permute.xlu0 %1725
  %1727 = vrot.lane.b32.xlu0 %v1680, 2
  %v1728 = vpop.permute.xlu0 %1727
  %1729 = vrot.lane.b32.xlu0 %v1682, 2
  %v1730 = vpop.permute.xlu0 %1729
  %1731 = vrot.lane.b32.xlu0 %v1684, 2
  %v1732 = vpop.permute.xlu0 %1731
  %1733 = vrot.lane.b32.xlu0 %v1686, 2
  %v1734 = vpop.permute.xlu0 %1733
  %1735 = vrot.lane.b32.xlu0 %v1688, 2
  %v1736 = vpop.permute.xlu0 %1735
  %1737 = vrot.lane.b32.xlu0 %v1690, 2
  %v1738 = vpop.permute.xlu0 %1737
  %1739 = vrot.lane.b32.xlu0 %v1692, 2
  %v1740 = vpop.permute.xlu0 %1739
  %1757 = vst.msk [vmem:[#allocation9 + $0x80] sm:$0xff] %vm433, %v1710
  %1758 = vst.msk [vmem:[#allocation9 + $0x88] sm:$0xff] %vm433, %v1712
  %1759 = vst.msk [vmem:[#allocation9 + $0x90] sm:$0xff] %vm433, %v1714
  %1760 = vst.msk [vmem:[#allocation9 + $0x98] sm:$0xff] %vm433, %v1716
  %1761 = vst.msk [vmem:[#allocation9 + $0xa0] sm:$0xff] %vm433, %v1718
  %1762 = vst.msk [vmem:[#allocation9 + $0xa8] sm:$0xff] %vm433, %v1720
  %1763 = vst.msk [vmem:[#allocation9 + $0xb0] sm:$0xff] %vm433, %v1722
  %1764 = vst.msk [vmem:[#allocation9 + $0xb8] sm:$0xff] %vm433, %v1724
  %1765 = vst.msk [vmem:[#allocation9 + $0xc0] sm:$0xff] %vm433, %v1726
  %1766 = vst.msk [vmem:[#allocation9 + $0xc8] sm:$0xff] %vm433, %v1728
  %1767 = vst.msk [vmem:[#allocation9 + $0xd0] sm:$0xff] %vm433, %v1730
  %1768 = vst.msk [vmem:[#allocation9 + $0xd8] sm:$0xff] %vm433, %v1732
  %1769 = vst.msk [vmem:[#allocation9 + $0xe0] sm:$0xff] %vm433, %v1734
  %1770 = vst.msk [vmem:[#allocation9 + $0xe8] sm:$0xff] %vm433, %v1736
  %1771 = vst.msk [vmem:[#allocation9 + $0xf0] sm:$0xff] %vm433, %v1738
  %1772 = vst.msk [vmem:[#allocation9 + $0xf8] sm:$0xff] %vm433, %v1740
  %s1773 = scalar_lea.vmem [#allocation2], 269
  %v1774 = vld [vmem:[%s1773] ss:$2 sm:$0xff]
  %s1775 = scalar_lea.vmem [#allocation2], 285
  %v1776 = vld [vmem:[%s1775] ss:$2 sm:$0xff]
  %s1777 = scalar_lea.vmem [#allocation2], 301
  %v1778 = vld [vmem:[%s1777] ss:$2 sm:$0xff]
  %s1779 = scalar_lea.vmem [#allocation2], 317
  %v1780 = vld [vmem:[%s1779] ss:$2 sm:$0xff]
  %s1781 = scalar_lea.vmem [#allocation2], 333
  %v1782 = vld [vmem:[%s1781] ss:$2 sm:$0xff]
  %s1783 = scalar_lea.vmem [#allocation2], 349
  %v1784 = vld [vmem:[%s1783] ss:$2 sm:$0xff]
  %s1785 = scalar_lea.vmem [#allocation2], 365
  %v1786 = vld [vmem:[%s1785] ss:$2 sm:$0xff]
  %s1787 = scalar_lea.vmem [#allocation2], 381
  %v1788 = vld [vmem:[%s1787] ss:$2 sm:$0xff]
  %s1789 = scalar_lea.vmem [#allocation2], 397
  %v1790 = vld [vmem:[%s1789] ss:$2 sm:$0xff]
  %s1791 = scalar_lea.vmem [#allocation2], 413
  %v1792 = vld [vmem:[%s1791] ss:$2 sm:$0xff]
  %s1793 = scalar_lea.vmem [#allocation2], 429
  %v1794 = vld [vmem:[%s1793] ss:$2 sm:$0xff]
  %s1795 = scalar_lea.vmem [#allocation2], 445
  %v1796 = vld [vmem:[%s1795] ss:$2 sm:$0xff]
  %s1797 = scalar_lea.vmem [#allocation2], 461
  %v1798 = vld [vmem:[%s1797] ss:$2 sm:$0xff]
  %s1799 = scalar_lea.vmem [#allocation2], 477
  %v1800 = vld [vmem:[%s1799] ss:$2 sm:$0xff]
  %s1801 = scalar_lea.vmem [#allocation2], 493
  %v1802 = vld [vmem:[%s1801] ss:$2 sm:$0xff]
  %s1803 = scalar_lea.vmem [#allocation2], 509
  %v1804 = vld [vmem:[%s1803] ss:$2 sm:$0xff]
  %1821 = vrot.lane.b32.xlu0 %v1774, 3
  %v1822 = vpop.permute.xlu0 %1821
  %1823 = vrot.lane.b32.xlu0 %v1776, 3
  %v1824 = vpop.permute.xlu0 %1823
  %1825 = vrot.lane.b32.xlu0 %v1778, 3
  %v1826 = vpop.permute.xlu0 %1825
  %1827 = vrot.lane.b32.xlu0 %v1780, 3
  %v1828 = vpop.permute.xlu0 %1827
  %1829 = vrot.lane.b32.xlu0 %v1782, 3
  %v1830 = vpop.permute.xlu0 %1829
  %1831 = vrot.lane.b32.xlu0 %v1784, 3
  %v1832 = vpop.permute.xlu0 %1831
  %1833 = vrot.lane.b32.xlu0 %v1786, 3
  %v1834 = vpop.permute.xlu0 %1833
  %1835 = vrot.lane.b32.xlu0 %v1788, 3
  %v1836 = vpop.permute.xlu0 %1835
  %1837 = vrot.lane.b32.xlu0 %v1790, 3
  %v1838 = vpop.permute.xlu0 %1837
  %1839 = vrot.lane.b32.xlu0 %v1792, 3
  %v1840 = vpop.permute.xlu0 %1839
  %1841 = vrot.lane.b32.xlu0 %v1794, 3
  %v1842 = vpop.permute.xlu0 %1841
  %1843 = vrot.lane.b32.xlu0 %v1796, 3
  %v1844 = vpop.permute.xlu0 %1843
  %1845 = vrot.lane.b32.xlu0 %v1798, 3
  %v1846 = vpop.permute.xlu0 %1845
  %1847 = vrot.lane.b32.xlu0 %v1800, 3
  %v1848 = vpop.permute.xlu0 %1847
  %1849 = vrot.lane.b32.xlu0 %v1802, 3
  %v1850 = vpop.permute.xlu0 %1849
  %1851 = vrot.lane.b32.xlu0 %v1804, 3
  %v1852 = vpop.permute.xlu0 %1851
  %1869 = vst.msk [vmem:[#allocation9 + $0x80] sm:$0xff] %vm546, %v1822
  %1870 = vst.msk [vmem:[#allocation9 + $0x88] sm:$0xff] %vm546, %v1824
  %1871 = vst.msk [vmem:[#allocation9 + $0x90] sm:$0xff] %vm546, %v1826
  %1872 = vst.msk [vmem:[#allocation9 + $0x98] sm:$0xff] %vm546, %v1828
  %1873 = vst.msk [vmem:[#allocation9 + $0xa0] sm:$0xff] %vm546, %v1830
  %1874 = vst.msk [vmem:[#allocation9 + $0xa8] sm:$0xff] %vm546, %v1832
  %1875 = vst.msk [vmem:[#allocation9 + $0xb0] sm:$0xff] %vm546, %v1834
  %1876 = vst.msk [vmem:[#allocation9 + $0xb8] sm:$0xff] %vm546, %v1836
  %1877 = vst.msk [vmem:[#allocation9 + $0xc0] sm:$0xff] %vm546, %v1838
  %1878 = vst.msk [vmem:[#allocation9 + $0xc8] sm:$0xff] %vm546, %v1840
  %1879 = vst.msk [vmem:[#allocation9 + $0xd0] sm:$0xff] %vm546, %v1842
  %1880 = vst.msk [vmem:[#allocation9 + $0xd8] sm:$0xff] %vm546, %v1844
  %1881 = vst.msk [vmem:[#allocation9 + $0xe0] sm:$0xff] %vm546, %v1846
  %1882 = vst.msk [vmem:[#allocation9 + $0xe8] sm:$0xff] %vm546, %v1848
  %1883 = vst.msk [vmem:[#allocation9 + $0xf0] sm:$0xff] %vm546, %v1850
  %1884 = vst.msk [vmem:[#allocation9 + $0xf8] sm:$0xff] %vm546, %v1852
  %s1885 = scalar_lea.vmem [#allocation2], 270
  %v1886 = vld [vmem:[%s1885] ss:$2 sm:$0xff]
  %s1887 = scalar_lea.vmem [#allocation2], 286
  %v1888 = vld [vmem:[%s1887] ss:$2 sm:$0xff]
  %s1889 = scalar_lea.vmem [#allocation2], 302
  %v1890 = vld [vmem:[%s1889] ss:$2 sm:$0xff]
  %s1891 = scalar_lea.vmem [#allocation2], 318
  %v1892 = vld [vmem:[%s1891] ss:$2 sm:$0xff]
  %s1893 = scalar_lea.vmem [#allocation2], 334
  %v1894 = vld [vmem:[%s1893] ss:$2 sm:$0xff]
  %s1895 = scalar_lea.vmem [#allocation2], 350
  %v1896 = vld [vmem:[%s1895] ss:$2 sm:$0xff]
  %s1897 = scalar_lea.vmem [#allocation2], 366
  %v1898 = vld [vmem:[%s1897] ss:$2 sm:$0xff]
  %s1899 = scalar_lea.vmem [#allocation2], 382
  %v1900 = vld [vmem:[%s1899] ss:$2 sm:$0xff]
  %s1901 = scalar_lea.vmem [#allocation2], 398
  %v1902 = vld [vmem:[%s1901] ss:$2 sm:$0xff]
  %s1903 = scalar_lea.vmem [#allocation2], 414
  %v1904 = vld [vmem:[%s1903] ss:$2 sm:$0xff]
  %s1905 = scalar_lea.vmem [#allocation2], 430
  %v1906 = vld [vmem:[%s1905] ss:$2 sm:$0xff]
  %s1907 = scalar_lea.vmem [#allocation2], 446
  %v1908 = vld [vmem:[%s1907] ss:$2 sm:$0xff]
  %s1909 = scalar_lea.vmem [#allocation2], 462
  %v1910 = vld [vmem:[%s1909] ss:$2 sm:$0xff]
  %s1911 = scalar_lea.vmem [#allocation2], 478
  %v1912 = vld [vmem:[%s1911] ss:$2 sm:$0xff]
  %s1913 = scalar_lea.vmem [#allocation2], 494
  %v1914 = vld [vmem:[%s1913] ss:$2 sm:$0xff]
  %s1915 = scalar_lea.vmem [#allocation2], 510
  %v1916 = vld [vmem:[%s1915] ss:$2 sm:$0xff]
  %1933 = vrot.lane.b32.xlu0 %v1886, 4
  %v1934 = vpop.permute.xlu0 %1933
  %1935 = vrot.lane.b32.xlu0 %v1888, 4
  %v1936 = vpop.permute.xlu0 %1935
  %1937 = vrot.lane.b32.xlu0 %v1890, 4
  %v1938 = vpop.permute.xlu0 %1937
  %1939 = vrot.lane.b32.xlu0 %v1892, 4
  %v1940 = vpop.permute.xlu0 %1939
  %1941 = vrot.lane.b32.xlu0 %v1894, 4
  %v1942 = vpop.permute.xlu0 %1941
  %1943 = vrot.lane.b32.xlu0 %v1896, 4
  %v1944 = vpop.permute.xlu0 %1943
  %1945 = vrot.lane.b32.xlu0 %v1898, 4
  %v1946 = vpop.permute.xlu0 %1945
  %1947 = vrot.lane.b32.xlu0 %v1900, 4
  %v1948 = vpop.permute.xlu0 %1947
  %1949 = vrot.lane.b32.xlu0 %v1902, 4
  %v1950 = vpop.permute.xlu0 %1949
  %1951 = vrot.lane.b32.xlu0 %v1904, 4
  %v1952 = vpop.permute.xlu0 %1951
  %1953 = vrot.lane.b32.xlu0 %v1906, 4
  %v1954 = vpop.permute.xlu0 %1953
  %1955 = vrot.lane.b32.xlu0 %v1908, 4
  %v1956 = vpop.permute.xlu0 %1955
  %1957 = vrot.lane.b32.xlu0 %v1910, 4
  %v1958 = vpop.permute.xlu0 %1957
  %1959 = vrot.lane.b32.xlu0 %v1912, 4
  %v1960 = vpop.permute.xlu0 %1959
  %1961 = vrot.lane.b32.xlu0 %v1914, 4
  %v1962 = vpop.permute.xlu0 %1961
  %1963 = vrot.lane.b32.xlu0 %v1916, 4
  %v1964 = vpop.permute.xlu0 %1963
  %1981 = vst.msk [vmem:[#allocation9 + $0x80] sm:$0xff] %vm659, %v1934
  %1982 = vst.msk [vmem:[#allocation9 + $0x88] sm:$0xff] %vm659, %v1936
  %1983 = vst.msk [vmem:[#allocation9 + $0x90] sm:$0xff] %vm659, %v1938
  %1984 = vst.msk [vmem:[#allocation9 + $0x98] sm:$0xff] %vm659, %v1940
  %1985 = vst.msk [vmem:[#allocation9 + $0xa0] sm:$0xff] %vm659, %v1942
  %1986 = vst.msk [vmem:[#allocation9 + $0xa8] sm:$0xff] %vm659, %v1944
  %1987 = vst.msk [vmem:[#allocation9 + $0xb0] sm:$0xff] %vm659, %v1946
  %1988 = vst.msk [vmem:[#allocation9 + $0xb8] sm:$0xff] %vm659, %v1948
  %1989 = vst.msk [vmem:[#allocation9 + $0xc0] sm:$0xff] %vm659, %v1950
  %1990 = vst.msk [vmem:[#allocation9 + $0xc8] sm:$0xff] %vm659, %v1952
  %1991 = vst.msk [vmem:[#allocation9 + $0xd0] sm:$0xff] %vm659, %v1954
  %1992 = vst.msk [vmem:[#allocation9 + $0xd8] sm:$0xff] %vm659, %v1956
  %1993 = vst.msk [vmem:[#allocation9 + $0xe0] sm:$0xff] %vm659, %v1958
  %1994 = vst.msk [vmem:[#allocation9 + $0xe8] sm:$0xff] %vm659, %v1960
  %1995 = vst.msk [vmem:[#allocation9 + $0xf0] sm:$0xff] %vm659, %v1962
  %1996 = vst.msk [vmem:[#allocation9 + $0xf8] sm:$0xff] %vm659, %v1964
  %s1997 = scalar_lea.vmem [#allocation2], 271
  %v1998 = vld [vmem:[%s1997] ss:$2 sm:$0xff]
  %s1999 = scalar_lea.vmem [#allocation2], 287
  %v2000 = vld [vmem:[%s1999] ss:$2 sm:$0xff]
  %s2001 = scalar_lea.vmem [#allocation2], 303
  %v2002 = vld [vmem:[%s2001] ss:$2 sm:$0xff]
  %s2003 = scalar_lea.vmem [#allocation2], 319
  %v2004 = vld [vmem:[%s2003] ss:$2 sm:$0xff]
  %s2005 = scalar_lea.vmem [#allocation2], 335
  %v2006 = vld [vmem:[%s2005] ss:$2 sm:$0xff]
  %s2007 = scalar_lea.vmem [#allocation2], 351
  %v2008 = vld [vmem:[%s2007] ss:$2 sm:$0xff]
  %s2009 = scalar_lea.vmem [#allocation2], 367
  %v2010 = vld [vmem:[%s2009] ss:$2 sm:$0xff]
  %s2011 = scalar_lea.vmem [#allocation2], 383
  %v2012 = vld [vmem:[%s2011] ss:$2 sm:$0xff]
  %s2013 = scalar_lea.vmem [#allocation2], 399
  %v2014 = vld [vmem:[%s2013] ss:$2 sm:$0xff]
  %s2015 = scalar_lea.vmem [#allocation2], 415
  %v2016 = vld [vmem:[%s2015] ss:$2 sm:$0xff]
  %s2017 = scalar_lea.vmem [#allocation2], 431
  %v2018 = vld [vmem:[%s2017] ss:$2 sm:$0xff]
  %s2019 = scalar_lea.vmem [#allocation2], 447
  %v2020 = vld [vmem:[%s2019] ss:$2 sm:$0xff]
  %s2021 = scalar_lea.vmem [#allocation2], 463
  %v2022 = vld [vmem:[%s2021] ss:$2 sm:$0xff]
  %s2023 = scalar_lea.vmem [#allocation2], 479
  %v2024 = vld [vmem:[%s2023] ss:$2 sm:$0xff]
  %s2025 = scalar_lea.vmem [#allocation2], 495
  %v2026 = vld [vmem:[%s2025] ss:$2 sm:$0xff]
  %s2027 = scalar_lea.vmem [#allocation2], 511
  %v2028 = vld [vmem:[%s2027] ss:$2 sm:$0xff]
  %2045 = vrot.lane.b32.xlu0 %v1998, 5
  %v2046 = vpop.permute.xlu0 %2045
  %2047 = vrot.lane.b32.xlu0 %v2000, 5
  %v2048 = vpop.permute.xlu0 %2047
  %2049 = vrot.lane.b32.xlu0 %v2002, 5
  %v2050 = vpop.permute.xlu0 %2049
  %2051 = vrot.lane.b32.xlu0 %v2004, 5
  %v2052 = vpop.permute.xlu0 %2051
  %2053 = vrot.lane.b32.xlu0 %v2006, 5
  %v2054 = vpop.permute.xlu0 %2053
  %2055 = vrot.lane.b32.xlu0 %v2008, 5
  %v2056 = vpop.permute.xlu0 %2055
  %2057 = vrot.lane.b32.xlu0 %v2010, 5
  %v2058 = vpop.permute.xlu0 %2057
  %2059 = vrot.lane.b32.xlu0 %v2012, 5
  %v2060 = vpop.permute.xlu0 %2059
  %2061 = vrot.lane.b32.xlu0 %v2014, 5
  %v2062 = vpop.permute.xlu0 %2061
  %2063 = vrot.lane.b32.xlu0 %v2016, 5
  %v2064 = vpop.permute.xlu0 %2063
  %2065 = vrot.lane.b32.xlu0 %v2018, 5
  %v2066 = vpop.permute.xlu0 %2065
  %2067 = vrot.lane.b32.xlu0 %v2020, 5
  %v2068 = vpop.permute.xlu0 %2067
  %2069 = vrot.lane.b32.xlu0 %v2022, 5
  %v2070 = vpop.permute.xlu0 %2069
  %2071 = vrot.lane.b32.xlu0 %v2024, 5
  %v2072 = vpop.permute.xlu0 %2071
  %2073 = vrot.lane.b32.xlu0 %v2026, 5
  %v2074 = vpop.permute.xlu0 %2073
  %2075 = vrot.lane.b32.xlu0 %v2028, 5
  %v2076 = vpop.permute.xlu0 %2075
  %2093 = vst.msk [vmem:[#allocation9 + $0x80] sm:$0xff] %vm772, %v2046
  %2094 = vst.msk [vmem:[#allocation9 + $0x88] sm:$0xff] %vm772, %v2048
  %2095 = vst.msk [vmem:[#allocation9 + $0x90] sm:$0xff] %vm772, %v2050
  %2096 = vst.msk [vmem:[#allocation9 + $0x98] sm:$0xff] %vm772, %v2052
  %2097 = vst.msk [vmem:[#allocation9 + $0xa0] sm:$0xff] %vm772, %v2054
  %2098 = vst.msk [vmem:[#allocation9 + $0xa8] sm:$0xff] %vm772, %v2056
  %2099 = vst.msk [vmem:[#allocation9 + $0xb0] sm:$0xff] %vm772, %v2058
  %2100 = vst.msk [vmem:[#allocation9 + $0xb8] sm:$0xff] %vm772, %v2060
  %2101 = vst.msk [vmem:[#allocation9 + $0xc0] sm:$0xff] %vm772, %v2062
  %2102 = vst.msk [vmem:[#allocation9 + $0xc8] sm:$0xff] %vm772, %v2064
  %2103 = vst.msk [vmem:[#allocation9 + $0xd0] sm:$0xff] %vm772, %v2066
  %2104 = vst.msk [vmem:[#allocation9 + $0xd8] sm:$0xff] %vm772, %v2068
  %2105 = vst.msk [vmem:[#allocation9 + $0xe0] sm:$0xff] %vm772, %v2070
  %2106 = vst.msk [vmem:[#allocation9 + $0xe8] sm:$0xff] %vm772, %v2072
  %2107 = vst.msk [vmem:[#allocation9 + $0xf0] sm:$0xff] %vm772, %v2074
  %2108 = vst.msk [vmem:[#allocation9 + $0xf8] sm:$0xff] %vm772, %v2076
  %s2109 = scalar_lea.vmem [#allocation2], 272
  %v2110 = vld [vmem:[%s2109] ss:$2 sm:$0xff]
  %s2111 = scalar_lea.vmem [#allocation2], 288
  %v2112 = vld [vmem:[%s2111] ss:$2 sm:$0xff]
  %s2113 = scalar_lea.vmem [#allocation2], 304
  %v2114 = vld [vmem:[%s2113] ss:$2 sm:$0xff]
  %s2115 = scalar_lea.vmem [#allocation2], 320
  %v2116 = vld [vmem:[%s2115] ss:$2 sm:$0xff]
  %s2117 = scalar_lea.vmem [#allocation2], 336
  %v2118 = vld [vmem:[%s2117] ss:$2 sm:$0xff]
  %s2119 = scalar_lea.vmem [#allocation2], 352
  %v2120 = vld [vmem:[%s2119] ss:$2 sm:$0xff]
  %s2121 = scalar_lea.vmem [#allocation2], 368
  %v2122 = vld [vmem:[%s2121] ss:$2 sm:$0xff]
  %s2123 = scalar_lea.vmem [#allocation2], 384
  %v2124 = vld [vmem:[%s2123] ss:$2 sm:$0xff]
  %s2125 = scalar_lea.vmem [#allocation2], 400
  %v2126 = vld [vmem:[%s2125] ss:$2 sm:$0xff]
  %s2127 = scalar_lea.vmem [#allocation2], 416
  %v2128 = vld [vmem:[%s2127] ss:$2 sm:$0xff]
  %s2129 = scalar_lea.vmem [#allocation2], 432
  %v2130 = vld [vmem:[%s2129] ss:$2 sm:$0xff]
  %s2131 = scalar_lea.vmem [#allocation2], 448
  %v2132 = vld [vmem:[%s2131] ss:$2 sm:$0xff]
  %s2133 = scalar_lea.vmem [#allocation2], 464
  %v2134 = vld [vmem:[%s2133] ss:$2 sm:$0xff]
  %s2135 = scalar_lea.vmem [#allocation2], 480
  %v2136 = vld [vmem:[%s2135] ss:$2 sm:$0xff]
  %s2137 = scalar_lea.vmem [#allocation2], 496
  %v2138 = vld [vmem:[%s2137] ss:$2 sm:$0xff]
  %s2139 = scalar_lea.vmem [#allocation2], 512
  %v2140 = vld [vmem:[%s2139] ss:$2 sm:$0xff]
  %2157 = vrot.lane.b32.xlu0 %v2110, 6
  %v2158 = vpop.permute.xlu0 %2157
  %2159 = vrot.lane.b32.xlu0 %v2112, 6
  %v2160 = vpop.permute.xlu0 %2159
  %2161 = vrot.lane.b32.xlu0 %v2114, 6
  %v2162 = vpop.permute.xlu0 %2161
  %2163 = vrot.lane.b32.xlu0 %v2116, 6
  %v2164 = vpop.permute.xlu0 %2163
  %2165 = vrot.lane.b32.xlu0 %v2118, 6
  %v2166 = vpop.permute.xlu0 %2165
  %2167 = vrot.lane.b32.xlu0 %v2120, 6
  %v2168 = vpop.permute.xlu0 %2167
  %2169 = vrot.lane.b32.xlu0 %v2122, 6
  %v2170 = vpop.permute.xlu0 %2169
  %2171 = vrot.lane.b32.xlu0 %v2124, 6
  %v2172 = vpop.permute.xlu0 %2171
  %2173 = vrot.lane.b32.xlu0 %v2126, 6
  %v2174 = vpop.permute.xlu0 %2173
  %2175 = vrot.lane.b32.xlu0 %v2128, 6
  %v2176 = vpop.permute.xlu0 %2175
  %2177 = vrot.lane.b32.xlu0 %v2130, 6
  %v2178 = vpop.permute.xlu0 %2177
  %2179 = vrot.lane.b32.xlu0 %v2132, 6
  %v2180 = vpop.permute.xlu0 %2179
  %2181 = vrot.lane.b32.xlu0 %v2134, 6
  %v2182 = vpop.permute.xlu0 %2181
  %2183 = vrot.lane.b32.xlu0 %v2136, 6
  %v2184 = vpop.permute.xlu0 %2183
  %2185 = vrot.lane.b32.xlu0 %v2138, 6
  %v2186 = vpop.permute.xlu0 %2185
  %2187 = vrot.lane.b32.xlu0 %v2140, 6
  %v2188 = vpop.permute.xlu0 %2187
  %2205 = vst.msk [vmem:[#allocation9 + $0x80] sm:$0xff] %vm885, %v2158
  %2206 = vst.msk [vmem:[#allocation9 + $0x88] sm:$0xff] %vm885, %v2160
  %2207 = vst.msk [vmem:[#allocation9 + $0x90] sm:$0xff] %vm885, %v2162
  %2208 = vst.msk [vmem:[#allocation9 + $0x98] sm:$0xff] %vm885, %v2164
  %2209 = vst.msk [vmem:[#allocation9 + $0xa0] sm:$0xff] %vm885, %v2166
  %2210 = vst.msk [vmem:[#allocation9 + $0xa8] sm:$0xff] %vm885, %v2168
  %2211 = vst.msk [vmem:[#allocation9 + $0xb0] sm:$0xff] %vm885, %v2170
  %2212 = vst.msk [vmem:[#allocation9 + $0xb8] sm:$0xff] %vm885, %v2172
  %2213 = vst.msk [vmem:[#allocation9 + $0xc0] sm:$0xff] %vm885, %v2174
  %2214 = vst.msk [vmem:[#allocation9 + $0xc8] sm:$0xff] %vm885, %v2176
  %2215 = vst.msk [vmem:[#allocation9 + $0xd0] sm:$0xff] %vm885, %v2178
  %2216 = vst.msk [vmem:[#allocation9 + $0xd8] sm:$0xff] %vm885, %v2180
  %2217 = vst.msk [vmem:[#allocation9 + $0xe0] sm:$0xff] %vm885, %v2182
  %2218 = vst.msk [vmem:[#allocation9 + $0xe8] sm:$0xff] %vm885, %v2184
  %2219 = vst.msk [vmem:[#allocation9 + $0xf0] sm:$0xff] %vm885, %v2186
  %2220 = vst.msk [vmem:[#allocation9 + $0xf8] sm:$0xff] %vm885, %v2188
  %s2221 = scalar_lea.vmem [#allocation2], 273
  %v2222 = vld [vmem:[%s2221] ss:$2 sm:$0xff]
  %s2223 = scalar_lea.vmem [#allocation2], 289
  %v2224 = vld [vmem:[%s2223] ss:$2 sm:$0xff]
  %s2225 = scalar_lea.vmem [#allocation2], 305
  %v2226 = vld [vmem:[%s2225] ss:$2 sm:$0xff]
  %s2227 = scalar_lea.vmem [#allocation2], 321
  %v2228 = vld [vmem:[%s2227] ss:$2 sm:$0xff]
  %s2229 = scalar_lea.vmem [#allocation2], 337
  %v2230 = vld [vmem:[%s2229] ss:$2 sm:$0xff]
  %s2231 = scalar_lea.vmem [#allocation2], 353
  %v2232 = vld [vmem:[%s2231] ss:$2 sm:$0xff]
  %s2233 = scalar_lea.vmem [#allocation2], 369
  %v2234 = vld [vmem:[%s2233] ss:$2 sm:$0xff]
  %s2235 = scalar_lea.vmem [#allocation2], 385
  %v2236 = vld [vmem:[%s2235] ss:$2 sm:$0xff]
  %s2237 = scalar_lea.vmem [#allocation2], 401
  %v2238 = vld [vmem:[%s2237] ss:$2 sm:$0xff]
  %s2239 = scalar_lea.vmem [#allocation2], 417
  %v2240 = vld [vmem:[%s2239] ss:$2 sm:$0xff]
  %s2241 = scalar_lea.vmem [#allocation2], 433
  %v2242 = vld [vmem:[%s2241] ss:$2 sm:$0xff]
  %s2243 = scalar_lea.vmem [#allocation2], 449
  %v2244 = vld [vmem:[%s2243] ss:$2 sm:$0xff]
  %s2245 = scalar_lea.vmem [#allocation2], 465
  %v2246 = vld [vmem:[%s2245] ss:$2 sm:$0xff]
  %s2247 = scalar_lea.vmem [#allocation2], 481
  %v2248 = vld [vmem:[%s2247] ss:$2 sm:$0xff]
  %s2249 = scalar_lea.vmem [#allocation2], 497
  %v2250 = vld [vmem:[%s2249] ss:$2 sm:$0xff]
  %s2251 = scalar_lea.vmem [#allocation2], 513
  %v2252 = vld [vmem:[%s2251] ss:$2 sm:$0xff]
  %2269 = vrot.lane.b32.xlu0 %v2222, 7
  %v2270 = vpop.permute.xlu0 %2269
  %2271 = vrot.lane.b32.xlu0 %v2224, 7
  %v2272 = vpop.permute.xlu0 %2271
  %2273 = vrot.lane.b32.xlu0 %v2226, 7
  %v2274 = vpop.permute.xlu0 %2273
  %2275 = vrot.lane.b32.xlu0 %v2228, 7
  %v2276 = vpop.permute.xlu0 %2275
  %2277 = vrot.lane.b32.xlu0 %v2230, 7
  %v2278 = vpop.permute.xlu0 %2277
  %2279 = vrot.lane.b32.xlu0 %v2232, 7
  %v2280 = vpop.permute.xlu0 %2279
  %2281 = vrot.lane.b32.xlu0 %v2234, 7
  %v2282 = vpop.permute.xlu0 %2281
  %2283 = vrot.lane.b32.xlu0 %v2236, 7
  %v2284 = vpop.permute.xlu0 %2283
  %2285 = vrot.lane.b32.xlu0 %v2238, 7
  %v2286 = vpop.permute.xlu0 %2285
  %2287 = vrot.lane.b32.xlu0 %v2240, 7
  %v2288 = vpop.permute.xlu0 %2287
  %2289 = vrot.lane.b32.xlu0 %v2242, 7
  %v2290 = vpop.permute.xlu0 %2289
  %2291 = vrot.lane.b32.xlu0 %v2244, 7
  %v2292 = vpop.permute.xlu0 %2291
  %2293 = vrot.lane.b32.xlu0 %v2246, 7
  %v2294 = vpop.permute.xlu0 %2293
  %2295 = vrot.lane.b32.xlu0 %v2248, 7
  %v2296 = vpop.permute.xlu0 %2295
  %2297 = vrot.lane.b32.xlu0 %v2250, 7
  %v2298 = vpop.permute.xlu0 %2297
  %2299 = vrot.lane.b32.xlu0 %v2252, 7
  %v2300 = vpop.permute.xlu0 %2299
  %2317 = vst.msk [vmem:[#allocation9 + $0x80] sm:$0xff] %vm998, %v2270
  %2318 = vst.msk [vmem:[#allocation9 + $0x88] sm:$0xff] %vm998, %v2272
  %2319 = vst.msk [vmem:[#allocation9 + $0x90] sm:$0xff] %vm998, %v2274
  %2320 = vst.msk [vmem:[#allocation9 + $0x98] sm:$0xff] %vm998, %v2276
  %2321 = vst.msk [vmem:[#allocation9 + $0xa0] sm:$0xff] %vm998, %v2278
  %2322 = vst.msk [vmem:[#allocation9 + $0xa8] sm:$0xff] %vm998, %v2280
  %2323 = vst.msk [vmem:[#allocation9 + $0xb0] sm:$0xff] %vm998, %v2282
  %2324 = vst.msk [vmem:[#allocation9 + $0xb8] sm:$0xff] %vm998, %v2284
  %2325 = vst.msk [vmem:[#allocation9 + $0xc0] sm:$0xff] %vm998, %v2286
  %2326 = vst.msk [vmem:[#allocation9 + $0xc8] sm:$0xff] %vm998, %v2288
  %2327 = vst.msk [vmem:[#allocation9 + $0xd0] sm:$0xff] %vm998, %v2290
  %2328 = vst.msk [vmem:[#allocation9 + $0xd8] sm:$0xff] %vm998, %v2292
  %2329 = vst.msk [vmem:[#allocation9 + $0xe0] sm:$0xff] %vm998, %v2294
  %2330 = vst.msk [vmem:[#allocation9 + $0xe8] sm:$0xff] %vm998, %v2296
  %2331 = vst.msk [vmem:[#allocation9 + $0xf0] sm:$0xff] %vm998, %v2298
  %2332 = vst.msk [vmem:[#allocation9 + $0xf8] sm:$0xff] %vm998, %v2300
  %s2333 = scalar_lea.vmem [#allocation2], 274
  %v2334 = vld [vmem:[%s2333] ss:$2 sm:$0xff]
  %s2335 = scalar_lea.vmem [#allocation2], 290
  %v2336 = vld [vmem:[%s2335] ss:$2 sm:$0xff]
  %s2337 = scalar_lea.vmem [#allocation2], 306
  %v2338 = vld [vmem:[%s2337] ss:$2 sm:$0xff]
  %s2339 = scalar_lea.vmem [#allocation2], 322
  %v2340 = vld [vmem:[%s2339] ss:$2 sm:$0xff]
  %s2341 = scalar_lea.vmem [#allocation2], 338
  %v2342 = vld [vmem:[%s2341] ss:$2 sm:$0xff]
  %s2343 = scalar_lea.vmem [#allocation2], 354
  %v2344 = vld [vmem:[%s2343] ss:$2 sm:$0xff]
  %s2345 = scalar_lea.vmem [#allocation2], 370
  %v2346 = vld [vmem:[%s2345] ss:$2 sm:$0xff]
  %s2347 = scalar_lea.vmem [#allocation2], 386
  %v2348 = vld [vmem:[%s2347] ss:$2 sm:$0xff]
  %s2349 = scalar_lea.vmem [#allocation2], 402
  %v2350 = vld [vmem:[%s2349] ss:$2 sm:$0xff]
  %s2351 = scalar_lea.vmem [#allocation2], 418
  %v2352 = vld [vmem:[%s2351] ss:$2 sm:$0xff]
  %s2353 = scalar_lea.vmem [#allocation2], 434
  %v2354 = vld [vmem:[%s2353] ss:$2 sm:$0xff]
  %s2355 = scalar_lea.vmem [#allocation2], 450
  %v2356 = vld [vmem:[%s2355] ss:$2 sm:$0xff]
  %s2357 = scalar_lea.vmem [#allocation2], 466
  %v2358 = vld [vmem:[%s2357] ss:$2 sm:$0xff]
  %s2359 = scalar_lea.vmem [#allocation2], 482
  %v2360 = vld [vmem:[%s2359] ss:$2 sm:$0xff]
  %s2361 = scalar_lea.vmem [#allocation2], 498
  %v2362 = vld [vmem:[%s2361] ss:$2 sm:$0xff]
  %s2363 = scalar_lea.vmem [#allocation2], 514
  %v2364 = vld [vmem:[%s2363] ss:$2 sm:$0xff]
  %2381 = vrot.lane.b32.xlu0 %v2334, 8
  %v2382 = vpop.permute.xlu0 %2381
  %2383 = vrot.lane.b32.xlu0 %v2336, 8
  %v2384 = vpop.permute.xlu0 %2383
  %2385 = vrot.lane.b32.xlu0 %v2338, 8
  %v2386 = vpop.permute.xlu0 %2385
  %2387 = vrot.lane.b32.xlu0 %v2340, 8
  %v2388 = vpop.permute.xlu0 %2387
  %2389 = vrot.lane.b32.xlu0 %v2342, 8
  %v2390 = vpop.permute.xlu0 %2389
  %2391 = vrot.lane.b32.xlu0 %v2344, 8
  %v2392 = vpop.permute.xlu0 %2391
  %2393 = vrot.lane.b32.xlu0 %v2346, 8
  %v2394 = vpop.permute.xlu0 %2393
  %2395 = vrot.lane.b32.xlu0 %v2348, 8
  %v2396 = vpop.permute.xlu0 %2395
  %2397 = vrot.lane.b32.xlu0 %v2350, 8
  %v2398 = vpop.permute.xlu0 %2397
  %2399 = vrot.lane.b32.xlu0 %v2352, 8
  %v2400 = vpop.permute.xlu0 %2399
  %2401 = vrot.lane.b32.xlu0 %v2354, 8
  %v2402 = vpop.permute.xlu0 %2401
  %2403 = vrot.lane.b32.xlu0 %v2356, 8
  %v2404 = vpop.permute.xlu0 %2403
  %2405 = vrot.lane.b32.xlu0 %v2358, 8
  %v2406 = vpop.permute.xlu0 %2405
  %2407 = vrot.lane.b32.xlu0 %v2360, 8
  %v2408 = vpop.permute.xlu0 %2407
  %2409 = vrot.lane.b32.xlu0 %v2362, 8
  %v2410 = vpop.permute.xlu0 %2409
  %2411 = vrot.lane.b32.xlu0 %v2364, 8
  %v2412 = vpop.permute.xlu0 %2411
  %2429 = vst.msk [vmem:[#allocation9 + $0x80] sm:$0xff] %vm1111, %v2382
  %2430 = vst.msk [vmem:[#allocation9 + $0x88] sm:$0xff] %vm1111, %v2384
  %2431 = vst.msk [vmem:[#allocation9 + $0x90] sm:$0xff] %vm1111, %v2386
  %2432 = vst.msk [vmem:[#allocation9 + $0x98] sm:$0xff] %vm1111, %v2388
  %2433 = vst.msk [vmem:[#allocation9 + $0xa0] sm:$0xff] %vm1111, %v2390
  %2434 = vst.msk [vmem:[#allocation9 + $0xa8] sm:$0xff] %vm1111, %v2392
  %2435 = vst.msk [vmem:[#allocation9 + $0xb0] sm:$0xff] %vm1111, %v2394
  %2436 = vst.msk [vmem:[#allocation9 + $0xb8] sm:$0xff] %vm1111, %v2396
  %2437 = vst.msk [vmem:[#allocation9 + $0xc0] sm:$0xff] %vm1111, %v2398
  %2438 = vst.msk [vmem:[#allocation9 + $0xc8] sm:$0xff] %vm1111, %v2400
  %2439 = vst.msk [vmem:[#allocation9 + $0xd0] sm:$0xff] %vm1111, %v2402
  %2440 = vst.msk [vmem:[#allocation9 + $0xd8] sm:$0xff] %vm1111, %v2404
  %2441 = vst.msk [vmem:[#allocation9 + $0xe0] sm:$0xff] %vm1111, %v2406
  %2442 = vst.msk [vmem:[#allocation9 + $0xe8] sm:$0xff] %vm1111, %v2408
  %2443 = vst.msk [vmem:[#allocation9 + $0xf0] sm:$0xff] %vm1111, %v2410
  %2444 = vst.msk [vmem:[#allocation9 + $0xf8] sm:$0xff] %vm1111, %v2412
  %s2445 = scalar_lea.vmem [#allocation2], 275
  %v2446 = vld [vmem:[%s2445] ss:$2 sm:$0xff]
  %s2447 = scalar_lea.vmem [#allocation2], 291
  %v2448 = vld [vmem:[%s2447] ss:$2 sm:$0xff]
  %s2449 = scalar_lea.vmem [#allocation2], 307
  %v2450 = vld [vmem:[%s2449] ss:$2 sm:$0xff]
  %s2451 = scalar_lea.vmem [#allocation2], 323
  %v2452 = vld [vmem:[%s2451] ss:$2 sm:$0xff]
  %s2453 = scalar_lea.vmem [#allocation2], 339
  %v2454 = vld [vmem:[%s2453] ss:$2 sm:$0xff]
  %s2455 = scalar_lea.vmem [#allocation2], 355
  %v2456 = vld [vmem:[%s2455] ss:$2 sm:$0xff]
  %s2457 = scalar_lea.vmem [#allocation2], 371
  %v2458 = vld [vmem:[%s2457] ss:$2 sm:$0xff]
  %s2459 = scalar_lea.vmem [#allocation2], 387
  %v2460 = vld [vmem:[%s2459] ss:$2 sm:$0xff]
  %s2461 = scalar_lea.vmem [#allocation2], 403
  %v2462 = vld [vmem:[%s2461] ss:$2 sm:$0xff]
  %s2463 = scalar_lea.vmem [#allocation2], 419
  %v2464 = vld [vmem:[%s2463] ss:$2 sm:$0xff]
  %s2465 = scalar_lea.vmem [#allocation2], 435
  %v2466 = vld [vmem:[%s2465] ss:$2 sm:$0xff]
  %s2467 = scalar_lea.vmem [#allocation2], 451
  %v2468 = vld [vmem:[%s2467] ss:$2 sm:$0xff]
  %s2469 = scalar_lea.vmem [#allocation2], 467
  %v2470 = vld [vmem:[%s2469] ss:$2 sm:$0xff]
  %s2471 = scalar_lea.vmem [#allocation2], 483
  %v2472 = vld [vmem:[%s2471] ss:$2 sm:$0xff]
  %s2473 = scalar_lea.vmem [#allocation2], 499
  %v2474 = vld [vmem:[%s2473] ss:$2 sm:$0xff]
  %s2475 = scalar_lea.vmem [#allocation2], 515
  %v2476 = vld [vmem:[%s2475] ss:$2 sm:$0xff]
  %2493 = vrot.lane.b32.xlu0 %v2446, 9
  %v2494 = vpop.permute.xlu0 %2493
  %2495 = vrot.lane.b32.xlu0 %v2448, 9
  %v2496 = vpop.permute.xlu0 %2495
  %2497 = vrot.lane.b32.xlu0 %v2450, 9
  %v2498 = vpop.permute.xlu0 %2497
  %2499 = vrot.lane.b32.xlu0 %v2452, 9
  %v2500 = vpop.permute.xlu0 %2499
  %2501 = vrot.lane.b32.xlu0 %v2454, 9
  %v2502 = vpop.permute.xlu0 %2501
  %2503 = vrot.lane.b32.xlu0 %v2456, 9
  %v2504 = vpop.permute.xlu0 %2503
  %2505 = vrot.lane.b32.xlu0 %v2458, 9
  %v2506 = vpop.permute.xlu0 %2505
  %2507 = vrot.lane.b32.xlu0 %v2460, 9
  %v2508 = vpop.permute.xlu0 %2507
  %2509 = vrot.lane.b32.xlu0 %v2462, 9
  %v2510 = vpop.permute.xlu0 %2509
  %2511 = vrot.lane.b32.xlu0 %v2464, 9
  %v2512 = vpop.permute.xlu0 %2511
  %2513 = vrot.lane.b32.xlu0 %v2466, 9
  %v2514 = vpop.permute.xlu0 %2513
  %2515 = vrot.lane.b32.xlu0 %v2468, 9
  %v2516 = vpop.permute.xlu0 %2515
  %2517 = vrot.lane.b32.xlu0 %v2470, 9
  %v2518 = vpop.permute.xlu0 %2517
  %2519 = vrot.lane.b32.xlu0 %v2472, 9
  %v2520 = vpop.permute.xlu0 %2519
  %2521 = vrot.lane.b32.xlu0 %v2474, 9
  %v2522 = vpop.permute.xlu0 %2521
  %2523 = vrot.lane.b32.xlu0 %v2476, 9
  %v2524 = vpop.permute.xlu0 %2523
  %2541 = vst.msk [vmem:[#allocation9 + $0x80] sm:$0xff] %vm1224, %v2494
  %2542 = vst.msk [vmem:[#allocation9 + $0x88] sm:$0xff] %vm1224, %v2496
  %2543 = vst.msk [vmem:[#allocation9 + $0x90] sm:$0xff] %vm1224, %v2498
  %2544 = vst.msk [vmem:[#allocation9 + $0x98] sm:$0xff] %vm1224, %v2500
  %2545 = vst.msk [vmem:[#allocation9 + $0xa0] sm:$0xff] %vm1224, %v2502
  %2546 = vst.msk [vmem:[#allocation9 + $0xa8] sm:$0xff] %vm1224, %v2504
  %2547 = vst.msk [vmem:[#allocation9 + $0xb0] sm:$0xff] %vm1224, %v2506
  %2548 = vst.msk [vmem:[#allocation9 + $0xb8] sm:$0xff] %vm1224, %v2508
  %2549 = vst.msk [vmem:[#allocation9 + $0xc0] sm:$0xff] %vm1224, %v2510
  %2550 = vst.msk [vmem:[#allocation9 + $0xc8] sm:$0xff] %vm1224, %v2512
  %2551 = vst.msk [vmem:[#allocation9 + $0xd0] sm:$0xff] %vm1224, %v2514
  %2552 = vst.msk [vmem:[#allocation9 + $0xd8] sm:$0xff] %vm1224, %v2516
  %2553 = vst.msk [vmem:[#allocation9 + $0xe0] sm:$0xff] %vm1224, %v2518
  %2554 = vst.msk [vmem:[#allocation9 + $0xe8] sm:$0xff] %vm1224, %v2520
  %2555 = vst.msk [vmem:[#allocation9 + $0xf0] sm:$0xff] %vm1224, %v2522
  %2556 = vst.msk [vmem:[#allocation9 + $0xf8] sm:$0xff] %vm1224, %v2524
  %s2557 = scalar_lea.vmem [#allocation2], 276
  %v2558 = vld [vmem:[%s2557] ss:$2 sm:$0xff]
  %s2559 = scalar_lea.vmem [#allocation2], 292
  %v2560 = vld [vmem:[%s2559] ss:$2 sm:$0xff]
  %s2561 = scalar_lea.vmem [#allocation2], 308
  %v2562 = vld [vmem:[%s2561] ss:$2 sm:$0xff]
  %s2563 = scalar_lea.vmem [#allocation2], 324
  %v2564 = vld [vmem:[%s2563] ss:$2 sm:$0xff]
  %s2565 = scalar_lea.vmem [#allocation2], 340
  %v2566 = vld [vmem:[%s2565] ss:$2 sm:$0xff]
  %s2567 = scalar_lea.vmem [#allocation2], 356
  %v2568 = vld [vmem:[%s2567] ss:$2 sm:$0xff]
  %s2569 = scalar_lea.vmem [#allocation2], 372
  %v2570 = vld [vmem:[%s2569] ss:$2 sm:$0xff]
  %s2571 = scalar_lea.vmem [#allocation2], 388
  %v2572 = vld [vmem:[%s2571] ss:$2 sm:$0xff]
  %s2573 = scalar_lea.vmem [#allocation2], 404
  %v2574 = vld [vmem:[%s2573] ss:$2 sm:$0xff]
  %s2575 = scalar_lea.vmem [#allocation2], 420
  %v2576 = vld [vmem:[%s2575] ss:$2 sm:$0xff]
  %s2577 = scalar_lea.vmem [#allocation2], 436
  %v2578 = vld [vmem:[%s2577] ss:$2 sm:$0xff]
  %s2579 = scalar_lea.vmem [#allocation2], 452
  %v2580 = vld [vmem:[%s2579] ss:$2 sm:$0xff]
  %s2581 = scalar_lea.vmem [#allocation2], 468
  %v2582 = vld [vmem:[%s2581] ss:$2 sm:$0xff]
  %s2583 = scalar_lea.vmem [#allocation2], 484
  %v2584 = vld [vmem:[%s2583] ss:$2 sm:$0xff]
  %s2585 = scalar_lea.vmem [#allocation2], 500
  %v2586 = vld [vmem:[%s2585] ss:$2 sm:$0xff]
  %s2587 = scalar_lea.vmem [#allocation2], 516
  %v2588 = vld [vmem:[%s2587] ss:$2 sm:$0xff]
  %2605 = vrot.lane.b32.xlu0 %v2558, 10
  %v2606 = vpop.permute.xlu0 %2605
  %2607 = vrot.lane.b32.xlu0 %v2560, 10
  %v2608 = vpop.permute.xlu0 %2607
  %2609 = vrot.lane.b32.xlu0 %v2562, 10
  %v2610 = vpop.permute.xlu0 %2609
  %2611 = vrot.lane.b32.xlu0 %v2564, 10
  %v2612 = vpop.permute.xlu0 %2611
  %2613 = vrot.lane.b32.xlu0 %v2566, 10
  %v2614 = vpop.permute.xlu0 %2613
  %2615 = vrot.lane.b32.xlu0 %v2568, 10
  %v2616 = vpop.permute.xlu0 %2615
  %2617 = vrot.lane.b32.xlu0 %v2570, 10
  %v2618 = vpop.permute.xlu0 %2617
  %2619 = vrot.lane.b32.xlu0 %v2572, 10
  %v2620 = vpop.permute.xlu0 %2619
  %2621 = vrot.lane.b32.xlu0 %v2574, 10
  %v2622 = vpop.permute.xlu0 %2621
  %2623 = vrot.lane.b32.xlu0 %v2576, 10
  %v2624 = vpop.permute.xlu0 %2623
  %2625 = vrot.lane.b32.xlu0 %v2578, 10
  %v2626 = vpop.permute.xlu0 %2625
  %2627 = vrot.lane.b32.xlu0 %v2580, 10
  %v2628 = vpop.permute.xlu0 %2627
  %2629 = vrot.lane.b32.xlu0 %v2582, 10
  %v2630 = vpop.permute.xlu0 %2629
  %2631 = vrot.lane.b32.xlu0 %v2584, 10
  %v2632 = vpop.permute.xlu0 %2631
  %2633 = vrot.lane.b32.xlu0 %v2586, 10
  %v2634 = vpop.permute.xlu0 %2633
  %2635 = vrot.lane.b32.xlu0 %v2588, 10
  %v2636 = vpop.permute.xlu0 %2635
  %2653 = vst.msk [vmem:[#allocation9 + $0x80] sm:$0xff] %vm1337, %v2606
  %2654 = vst.msk [vmem:[#allocation9 + $0x88] sm:$0xff] %vm1337, %v2608
  %2655 = vst.msk [vmem:[#allocation9 + $0x90] sm:$0xff] %vm1337, %v2610
  %2656 = vst.msk [vmem:[#allocation9 + $0x98] sm:$0xff] %vm1337, %v2612
  %2657 = vst.msk [vmem:[#allocation9 + $0xa0] sm:$0xff] %vm1337, %v2614
  %2658 = vst.msk [vmem:[#allocation9 + $0xa8] sm:$0xff] %vm1337, %v2616
  %2659 = vst.msk [vmem:[#allocation9 + $0xb0] sm:$0xff] %vm1337, %v2618
  %2660 = vst.msk [vmem:[#allocation9 + $0xb8] sm:$0xff] %vm1337, %v2620
  %2661 = vst.msk [vmem:[#allocation9 + $0xc0] sm:$0xff] %vm1337, %v2622
  %2662 = vst.msk [vmem:[#allocation9 + $0xc8] sm:$0xff] %vm1337, %v2624
  %2663 = vst.msk [vmem:[#allocation9 + $0xd0] sm:$0xff] %vm1337, %v2626
  %2664 = vst.msk [vmem:[#allocation9 + $0xd8] sm:$0xff] %vm1337, %v2628
  %2665 = vst.msk [vmem:[#allocation9 + $0xe0] sm:$0xff] %vm1337, %v2630
  %2666 = vst.msk [vmem:[#allocation9 + $0xe8] sm:$0xff] %vm1337, %v2632
  %2667 = vst.msk [vmem:[#allocation9 + $0xf0] sm:$0xff] %vm1337, %v2634
  %2668 = vst.msk [vmem:[#allocation9 + $0xf8] sm:$0xff] %vm1337, %v2636
  %s2669 = scalar_lea.vmem [#allocation2], 277
  %v2670 = vld [vmem:[%s2669] ss:$2 sm:$0xff]
  %s2671 = scalar_lea.vmem [#allocation2], 293
  %v2672 = vld [vmem:[%s2671] ss:$2 sm:$0xff]
  %s2673 = scalar_lea.vmem [#allocation2], 309
  %v2674 = vld [vmem:[%s2673] ss:$2 sm:$0xff]
  %s2675 = scalar_lea.vmem [#allocation2], 325
  %v2676 = vld [vmem:[%s2675] ss:$2 sm:$0xff]
  %s2677 = scalar_lea.vmem [#allocation2], 341
  %v2678 = vld [vmem:[%s2677] ss:$2 sm:$0xff]
  %s2679 = scalar_lea.vmem [#allocation2], 357
  %v2680 = vld [vmem:[%s2679] ss:$2 sm:$0xff]
  %s2681 = scalar_lea.vmem [#allocation2], 373
  %v2682 = vld [vmem:[%s2681] ss:$2 sm:$0xff]
  %s2683 = scalar_lea.vmem [#allocation2], 389
  %v2684 = vld [vmem:[%s2683] ss:$2 sm:$0xff]
  %s2685 = scalar_lea.vmem [#allocation2], 405
  %v2686 = vld [vmem:[%s2685] ss:$2 sm:$0xff]
  %s2687 = scalar_lea.vmem [#allocation2], 421
  %v2688 = vld [vmem:[%s2687] ss:$2 sm:$0xff]
  %s2689 = scalar_lea.vmem [#allocation2], 437
  %v2690 = vld [vmem:[%s2689] ss:$2 sm:$0xff]
  %s2691 = scalar_lea.vmem [#allocation2], 453
  %v2692 = vld [vmem:[%s2691] ss:$2 sm:$0xff]
  %s2693 = scalar_lea.vmem [#allocation2], 469
  %v2694 = vld [vmem:[%s2693] ss:$2 sm:$0xff]
  %s2695 = scalar_lea.vmem [#allocation2], 485
  %v2696 = vld [vmem:[%s2695] ss:$2 sm:$0xff]
  %s2697 = scalar_lea.vmem [#allocation2], 501
  %v2698 = vld [vmem:[%s2697] ss:$2 sm:$0xff]
  %s2699 = scalar_lea.vmem [#allocation2], 517
  %v2700 = vld [vmem:[%s2699] ss:$2 sm:$0xff]
  %2717 = vrot.lane.b32.xlu0 %v2670, 11
  %v2718 = vpop.permute.xlu0 %2717
  %2719 = vrot.lane.b32.xlu0 %v2672, 11
  %v2720 = vpop.permute.xlu0 %2719
  %2721 = vrot.lane.b32.xlu0 %v2674, 11
  %v2722 = vpop.permute.xlu0 %2721
  %2723 = vrot.lane.b32.xlu0 %v2676, 11
  %v2724 = vpop.permute.xlu0 %2723
  %2725 = vrot.lane.b32.xlu0 %v2678, 11
  %v2726 = vpop.permute.xlu0 %2725
  %2727 = vrot.lane.b32.xlu0 %v2680, 11
  %v2728 = vpop.permute.xlu0 %2727
  %2729 = vrot.lane.b32.xlu0 %v2682, 11
  %v2730 = vpop.permute.xlu0 %2729
  %2731 = vrot.lane.b32.xlu0 %v2684, 11
  %v2732 = vpop.permute.xlu0 %2731
  %2733 = vrot.lane.b32.xlu0 %v2686, 11
  %v2734 = vpop.permute.xlu0 %2733
  %2735 = vrot.lane.b32.xlu0 %v2688, 11
  %v2736 = vpop.permute.xlu0 %2735
  %2737 = vrot.lane.b32.xlu0 %v2690, 11
  %v2738 = vpop.permute.xlu0 %2737
  %2739 = vrot.lane.b32.xlu0 %v2692, 11
  %v2740 = vpop.permute.xlu0 %2739
  %2741 = vrot.lane.b32.xlu0 %v2694, 11
  %v2742 = vpop.permute.xlu0 %2741
  %2743 = vrot.lane.b32.xlu0 %v2696, 11
  %v2744 = vpop.permute.xlu0 %2743
  %2745 = vrot.lane.b32.xlu0 %v2698, 11
  %v2746 = vpop.permute.xlu0 %2745
  %2747 = vrot.lane.b32.xlu0 %v2700, 11
  %v2748 = vpop.permute.xlu0 %2747
  %2765 = vst.msk [vmem:[#allocation9 + $0x80] sm:$0xff] %vm1450, %v2718
  %2766 = vst.msk [vmem:[#allocation9 + $0x88] sm:$0xff] %vm1450, %v2720
  %2767 = vst.msk [vmem:[#allocation9 + $0x90] sm:$0xff] %vm1450, %v2722
  %2768 = vst.msk [vmem:[#allocation9 + $0x98] sm:$0xff] %vm1450, %v2724
  %2769 = vst.msk [vmem:[#allocation9 + $0xa0] sm:$0xff] %vm1450, %v2726
  %2770 = vst.msk [vmem:[#allocation9 + $0xa8] sm:$0xff] %vm1450, %v2728
  %2771 = vst.msk [vmem:[#allocation9 + $0xb0] sm:$0xff] %vm1450, %v2730
  %2772 = vst.msk [vmem:[#allocation9 + $0xb8] sm:$0xff] %vm1450, %v2732
  %2773 = vst.msk [vmem:[#allocation9 + $0xc0] sm:$0xff] %vm1450, %v2734
  %2774 = vst.msk [vmem:[#allocation9 + $0xc8] sm:$0xff] %vm1450, %v2736
  %2775 = vst.msk [vmem:[#allocation9 + $0xd0] sm:$0xff] %vm1450, %v2738
  %2776 = vst.msk [vmem:[#allocation9 + $0xd8] sm:$0xff] %vm1450, %v2740
  %2777 = vst.msk [vmem:[#allocation9 + $0xe0] sm:$0xff] %vm1450, %v2742
  %2778 = vst.msk [vmem:[#allocation9 + $0xe8] sm:$0xff] %vm1450, %v2744
  %2779 = vst.msk [vmem:[#allocation9 + $0xf0] sm:$0xff] %vm1450, %v2746
  %2780 = vst.msk [vmem:[#allocation9 + $0xf8] sm:$0xff] %vm1450, %v2748
  %v2781 = vld [vmem:[#allocation9] sm:$0xff]
  %v2782 = vld [vmem:[#allocation9 + $0x8] sm:$0xff]
  %v2783 = vld [vmem:[#allocation9 + $0x10] sm:$0xff]
  %v2784 = vld [vmem:[#allocation9 + $0x18] sm:$0xff]
  %v2785 = vld [vmem:[#allocation9 + $0x20] sm:$0xff]
  %v2786 = vld [vmem:[#allocation9 + $0x28] sm:$0xff]
  %v2787 = vld [vmem:[#allocation9 + $0x30] sm:$0xff]
  %v2788 = vld [vmem:[#allocation9 + $0x38] sm:$0xff]
  %v2789 = vld [vmem:[#allocation9 + $0x40] sm:$0xff]
  %v2790 = vld [vmem:[#allocation9 + $0x48] sm:$0xff]
  %v2791 = vld [vmem:[#allocation9 + $0x50] sm:$0xff]
  %v2792 = vld [vmem:[#allocation9 + $0x58] sm:$0xff]
  %v2793 = vld [vmem:[#allocation9 + $0x60] sm:$0xff]
  %v2794 = vld [vmem:[#allocation9 + $0x68] sm:$0xff]
  %v2795 = vld [vmem:[#allocation9 + $0x70] sm:$0xff]
  %v2796 = vld [vmem:[#allocation9 + $0x78] sm:$0xff]
  %v2797 = vld [vmem:[#allocation9 + $0x80] sm:$0xff]
  %v2798 = vld [vmem:[#allocation9 + $0x88] sm:$0xff]
  %v2799 = vld [vmem:[#allocation9 + $0x90] sm:$0xff]
  %v2800 = vld [vmem:[#allocation9 + $0x98] sm:$0xff]
  %v2801 = vld [vmem:[#allocation9 + $0xa0] sm:$0xff]
  %v2802 = vld [vmem:[#allocation9 + $0xa8] sm:$0xff]
  %v2803 = vld [vmem:[#allocation9 + $0xb0] sm:$0xff]
  %v2804 = vld [vmem:[#allocation9 + $0xb8] sm:$0xff]
  %v2805 = vld [vmem:[#allocation9 + $0xc0] sm:$0xff]
  %v2806 = vld [vmem:[#allocation9 + $0xc8] sm:$0xff]
  %v2807 = vld [vmem:[#allocation9 + $0xd0] sm:$0xff]
  %v2808 = vld [vmem:[#allocation9 + $0xd8] sm:$0xff]
  %v2809 = vld [vmem:[#allocation9 + $0xe0] sm:$0xff]
  %v2810 = vld [vmem:[#allocation9 + $0xe8] sm:$0xff]
  %v2811 = vld [vmem:[#allocation9 + $0xf0] sm:$0xff]
  %v2812 = vld [vmem:[#allocation9 + $0xf8] sm:$0xff]
  %v2813 = vld [vmem:[%s1] sm:$0xff]
  %v2814 = vld [vmem:[%s1 + $0x8] sm:$0xf]
  %vm2815 = vcmask 97280
  %v2817 = vsel %vm2815, %v2781, 0
  %v2820 = vsel %vm2815, %v2782, 0
  %v2823 = vsel %vm2815, %v2783, 0
  %v2826 = vsel %vm2815, %v2784, 0
  %v2829 = vsel %vm2815, %v2785, 0
  %v2832 = vsel %vm2815, %v2786, 0
  %v2835 = vsel %vm2815, %v2787, 0
  %v2838 = vsel %vm2815, %v2788, 0
  %v2841 = vsel %vm2815, %v2789, 0
  %v2844 = vsel %vm2815, %v2790, 0
  %v2847 = vsel %vm2815, %v2791, 0
  %v2850 = vsel %vm2815, %v2792, 0
  %v2853 = vsel %vm2815, %v2793, 0
  %v2856 = vsel %vm2815, %v2794, 0
  %v2859 = vsel %vm2815, %v2795, 0
  %v2862 = vsel %vm2815, %v2796, 0
  %v2865 = vsel %vm2815, %v2797, 0
  %v2868 = vsel %vm2815, %v2798, 0
  %v2871 = vsel %vm2815, %v2799, 0
  %v2874 = vsel %vm2815, %v2800, 0
  %v2877 = vsel %vm2815, %v2801, 0
  %v2880 = vsel %vm2815, %v2802, 0
  %v2883 = vsel %vm2815, %v2803, 0
  %v2886 = vsel %vm2815, %v2804, 0
  %v2889 = vsel %vm2815, %v2805, 0
  %v2892 = vsel %vm2815, %v2806, 0
  %v2895 = vsel %vm2815, %v2807, 0
  %v2898 = vsel %vm2815, %v2808, 0
  %v2901 = vsel %vm2815, %v2809, 0
  %v2904 = vsel %vm2815, %v2810, 0
  %v2907 = vsel %vm2815, %v2811, 0
  %v2910 = vsel %vm2815, %v2812, 0
  %vm2912 = vcmask 1043456
  %v2914 = vsel %vm2912, %v2814, 0
  %2916 = vmatprep.subr.mxu0 0.0
  %2917 = vmatpush1.msra.mxu0 %v2813
  %2918 = vmatprep.subr.mxu0 0.0
  %2919 = vmatpush1.msra.mxu0 %v2914
  %2920 = vmatprep.subr.mxu0 0.0
  %2921 = vmatpush1.msra.mxu0 0.0
  %2922 = vmatprep.subr.mxu0 0.0
  %2923 = vmatpush1.msra.mxu0 0.0
  %2924 = vmatprep.subr.mxu0 0.0
  %2925 = vmatpush1.msra.mxu0 0.0
  %2926 = vmatprep.subr.mxu0 0.0
  %2927 = vmatpush1.msra.mxu0 0.0
  %2928 = vmatprep.subr.mxu0 0.0
  %2929 = vmatpush1.msra.mxu0 0.0
  %2930 = vmatprep.subr.mxu0 0.0
  %2931 = vmatpush1.msra.mxu0 0.0
  %2932 = vmatprep.subr.mxu0 0.0
  %2933 = vmatpush1.msra.mxu0 0.0
  %2934 = vmatprep.subr.mxu0 0.0
  %2935 = vmatpush1.msra.mxu0 0.0
  %2936 = vmatprep.subr.mxu0 0.0
  %2937 = vmatpush1.msra.mxu0 0.0
  %2938 = vmatprep.subr.mxu0 0.0
  %2939 = vmatpush1.msra.mxu0 0.0
  %2940 = vmatprep.subr.mxu0 0.0
  %2941 = vmatpush1.msra.mxu0 0.0
  %2942 = vmatprep.subr.mxu0 0.0
  %2943 = vmatpush1.msra.mxu0 0.0
  %2944 = vmatprep.subr.mxu0 0.0
  %2945 = vmatpush1.msra.mxu0 0.0
  %2946 = vmatprep.subr.mxu0 0.0
  %2947 = vmatpush1.msra.mxu0 0.0
  %2948 = vmatprep.subr.mxu0 0.0
  %2949 = vmatpush1.msra.mxu0 0.0
  %2950 = vmatprep.subr.mxu0 0.0
  %2951 = vmatpush1.msra.mxu0 0.0
  %2952 = vmatprep.subr.mxu0 0.0
  %2953 = vmatpush1.msra.mxu0 0.0
  %2954 = vmatprep.subr.mxu0 0.0
  %2955 = vmatpush1.msra.mxu0 0.0
  %2956 = vmatprep.subr.mxu0 0.0
  %2957 = vmatpush1.msra.mxu0 0.0
  %2958 = vmatprep.subr.mxu0 0.0
  %2959 = vmatpush1.msra.mxu0 0.0
  %2960 = vmatprep.subr.mxu0 0.0
  %2961 = vmatpush1.msra.mxu0 0.0
  %2962 = vmatprep.subr.mxu0 0.0
  %2963 = vmatpush1.msra.mxu0 0.0
  %2964 = vmatprep.subr.mxu0 0.0
  %2965 = vmatpush1.msra.mxu0 0.0
  %2966 = vmatprep.subr.mxu0 0.0
  %2967 = vmatpush1.msra.mxu0 0.0
  %2968 = vmatprep.subr.mxu0 0.0
  %2969 = vmatpush1.msra.mxu0 0.0
  %2970 = vmatprep.subr.mxu0 0.0
  %2971 = vmatpush1.msra.mxu0 0.0
  %2972 = vmatprep.subr.mxu0 0.0
  %2973 = vmatpush1.msra.mxu0 0.0
  %2974 = vmatprep.subr.mxu0 0.0
  %2975 = vmatpush1.msra.mxu0 0.0
  %2976 = vmatprep.subr.mxu0 0.0
  %2977 = vmatpush1.msra.mxu0 0.0
  %2978 = vmatprep.subr.mxu0 0.0
  %2979 = vmatpush1.msra.mxu0 0.0
  %2980 = vmatprep.mubr.f32.mxu0 0.0
  %2981 = vmatmul.mubr.f32.gmra.mrb[0].mxu0 %v2817
  %v2982 = vpop.f32.mrb[0].mxu0
  %v2983 = vadd.f32 0.0, %v2982
  %v2984 = vpop.f32.mrb[0].mxu0
  %2985 = vmatprep.mubr.f32.mxu0 0.0
  %2986 = vmatmul.mubr.f32.gmra.mrb[0].mxu0 %v2820
  %v2987 = vpop.f32.mrb[0].mxu0
  %v2988 = vadd.f32 0.0, %v2987
  %v2989 = vpop.f32.mrb[0].mxu0
  %2990 = vmatprep.mubr.f32.mxu0 0.0
  %2991 = vmatmul.mubr.f32.gmra.mrb[0].mxu0 %v2823
  %v2992 = vpop.f32.mrb[0].mxu0
  %v2993 = vadd.f32 0.0, %v2992
  %v2994 = vpop.f32.mrb[0].mxu0
  %2995 = vmatprep.mubr.f32.mxu0 0.0
  %2996 = vmatmul.mubr.f32.gmra.mrb[0].mxu0 %v2826
  %v2997 = vpop.f32.mrb[0].mxu0
  %v2998 = vadd.f32 0.0, %v2997
  %v2999 = vpop.f32.mrb[0].mxu0
  %3000 = vmatprep.mubr.f32.mxu0 0.0
  %3001 = vmatmul.mubr.f32.gmra.mrb[0].mxu0 %v2829
  %v3002 = vpop.f32.mrb[0].mxu0
  %v3003 = vadd.f32 0.0, %v3002
  %v3004 = vpop.f32.mrb[0].mxu0
  %3005 = vmatprep.mubr.f32.mxu0 0.0
  %3006 = vmatmul.mubr.f32.gmra.mrb[0].mxu0 %v2832
  %v3007 = vpop.f32.mrb[0].mxu0
  %v3008 = vadd.f32 0.0, %v3007
  %v3009 = vpop.f32.mrb[0].mxu0
  %3010 = vmatprep.mubr.f32.mxu0 0.0
  %3011 = vmatmul.mubr.f32.gmra.mrb[0].mxu0 %v2835
  %v3012 = vpop.f32.mrb[0].mxu0
  %v3013 = vadd.f32 0.0, %v3012
  %v3014 = vpop.f32.mrb[0].mxu0
  %3015 = vmatprep.mubr.f32.mxu0 0.0
  %3016 = vmatmul.mubr.f32.gmra.mrb[0].mxu0 %v2838
  %v3017 = vpop.f32.mrb[0].mxu0
  %v3018 = vadd.f32 0.0, %v3017
  %v3019 = vpop.f32.mrb[0].mxu0
  %3020 = vmatprep.mubr.f32.mxu0 0.0
  %3021 = vmatmul.mubr.f32.gmra.mrb[0].mxu0 %v2841
  %v3022 = vpop.f32.mrb[0].mxu0
  %v3023 = vadd.f32 0.0, %v3022
  %v3024 = vpop.f32.mrb[0].mxu0
  %3025 = vmatprep.mubr.f32.mxu0 0.0
  %3026 = vmatmul.mubr.f32.gmra.mrb[0].mxu0 %v2844
  %v3027 = vpop.f32.mrb[0].mxu0
  %v3028 = vadd.f32 0.0, %v3027
  %v3029 = vpop.f32.mrb[0].mxu0
  %3030 = vmatprep.mubr.f32.mxu0 0.0
  %3031 = vmatmul.mubr.f32.gmra.mrb[0].mxu0 %v2847
  %v3032 = vpop.f32.mrb[0].mxu0
  %v3033 = vadd.f32 0.0, %v3032
  %v3034 = vpop.f32.mrb[0].mxu0
  %3035 = vmatprep.mubr.f32.mxu0 0.0
  %3036 = vmatmul.mubr.f32.gmra.mrb[0].mxu0 %v2850
  %v3037 = vpop.f32.mrb[0].mxu0
  %v3038 = vadd.f32 0.0, %v3037
  %v3039 = vpop.f32.mrb[0].mxu0
  %3040 = vmatprep.mubr.f32.mxu0 0.0
  %3041 = vmatmul.mubr.f32.gmra.mrb[0].mxu0 %v2853
  %v3042 = vpop.f32.mrb[0].mxu0
  %v3043 = vadd.f32 0.0, %v3042
  %v3044 = vpop.f32.mrb[0].mxu0
  %3045 = vmatprep.mubr.f32.mxu0 0.0
  %3046 = vmatmul.mubr.f32.gmra.mrb[0].mxu0 %v2856
  %v3047 = vpop.f32.mrb[0].mxu0
  %v3048 = vadd.f32 0.0, %v3047
  %v3049 = vpop.f32.mrb[0].mxu0
  %3050 = vmatprep.mubr.f32.mxu0 0.0
  %3051 = vmatmul.mubr.f32.gmra.mrb[0].mxu0 %v2859
  %v3052 = vpop.f32.mrb[0].mxu0
  %v3053 = vadd.f32 0.0, %v3052
  %v3054 = vpop.f32.mrb[0].mxu0
  %3055 = vmatprep.mubr.f32.mxu0 0.0
  %3056 = vmatmul.mubr.f32.gmra.mrb[0].mxu0 %v2862
  %v3057 = vpop.f32.mrb[0].mxu0
  %v3058 = vadd.f32 0.0, %v3057
  %v3059 = vpop.f32.mrb[0].mxu0
  %3060 = vmatprep.mubr.f32.mxu0 0.0
  %3061 = vmatmul.mubr.f32.gmra.mrb[0].mxu0 %v2865
  %v3062 = vpop.f32.mrb[0].mxu0
  %v3063 = vadd.f32 0.0, %v3062
  %v3064 = vpop.f32.mrb[0].mxu0
  %3065 = vmatprep.mubr.f32.mxu0 0.0
  %3066 = vmatmul.mubr.f32.gmra.mrb[0].mxu0 %v2868
  %v3067 = vpop.f32.mrb[0].mxu0
  %v3068 = vadd.f32 0.0, %v3067
  %v3069 = vpop.f32.mrb[0].mxu0
  %3070 = vmatprep.mubr.f32.mxu0 0.0
  %3071 = vmatmul.mubr.f32.gmra.mrb[0].mxu0 %v2871
  %v3072 = vpop.f32.mrb[0].mxu0
  %v3073 = vadd.f32 0.0, %v3072
  %v3074 = vpop.f32.mrb[0].mxu0
  %3075 = vmatprep.mubr.f32.mxu0 0.0
  %3076 = vmatmul.mubr.f32.gmra.mrb[0].mxu0 %v2874
  %v3077 = vpop.f32.mrb[0].mxu0
  %v3078 = vadd.f32 0.0, %v3077
  %v3079 = vpop.f32.mrb[0].mxu0
  %3080 = vmatprep.mubr.f32.mxu0 0.0
  %3081 = vmatmul.mubr.f32.gmra.mrb[0].mxu0 %v2877
  %v3082 = vpop.f32.mrb[0].mxu0
  %v3083 = vadd.f32 0.0, %v3082
  %v3084 = vpop.f32.mrb[0].mxu0
  %3085 = vmatprep.mubr.f32.mxu0 0.0
  %3086 = vmatmul.mubr.f32.gmra.mrb[0].mxu0 %v2880
  %v3087 = vpop.f32.mrb[0].mxu0
  %v3088 = vadd.f32 0.0, %v3087
  %v3089 = vpop.f32.mrb[0].mxu0
  %3090 = vmatprep.mubr.f32.mxu0 0.0
  %3091 = vmatmul.mubr.f32.gmra.mrb[0].mxu0 %v2883
  %v3092 = vpop.f32.mrb[0].mxu0
  %v3093 = vadd.f32 0.0, %v3092
  %v3094 = vpop.f32.mrb[0].mxu0
  %3095 = vmatprep.mubr.f32.mxu0 0.0
  %3096 = vmatmul.mubr.f32.gmra.mrb[0].mxu0 %v2886
  %v3097 = vpop.f32.mrb[0].mxu0
  %v3098 = vadd.f32 0.0, %v3097
  %v3099 = vpop.f32.mrb[0].mxu0
  %3100 = vmatprep.mubr.f32.mxu0 0.0
  %3101 = vmatmul.mubr.f32.gmra.mrb[0].mxu0 %v2889
  %v3102 = vpop.f32.mrb[0].mxu0
  %v3103 = vadd.f32 0.0, %v3102
  %v3104 = vpop.f32.mrb[0].mxu0
  %3105 = vmatprep.mubr.f32.mxu0 0.0
  %3106 = vmatmul.mubr.f32.gmra.mrb[0].mxu0 %v2892
  %v3107 = vpop.f32.mrb[0].mxu0
  %v3108 = vadd.f32 0.0, %v3107
  %v3109 = vpop.f32.mrb[0].mxu0
  %3110 = vmatprep.mubr.f32.mxu0 0.0
  %3111 = vmatmul.mubr.f32.gmra.mrb[0].mxu0 %v2895
  %v3112 = vpop.f32.mrb[0].mxu0
  %v3113 = vadd.f32 0.0, %v3112
  %v3114 = vpop.f32.mrb[0].mxu0
  %3115 = vmatprep.mubr.f32.mxu0 0.0
  %3116 = vmatmul.mubr.f32.gmra.mrb[0].mxu0 %v2898
  %v3117 = vpop.f32.mrb[0].mxu0
  %v3118 = vadd.f32 0.0, %v3117
  %v3119 = vpop.f32.mrb[0].mxu0
  %3120 = vmatprep.mubr.f32.mxu0 0.0
  %3121 = vmatmul.mubr.f32.gmra.mrb[0].mxu0 %v2901
  %v3122 = vpop.f32.mrb[0].mxu0
  %v3123 = vadd.f32 0.0, %v3122
  %v3124 = vpop.f32.mrb[0].mxu0
  %3125 = vmatprep.mubr.f32.mxu0 0.0
  %3126 = vmatmul.mubr.f32.gmra.mrb[0].mxu0 %v2904
  %v3127 = vpop.f32.mrb[0].mxu0
  %v3128 = vadd.f32 0.0, %v3127
  %v3129 = vpop.f32.mrb[0].mxu0
  %3130 = vmatprep.mubr.f32.mxu0 0.0
  %3131 = vmatmul.mubr.f32.gmra.mrb[0].mxu0 %v2907
  %v3132 = vpop.f32.mrb[0].mxu0
  %v3133 = vadd.f32 0.0, %v3132
  %v3134 = vpop.f32.mrb[0].mxu0
  %3135 = vmatprep.mubr.f32.mxu0 0.0
  %3136 = vmatmul.mubr.f32.gmra.mrb[0].mxu0 %v2910
  %v3137 = vpop.f32.mrb[0].mxu0
  %v3138 = vadd.f32 0.0, %v3137
  %v3139 = vpop.f32.mrb[0].mxu0
  %3140 = vdwg.mxu0
  %v3141 = vld [vmem:[%s2] sm:$0x1]
  %v3143 = vlaneseq
  %v3144 = vshrl.u32 %v3143, 7
  %v3145 = vsub.s32 0, %v3144
  %v3146 = vrot.slane %v3141, %v3145
  %v3148 = vmul.f32 %v2983, %v3146
  %v3149 = vmul.f32 %v2988, %v3146
  %v3150 = vmul.f32 %v2993, %v3146
  %v3151 = vmul.f32 %v2998, %v3146
  %v3152 = vmul.f32 %v3003, %v3146
  %v3153 = vmul.f32 %v3008, %v3146
  %v3154 = vmul.f32 %v3013, %v3146
  %v3155 = vmul.f32 %v3018, %v3146
  %v3156 = vmul.f32 %v3023, %v3146
  %v3157 = vmul.f32 %v3028, %v3146
  %v3158 = vmul.f32 %v3033, %v3146
  %v3159 = vmul.f32 %v3038, %v3146
  %v3160 = vmul.f32 %v3043, %v3146
  %v3161 = vmul.f32 %v3048, %v3146
  %v3162 = vmul.f32 %v3053, %v3146
  %v3163 = vmul.f32 %v3058, %v3146
  %v3164 = vmul.f32 %v3063, %v3146
  %v3165 = vmul.f32 %v3068, %v3146
  %v3166 = vmul.f32 %v3073, %v3146
  %v3167 = vmul.f32 %v3078, %v3146
  %v3168 = vmul.f32 %v3083, %v3146
  %v3169 = vmul.f32 %v3088, %v3146
  %v3170 = vmul.f32 %v3093, %v3146
  %v3171 = vmul.f32 %v3098, %v3146
  %v3172 = vmul.f32 %v3103, %v3146
  %v3173 = vmul.f32 %v3108, %v3146
  %v3174 = vmul.f32 %v3113, %v3146
  %v3175 = vmul.f32 %v3118, %v3146
  %v3176 = vmul.f32 %v3123, %v3146
  %v3177 = vmul.f32 %v3128, %v3146
  %v3178 = vmul.f32 %v3133, %v3146
  %v3179 = vmul.f32 %v3138, %v3146
  %v3180 = vld [vmem:[%s3] sm:$0x1]
  %v3182 = vlaneseq
  %v3183 = vshrl.u32 %v3182, 7
  %v3184 = vsub.s32 0, %v3183
  %v3185 = vrot.slane %v3180, %v3184
  %v3187 = vadd.f32 %v3148, %v3185
  %v3188 = vadd.f32 %v3149, %v3185
  %v3189 = vadd.f32 %v3150, %v3185
  %v3190 = vadd.f32 %v3151, %v3185
  %v3191 = vadd.f32 %v3152, %v3185
  %v3192 = vadd.f32 %v3153, %v3185
  %v3193 = vadd.f32 %v3154, %v3185
  %v3194 = vadd.f32 %v3155, %v3185
  %v3195 = vadd.f32 %v3156, %v3185
  %v3196 = vadd.f32 %v3157, %v3185
  %v3197 = vadd.f32 %v3158, %v3185
  %v3198 = vadd.f32 %v3159, %v3185
  %v3199 = vadd.f32 %v3160, %v3185
  %v3200 = vadd.f32 %v3161, %v3185
  %v3201 = vadd.f32 %v3162, %v3185
  %v3202 = vadd.f32 %v3163, %v3185
  %v3203 = vadd.f32 %v3164, %v3185
  %v3204 = vadd.f32 %v3165, %v3185
  %v3205 = vadd.f32 %v3166, %v3185
  %v3206 = vadd.f32 %v3167, %v3185
  %v3207 = vadd.f32 %v3168, %v3185
  %v3208 = vadd.f32 %v3169, %v3185
  %v3209 = vadd.f32 %v3170, %v3185
  %v3210 = vadd.f32 %v3171, %v3185
  %v3211 = vadd.f32 %v3172, %v3185
  %v3212 = vadd.f32 %v3173, %v3185
  %v3213 = vadd.f32 %v3174, %v3185
  %v3214 = vadd.f32 %v3175, %v3185
  %v3215 = vadd.f32 %v3176, %v3185
  %v3216 = vadd.f32 %v3177, %v3185
  %v3217 = vadd.f32 %v3178, %v3185
  %v3218 = vadd.f32 %v3179, %v3185
  %v3219 = vmax.f32 %v3187, 0.0
  %v3220 = vmax.f32 %v3188, 0.0
  %v3221 = vmax.f32 %v3189, 0.0
  %v3222 = vmax.f32 %v3190, 0.0
  %v3223 = vmax.f32 %v3191, 0.0
  %v3224 = vmax.f32 %v3192, 0.0
  %v3225 = vmax.f32 %v3193, 0.0
  %v3226 = vmax.f32 %v3194, 0.0
  %v3227 = vmax.f32 %v3195, 0.0
  %v3228 = vmax.f32 %v3196, 0.0
  %v3229 = vmax.f32 %v3197, 0.0
  %v3230 = vmax.f32 %v3198, 0.0
  %v3231 = vmax.f32 %v3199, 0.0
  %v3232 = vmax.f32 %v3200, 0.0
  %v3233 = vmax.f32 %v3201, 0.0
  %v3234 = vmax.f32 %v3202, 0.0
  %v3235 = vmax.f32 %v3203, 0.0
  %v3236 = vmax.f32 %v3204, 0.0
  %v3237 = vmax.f32 %v3205, 0.0
  %v3238 = vmax.f32 %v3206, 0.0
  %v3239 = vmax.f32 %v3207, 0.0
  %v3240 = vmax.f32 %v3208, 0.0
  %v3241 = vmax.f32 %v3209, 0.0
  %v3242 = vmax.f32 %v3210, 0.0
  %v3243 = vmax.f32 %v3211, 0.0
  %v3244 = vmax.f32 %v3212, 0.0
  %v3245 = vmax.f32 %v3213, 0.0
  %v3246 = vmax.f32 %v3214, 0.0
  %v3247 = vmax.f32 %v3215, 0.0
  %v3248 = vmax.f32 %v3216, 0.0
  %v3249 = vmax.f32 %v3217, 0.0
  %v3250 = vmax.f32 %v3218, 0.0
  %vm3251 = vcmask 126976
  %3252 = vst.msk [vmem:[#allocation3] sm:$0x1f] %vm3251, 0.0
  %3253 = vst.msk [vmem:[#allocation3 + $0x85] sm:$0x1f] %vm3251, 0.0
  %vm3254 = vcmask 130048
  %3255 = vst.msk [vmem:[#allocation3 + $0x5] sm:$0xff] %vm3254, %v3219
  %3256 = vst.msk [vmem:[#allocation3 + $0xd] sm:$0xff] %vm3254, %v3220
  %3257 = vst.msk [vmem:[#allocation3 + $0x15] sm:$0xff] %vm3254, %v3221
  %3258 = vst.msk [vmem:[#allocation3 + $0x1d] sm:$0xff] %vm3254, %v3222
  %3259 = vst.msk [vmem:[#allocation3 + $0x25] sm:$0xff] %vm3254, %v3223
  %3260 = vst.msk [vmem:[#allocation3 + $0x2d] sm:$0xff] %vm3254, %v3224
  %3261 = vst.msk [vmem:[#allocation3 + $0x35] sm:$0xff] %vm3254, %v3225
  %3262 = vst.msk [vmem:[#allocation3 + $0x3d] sm:$0xff] %vm3254, %v3226
  %3263 = vst.msk [vmem:[#allocation3 + $0x45] sm:$0xff] %vm3254, %v3227
  %3264 = vst.msk [vmem:[#allocation3 + $0x4d] sm:$0xff] %vm3254, %v3228
  %3265 = vst.msk [vmem:[#allocation3 + $0x55] sm:$0xff] %vm3254, %v3229
  %3266 = vst.msk [vmem:[#allocation3 + $0x5d] sm:$0xff] %vm3254, %v3230
  %3267 = vst.msk [vmem:[#allocation3 + $0x65] sm:$0xff] %vm3254, %v3231
  %3268 = vst.msk [vmem:[#allocation3 + $0x6d] sm:$0xff] %vm3254, %v3232
  %3269 = vst.msk [vmem:[#allocation3 + $0x75] sm:$0xff] %vm3254, %v3233
  %3270 = vst.msk [vmem:[#allocation3 + $0x7d] sm:$0xff] %vm3254, %v3234
  %v3271 = vld [vmem:[#allocation3] ss:$2 sm:$0xff]
  %s3272 = scalar_lea.vmem [#allocation3], 16
  %v3273 = vld [vmem:[%s3272] ss:$2 sm:$0xff]
  %s3274 = scalar_lea.vmem [#allocation3], 32
  %v3275 = vld [vmem:[%s3274] ss:$2 sm:$0xff]
  %s3276 = scalar_lea.vmem [#allocation3], 48
  %v3277 = vld [vmem:[%s3276] ss:$2 sm:$0xff]
  %s3278 = scalar_lea.vmem [#allocation3], 64
  %v3279 = vld [vmem:[%s3278] ss:$2 sm:$0xff]
  %s3280 = scalar_lea.vmem [#allocation3], 80
  %v3281 = vld [vmem:[%s3280] ss:$2 sm:$0xff]
  %s3282 = scalar_lea.vmem [#allocation3], 96
  %v3283 = vld [vmem:[%s3282] ss:$2 sm:$0xff]
  %s3284 = scalar_lea.vmem [#allocation3], 112
  %v3285 = vld [vmem:[%s3284] ss:$2 sm:$0xff]
  %3286 = vst.msk [vmem:[#allocation10] sm:$0xff] %vm3254, %v3271
  %3287 = vst.msk [vmem:[#allocation10 + $0x10] sm:$0xff] %vm3254, %v3273
  %3288 = vst.msk [vmem:[#allocation10 + $0x20] sm:$0xff] %vm3254, %v3275
  %3289 = vst.msk [vmem:[#allocation10 + $0x30] sm:$0xff] %vm3254, %v3277
  %3290 = vst.msk [vmem:[#allocation10 + $0x40] sm:$0xff] %vm3254, %v3279
  %3291 = vst.msk [vmem:[#allocation10 + $0x50] sm:$0xff] %vm3254, %v3281
  %3292 = vst.msk [vmem:[#allocation10 + $0x60] sm:$0xff] %vm3254, %v3283
  %3293 = vst.msk [vmem:[#allocation10 + $0x70] sm:$0xff] %vm3254, %v3285
  %s3294 = scalar_lea.vmem [#allocation3], 1
  %v3295 = vld [vmem:[%s3294] ss:$2 sm:$0xff]
  %s3296 = scalar_lea.vmem [#allocation3], 17
  %v3297 = vld [vmem:[%s3296] ss:$2 sm:$0xff]
  %s3298 = scalar_lea.vmem [#allocation3], 33
  %v3299 = vld [vmem:[%s3298] ss:$2 sm:$0xff]
  %s3300 = scalar_lea.vmem [#allocation3], 49
  %v3301 = vld [vmem:[%s3300] ss:$2 sm:$0xff]
  %s3302 = scalar_lea.vmem [#allocation3], 65
  %v3303 = vld [vmem:[%s3302] ss:$2 sm:$0xff]
  %s3304 = scalar_lea.vmem [#allocation3], 81
  %v3305 = vld [vmem:[%s3304] ss:$2 sm:$0xff]
  %s3306 = scalar_lea.vmem [#allocation3], 97
  %v3307 = vld [vmem:[%s3306] ss:$2 sm:$0xff]
  %s3308 = scalar_lea.vmem [#allocation3], 113
  %v3309 = vld [vmem:[%s3308] ss:$2 sm:$0xff]
  %3318 = vrot.lane.b32.xlu0 %v3295, 16
  %v3319 = vpop.permute.xlu0 %3318
  %3320 = vrot.lane.b32.xlu0 %v3297, 16
  %v3321 = vpop.permute.xlu0 %3320
  %3322 = vrot.lane.b32.xlu0 %v3299, 16
  %v3323 = vpop.permute.xlu0 %3322
  %3324 = vrot.lane.b32.xlu0 %v3301, 16
  %v3325 = vpop.permute.xlu0 %3324
  %3326 = vrot.lane.b32.xlu0 %v3303, 16
  %v3327 = vpop.permute.xlu0 %3326
  %3328 = vrot.lane.b32.xlu0 %v3305, 16
  %v3329 = vpop.permute.xlu0 %3328
  %3330 = vrot.lane.b32.xlu0 %v3307, 16
  %v3331 = vpop.permute.xlu0 %3330
  %3332 = vrot.lane.b32.xlu0 %v3309, 16
  %v3333 = vpop.permute.xlu0 %3332
  %vm3342 = vcmask 261248
  %3343 = vst.msk [vmem:[#allocation10] sm:$0xff] %vm3342, %v3319
  %3344 = vst.msk [vmem:[#allocation10 + $0x10] sm:$0xff] %vm3342, %v3321
  %3345 = vst.msk [vmem:[#allocation10 + $0x20] sm:$0xff] %vm3342, %v3323
  %3346 = vst.msk [vmem:[#allocation10 + $0x30] sm:$0xff] %vm3342, %v3325
  %3347 = vst.msk [vmem:[#allocation10 + $0x40] sm:$0xff] %vm3342, %v3327
  %3348 = vst.msk [vmem:[#allocation10 + $0x50] sm:$0xff] %vm3342, %v3329
  %3349 = vst.msk [vmem:[#allocation10 + $0x60] sm:$0xff] %vm3342, %v3331
  %3350 = vst.msk [vmem:[#allocation10 + $0x70] sm:$0xff] %vm3342, %v3333
  %s3351 = scalar_lea.vmem [#allocation3], 2
  %v3352 = vld [vmem:[%s3351] ss:$2 sm:$0xff]
  %s3353 = scalar_lea.vmem [#allocation3], 18
  %v3354 = vld [vmem:[%s3353] ss:$2 sm:$0xff]
  %s3355 = scalar_lea.vmem [#allocation3], 34
  %v3356 = vld [vmem:[%s3355] ss:$2 sm:$0xff]
  %s3357 = scalar_lea.vmem [#allocation3], 50
  %v3358 = vld [vmem:[%s3357] ss:$2 sm:$0xff]
  %s3359 = scalar_lea.vmem [#allocation3], 66
  %v3360 = vld [vmem:[%s3359] ss:$2 sm:$0xff]
  %s3361 = scalar_lea.vmem [#allocation3], 82
  %v3362 = vld [vmem:[%s3361] ss:$2 sm:$0xff]
  %s3363 = scalar_lea.vmem [#allocation3], 98
  %v3364 = vld [vmem:[%s3363] ss:$2 sm:$0xff]
  %s3365 = scalar_lea.vmem [#allocation3], 114
  %v3366 = vld [vmem:[%s3365] ss:$2 sm:$0xff]
  %3375 = vrot.lane.b32.xlu0 %v3352, 32
  %v3376 = vpop.permute.xlu0 %3375
  %3377 = vrot.lane.b32.xlu0 %v3354, 32
  %v3378 = vpop.permute.xlu0 %3377
  %3379 = vrot.lane.b32.xlu0 %v3356, 32
  %v3380 = vpop.permute.xlu0 %3379
  %3381 = vrot.lane.b32.xlu0 %v3358, 32
  %v3382 = vpop.permute.xlu0 %3381
  %3383 = vrot.lane.b32.xlu0 %v3360, 32
  %v3384 = vpop.permute.xlu0 %3383
  %3385 = vrot.lane.b32.xlu0 %v3362, 32
  %v3386 = vpop.permute.xlu0 %3385
  %3387 = vrot.lane.b32.xlu0 %v3364, 32
  %v3388 = vpop.permute.xlu0 %3387
  %3389 = vrot.lane.b32.xlu0 %v3366, 32
  %v3390 = vpop.permute.xlu0 %3389
  %vm3399 = vcmask 392448
  %3400 = vst.msk [vmem:[#allocation10] sm:$0xff] %vm3399, %v3376
  %3401 = vst.msk [vmem:[#allocation10 + $0x10] sm:$0xff] %vm3399, %v3378
  %3402 = vst.msk [vmem:[#allocation10 + $0x20] sm:$0xff] %vm3399, %v3380
  %3403 = vst.msk [vmem:[#allocation10 + $0x30] sm:$0xff] %vm3399, %v3382
  %3404 = vst.msk [vmem:[#allocation10 + $0x40] sm:$0xff] %vm3399, %v3384
  %3405 = vst.msk [vmem:[#allocation10 + $0x50] sm:$0xff] %vm3399, %v3386
  %3406 = vst.msk [vmem:[#allocation10 + $0x60] sm:$0xff] %vm3399, %v3388
  %3407 = vst.msk [vmem:[#allocation10 + $0x70] sm:$0xff] %vm3399, %v3390
  %s3408 = scalar_lea.vmem [#allocation3], 3
  %v3409 = vld [vmem:[%s3408] ss:$2 sm:$0xff]
  %s3410 = scalar_lea.vmem [#allocation3], 19
  %v3411 = vld [vmem:[%s3410] ss:$2 sm:$0xff]
  %s3412 = scalar_lea.vmem [#allocation3], 35
  %v3413 = vld [vmem:[%s3412] ss:$2 sm:$0xff]
  %s3414 = scalar_lea.vmem [#allocation3], 51
  %v3415 = vld [vmem:[%s3414] ss:$2 sm:$0xff]
  %s3416 = scalar_lea.vmem [#allocation3], 67
  %v3417 = vld [vmem:[%s3416] ss:$2 sm:$0xff]
  %s3418 = scalar_lea.vmem [#allocation3], 83
  %v3419 = vld [vmem:[%s3418] ss:$2 sm:$0xff]
  %s3420 = scalar_lea.vmem [#allocation3], 99
  %v3421 = vld [vmem:[%s3420] ss:$2 sm:$0xff]
  %s3422 = scalar_lea.vmem [#allocation3], 115
  %v3423 = vld [vmem:[%s3422] ss:$2 sm:$0xff]
  %3432 = vrot.lane.b32.xlu0 %v3409, 48
  %v3433 = vpop.permute.xlu0 %3432
  %3434 = vrot.lane.b32.xlu0 %v3411, 48
  %v3435 = vpop.permute.xlu0 %3434
  %3436 = vrot.lane.b32.xlu0 %v3413, 48
  %v3437 = vpop.permute.xlu0 %3436
  %3438 = vrot.lane.b32.xlu0 %v3415, 48
  %v3439 = vpop.permute.xlu0 %3438
  %3440 = vrot.lane.b32.xlu0 %v3417, 48
  %v3441 = vpop.permute.xlu0 %3440
  %3442 = vrot.lane.b32.xlu0 %v3419, 48
  %v3443 = vpop.permute.xlu0 %3442
  %3444 = vrot.lane.b32.xlu0 %v3421, 48
  %v3445 = vpop.permute.xlu0 %3444
  %3446 = vrot.lane.b32.xlu0 %v3423, 48
  %v3447 = vpop.permute.xlu0 %3446
  %vm3456 = vcmask 523648
  %3457 = vst.msk [vmem:[#allocation10] sm:$0xff] %vm3456, %v3433
  %3458 = vst.msk [vmem:[#allocation10 + $0x10] sm:$0xff] %vm3456, %v3435
  %3459 = vst.msk [vmem:[#allocation10 + $0x20] sm:$0xff] %vm3456, %v3437
  %3460 = vst.msk [vmem:[#allocation10 + $0x30] sm:$0xff] %vm3456, %v3439
  %3461 = vst.msk [vmem:[#allocation10 + $0x40] sm:$0xff] %vm3456, %v3441
  %3462 = vst.msk [vmem:[#allocation10 + $0x50] sm:$0xff] %vm3456, %v3443
  %3463 = vst.msk [vmem:[#allocation10 + $0x60] sm:$0xff] %vm3456, %v3445
  %3464 = vst.msk [vmem:[#allocation10 + $0x70] sm:$0xff] %vm3456, %v3447
  %s3465 = scalar_lea.vmem [#allocation3], 4
  %v3466 = vld [vmem:[%s3465] ss:$2 sm:$0xff]
  %s3467 = scalar_lea.vmem [#allocation3], 20
  %v3468 = vld [vmem:[%s3467] ss:$2 sm:$0xff]
  %s3469 = scalar_lea.vmem [#allocation3], 36
  %v3470 = vld [vmem:[%s3469] ss:$2 sm:$0xff]
  %s3471 = scalar_lea.vmem [#allocation3], 52
  %v3472 = vld [vmem:[%s3471] ss:$2 sm:$0xff]
  %s3473 = scalar_lea.vmem [#allocation3], 68
  %v3474 = vld [vmem:[%s3473] ss:$2 sm:$0xff]
  %s3475 = scalar_lea.vmem [#allocation3], 84
  %v3476 = vld [vmem:[%s3475] ss:$2 sm:$0xff]
  %s3477 = scalar_lea.vmem [#allocation3], 100
  %v3478 = vld [vmem:[%s3477] ss:$2 sm:$0xff]
  %s3479 = scalar_lea.vmem [#allocation3], 116
  %v3480 = vld [vmem:[%s3479] ss:$2 sm:$0xff]
  %3489 = vrot.lane.b32.xlu0 %v3466, 64
  %v3490 = vpop.permute.xlu0 %3489
  %3491 = vrot.lane.b32.xlu0 %v3468, 64
  %v3492 = vpop.permute.xlu0 %3491
  %3493 = vrot.lane.b32.xlu0 %v3470, 64
  %v3494 = vpop.permute.xlu0 %3493
  %3495 = vrot.lane.b32.xlu0 %v3472, 64
  %v3496 = vpop.permute.xlu0 %3495
  %3497 = vrot.lane.b32.xlu0 %v3474, 64
  %v3498 = vpop.permute.xlu0 %3497
  %3499 = vrot.lane.b32.xlu0 %v3476, 64
  %v3500 = vpop.permute.xlu0 %3499
  %3501 = vrot.lane.b32.xlu0 %v3478, 64
  %v3502 = vpop.permute.xlu0 %3501
  %3503 = vrot.lane.b32.xlu0 %v3480, 64
  %v3504 = vpop.permute.xlu0 %3503
  %vm3513 = vcmask 654848
  %3514 = vst.msk [vmem:[#allocation10] sm:$0xff] %vm3513, %v3490
  %3515 = vst.msk [vmem:[#allocation10 + $0x10] sm:$0xff] %vm3513, %v3492
  %3516 = vst.msk [vmem:[#allocation10 + $0x20] sm:$0xff] %vm3513, %v3494
  %3517 = vst.msk [vmem:[#allocation10 + $0x30] sm:$0xff] %vm3513, %v3496
  %3518 = vst.msk [vmem:[#allocation10 + $0x40] sm:$0xff] %vm3513, %v3498
  %3519 = vst.msk [vmem:[#allocation10 + $0x50] sm:$0xff] %vm3513, %v3500
  %3520 = vst.msk [vmem:[#allocation10 + $0x60] sm:$0xff] %vm3513, %v3502
  %3521 = vst.msk [vmem:[#allocation10 + $0x70] sm:$0xff] %vm3513, %v3504
  %s3522 = scalar_lea.vmem [#allocation3], 5
  %v3523 = vld [vmem:[%s3522] ss:$2 sm:$0xff]
  %s3524 = scalar_lea.vmem [#allocation3], 21
  %v3525 = vld [vmem:[%s3524] ss:$2 sm:$0xff]
  %s3526 = scalar_lea.vmem [#allocation3], 37
  %v3527 = vld [vmem:[%s3526] ss:$2 sm:$0xff]
  %s3528 = scalar_lea.vmem [#allocation3], 53
  %v3529 = vld [vmem:[%s3528] ss:$2 sm:$0xff]
  %s3530 = scalar_lea.vmem [#allocation3], 69
  %v3531 = vld [vmem:[%s3530] ss:$2 sm:$0xff]
  %s3532 = scalar_lea.vmem [#allocation3], 85
  %v3533 = vld [vmem:[%s3532] ss:$2 sm:$0xff]
  %s3534 = scalar_lea.vmem [#allocation3], 101
  %v3535 = vld [vmem:[%s3534] ss:$2 sm:$0xff]
  %s3536 = scalar_lea.vmem [#allocation3], 117
  %v3537 = vld [vmem:[%s3536] ss:$2 sm:$0xff]
  %3546 = vrot.lane.b32.xlu0 %v3523, 80
  %v3547 = vpop.permute.xlu0 %3546
  %3548 = vrot.lane.b32.xlu0 %v3525, 80
  %v3549 = vpop.permute.xlu0 %3548
  %3550 = vrot.lane.b32.xlu0 %v3527, 80
  %v3551 = vpop.permute.xlu0 %3550
  %3552 = vrot.lane.b32.xlu0 %v3529, 80
  %v3553 = vpop.permute.xlu0 %3552
  %3554 = vrot.lane.b32.xlu0 %v3531, 80
  %v3555 = vpop.permute.xlu0 %3554
  %3556 = vrot.lane.b32.xlu0 %v3533, 80
  %v3557 = vpop.permute.xlu0 %3556
  %3558 = vrot.lane.b32.xlu0 %v3535, 80
  %v3559 = vpop.permute.xlu0 %3558
  %3560 = vrot.lane.b32.xlu0 %v3537, 80
  %v3561 = vpop.permute.xlu0 %3560
  %vm3570 = vcmask 786048
  %3571 = vst.msk [vmem:[#allocation10] sm:$0xff] %vm3570, %v3547
  %3572 = vst.msk [vmem:[#allocation10 + $0x10] sm:$0xff] %vm3570, %v3549
  %3573 = vst.msk [vmem:[#allocation10 + $0x20] sm:$0xff] %vm3570, %v3551
  %3574 = vst.msk [vmem:[#allocation10 + $0x30] sm:$0xff] %vm3570, %v3553
  %3575 = vst.msk [vmem:[#allocation10 + $0x40] sm:$0xff] %vm3570, %v3555
  %3576 = vst.msk [vmem:[#allocation10 + $0x50] sm:$0xff] %vm3570, %v3557
  %3577 = vst.msk [vmem:[#allocation10 + $0x60] sm:$0xff] %vm3570, %v3559
  %3578 = vst.msk [vmem:[#allocation10 + $0x70] sm:$0xff] %vm3570, %v3561
  %s3579 = scalar_lea.vmem [#allocation3], 6
  %v3580 = vld [vmem:[%s3579] ss:$2 sm:$0xff]
  %s3581 = scalar_lea.vmem [#allocation3], 22
  %v3582 = vld [vmem:[%s3581] ss:$2 sm:$0xff]
  %s3583 = scalar_lea.vmem [#allocation3], 38
  %v3584 = vld [vmem:[%s3583] ss:$2 sm:$0xff]
  %s3585 = scalar_lea.vmem [#allocation3], 54
  %v3586 = vld [vmem:[%s3585] ss:$2 sm:$0xff]
  %s3587 = scalar_lea.vmem [#allocation3], 70
  %v3588 = vld [vmem:[%s3587] ss:$2 sm:$0xff]
  %s3589 = scalar_lea.vmem [#allocation3], 86
  %v3590 = vld [vmem:[%s3589] ss:$2 sm:$0xff]
  %s3591 = scalar_lea.vmem [#allocation3], 102
  %v3592 = vld [vmem:[%s3591] ss:$2 sm:$0xff]
  %s3593 = scalar_lea.vmem [#allocation3], 118
  %v3594 = vld [vmem:[%s3593] ss:$2 sm:$0xff]
  %3603 = vrot.lane.b32.xlu0 %v3580, 96
  %v3604 = vpop.permute.xlu0 %3603
  %3605 = vrot.lane.b32.xlu0 %v3582, 96
  %v3606 = vpop.permute.xlu0 %3605
  %3607 = vrot.lane.b32.xlu0 %v3584, 96
  %v3608 = vpop.permute.xlu0 %3607
  %3609 = vrot.lane.b32.xlu0 %v3586, 96
  %v3610 = vpop.permute.xlu0 %3609
  %3611 = vrot.lane.b32.xlu0 %v3588, 96
  %v3612 = vpop.permute.xlu0 %3611
  %3613 = vrot.lane.b32.xlu0 %v3590, 96
  %v3614 = vpop.permute.xlu0 %3613
  %3615 = vrot.lane.b32.xlu0 %v3592, 96
  %v3616 = vpop.permute.xlu0 %3615
  %3617 = vrot.lane.b32.xlu0 %v3594, 96
  %v3618 = vpop.permute.xlu0 %3617
  %vm3627 = vcmask 917248
  %3628 = vst.msk [vmem:[#allocation10] sm:$0xff] %vm3627, %v3604
  %3629 = vst.msk [vmem:[#allocation10 + $0x10] sm:$0xff] %vm3627, %v3606
  %3630 = vst.msk [vmem:[#allocation10 + $0x20] sm:$0xff] %vm3627, %v3608
  %3631 = vst.msk [vmem:[#allocation10 + $0x30] sm:$0xff] %vm3627, %v3610
  %3632 = vst.msk [vmem:[#allocation10 + $0x40] sm:$0xff] %vm3627, %v3612
  %3633 = vst.msk [vmem:[#allocation10 + $0x50] sm:$0xff] %vm3627, %v3614
  %3634 = vst.msk [vmem:[#allocation10 + $0x60] sm:$0xff] %vm3627, %v3616
  %3635 = vst.msk [vmem:[#allocation10 + $0x70] sm:$0xff] %vm3627, %v3618
  %s3636 = scalar_lea.vmem [#allocation3], 7
  %v3637 = vld [vmem:[%s3636] ss:$2 sm:$0xff]
  %s3638 = scalar_lea.vmem [#allocation3], 23
  %v3639 = vld [vmem:[%s3638] ss:$2 sm:$0xff]
  %s3640 = scalar_lea.vmem [#allocation3], 39
  %v3641 = vld [vmem:[%s3640] ss:$2 sm:$0xff]
  %s3642 = scalar_lea.vmem [#allocation3], 55
  %v3643 = vld [vmem:[%s3642] ss:$2 sm:$0xff]
  %s3644 = scalar_lea.vmem [#allocation3], 71
  %v3645 = vld [vmem:[%s3644] ss:$2 sm:$0xff]
  %s3646 = scalar_lea.vmem [#allocation3], 87
  %v3647 = vld [vmem:[%s3646] ss:$2 sm:$0xff]
  %s3648 = scalar_lea.vmem [#allocation3], 103
  %v3649 = vld [vmem:[%s3648] ss:$2 sm:$0xff]
  %s3650 = scalar_lea.vmem [#allocation3], 119
  %v3651 = vld [vmem:[%s3650] ss:$2 sm:$0xff]
  %3660 = vrot.lane.b32.xlu0 %v3637, 112
  %v3661 = vpop.permute.xlu0 %3660
  %3662 = vrot.lane.b32.xlu0 %v3639, 112
  %v3663 = vpop.permute.xlu0 %3662
  %3664 = vrot.lane.b32.xlu0 %v3641, 112
  %v3665 = vpop.permute.xlu0 %3664
  %3666 = vrot.lane.b32.xlu0 %v3643, 112
  %v3667 = vpop.permute.xlu0 %3666
  %3668 = vrot.lane.b32.xlu0 %v3645, 112
  %v3669 = vpop.permute.xlu0 %3668
  %3670 = vrot.lane.b32.xlu0 %v3647, 112
  %v3671 = vpop.permute.xlu0 %3670
  %3672 = vrot.lane.b32.xlu0 %v3649, 112
  %v3673 = vpop.permute.xlu0 %3672
  %3674 = vrot.lane.b32.xlu0 %v3651, 112
  %v3675 = vpop.permute.xlu0 %3674
  %vm3684 = vcmask 1048448
  %3685 = vst.msk [vmem:[#allocation10] sm:$0xff] %vm3684, %v3661
  %3686 = vst.msk [vmem:[#allocation10 + $0x10] sm:$0xff] %vm3684, %v3663
  %3687 = vst.msk [vmem:[#allocation10 + $0x20] sm:$0xff] %vm3684, %v3665
  %3688 = vst.msk [vmem:[#allocation10 + $0x30] sm:$0xff] %vm3684, %v3667
  %3689 = vst.msk [vmem:[#allocation10 + $0x40] sm:$0xff] %vm3684, %v3669
  %3690 = vst.msk [vmem:[#allocation10 + $0x50] sm:$0xff] %vm3684, %v3671
  %3691 = vst.msk [vmem:[#allocation10 + $0x60] sm:$0xff] %vm3684, %v3673
  %3692 = vst.msk [vmem:[#allocation10 + $0x70] sm:$0xff] %vm3684, %v3675
  %s3693 = scalar_lea.vmem [#allocation3], 8
  %v3694 = vld [vmem:[%s3693] ss:$2 sm:$0xff]
  %s3695 = scalar_lea.vmem [#allocation3], 24
  %v3696 = vld [vmem:[%s3695] ss:$2 sm:$0xff]
  %s3697 = scalar_lea.vmem [#allocation3], 40
  %v3698 = vld [vmem:[%s3697] ss:$2 sm:$0xff]
  %s3699 = scalar_lea.vmem [#allocation3], 56
  %v3700 = vld [vmem:[%s3699] ss:$2 sm:$0xff]
  %s3701 = scalar_lea.vmem [#allocation3], 72
  %v3702 = vld [vmem:[%s3701] ss:$2 sm:$0xff]
  %s3703 = scalar_lea.vmem [#allocation3], 88
  %v3704 = vld [vmem:[%s3703] ss:$2 sm:$0xff]
  %s3705 = scalar_lea.vmem [#allocation3], 104
  %v3706 = vld [vmem:[%s3705] ss:$2 sm:$0xff]
  %s3707 = scalar_lea.vmem [#allocation3], 120
  %v3708 = vld [vmem:[%s3707] ss:$2 sm:$0xff]
  %3709 = vst.msk [vmem:[#allocation10 + $0x8] sm:$0xff] %vm3254, %v3694
  %3710 = vst.msk [vmem:[#allocation10 + $0x18] sm:$0xff] %vm3254, %v3696
  %3711 = vst.msk [vmem:[#allocation10 + $0x28] sm:$0xff] %vm3254, %v3698
  %3712 = vst.msk [vmem:[#allocation10 + $0x38] sm:$0xff] %vm3254, %v3700
  %3713 = vst.msk [vmem:[#allocation10 + $0x48] sm:$0xff] %vm3254, %v3702
  %3714 = vst.msk [vmem:[#allocation10 + $0x58] sm:$0xff] %vm3254, %v3704
  %3715 = vst.msk [vmem:[#allocation10 + $0x68] sm:$0xff] %vm3254, %v3706
  %3716 = vst.msk [vmem:[#allocation10 + $0x78] sm:$0xff] %vm3254, %v3708
  %s3717 = scalar_lea.vmem [#allocation3], 9
  %v3718 = vld [vmem:[%s3717] ss:$2 sm:$0xff]
  %s3719 = scalar_lea.vmem [#allocation3], 25
  %v3720 = vld [vmem:[%s3719] ss:$2 sm:$0xff]
  %s3721 = scalar_lea.vmem [#allocation3], 41
  %v3722 = vld [vmem:[%s3721] ss:$2 sm:$0xff]
  %s3723 = scalar_lea.vmem [#allocation3], 57
  %v3724 = vld [vmem:[%s3723] ss:$2 sm:$0xff]
  %s3725 = scalar_lea.vmem [#allocation3], 73
  %v3726 = vld [vmem:[%s3725] ss:$2 sm:$0xff]
  %s3727 = scalar_lea.vmem [#allocation3], 89
  %v3728 = vld [vmem:[%s3727] ss:$2 sm:$0xff]
  %s3729 = scalar_lea.vmem [#allocation3], 105
  %v3730 = vld [vmem:[%s3729] ss:$2 sm:$0xff]
  %s3731 = scalar_lea.vmem [#allocation3], 121
  %v3732 = vld [vmem:[%s3731] ss:$2 sm:$0xff]
  %3741 = vrot.lane.b32.xlu0 %v3718, 16
  %v3742 = vpop.permute.xlu0 %3741
  %3743 = vrot.lane.b32.xlu0 %v3720, 16
  %v3744 = vpop.permute.xlu0 %3743
  %3745 = vrot.lane.b32.xlu0 %v3722, 16
  %v3746 = vpop.permute.xlu0 %3745
  %3747 = vrot.lane.b32.xlu0 %v3724, 16
  %v3748 = vpop.permute.xlu0 %3747
  %3749 = vrot.lane.b32.xlu0 %v3726, 16
  %v3750 = vpop.permute.xlu0 %3749
  %3751 = vrot.lane.b32.xlu0 %v3728, 16
  %v3752 = vpop.permute.xlu0 %3751
  %3753 = vrot.lane.b32.xlu0 %v3730, 16
  %v3754 = vpop.permute.xlu0 %3753
  %3755 = vrot.lane.b32.xlu0 %v3732, 16
  %v3756 = vpop.permute.xlu0 %3755
  %3765 = vst.msk [vmem:[#allocation10 + $0x8] sm:$0xff] %vm3342, %v3742
  %3766 = vst.msk [vmem:[#allocation10 + $0x18] sm:$0xff] %vm3342, %v3744
  %3767 = vst.msk [vmem:[#allocation10 + $0x28] sm:$0xff] %vm3342, %v3746
  %3768 = vst.msk [vmem:[#allocation10 + $0x38] sm:$0xff] %vm3342, %v3748
  %3769 = vst.msk [vmem:[#allocation10 + $0x48] sm:$0xff] %vm3342, %v3750
  %3770 = vst.msk [vmem:[#allocation10 + $0x58] sm:$0xff] %vm3342, %v3752
  %3771 = vst.msk [vmem:[#allocation10 + $0x68] sm:$0xff] %vm3342, %v3754
  %3772 = vst.msk [vmem:[#allocation10 + $0x78] sm:$0xff] %vm3342, %v3756
  %s3773 = scalar_lea.vmem [#allocation3], 10
  %v3774 = vld [vmem:[%s3773] ss:$2 sm:$0xff]
  %s3775 = scalar_lea.vmem [#allocation3], 26
  %v3776 = vld [vmem:[%s3775] ss:$2 sm:$0xff]
  %s3777 = scalar_lea.vmem [#allocation3], 42
  %v3778 = vld [vmem:[%s3777] ss:$2 sm:$0xff]
  %s3779 = scalar_lea.vmem [#allocation3], 58
  %v3780 = vld [vmem:[%s3779] ss:$2 sm:$0xff]
  %s3781 = scalar_lea.vmem [#allocation3], 74
  %v3782 = vld [vmem:[%s3781] ss:$2 sm:$0xff]
  %s3783 = scalar_lea.vmem [#allocation3], 90
  %v3784 = vld [vmem:[%s3783] ss:$2 sm:$0xff]
  %s3785 = scalar_lea.vmem [#allocation3], 106
  %v3786 = vld [vmem:[%s3785] ss:$2 sm:$0xff]
  %s3787 = scalar_lea.vmem [#allocation3], 122
  %v3788 = vld [vmem:[%s3787] ss:$2 sm:$0xff]
  %3797 = vrot.lane.b32.xlu0 %v3774, 32
  %v3798 = vpop.permute.xlu0 %3797
  %3799 = vrot.lane.b32.xlu0 %v3776, 32
  %v3800 = vpop.permute.xlu0 %3799
  %3801 = vrot.lane.b32.xlu0 %v3778, 32
  %v3802 = vpop.permute.xlu0 %3801
  %3803 = vrot.lane.b32.xlu0 %v3780, 32
  %v3804 = vpop.permute.xlu0 %3803
  %3805 = vrot.lane.b32.xlu0 %v3782, 32
  %v3806 = vpop.permute.xlu0 %3805
  %3807 = vrot.lane.b32.xlu0 %v3784, 32
  %v3808 = vpop.permute.xlu0 %3807
  %3809 = vrot.lane.b32.xlu0 %v3786, 32
  %v3810 = vpop.permute.xlu0 %3809
  %3811 = vrot.lane.b32.xlu0 %v3788, 32
  %v3812 = vpop.permute.xlu0 %3811
  %3821 = vst.msk [vmem:[#allocation10 + $0x8] sm:$0xff] %vm3399, %v3798
  %3822 = vst.msk [vmem:[#allocation10 + $0x18] sm:$0xff] %vm3399, %v3800
  %3823 = vst.msk [vmem:[#allocation10 + $0x28] sm:$0xff] %vm3399, %v3802
  %3824 = vst.msk [vmem:[#allocation10 + $0x38] sm:$0xff] %vm3399, %v3804
  %3825 = vst.msk [vmem:[#allocation10 + $0x48] sm:$0xff] %vm3399, %v3806
  %3826 = vst.msk [vmem:[#allocation10 + $0x58] sm:$0xff] %vm3399, %v3808
  %3827 = vst.msk [vmem:[#allocation10 + $0x68] sm:$0xff] %vm3399, %v3810
  %3828 = vst.msk [vmem:[#allocation10 + $0x78] sm:$0xff] %vm3399, %v3812
  %s3829 = scalar_lea.vmem [#allocation3], 11
  %v3830 = vld [vmem:[%s3829] ss:$2 sm:$0xff]
  %s3831 = scalar_lea.vmem [#allocation3], 27
  %v3832 = vld [vmem:[%s3831] ss:$2 sm:$0xff]
  %s3833 = scalar_lea.vmem [#allocation3], 43
  %v3834 = vld [vmem:[%s3833] ss:$2 sm:$0xff]
  %s3835 = scalar_lea.vmem [#allocation3], 59
  %v3836 = vld [vmem:[%s3835] ss:$2 sm:$0xff]
  %s3837 = scalar_lea.vmem [#allocation3], 75
  %v3838 = vld [vmem:[%s3837] ss:$2 sm:$0xff]
  %s3839 = scalar_lea.vmem [#allocation3], 91
  %v3840 = vld [vmem:[%s3839] ss:$2 sm:$0xff]
  %s3841 = scalar_lea.vmem [#allocation3], 107
  %v3842 = vld [vmem:[%s3841] ss:$2 sm:$0xff]
  %s3843 = scalar_lea.vmem [#allocation3], 123
  %v3844 = vld [vmem:[%s3843] ss:$2 sm:$0xff]
  %3853 = vrot.lane.b32.xlu0 %v3830, 48
  %v3854 = vpop.permute.xlu0 %3853
  %3855 = vrot.lane.b32.xlu0 %v3832, 48
  %v3856 = vpop.permute.xlu0 %3855
  %3857 = vrot.lane.b32.xlu0 %v3834, 48
  %v3858 = vpop.permute.xlu0 %3857
  %3859 = vrot.lane.b32.xlu0 %v3836, 48
  %v3860 = vpop.permute.xlu0 %3859
  %3861 = vrot.lane.b32.xlu0 %v3838, 48
  %v3862 = vpop.permute.xlu0 %3861
  %3863 = vrot.lane.b32.xlu0 %v3840, 48
  %v3864 = vpop.permute.xlu0 %3863
  %3865 = vrot.lane.b32.xlu0 %v3842, 48
  %v3866 = vpop.permute.xlu0 %3865
  %3867 = vrot.lane.b32.xlu0 %v3844, 48
  %v3868 = vpop.permute.xlu0 %3867
  %3877 = vst.msk [vmem:[#allocation10 + $0x8] sm:$0xff] %vm3456, %v3854
  %3878 = vst.msk [vmem:[#allocation10 + $0x18] sm:$0xff] %vm3456, %v3856
  %3879 = vst.msk [vmem:[#allocation10 + $0x28] sm:$0xff] %vm3456, %v3858
  %3880 = vst.msk [vmem:[#allocation10 + $0x38] sm:$0xff] %vm3456, %v3860
  %3881 = vst.msk [vmem:[#allocation10 + $0x48] sm:$0xff] %vm3456, %v3862
  %3882 = vst.msk [vmem:[#allocation10 + $0x58] sm:$0xff] %vm3456, %v3864
  %3883 = vst.msk [vmem:[#allocation10 + $0x68] sm:$0xff] %vm3456, %v3866
  %3884 = vst.msk [vmem:[#allocation10 + $0x78] sm:$0xff] %vm3456, %v3868
  %3885 = vst.msk [vmem:[#allocation3 + $0x8a] sm:$0x1f] %vm3251, 0.0
  %3886 = vst.msk [vmem:[#allocation3 + $0x10f] sm:$0x1f] %vm3251, 0.0
  %3887 = vst.msk [vmem:[#allocation3 + $0x8f] sm:$0xff] %vm3254, %v3235
  %3888 = vst.msk [vmem:[#allocation3 + $0x97] sm:$0xff] %vm3254, %v3236
  %3889 = vst.msk [vmem:[#allocation3 + $0x9f] sm:$0xff] %vm3254, %v3237
  %3890 = vst.msk [vmem:[#allocation3 + $0xa7] sm:$0xff] %vm3254, %v3238
  %3891 = vst.msk [vmem:[#allocation3 + $0xaf] sm:$0xff] %vm3254, %v3239
  %3892 = vst.msk [vmem:[#allocation3 + $0xb7] sm:$0xff] %vm3254, %v3240
  %3893 = vst.msk [vmem:[#allocation3 + $0xbf] sm:$0xff] %vm3254, %v3241
  %3894 = vst.msk [vmem:[#allocation3 + $0xc7] sm:$0xff] %vm3254, %v3242
  %3895 = vst.msk [vmem:[#allocation3 + $0xcf] sm:$0xff] %vm3254, %v3243
  %3896 = vst.msk [vmem:[#allocation3 + $0xd7] sm:$0xff] %vm3254, %v3244
  %3897 = vst.msk [vmem:[#allocation3 + $0xdf] sm:$0xff] %vm3254, %v3245
  %3898 = vst.msk [vmem:[#allocation3 + $0xe7] sm:$0xff] %vm3254, %v3246
  %3899 = vst.msk [vmem:[#allocation3 + $0xef] sm:$0xff] %vm3254, %v3247
  %3900 = vst.msk [vmem:[#allocation3 + $0xf7] sm:$0xff] %vm3254, %v3248
  %3901 = vst.msk [vmem:[#allocation3 + $0xff] sm:$0xff] %vm3254, %v3249
  %3902 = vst.msk [vmem:[#allocation3 + $0x107] sm:$0xff] %vm3254, %v3250
  %s3903 = scalar_lea.vmem [#allocation3], 138
  %v3904 = vld [vmem:[%s3903] ss:$2 sm:$0xff]
  %s3905 = scalar_lea.vmem [#allocation3], 154
  %v3906 = vld [vmem:[%s3905] ss:$2 sm:$0xff]
  %s3907 = scalar_lea.vmem [#allocation3], 170
  %v3908 = vld [vmem:[%s3907] ss:$2 sm:$0xff]
  %s3909 = scalar_lea.vmem [#allocation3], 186
  %v3910 = vld [vmem:[%s3909] ss:$2 sm:$0xff]
  %s3911 = scalar_lea.vmem [#allocation3], 202
  %v3912 = vld [vmem:[%s3911] ss:$2 sm:$0xff]
  %s3913 = scalar_lea.vmem [#allocation3], 218
  %v3914 = vld [vmem:[%s3913] ss:$2 sm:$0xff]
  %s3915 = scalar_lea.vmem [#allocation3], 234
  %v3916 = vld [vmem:[%s3915] ss:$2 sm:$0xff]
  %s3917 = scalar_lea.vmem [#allocation3], 250
  %v3918 = vld [vmem:[%s3917] ss:$2 sm:$0xff]
  %3919 = vst.msk [vmem:[#allocation10 + $0x80] sm:$0xff] %vm3254, %v3904
  %3920 = vst.msk [vmem:[#allocation10 + $0x90] sm:$0xff] %vm3254, %v3906
  %3921 = vst.msk [vmem:[#allocation10 + $0xa0] sm:$0xff] %vm3254, %v3908
  %3922 = vst.msk [vmem:[#allocation10 + $0xb0] sm:$0xff] %vm3254, %v3910
  %3923 = vst.msk [vmem:[#allocation10 + $0xc0] sm:$0xff] %vm3254, %v3912
  %3924 = vst.msk [vmem:[#allocation10 + $0xd0] sm:$0xff] %vm3254, %v3914
  %3925 = vst.msk [vmem:[#allocation10 + $0xe0] sm:$0xff] %vm3254, %v3916
  %3926 = vst.msk [vmem:[#allocation10 + $0xf0] sm:$0xff] %vm3254, %v3918
  %s3927 = scalar_lea.vmem [#allocation3], 139
  %v3928 = vld [vmem:[%s3927] ss:$2 sm:$0xff]
  %s3929 = scalar_lea.vmem [#allocation3], 155
  %v3930 = vld [vmem:[%s3929] ss:$2 sm:$0xff]
  %s3931 = scalar_lea.vmem [#allocation3], 171
  %v3932 = vld [vmem:[%s3931] ss:$2 sm:$0xff]
  %s3933 = scalar_lea.vmem [#allocation3], 187
  %v3934 = vld [vmem:[%s3933] ss:$2 sm:$0xff]
  %s3935 = scalar_lea.vmem [#allocation3], 203
  %v3936 = vld [vmem:[%s3935] ss:$2 sm:$0xff]
  %s3937 = scalar_lea.vmem [#allocation3], 219
  %v3938 = vld [vmem:[%s3937] ss:$2 sm:$0xff]
  %s3939 = scalar_lea.vmem [#allocation3], 235
  %v3940 = vld [vmem:[%s3939] ss:$2 sm:$0xff]
  %s3941 = scalar_lea.vmem [#allocation3], 251
  %v3942 = vld [vmem:[%s3941] ss:$2 sm:$0xff]
  %3951 = vrot.lane.b32.xlu0 %v3928, 16
  %v3952 = vpop.permute.xlu0 %3951
  %3953 = vrot.lane.b32.xlu0 %v3930, 16
  %v3954 = vpop.permute.xlu0 %3953
  %3955 = vrot.lane.b32.xlu0 %v3932, 16
  %v3956 = vpop.permute.xlu0 %3955
  %3957 = vrot.lane.b32.xlu0 %v3934, 16
  %v3958 = vpop.permute.xlu0 %3957
  %3959 = vrot.lane.b32.xlu0 %v3936, 16
  %v3960 = vpop.permute.xlu0 %3959
  %3961 = vrot.lane.b32.xlu0 %v3938, 16
  %v3962 = vpop.permute.xlu0 %3961
  %3963 = vrot.lane.b32.xlu0 %v3940, 16
  %v3964 = vpop.permute.xlu0 %3963
  %3965 = vrot.lane.b32.xlu0 %v3942, 16
  %v3966 = vpop.permute.xlu0 %3965
  %3975 = vst.msk [vmem:[#allocation10 + $0x80] sm:$0xff] %vm3342, %v3952
  %3976 = vst.msk [vmem:[#allocation10 + $0x90] sm:$0xff] %vm3342, %v3954
  %3977 = vst.msk [vmem:[#allocation10 + $0xa0] sm:$0xff] %vm3342, %v3956
  %3978 = vst.msk [vmem:[#allocation10 + $0xb0] sm:$0xff] %vm3342, %v3958
  %3979 = vst.msk [vmem:[#allocation10 + $0xc0] sm:$0xff] %vm3342, %v3960
  %3980 = vst.msk [vmem:[#allocation10 + $0xd0] sm:$0xff] %vm3342, %v3962
  %3981 = vst.msk [vmem:[#allocation10 + $0xe0] sm:$0xff] %vm3342, %v3964
  %3982 = vst.msk [vmem:[#allocation10 + $0xf0] sm:$0xff] %vm3342, %v3966
  %s3983 = scalar_lea.vmem [#allocation3], 140
  %v3984 = vld [vmem:[%s3983] ss:$2 sm:$0xff]
  %s3985 = scalar_lea.vmem [#allocation3], 156
  %v3986 = vld [vmem:[%s3985] ss:$2 sm:$0xff]
  %s3987 = scalar_lea.vmem [#allocation3], 172
  %v3988 = vld [vmem:[%s3987] ss:$2 sm:$0xff]
  %s3989 = scalar_lea.vmem [#allocation3], 188
  %v3990 = vld [vmem:[%s3989] ss:$2 sm:$0xff]
  %s3991 = scalar_lea.vmem [#allocation3], 204
  %v3992 = vld [vmem:[%s3991] ss:$2 sm:$0xff]
  %s3993 = scalar_lea.vmem [#allocation3], 220
  %v3994 = vld [vmem:[%s3993] ss:$2 sm:$0xff]
  %s3995 = scalar_lea.vmem [#allocation3], 236
  %v3996 = vld [vmem:[%s3995] ss:$2 sm:$0xff]
  %s3997 = scalar_lea.vmem [#allocation3], 252
  %v3998 = vld [vmem:[%s3997] ss:$2 sm:$0xff]
  %4007 = vrot.lane.b32.xlu0 %v3984, 32
  %v4008 = vpop.permute.xlu0 %4007
  %4009 = vrot.lane.b32.xlu0 %v3986, 32
  %v4010 = vpop.permute.xlu0 %4009
  %4011 = vrot.lane.b32.xlu0 %v3988, 32
  %v4012 = vpop.permute.xlu0 %4011
  %4013 = vrot.lane.b32.xlu0 %v3990, 32
  %v4014 = vpop.permute.xlu0 %4013
  %4015 = vrot.lane.b32.xlu0 %v3992, 32
  %v4016 = vpop.permute.xlu0 %4015
  %4017 = vrot.lane.b32.xlu0 %v3994, 32
  %v4018 = vpop.permute.xlu0 %4017
  %4019 = vrot.lane.b32.xlu0 %v3996, 32
  %v4020 = vpop.permute.xlu0 %4019
  %4021 = vrot.lane.b32.xlu0 %v3998, 32
  %v4022 = vpop.permute.xlu0 %4021
  %4031 = vst.msk [vmem:[#allocation10 + $0x80] sm:$0xff] %vm3399, %v4008
  %4032 = vst.msk [vmem:[#allocation10 + $0x90] sm:$0xff] %vm3399, %v4010
  %4033 = vst.msk [vmem:[#allocation10 + $0xa0] sm:$0xff] %vm3399, %v4012
  %4034 = vst.msk [vmem:[#allocation10 + $0xb0] sm:$0xff] %vm3399, %v4014
  %4035 = vst.msk [vmem:[#allocation10 + $0xc0] sm:$0xff] %vm3399, %v4016
  %4036 = vst.msk [vmem:[#allocation10 + $0xd0] sm:$0xff] %vm3399, %v4018
  %4037 = vst.msk [vmem:[#allocation10 + $0xe0] sm:$0xff] %vm3399, %v4020
  %4038 = vst.msk [vmem:[#allocation10 + $0xf0] sm:$0xff] %vm3399, %v4022
  %s4039 = scalar_lea.vmem [#allocation3], 141
  %v4040 = vld [vmem:[%s4039] ss:$2 sm:$0xff]
  %s4041 = scalar_lea.vmem [#allocation3], 157
  %v4042 = vld [vmem:[%s4041] ss:$2 sm:$0xff]
  %s4043 = scalar_lea.vmem [#allocation3], 173
  %v4044 = vld [vmem:[%s4043] ss:$2 sm:$0xff]
  %s4045 = scalar_lea.vmem [#allocation3], 189
  %v4046 = vld [vmem:[%s4045] ss:$2 sm:$0xff]
  %s4047 = scalar_lea.vmem [#allocation3], 205
  %v4048 = vld [vmem:[%s4047] ss:$2 sm:$0xff]
  %s4049 = scalar_lea.vmem [#allocation3], 221
  %v4050 = vld [vmem:[%s4049] ss:$2 sm:$0xff]
  %s4051 = scalar_lea.vmem [#allocation3], 237
  %v4052 = vld [vmem:[%s4051] ss:$2 sm:$0xff]
  %s4053 = scalar_lea.vmem [#allocation3], 253
  %v4054 = vld [vmem:[%s4053] ss:$2 sm:$0xff]
  %4063 = vrot.lane.b32.xlu0 %v4040, 48
  %v4064 = vpop.permute.xlu0 %4063
  %4065 = vrot.lane.b32.xlu0 %v4042, 48
  %v4066 = vpop.permute.xlu0 %4065
  %4067 = vrot.lane.b32.xlu0 %v4044, 48
  %v4068 = vpop.permute.xlu0 %4067
  %4069 = vrot.lane.b32.xlu0 %v4046, 48
  %v4070 = vpop.permute.xlu0 %4069
  %4071 = vrot.lane.b32.xlu0 %v4048, 48
  %v4072 = vpop.permute.xlu0 %4071
  %4073 = vrot.lane.b32.xlu0 %v4050, 48
  %v4074 = vpop.permute.xlu0 %4073
  %4075 = vrot.lane.b32.xlu0 %v4052, 48
  %v4076 = vpop.permute.xlu0 %4075
  %4077 = vrot.lane.b32.xlu0 %v4054, 48
  %v4078 = vpop.permute.xlu0 %4077
  %4087 = vst.msk [vmem:[#allocation10 + $0x80] sm:$0xff] %vm3456, %v4064
  %4088 = vst.msk [vmem:[#allocation10 + $0x90] sm:$0xff] %vm3456, %v4066
  %4089 = vst.msk [vmem:[#allocation10 + $0xa0] sm:$0xff] %vm3456, %v4068
  %4090 = vst.msk [vmem:[#allocation10 + $0xb0] sm:$0xff] %vm3456, %v4070
  %4091 = vst.msk [vmem:[#allocation10 + $0xc0] sm:$0xff] %vm3456, %v4072
  %4092 = vst.msk [vmem:[#allocation10 + $0xd0] sm:$0xff] %vm3456, %v4074
  %4093 = vst.msk [vmem:[#allocation10 + $0xe0] sm:$0xff] %vm3456, %v4076
  %4094 = vst.msk [vmem:[#allocation10 + $0xf0] sm:$0xff] %vm3456, %v4078
  %s4095 = scalar_lea.vmem [#allocation3], 142
  %v4096 = vld [vmem:[%s4095] ss:$2 sm:$0xff]
  %s4097 = scalar_lea.vmem [#allocation3], 158
  %v4098 = vld [vmem:[%s4097] ss:$2 sm:$0xff]
  %s4099 = scalar_lea.vmem [#allocation3], 174
  %v4100 = vld [vmem:[%s4099] ss:$2 sm:$0xff]
  %s4101 = scalar_lea.vmem [#allocation3], 190
  %v4102 = vld [vmem:[%s4101] ss:$2 sm:$0xff]
  %s4103 = scalar_lea.vmem [#allocation3], 206
  %v4104 = vld [vmem:[%s4103] ss:$2 sm:$0xff]
  %s4105 = scalar_lea.vmem [#allocation3], 222
  %v4106 = vld [vmem:[%s4105] ss:$2 sm:$0xff]
  %s4107 = scalar_lea.vmem [#allocation3], 238
  %v4108 = vld [vmem:[%s4107] ss:$2 sm:$0xff]
  %s4109 = scalar_lea.vmem [#allocation3], 254
  %v4110 = vld [vmem:[%s4109] ss:$2 sm:$0xff]
  %4119 = vrot.lane.b32.xlu0 %v4096, 64
  %v4120 = vpop.permute.xlu0 %4119
  %4121 = vrot.lane.b32.xlu0 %v4098, 64
  %v4122 = vpop.permute.xlu0 %4121
  %4123 = vrot.lane.b32.xlu0 %v4100, 64
  %v4124 = vpop.permute.xlu0 %4123
  %4125 = vrot.lane.b32.xlu0 %v4102, 64
  %v4126 = vpop.permute.xlu0 %4125
  %4127 = vrot.lane.b32.xlu0 %v4104, 64
  %v4128 = vpop.permute.xlu0 %4127
  %4129 = vrot.lane.b32.xlu0 %v4106, 64
  %v4130 = vpop.permute.xlu0 %4129
  %4131 = vrot.lane.b32.xlu0 %v4108, 64
  %v4132 = vpop.permute.xlu0 %4131
  %4133 = vrot.lane.b32.xlu0 %v4110, 64
  %v4134 = vpop.permute.xlu0 %4133
  %4143 = vst.msk [vmem:[#allocation10 + $0x80] sm:$0xff] %vm3513, %v4120
  %4144 = vst.msk [vmem:[#allocation10 + $0x90] sm:$0xff] %vm3513, %v4122
  %4145 = vst.msk [vmem:[#allocation10 + $0xa0] sm:$0xff] %vm3513, %v4124
  %4146 = vst.msk [vmem:[#allocation10 + $0xb0] sm:$0xff] %vm3513, %v4126
  %4147 = vst.msk [vmem:[#allocation10 + $0xc0] sm:$0xff] %vm3513, %v4128
  %4148 = vst.msk [vmem:[#allocation10 + $0xd0] sm:$0xff] %vm3513, %v4130
  %4149 = vst.msk [vmem:[#allocation10 + $0xe0] sm:$0xff] %vm3513, %v4132
  %4150 = vst.msk [vmem:[#allocation10 + $0xf0] sm:$0xff] %vm3513, %v4134
  %s4151 = scalar_lea.vmem [#allocation3], 143
  %v4152 = vld [vmem:[%s4151] ss:$2 sm:$0xff]
  %s4153 = scalar_lea.vmem [#allocation3], 159
  %v4154 = vld [vmem:[%s4153] ss:$2 sm:$0xff]
  %s4155 = scalar_lea.vmem [#allocation3], 175
  %v4156 = vld [vmem:[%s4155] ss:$2 sm:$0xff]
  %s4157 = scalar_lea.vmem [#allocation3], 191
  %v4158 = vld [vmem:[%s4157] ss:$2 sm:$0xff]
  %s4159 = scalar_lea.vmem [#allocation3], 207
  %v4160 = vld [vmem:[%s4159] ss:$2 sm:$0xff]
  %s4161 = scalar_lea.vmem [#allocation3], 223
  %v4162 = vld [vmem:[%s4161] ss:$2 sm:$0xff]
  %s4163 = scalar_lea.vmem [#allocation3], 239
  %v4164 = vld [vmem:[%s4163] ss:$2 sm:$0xff]
  %s4165 = scalar_lea.vmem [#allocation3], 255
  %v4166 = vld [vmem:[%s4165] ss:$2 sm:$0xff]
  %4175 = vrot.lane.b32.xlu0 %v4152, 80
  %v4176 = vpop.permute.xlu0 %4175
  %4177 = vrot.lane.b32.xlu0 %v4154, 80
  %v4178 = vpop.permute.xlu0 %4177
  %4179 = vrot.lane.b32.xlu0 %v4156, 80
  %v4180 = vpop.permute.xlu0 %4179
  %4181 = vrot.lane.b32.xlu0 %v4158, 80
  %v4182 = vpop.permute.xlu0 %4181
  %4183 = vrot.lane.b32.xlu0 %v4160, 80
  %v4184 = vpop.permute.xlu0 %4183
  %4185 = vrot.lane.b32.xlu0 %v4162, 80
  %v4186 = vpop.permute.xlu0 %4185
  %4187 = vrot.lane.b32.xlu0 %v4164, 80
  %v4188 = vpop.permute.xlu0 %4187
  %4189 = vrot.lane.b32.xlu0 %v4166, 80
  %v4190 = vpop.permute.xlu0 %4189
  %4199 = vst.msk [vmem:[#allocation10 + $0x80] sm:$0xff] %vm3570, %v4176
  %4200 = vst.msk [vmem:[#allocation10 + $0x90] sm:$0xff] %vm3570, %v4178
  %4201 = vst.msk [vmem:[#allocation10 + $0xa0] sm:$0xff] %vm3570, %v4180
  %4202 = vst.msk [vmem:[#allocation10 + $0xb0] sm:$0xff] %vm3570, %v4182
  %4203 = vst.msk [vmem:[#allocation10 + $0xc0] sm:$0xff] %vm3570, %v4184
  %4204 = vst.msk [vmem:[#allocation10 + $0xd0] sm:$0xff] %vm3570, %v4186
  %4205 = vst.msk [vmem:[#allocation10 + $0xe0] sm:$0xff] %vm3570, %v4188
  %4206 = vst.msk [vmem:[#allocation10 + $0xf0] sm:$0xff] %vm3570, %v4190
  %s4207 = scalar_lea.vmem [#allocation3], 144
  %v4208 = vld [vmem:[%s4207] ss:$2 sm:$0xff]
  %s4209 = scalar_lea.vmem [#allocation3], 160
  %v4210 = vld [vmem:[%s4209] ss:$2 sm:$0xff]
  %s4211 = scalar_lea.vmem [#allocation3], 176
  %v4212 = vld [vmem:[%s4211] ss:$2 sm:$0xff]
  %s4213 = scalar_lea.vmem [#allocation3], 192
  %v4214 = vld [vmem:[%s4213] ss:$2 sm:$0xff]
  %s4215 = scalar_lea.vmem [#allocation3], 208
  %v4216 = vld [vmem:[%s4215] ss:$2 sm:$0xff]
  %s4217 = scalar_lea.vmem [#allocation3], 224
  %v4218 = vld [vmem:[%s4217] ss:$2 sm:$0xff]
  %s4219 = scalar_lea.vmem [#allocation3], 240
  %v4220 = vld [vmem:[%s4219] ss:$2 sm:$0xff]
  %s4221 = scalar_lea.vmem [#allocation3], 256
  %v4222 = vld [vmem:[%s4221] ss:$2 sm:$0xff]
  %4231 = vrot.lane.b32.xlu0 %v4208, 96
  %v4232 = vpop.permute.xlu0 %4231
  %4233 = vrot.lane.b32.xlu0 %v4210, 96
  %v4234 = vpop.permute.xlu0 %4233
  %4235 = vrot.lane.b32.xlu0 %v4212, 96
  %v4236 = vpop.permute.xlu0 %4235
  %4237 = vrot.lane.b32.xlu0 %v4214, 96
  %v4238 = vpop.permute.xlu0 %4237
  %4239 = vrot.lane.b32.xlu0 %v4216, 96
  %v4240 = vpop.permute.xlu0 %4239
  %4241 = vrot.lane.b32.xlu0 %v4218, 96
  %v4242 = vpop.permute.xlu0 %4241
  %4243 = vrot.lane.b32.xlu0 %v4220, 96
  %v4244 = vpop.permute.xlu0 %4243
  %4245 = vrot.lane.b32.xlu0 %v4222, 96
  %v4246 = vpop.permute.xlu0 %4245
  %4255 = vst.msk [vmem:[#allocation10 + $0x80] sm:$0xff] %vm3627, %v4232
  %4256 = vst.msk [vmem:[#allocation10 + $0x90] sm:$0xff] %vm3627, %v4234
  %4257 = vst.msk [vmem:[#allocation10 + $0xa0] sm:$0xff] %vm3627, %v4236
  %4258 = vst.msk [vmem:[#allocation10 + $0xb0] sm:$0xff] %vm3627, %v4238
  %4259 = vst.msk [vmem:[#allocation10 + $0xc0] sm:$0xff] %vm3627, %v4240
  %4260 = vst.msk [vmem:[#allocation10 + $0xd0] sm:$0xff] %vm3627, %v4242
  %4261 = vst.msk [vmem:[#allocation10 + $0xe0] sm:$0xff] %vm3627, %v4244
  %4262 = vst.msk [vmem:[#allocation10 + $0xf0] sm:$0xff] %vm3627, %v4246
  %s4263 = scalar_lea.vmem [#allocation3], 145
  %v4264 = vld [vmem:[%s4263] ss:$2 sm:$0xff]
  %s4265 = scalar_lea.vmem [#allocation3], 161
  %v4266 = vld [vmem:[%s4265] ss:$2 sm:$0xff]
  %s4267 = scalar_lea.vmem [#allocation3], 177
  %v4268 = vld [vmem:[%s4267] ss:$2 sm:$0xff]
  %s4269 = scalar_lea.vmem [#allocation3], 193
  %v4270 = vld [vmem:[%s4269] ss:$2 sm:$0xff]
  %s4271 = scalar_lea.vmem [#allocation3], 209
  %v4272 = vld [vmem:[%s4271] ss:$2 sm:$0xff]
  %s4273 = scalar_lea.vmem [#allocation3], 225
  %v4274 = vld [vmem:[%s4273] ss:$2 sm:$0xff]
  %s4275 = scalar_lea.vmem [#allocation3], 241
  %v4276 = vld [vmem:[%s4275] ss:$2 sm:$0xff]
  %s4277 = scalar_lea.vmem [#allocation3], 257
  %v4278 = vld [vmem:[%s4277] ss:$2 sm:$0xff]
  %4287 = vrot.lane.b32.xlu0 %v4264, 112
  %v4288 = vpop.permute.xlu0 %4287
  %4289 = vrot.lane.b32.xlu0 %v4266, 112
  %v4290 = vpop.permute.xlu0 %4289
  %4291 = vrot.lane.b32.xlu0 %v4268, 112
  %v4292 = vpop.permute.xlu0 %4291
  %4293 = vrot.lane.b32.xlu0 %v4270, 112
  %v4294 = vpop.permute.xlu0 %4293
  %4295 = vrot.lane.b32.xlu0 %v4272, 112
  %v4296 = vpop.permute.xlu0 %4295
  %4297 = vrot.lane.b32.xlu0 %v4274, 112
  %v4298 = vpop.permute.xlu0 %4297
  %4299 = vrot.lane.b32.xlu0 %v4276, 112
  %v4300 = vpop.permute.xlu0 %4299
  %4301 = vrot.lane.b32.xlu0 %v4278, 112
  %v4302 = vpop.permute.xlu0 %4301
  %4311 = vst.msk [vmem:[#allocation10 + $0x80] sm:$0xff] %vm3684, %v4288
  %4312 = vst.msk [vmem:[#allocation10 + $0x90] sm:$0xff] %vm3684, %v4290
  %4313 = vst.msk [vmem:[#allocation10 + $0xa0] sm:$0xff] %vm3684, %v4292
  %4314 = vst.msk [vmem:[#allocation10 + $0xb0] sm:$0xff] %vm3684, %v4294
  %4315 = vst.msk [vmem:[#allocation10 + $0xc0] sm:$0xff] %vm3684, %v4296
  %4316 = vst.msk [vmem:[#allocation10 + $0xd0] sm:$0xff] %vm3684, %v4298
  %4317 = vst.msk [vmem:[#allocation10 + $0xe0] sm:$0xff] %vm3684, %v4300
  %4318 = vst.msk [vmem:[#allocation10 + $0xf0] sm:$0xff] %vm3684, %v4302
  %s4319 = scalar_lea.vmem [#allocation3], 146
  %v4320 = vld [vmem:[%s4319] ss:$2 sm:$0xff]
  %s4321 = scalar_lea.vmem [#allocation3], 162
  %v4322 = vld [vmem:[%s4321] ss:$2 sm:$0xff]
  %s4323 = scalar_lea.vmem [#allocation3], 178
  %v4324 = vld [vmem:[%s4323] ss:$2 sm:$0xff]
  %s4325 = scalar_lea.vmem [#allocation3], 194
  %v4326 = vld [vmem:[%s4325] ss:$2 sm:$0xff]
  %s4327 = scalar_lea.vmem [#allocation3], 210
  %v4328 = vld [vmem:[%s4327] ss:$2 sm:$0xff]
  %s4329 = scalar_lea.vmem [#allocation3], 226
  %v4330 = vld [vmem:[%s4329] ss:$2 sm:$0xff]
  %s4331 = scalar_lea.vmem [#allocation3], 242
  %v4332 = vld [vmem:[%s4331] ss:$2 sm:$0xff]
  %s4333 = scalar_lea.vmem [#allocation3], 258
  %v4334 = vld [vmem:[%s4333] ss:$2 sm:$0xff]
  %4335 = vst.msk [vmem:[#allocation10 + $0x88] sm:$0xff] %vm3254, %v4320
  %4336 = vst.msk [vmem:[#allocation10 + $0x98] sm:$0xff] %vm3254, %v4322
  %4337 = vst.msk [vmem:[#allocation10 + $0xa8] sm:$0xff] %vm3254, %v4324
  %4338 = vst.msk [vmem:[#allocation10 + $0xb8] sm:$0xff] %vm3254, %v4326
  %4339 = vst.msk [vmem:[#allocation10 + $0xc8] sm:$0xff] %vm3254, %v4328
  %4340 = vst.msk [vmem:[#allocation10 + $0xd8] sm:$0xff] %vm3254, %v4330
  %4341 = vst.msk [vmem:[#allocation10 + $0xe8] sm:$0xff] %vm3254, %v4332
  %4342 = vst.msk [vmem:[#allocation10 + $0xf8] sm:$0xff] %vm3254, %v4334
  %s4343 = scalar_lea.vmem [#allocation3], 147
  %v4344 = vld [vmem:[%s4343] ss:$2 sm:$0xff]
  %s4345 = scalar_lea.vmem [#allocation3], 163
  %v4346 = vld [vmem:[%s4345] ss:$2 sm:$0xff]
  %s4347 = scalar_lea.vmem [#allocation3], 179
  %v4348 = vld [vmem:[%s4347] ss:$2 sm:$0xff]
  %s4349 = scalar_lea.vmem [#allocation3], 195
  %v4350 = vld [vmem:[%s4349] ss:$2 sm:$0xff]
  %s4351 = scalar_lea.vmem [#allocation3], 211
  %v4352 = vld [vmem:[%s4351] ss:$2 sm:$0xff]
  %s4353 = scalar_lea.vmem [#allocation3], 227
  %v4354 = vld [vmem:[%s4353] ss:$2 sm:$0xff]
  %s4355 = scalar_lea.vmem [#allocation3], 243
  %v4356 = vld [vmem:[%s4355] ss:$2 sm:$0xff]
  %s4357 = scalar_lea.vmem [#allocation3], 259
  %v4358 = vld [vmem:[%s4357] ss:$2 sm:$0xff]
  %4367 = vrot.lane.b32.xlu0 %v4344, 16
  %v4368 = vpop.permute.xlu0 %4367
  %4369 = vrot.lane.b32.xlu0 %v4346, 16
  %v4370 = vpop.permute.xlu0 %4369
  %4371 = vrot.lane.b32.xlu0 %v4348, 16
  %v4372 = vpop.permute.xlu0 %4371
  %4373 = vrot.lane.b32.xlu0 %v4350, 16
  %v4374 = vpop.permute.xlu0 %4373
  %4375 = vrot.lane.b32.xlu0 %v4352, 16
  %v4376 = vpop.permute.xlu0 %4375
  %4377 = vrot.lane.b32.xlu0 %v4354, 16
  %v4378 = vpop.permute.xlu0 %4377
  %4379 = vrot.lane.b32.xlu0 %v4356, 16
  %v4380 = vpop.permute.xlu0 %4379
  %4381 = vrot.lane.b32.xlu0 %v4358, 16
  %v4382 = vpop.permute.xlu0 %4381
  %4391 = vst.msk [vmem:[#allocation10 + $0x88] sm:$0xff] %vm3342, %v4368
  %4392 = vst.msk [vmem:[#allocation10 + $0x98] sm:$0xff] %vm3342, %v4370
  %4393 = vst.msk [vmem:[#allocation10 + $0xa8] sm:$0xff] %vm3342, %v4372
  %4394 = vst.msk [vmem:[#allocation10 + $0xb8] sm:$0xff] %vm3342, %v4374
  %4395 = vst.msk [vmem:[#allocation10 + $0xc8] sm:$0xff] %vm3342, %v4376
  %4396 = vst.msk [vmem:[#allocation10 + $0xd8] sm:$0xff] %vm3342, %v4378
  %4397 = vst.msk [vmem:[#allocation10 + $0xe8] sm:$0xff] %vm3342, %v4380
  %4398 = vst.msk [vmem:[#allocation10 + $0xf8] sm:$0xff] %vm3342, %v4382
  %s4399 = scalar_lea.vmem [#allocation3], 148
  %v4400 = vld [vmem:[%s4399] ss:$2 sm:$0xff]
  %s4401 = scalar_lea.vmem [#allocation3], 164
  %v4402 = vld [vmem:[%s4401] ss:$2 sm:$0xff]
  %s4403 = scalar_lea.vmem [#allocation3], 180
  %v4404 = vld [vmem:[%s4403] ss:$2 sm:$0xff]
  %s4405 = scalar_lea.vmem [#allocation3], 196
  %v4406 = vld [vmem:[%s4405] ss:$2 sm:$0xff]
  %s4407 = scalar_lea.vmem [#allocation3], 212
  %v4408 = vld [vmem:[%s4407] ss:$2 sm:$0xff]
  %s4409 = scalar_lea.vmem [#allocation3], 228
  %v4410 = vld [vmem:[%s4409] ss:$2 sm:$0xff]
  %s4411 = scalar_lea.vmem [#allocation3], 244
  %v4412 = vld [vmem:[%s4411] ss:$2 sm:$0xff]
  %s4413 = scalar_lea.vmem [#allocation3], 260
  %v4414 = vld [vmem:[%s4413] ss:$2 sm:$0xff]
  %4423 = vrot.lane.b32.xlu0 %v4400, 32
  %v4424 = vpop.permute.xlu0 %4423
  %4425 = vrot.lane.b32.xlu0 %v4402, 32
  %v4426 = vpop.permute.xlu0 %4425
  %4427 = vrot.lane.b32.xlu0 %v4404, 32
  %v4428 = vpop.permute.xlu0 %4427
  %4429 = vrot.lane.b32.xlu0 %v4406, 32
  %v4430 = vpop.permute.xlu0 %4429
  %4431 = vrot.lane.b32.xlu0 %v4408, 32
  %v4432 = vpop.permute.xlu0 %4431
  %4433 = vrot.lane.b32.xlu0 %v4410, 32
  %v4434 = vpop.permute.xlu0 %4433
  %4435 = vrot.lane.b32.xlu0 %v4412, 32
  %v4436 = vpop.permute.xlu0 %4435
  %4437 = vrot.lane.b32.xlu0 %v4414, 32
  %v4438 = vpop.permute.xlu0 %4437
  %4447 = vst.msk [vmem:[#allocation10 + $0x88] sm:$0xff] %vm3399, %v4424
  %4448 = vst.msk [vmem:[#allocation10 + $0x98] sm:$0xff] %vm3399, %v4426
  %4449 = vst.msk [vmem:[#allocation10 + $0xa8] sm:$0xff] %vm3399, %v4428
  %4450 = vst.msk [vmem:[#allocation10 + $0xb8] sm:$0xff] %vm3399, %v4430
  %4451 = vst.msk [vmem:[#allocation10 + $0xc8] sm:$0xff] %vm3399, %v4432
  %4452 = vst.msk [vmem:[#allocation10 + $0xd8] sm:$0xff] %vm3399, %v4434
  %4453 = vst.msk [vmem:[#allocation10 + $0xe8] sm:$0xff] %vm3399, %v4436
  %4454 = vst.msk [vmem:[#allocation10 + $0xf8] sm:$0xff] %vm3399, %v4438
  %s4455 = scalar_lea.vmem [#allocation3], 149
  %v4456 = vld [vmem:[%s4455] ss:$2 sm:$0xff]
  %s4457 = scalar_lea.vmem [#allocation3], 165
  %v4458 = vld [vmem:[%s4457] ss:$2 sm:$0xff]
  %s4459 = scalar_lea.vmem [#allocation3], 181
  %v4460 = vld [vmem:[%s4459] ss:$2 sm:$0xff]
  %s4461 = scalar_lea.vmem [#allocation3], 197
  %v4462 = vld [vmem:[%s4461] ss:$2 sm:$0xff]
  %s4463 = scalar_lea.vmem [#allocation3], 213
  %v4464 = vld [vmem:[%s4463] ss:$2 sm:$0xff]
  %s4465 = scalar_lea.vmem [#allocation3], 229
  %v4466 = vld [vmem:[%s4465] ss:$2 sm:$0xff]
  %s4467 = scalar_lea.vmem [#allocation3], 245
  %v4468 = vld [vmem:[%s4467] ss:$2 sm:$0xff]
  %s4469 = scalar_lea.vmem [#allocation3], 261
  %v4470 = vld [vmem:[%s4469] ss:$2 sm:$0xff]
  %4479 = vrot.lane.b32.xlu0 %v4456, 48
  %v4480 = vpop.permute.xlu0 %4479
  %4481 = vrot.lane.b32.xlu0 %v4458, 48
  %v4482 = vpop.permute.xlu0 %4481
  %4483 = vrot.lane.b32.xlu0 %v4460, 48
  %v4484 = vpop.permute.xlu0 %4483
  %4485 = vrot.lane.b32.xlu0 %v4462, 48
  %v4486 = vpop.permute.xlu0 %4485
  %4487 = vrot.lane.b32.xlu0 %v4464, 48
  %v4488 = vpop.permute.xlu0 %4487
  %4489 = vrot.lane.b32.xlu0 %v4466, 48
  %v4490 = vpop.permute.xlu0 %4489
  %4491 = vrot.lane.b32.xlu0 %v4468, 48
  %v4492 = vpop.permute.xlu0 %4491
  %4493 = vrot.lane.b32.xlu0 %v4470, 48
  %v4494 = vpop.permute.xlu0 %4493
  %4503 = vst.msk [vmem:[#allocation10 + $0x88] sm:$0xff] %vm3456, %v4480
  %4504 = vst.msk [vmem:[#allocation10 + $0x98] sm:$0xff] %vm3456, %v4482
  %4505 = vst.msk [vmem:[#allocation10 + $0xa8] sm:$0xff] %vm3456, %v4484
  %4506 = vst.msk [vmem:[#allocation10 + $0xb8] sm:$0xff] %vm3456, %v4486
  %4507 = vst.msk [vmem:[#allocation10 + $0xc8] sm:$0xff] %vm3456, %v4488
  %4508 = vst.msk [vmem:[#allocation10 + $0xd8] sm:$0xff] %vm3456, %v4490
  %4509 = vst.msk [vmem:[#allocation10 + $0xe8] sm:$0xff] %vm3456, %v4492
  %4510 = vst.msk [vmem:[#allocation10 + $0xf8] sm:$0xff] %vm3456, %v4494
  %v4511 = vld [vmem:[#allocation10] sm:$0xff]
  %v4512 = vld [vmem:[#allocation10 + $0x8] sm:$0xff]
  %v4513 = vld [vmem:[#allocation10 + $0x10] sm:$0xff]
  %v4514 = vld [vmem:[#allocation10 + $0x18] sm:$0xff]
  %v4515 = vld [vmem:[#allocation10 + $0x20] sm:$0xff]
  %v4516 = vld [vmem:[#allocation10 + $0x28] sm:$0xff]
  %v4517 = vld [vmem:[#allocation10 + $0x30] sm:$0xff]
  %v4518 = vld [vmem:[#allocation10 + $0x38] sm:$0xff]
  %v4519 = vld [vmem:[#allocation10 + $0x40] sm:$0xff]
  %v4520 = vld [vmem:[#allocation10 + $0x48] sm:$0xff]
  %v4521 = vld [vmem:[#allocation10 + $0x50] sm:$0xff]
  %v4522 = vld [vmem:[#allocation10 + $0x58] sm:$0xff]
  %v4523 = vld [vmem:[#allocation10 + $0x60] sm:$0xff]
  %v4524 = vld [vmem:[#allocation10 + $0x68] sm:$0xff]
  %v4525 = vld [vmem:[#allocation10 + $0x70] sm:$0xff]
  %v4526 = vld [vmem:[#allocation10 + $0x78] sm:$0xff]
  %v4527 = vld [vmem:[#allocation10 + $0x80] sm:$0xff]
  %v4528 = vld [vmem:[#allocation10 + $0x88] sm:$0xff]
  %v4529 = vld [vmem:[#allocation10 + $0x90] sm:$0xff]
  %v4530 = vld [vmem:[#allocation10 + $0x98] sm:$0xff]
  %v4531 = vld [vmem:[#allocation10 + $0xa0] sm:$0xff]
  %v4532 = vld [vmem:[#allocation10 + $0xa8] sm:$0xff]
  %v4533 = vld [vmem:[#allocation10 + $0xb0] sm:$0xff]
  %v4534 = vld [vmem:[#allocation10 + $0xb8] sm:$0xff]
  %v4535 = vld [vmem:[#allocation10 + $0xc0] sm:$0xff]
  %v4536 = vld [vmem:[#allocation10 + $0xc8] sm:$0xff]
  %v4537 = vld [vmem:[#allocation10 + $0xd0] sm:$0xff]
  %v4538 = vld [vmem:[#allocation10 + $0xd8] sm:$0xff]
  %v4539 = vld [vmem:[#allocation10 + $0xe0] sm:$0xff]
  %v4540 = vld [vmem:[#allocation10 + $0xe8] sm:$0xff]
  %v4541 = vld [vmem:[#allocation10 + $0xf0] sm:$0xff]
  %v4542 = vld [vmem:[#allocation10 + $0xf8] sm:$0xff]
  %v4543 = vld [vmem:[%s4] sm:$0xff]
  %v4544 = vld [vmem:[%s4 + $0x8] sm:$0xff]
  %v4545 = vld [vmem:[%s4 + $0x10] sm:$0xff]
  %v4546 = vld [vmem:[%s4 + $0x18] sm:$0xff]
  %v4547 = vld [vmem:[%s4 + $0x20] sm:$0xff]
  %v4548 = vld [vmem:[%s4 + $0x28] sm:$0xff]
  %v4549 = vld [vmem:[%s4 + $0x30] sm:$0xff]
  %v4550 = vld [vmem:[%s4 + $0x38] sm:$0xff]
  %v4551 = vld [vmem:[%s4 + $0x40] sm:$0xff]
  %v4552 = vld [vmem:[%s4 + $0x48] sm:$0xff]
  %v4553 = vld [vmem:[%s4 + $0x50] sm:$0xff]
  %v4554 = vld [vmem:[%s4 + $0x58] sm:$0xff]
  %v4555 = vld [vmem:[%s4 + $0x60] sm:$0xff]
  %v4556 = vld [vmem:[%s4 + $0x68] sm:$0xff]
  %v4557 = vld [vmem:[%s4 + $0x70] sm:$0xff]
  %v4558 = vld [vmem:[%s4 + $0x78] sm:$0xff]
  %v4559 = vld [vmem:[%s4 + $0x80] sm:$0xff]
  %v4560 = vld [vmem:[%s4 + $0x88] sm:$0xff]
  %v4561 = vld [vmem:[%s4 + $0x90] sm:$0xff]
  %v4562 = vld [vmem:[%s4 + $0x98] sm:$0xff]
  %v4563 = vld [vmem:[%s4 + $0xa0] sm:$0xff]
  %v4564 = vld [vmem:[%s4 + $0xa8] sm:$0xff]
  %v4565 = vld [vmem:[%s4 + $0xb0] sm:$0xff]
  %v4566 = vld [vmem:[%s4 + $0xb8] sm:$0xff]
  %vm4567 = vcmask 523264
  %v4569 = vsel %vm4567, %v4512, 0
  %v4572 = vsel %vm4567, %v4514, 0
  %v4575 = vsel %vm4567, %v4516, 0
  %v4578 = vsel %vm4567, %v4518, 0
  %v4581 = vsel %vm4567, %v4520, 0
  %v4584 = vsel %vm4567, %v4522, 0
  %v4587 = vsel %vm4567, %v4524, 0
  %v4590 = vsel %vm4567, %v4526, 0
  %v4593 = vsel %vm4567, %v4528, 0
  %v4596 = vsel %vm4567, %v4530, 0
  %v4599 = vsel %vm4567, %v4532, 0
  %v4602 = vsel %vm4567, %v4534, 0
  %v4605 = vsel %vm4567, %v4536, 0
  %v4608 = vsel %vm4567, %v4538, 0
  %v4611 = vsel %vm4567, %v4540, 0
  %v4614 = vsel %vm4567, %v4542, 0
  %4616 = vmatprep.subr.mxu0 0.0
  %4617 = vmatpush1.msra.mxu0 %v4543
  %4618 = vmatprep.subr.mxu0 0.0
  %4619 = vmatpush1.msra.mxu0 %v4544
  %4620 = vmatprep.subr.mxu0 0.0
  %4621 = vmatpush1.msra.mxu0 %v4545
  %4622 = vmatprep.subr.mxu0 0.0
  %4623 = vmatpush1.msra.mxu0 %v4546
  %4624 = vmatprep.subr.mxu0 0.0
  %4625 = vmatpush1.msra.mxu0 %v4547
  %4626 = vmatprep.subr.mxu0 0.0
  %4627 = vmatpush1.msra.mxu0 %v4548
  %4628 = vmatprep.subr.mxu0 0.0
  %4629 = vmatpush1.msra.mxu0 %v4549
  %4630 = vmatprep.subr.mxu0 0.0
  %4631 = vmatpush1.msra.mxu0 %v4550
  %4632 = vmatprep.subr.mxu0 0.0
  %4633 = vmatpush1.msra.mxu0 %v4551
  %4634 = vmatprep.subr.mxu0 0.0
  %4635 = vmatpush1.msra.mxu0 %v4552
  %4636 = vmatprep.subr.mxu0 0.0
  %4637 = vmatpush1.msra.mxu0 %v4553
  %4638 = vmatprep.subr.mxu0 0.0
  %4639 = vmatpush1.msra.mxu0 %v4554
  %4640 = vmatprep.subr.mxu0 0.0
  %4641 = vmatpush1.msra.mxu0 %v4555
  %4642 = vmatprep.subr.mxu0 0.0
  %4643 = vmatpush1.msra.mxu0 %v4556
  %4644 = vmatprep.subr.mxu0 0.0
  %4645 = vmatpush1.msra.mxu0 %v4557
  %4646 = vmatprep.subr.mxu0 0.0
  %4647 = vmatpush1.msra.mxu0 %v4558
  %4648 = vmatprep.subr.mxu0 0.0
  %4649 = vmatpush1.msra.mxu0 %v4559
  %4650 = vmatprep.subr.mxu0 0.0
  %4651 = vmatpush1.msra.mxu0 %v4560
  %4652 = vmatprep.subr.mxu0 0.0
  %4653 = vmatpush1.msra.mxu0 %v4561
  %4654 = vmatprep.subr.mxu0 0.0
  %4655 = vmatpush1.msra.mxu0 %v4562
  %4656 = vmatprep.subr.mxu0 0.0
  %4657 = vmatpush1.msra.mxu0 %v4563
  %4658 = vmatprep.subr.mxu0 0.0
  %4659 = vmatpush1.msra.mxu0 %v4564
  %4660 = vmatprep.subr.mxu0 0.0
  %4661 = vmatpush1.msra.mxu0 %v4565
  %4662 = vmatprep.subr.mxu0 0.0
  %4663 = vmatpush1.msra.mxu0 %v4566
  %4664 = vmatprep.subr.mxu0 0.0
  %4665 = vmatpush1.msra.mxu0 0.0
  %4666 = vmatprep.subr.mxu0 0.0
  %4667 = vmatpush1.msra.mxu0 0.0
  %4668 = vmatprep.subr.mxu0 0.0
  %4669 = vmatpush1.msra.mxu0 0.0
  %4670 = vmatprep.subr.mxu0 0.0
  %4671 = vmatpush1.msra.mxu0 0.0
  %4672 = vmatprep.subr.mxu0 0.0
  %4673 = vmatpush1.msra.mxu0 0.0
  %4674 = vmatprep.subr.mxu0 0.0
  %4675 = vmatpush1.msra.mxu0 0.0
  %4676 = vmatprep.subr.mxu0 0.0
  %4677 = vmatpush1.msra.mxu0 0.0
  %4678 = vmatprep.subr.mxu0 0.0
  %4679 = vmatpush1.msra.mxu0 0.0
  %4680 = vmatprep.mubr.f32.mxu0 %v4569
  %4681 = vmatmul.mubr.f32.gmra.mrb[0].mxu0 %v4511
  %v4682 = vpop.f32.mrb[0].mxu0
  %v4683 = vadd.f32 0.0, %v4682
  %v4684 = vpop.f32.mrb[0].mxu0
  %4685 = vmatprep.mubr.f32.mxu0 %v4572
  %4686 = vmatmul.mubr.f32.gmra.mrb[0].mxu0 %v4513
  %v4687 = vpop.f32.mrb[0].mxu0
  %v4688 = vadd.f32 0.0, %v4687
  %v4689 = vpop.f32.mrb[0].mxu0
  %4690 = vmatprep.mubr.f32.mxu0 %v4575
  %4691 = vmatmul.mubr.f32.gmra.mrb[0].mxu0 %v4515
  %v4692 = vpop.f32.mrb[0].mxu0
  %v4693 = vadd.f32 0.0, %v4692
  %v4694 = vpop.f32.mrb[0].mxu0
  %4695 = vmatprep.mubr.f32.mxu0 %v4578
  %4696 = vmatmul.mubr.f32.gmra.mrb[0].mxu0 %v4517
  %v4697 = vpop.f32.mrb[0].mxu0
  %v4698 = vadd.f32 0.0, %v4697
  %v4699 = vpop.f32.mrb[0].mxu0
  %4700 = vmatprep.mubr.f32.mxu0 %v4581
  %4701 = vmatmul.mubr.f32.gmra.mrb[0].mxu0 %v4519
  %v4702 = vpop.f32.mrb[0].mxu0
  %v4703 = vadd.f32 0.0, %v4702
  %v4704 = vpop.f32.mrb[0].mxu0
  %4705 = vmatprep.mubr.f32.mxu0 %v4584
  %4706 = vmatmul.mubr.f32.gmra.mrb[0].mxu0 %v4521
  %v4707 = vpop.f32.mrb[0].mxu0
  %v4708 = vadd.f32 0.0, %v4707
  %v4709 = vpop.f32.mrb[0].mxu0
  %4710 = vmatprep.mubr.f32.mxu0 %v4587
  %4711 = vmatmul.mubr.f32.gmra.mrb[0].mxu0 %v4523
  %v4712 = vpop.f32.mrb[0].mxu0
  %v4713 = vadd.f32 0.0, %v4712
  %v4714 = vpop.f32.mrb[0].mxu0
  %4715 = vmatprep.mubr.f32.mxu0 %v4590
  %4716 = vmatmul.mubr.f32.gmra.mrb[0].mxu0 %v4525
  %v4717 = vpop.f32.mrb[0].mxu0
  %v4718 = vadd.f32 0.0, %v4717
  %v4719 = vpop.f32.mrb[0].mxu0
  %4720 = vmatprep.mubr.f32.mxu0 %v4593
  %4721 = vmatmul.mubr.f32.gmra.mrb[0].mxu0 %v4527
  %v4722 = vpop.f32.mrb[0].mxu0
  %v4723 = vadd.f32 0.0, %v4722
  %v4724 = vpop.f32.mrb[0].mxu0
  %4725 = vmatprep.mubr.f32.mxu0 %v4596
  %4726 = vmatmul.mubr.f32.gmra.mrb[0].mxu0 %v4529
  %v4727 = vpop.f32.mrb[0].mxu0
  %v4728 = vadd.f32 0.0, %v4727
  %v4729 = vpop.f32.mrb[0].mxu0
  %4730 = vmatprep.mubr.f32.mxu0 %v4599
  %4731 = vmatmul.mubr.f32.gmra.mrb[0].mxu0 %v4531
  %v4732 = vpop.f32.mrb[0].mxu0
  %v4733 = vadd.f32 0.0, %v4732
  %v4734 = vpop.f32.mrb[0].mxu0
  %4735 = vmatprep.mubr.f32.mxu0 %v4602
  %4736 = vmatmul.mubr.f32.gmra.mrb[0].mxu0 %v4533
  %v4737 = vpop.f32.mrb[0].mxu0
  %v4738 = vadd.f32 0.0, %v4737
  %v4739 = vpop.f32.mrb[0].mxu0
  %4740 = vmatprep.mubr.f32.mxu0 %v4605
  %4741 = vmatmul.mubr.f32.gmra.mrb[0].mxu0 %v4535
  %v4742 = vpop.f32.mrb[0].mxu0
  %v4743 = vadd.f32 0.0, %v4742
  %v4744 = vpop.f32.mrb[0].mxu0
  %4745 = vmatprep.mubr.f32.mxu0 %v4608
  %4746 = vmatmul.mubr.f32.gmra.mrb[0].mxu0 %v4537
  %v4747 = vpop.f32.mrb[0].mxu0
  %v4748 = vadd.f32 0.0, %v4747
  %v4749 = vpop.f32.mrb[0].mxu0
  %4750 = vmatprep.mubr.f32.mxu0 %v4611
  %4751 = vmatmul.mubr.f32.gmra.mrb[0].mxu0 %v4539
  %v4752 = vpop.f32.mrb[0].mxu0
  %v4753 = vadd.f32 0.0, %v4752
  %v4754 = vpop.f32.mrb[0].mxu0
  %4755 = vmatprep.mubr.f32.mxu0 %v4614
  %4756 = vmatmul.mubr.f32.gmra.mrb[0].mxu0 %v4541
  %v4757 = vpop.f32.mrb[0].mxu0
  %v4758 = vadd.f32 0.0, %v4757
  %v4759 = vpop.f32.mrb[0].mxu0
  %4760 = vdwg.mxu0
  %v4761 = vld [vmem:[%s5] sm:$0x1]
  %v4763 = vlaneseq
  %v4764 = vshrl.u32 %v4763, 7
  %v4765 = vsub.s32 0, %v4764
  %v4766 = vrot.slane %v4761, %v4765
  %v4768 = vmul.f32 %v4683, %v4766
  %v4769 = vmul.f32 %v4688, %v4766
  %v4770 = vmul.f32 %v4693, %v4766
  %v4771 = vmul.f32 %v4698, %v4766
  %v4772 = vmul.f32 %v4703, %v4766
  %v4773 = vmul.f32 %v4708, %v4766
  %v4774 = vmul.f32 %v4713, %v4766
  %v4775 = vmul.f32 %v4718, %v4766
  %v4776 = vmul.f32 %v4723, %v4766
  %v4777 = vmul.f32 %v4728, %v4766
  %v4778 = vmul.f32 %v4733, %v4766
  %v4779 = vmul.f32 %v4738, %v4766
  %v4780 = vmul.f32 %v4743, %v4766
  %v4781 = vmul.f32 %v4748, %v4766
  %v4782 = vmul.f32 %v4753, %v4766
  %v4783 = vmul.f32 %v4758, %v4766
  %v4784 = vld [vmem:[%s6] sm:$0x1]
  %v4786 = vlaneseq
  %v4787 = vshrl.u32 %v4786, 7
  %v4788 = vsub.s32 0, %v4787
  %v4789 = vrot.slane %v4784, %v4788
  %v4791 = vadd.f32 %v4768, %v4789
  %v4792 = vadd.f32 %v4769, %v4789
  %v4793 = vadd.f32 %v4770, %v4789
  %v4794 = vadd.f32 %v4771, %v4789
  %v4795 = vadd.f32 %v4772, %v4789
  %v4796 = vadd.f32 %v4773, %v4789
  %v4797 = vadd.f32 %v4774, %v4789
  %v4798 = vadd.f32 %v4775, %v4789
  %v4799 = vadd.f32 %v4776, %v4789
  %v4800 = vadd.f32 %v4777, %v4789
  %v4801 = vadd.f32 %v4778, %v4789
  %v4802 = vadd.f32 %v4779, %v4789
  %v4803 = vadd.f32 %v4780, %v4789
  %v4804 = vadd.f32 %v4781, %v4789
  %v4805 = vadd.f32 %v4782, %v4789
  %v4806 = vadd.f32 %v4783, %v4789
  %v4807 = vmax.f32 %v4791, 0.0
  %v4808 = vmax.f32 %v4792, 0.0
  %v4809 = vmax.f32 %v4793, 0.0
  %v4810 = vmax.f32 %v4794, 0.0
  %v4811 = vmax.f32 %v4795, 0.0
  %v4812 = vmax.f32 %v4796, 0.0
  %v4813 = vmax.f32 %v4797, 0.0
  %v4814 = vmax.f32 %v4798, 0.0
  %v4815 = vmax.f32 %v4799, 0.0
  %v4816 = vmax.f32 %v4800, 0.0
  %v4817 = vmax.f32 %v4801, 0.0
  %v4818 = vmax.f32 %v4802, 0.0
  %v4819 = vmax.f32 %v4803, 0.0
  %v4820 = vmax.f32 %v4804, 0.0
  %v4821 = vmax.f32 %v4805, 0.0
  %v4822 = vmax.f32 %v4806, 0.0
  %vm4823 = vcmask 125952
  %4824 = vst.msk [vmem:[#allocation4] sm:$0xf] %vm4823, 0.0
  %4825 = vst.msk [vmem:[#allocation4 + $0x44] sm:$0xf] %vm4823, 0.0
  %4826 = vst.msk [vmem:[#allocation4 + $0x4] sm:$0xff] %vm3254, %v4807
  %4827 = vst.msk [vmem:[#allocation4 + $0xc] sm:$0xff] %vm3254, %v4808
  %4828 = vst.msk [vmem:[#allocation4 + $0x14] sm:$0xff] %vm3254, %v4809
  %4829 = vst.msk [vmem:[#allocation4 + $0x1c] sm:$0xff] %vm3254, %v4810
  %4830 = vst.msk [vmem:[#allocation4 + $0x24] sm:$0xff] %vm3254, %v4811
  %4831 = vst.msk [vmem:[#allocation4 + $0x2c] sm:$0xff] %vm3254, %v4812
  %4832 = vst.msk [vmem:[#allocation4 + $0x34] sm:$0xff] %vm3254, %v4813
  %4833 = vst.msk [vmem:[#allocation4 + $0x3c] sm:$0xff] %vm3254, %v4814
  %v4834 = vld [vmem:[#allocation4] ss:$2 sm:$0xff]
  %s4835 = scalar_lea.vmem [#allocation4], 16
  %v4836 = vld [vmem:[%s4835] ss:$2 sm:$0xff]
  %s4837 = scalar_lea.vmem [#allocation4], 32
  %v4838 = vld [vmem:[%s4837] ss:$2 sm:$0xff]
  %s4839 = scalar_lea.vmem [#allocation4], 48
  %v4840 = vld [vmem:[%s4839] ss:$2 sm:$0xff]
  %4841 = vst.msk [vmem:[#allocation11] sm:$0xff] %vm3254, %v4834
  %4842 = vst.msk [vmem:[#allocation11 + $0x10] sm:$0xff] %vm3254, %v4836
  %4843 = vst.msk [vmem:[#allocation11 + $0x20] sm:$0xff] %vm3254, %v4838
  %4844 = vst.msk [vmem:[#allocation11 + $0x30] sm:$0xff] %vm3254, %v4840
  %s4845 = scalar_lea.vmem [#allocation4], 1
  %v4846 = vld [vmem:[%s4845] ss:$2 sm:$0xff]
  %s4847 = scalar_lea.vmem [#allocation4], 17
  %v4848 = vld [vmem:[%s4847] ss:$2 sm:$0xff]
  %s4849 = scalar_lea.vmem [#allocation4], 33
  %v4850 = vld [vmem:[%s4849] ss:$2 sm:$0xff]
  %s4851 = scalar_lea.vmem [#allocation4], 49
  %v4852 = vld [vmem:[%s4851] ss:$2 sm:$0xff]
  %4857 = vrot.lane.b32.xlu0 %v4846, 16
  %v4858 = vpop.permute.xlu0 %4857
  %4859 = vrot.lane.b32.xlu0 %v4848, 16
  %v4860 = vpop.permute.xlu0 %4859
  %4861 = vrot.lane.b32.xlu0 %v4850, 16
  %v4862 = vpop.permute.xlu0 %4861
  %4863 = vrot.lane.b32.xlu0 %v4852, 16
  %v4864 = vpop.permute.xlu0 %4863
  %4869 = vst.msk [vmem:[#allocation11] sm:$0xff] %vm3342, %v4858
  %4870 = vst.msk [vmem:[#allocation11 + $0x10] sm:$0xff] %vm3342, %v4860
  %4871 = vst.msk [vmem:[#allocation11 + $0x20] sm:$0xff] %vm3342, %v4862
  %4872 = vst.msk [vmem:[#allocation11 + $0x30] sm:$0xff] %vm3342, %v4864
  %s4873 = scalar_lea.vmem [#allocation4], 2
  %v4874 = vld [vmem:[%s4873] ss:$2 sm:$0xff]
  %s4875 = scalar_lea.vmem [#allocation4], 18
  %v4876 = vld [vmem:[%s4875] ss:$2 sm:$0xff]
  %s4877 = scalar_lea.vmem [#allocation4], 34
  %v4878 = vld [vmem:[%s4877] ss:$2 sm:$0xff]
  %s4879 = scalar_lea.vmem [#allocation4], 50
  %v4880 = vld [vmem:[%s4879] ss:$2 sm:$0xff]
  %4885 = vrot.lane.b32.xlu0 %v4874, 32
  %v4886 = vpop.permute.xlu0 %4885
  %4887 = vrot.lane.b32.xlu0 %v4876, 32
  %v4888 = vpop.permute.xlu0 %4887
  %4889 = vrot.lane.b32.xlu0 %v4878, 32
  %v4890 = vpop.permute.xlu0 %4889
  %4891 = vrot.lane.b32.xlu0 %v4880, 32
  %v4892 = vpop.permute.xlu0 %4891
  %4897 = vst.msk [vmem:[#allocation11] sm:$0xff] %vm3399, %v4886
  %4898 = vst.msk [vmem:[#allocation11 + $0x10] sm:$0xff] %vm3399, %v4888
  %4899 = vst.msk [vmem:[#allocation11 + $0x20] sm:$0xff] %vm3399, %v4890
  %4900 = vst.msk [vmem:[#allocation11 + $0x30] sm:$0xff] %vm3399, %v4892
  %s4901 = scalar_lea.vmem [#allocation4], 3
  %v4902 = vld [vmem:[%s4901] ss:$2 sm:$0xff]
  %s4903 = scalar_lea.vmem [#allocation4], 19
  %v4904 = vld [vmem:[%s4903] ss:$2 sm:$0xff]
  %s4905 = scalar_lea.vmem [#allocation4], 35
  %v4906 = vld [vmem:[%s4905] ss:$2 sm:$0xff]
  %s4907 = scalar_lea.vmem [#allocation4], 51
  %v4908 = vld [vmem:[%s4907] ss:$2 sm:$0xff]
  %4913 = vrot.lane.b32.xlu0 %v4902, 48
  %v4914 = vpop.permute.xlu0 %4913
  %4915 = vrot.lane.b32.xlu0 %v4904, 48
  %v4916 = vpop.permute.xlu0 %4915
  %4917 = vrot.lane.b32.xlu0 %v4906, 48
  %v4918 = vpop.permute.xlu0 %4917
  %4919 = vrot.lane.b32.xlu0 %v4908, 48
  %v4920 = vpop.permute.xlu0 %4919
  %4925 = vst.msk [vmem:[#allocation11] sm:$0xff] %vm3456, %v4914
  %4926 = vst.msk [vmem:[#allocation11 + $0x10] sm:$0xff] %vm3456, %v4916
  %4927 = vst.msk [vmem:[#allocation11 + $0x20] sm:$0xff] %vm3456, %v4918
  %4928 = vst.msk [vmem:[#allocation11 + $0x30] sm:$0xff] %vm3456, %v4920
  %s4929 = scalar_lea.vmem [#allocation4], 4
  %v4930 = vld [vmem:[%s4929] ss:$2 sm:$0xff]
  %s4931 = scalar_lea.vmem [#allocation4], 20
  %v4932 = vld [vmem:[%s4931] ss:$2 sm:$0xff]
  %s4933 = scalar_lea.vmem [#allocation4], 36
  %v4934 = vld [vmem:[%s4933] ss:$2 sm:$0xff]
  %s4935 = scalar_lea.vmem [#allocation4], 52
  %v4936 = vld [vmem:[%s4935] ss:$2 sm:$0xff]
  %4941 = vrot.lane.b32.xlu0 %v4930, 64
  %v4942 = vpop.permute.xlu0 %4941
  %4943 = vrot.lane.b32.xlu0 %v4932, 64
  %v4944 = vpop.permute.xlu0 %4943
  %4945 = vrot.lane.b32.xlu0 %v4934, 64
  %v4946 = vpop.permute.xlu0 %4945
  %4947 = vrot.lane.b32.xlu0 %v4936, 64
  %v4948 = vpop.permute.xlu0 %4947
  %4953 = vst.msk [vmem:[#allocation11] sm:$0xff] %vm3513, %v4942
  %4954 = vst.msk [vmem:[#allocation11 + $0x10] sm:$0xff] %vm3513, %v4944
  %4955 = vst.msk [vmem:[#allocation11 + $0x20] sm:$0xff] %vm3513, %v4946
  %4956 = vst.msk [vmem:[#allocation11 + $0x30] sm:$0xff] %vm3513, %v4948
  %s4957 = scalar_lea.vmem [#allocation4], 5
  %v4958 = vld [vmem:[%s4957] ss:$2 sm:$0xff]
  %s4959 = scalar_lea.vmem [#allocation4], 21
  %v4960 = vld [vmem:[%s4959] ss:$2 sm:$0xff]
  %s4961 = scalar_lea.vmem [#allocation4], 37
  %v4962 = vld [vmem:[%s4961] ss:$2 sm:$0xff]
  %s4963 = scalar_lea.vmem [#allocation4], 53
  %v4964 = vld [vmem:[%s4963] ss:$2 sm:$0xff]
  %4969 = vrot.lane.b32.xlu0 %v4958, 80
  %v4970 = vpop.permute.xlu0 %4969
  %4971 = vrot.lane.b32.xlu0 %v4960, 80
  %v4972 = vpop.permute.xlu0 %4971
  %4973 = vrot.lane.b32.xlu0 %v4962, 80
  %v4974 = vpop.permute.xlu0 %4973
  %4975 = vrot.lane.b32.xlu0 %v4964, 80
  %v4976 = vpop.permute.xlu0 %4975
  %4981 = vst.msk [vmem:[#allocation11] sm:$0xff] %vm3570, %v4970
  %4982 = vst.msk [vmem:[#allocation11 + $0x10] sm:$0xff] %vm3570, %v4972
  %4983 = vst.msk [vmem:[#allocation11 + $0x20] sm:$0xff] %vm3570, %v4974
  %4984 = vst.msk [vmem:[#allocation11 + $0x30] sm:$0xff] %vm3570, %v4976
  %s4985 = scalar_lea.vmem [#allocation4], 6
  %v4986 = vld [vmem:[%s4985] ss:$2 sm:$0xff]
  %s4987 = scalar_lea.vmem [#allocation4], 22
  %v4988 = vld [vmem:[%s4987] ss:$2 sm:$0xff]
  %s4989 = scalar_lea.vmem [#allocation4], 38
  %v4990 = vld [vmem:[%s4989] ss:$2 sm:$0xff]
  %s4991 = scalar_lea.vmem [#allocation4], 54
  %v4992 = vld [vmem:[%s4991] ss:$2 sm:$0xff]
  %4997 = vrot.lane.b32.xlu0 %v4986, 96
  %v4998 = vpop.permute.xlu0 %4997
  %4999 = vrot.lane.b32.xlu0 %v4988, 96
  %v5000 = vpop.permute.xlu0 %4999
  %5001 = vrot.lane.b32.xlu0 %v4990, 96
  %v5002 = vpop.permute.xlu0 %5001
  %5003 = vrot.lane.b32.xlu0 %v4992, 96
  %v5004 = vpop.permute.xlu0 %5003
  %5009 = vst.msk [vmem:[#allocation11] sm:$0xff] %vm3627, %v4998
  %5010 = vst.msk [vmem:[#allocation11 + $0x10] sm:$0xff] %vm3627, %v5000
  %5011 = vst.msk [vmem:[#allocation11 + $0x20] sm:$0xff] %vm3627, %v5002
  %5012 = vst.msk [vmem:[#allocation11 + $0x30] sm:$0xff] %vm3627, %v5004
  %s5013 = scalar_lea.vmem [#allocation4], 7
  %v5014 = vld [vmem:[%s5013] ss:$2 sm:$0xff]
  %s5015 = scalar_lea.vmem [#allocation4], 23
  %v5016 = vld [vmem:[%s5015] ss:$2 sm:$0xff]
  %s5017 = scalar_lea.vmem [#allocation4], 39
  %v5018 = vld [vmem:[%s5017] ss:$2 sm:$0xff]
  %s5019 = scalar_lea.vmem [#allocation4], 55
  %v5020 = vld [vmem:[%s5019] ss:$2 sm:$0xff]
  %5025 = vrot.lane.b32.xlu0 %v5014, 112
  %v5026 = vpop.permute.xlu0 %5025
  %5027 = vrot.lane.b32.xlu0 %v5016, 112
  %v5028 = vpop.permute.xlu0 %5027
  %5029 = vrot.lane.b32.xlu0 %v5018, 112
  %v5030 = vpop.permute.xlu0 %5029
  %5031 = vrot.lane.b32.xlu0 %v5020, 112
  %v5032 = vpop.permute.xlu0 %5031
  %5037 = vst.msk [vmem:[#allocation11] sm:$0xff] %vm3684, %v5026
  %5038 = vst.msk [vmem:[#allocation11 + $0x10] sm:$0xff] %vm3684, %v5028
  %5039 = vst.msk [vmem:[#allocation11 + $0x20] sm:$0xff] %vm3684, %v5030
  %5040 = vst.msk [vmem:[#allocation11 + $0x30] sm:$0xff] %vm3684, %v5032
  %s5041 = scalar_lea.vmem [#allocation4], 8
  %v5042 = vld [vmem:[%s5041] ss:$2 sm:$0xff]
  %s5043 = scalar_lea.vmem [#allocation4], 24
  %v5044 = vld [vmem:[%s5043] ss:$2 sm:$0xff]
  %s5045 = scalar_lea.vmem [#allocation4], 40
  %v5046 = vld [vmem:[%s5045] ss:$2 sm:$0xff]
  %s5047 = scalar_lea.vmem [#allocation4], 56
  %v5048 = vld [vmem:[%s5047] ss:$2 sm:$0xff]
  %5049 = vst.msk [vmem:[#allocation11 + $0x8] sm:$0xff] %vm3254, %v5042
  %5050 = vst.msk [vmem:[#allocation11 + $0x18] sm:$0xff] %vm3254, %v5044
  %5051 = vst.msk [vmem:[#allocation11 + $0x28] sm:$0xff] %vm3254, %v5046
  %5052 = vst.msk [vmem:[#allocation11 + $0x38] sm:$0xff] %vm3254, %v5048
  %5053 = vst.msk [vmem:[#allocation4 + $0x48] sm:$0xf] %vm4823, 0.0
  %5054 = vst.msk [vmem:[#allocation4 + $0x8c] sm:$0xf] %vm4823, 0.0
  %5055 = vst.msk [vmem:[#allocation4 + $0x4c] sm:$0xff] %vm3254, %v4815
  %5056 = vst.msk [vmem:[#allocation4 + $0x54] sm:$0xff] %vm3254, %v4816
  %5057 = vst.msk [vmem:[#allocation4 + $0x5c] sm:$0xff] %vm3254, %v4817
  %5058 = vst.msk [vmem:[#allocation4 + $0x64] sm:$0xff] %vm3254, %v4818
  %5059 = vst.msk [vmem:[#allocation4 + $0x6c] sm:$0xff] %vm3254, %v4819
  %5060 = vst.msk [vmem:[#allocation4 + $0x74] sm:$0xff] %vm3254, %v4820
  %5061 = vst.msk [vmem:[#allocation4 + $0x7c] sm:$0xff] %vm3254, %v4821
  %5062 = vst.msk [vmem:[#allocation4 + $0x84] sm:$0xff] %vm3254, %v4822
  %s5063 = scalar_lea.vmem [#allocation4], 72
  %v5064 = vld [vmem:[%s5063] ss:$2 sm:$0xff]
  %s5065 = scalar_lea.vmem [#allocation4], 88
  %v5066 = vld [vmem:[%s5065] ss:$2 sm:$0xff]
  %s5067 = scalar_lea.vmem [#allocation4], 104
  %v5068 = vld [vmem:[%s5067] ss:$2 sm:$0xff]
  %s5069 = scalar_lea.vmem [#allocation4], 120
  %v5070 = vld [vmem:[%s5069] ss:$2 sm:$0xff]
  %5071 = vst.msk [vmem:[#allocation11 + $0x40] sm:$0xff] %vm3254, %v5064
  %5072 = vst.msk [vmem:[#allocation11 + $0x50] sm:$0xff] %vm3254, %v5066
  %5073 = vst.msk [vmem:[#allocation11 + $0x60] sm:$0xff] %vm3254, %v5068
  %5074 = vst.msk [vmem:[#allocation11 + $0x70] sm:$0xff] %vm3254, %v5070
  %s5075 = scalar_lea.vmem [#allocation4], 73
  %v5076 = vld [vmem:[%s5075] ss:$2 sm:$0xff]
  %s5077 = scalar_lea.vmem [#allocation4], 89
  %v5078 = vld [vmem:[%s5077] ss:$2 sm:$0xff]
  %s5079 = scalar_lea.vmem [#allocation4], 105
  %v5080 = vld [vmem:[%s5079] ss:$2 sm:$0xff]
  %s5081 = scalar_lea.vmem [#allocation4], 121
  %v5082 = vld [vmem:[%s5081] ss:$2 sm:$0xff]
  %5087 = vrot.lane.b32.xlu0 %v5076, 16
  %v5088 = vpop.permute.xlu0 %5087
  %5089 = vrot.lane.b32.xlu0 %v5078, 16
  %v5090 = vpop.permute.xlu0 %5089
  %5091 = vrot.lane.b32.xlu0 %v5080, 16
  %v5092 = vpop.permute.xlu0 %5091
  %5093 = vrot.lane.b32.xlu0 %v5082, 16
  %v5094 = vpop.permute.xlu0 %5093
  %5099 = vst.msk [vmem:[#allocation11 + $0x40] sm:$0xff] %vm3342, %v5088
  %5100 = vst.msk [vmem:[#allocation11 + $0x50] sm:$0xff] %vm3342, %v5090
  %5101 = vst.msk [vmem:[#allocation11 + $0x60] sm:$0xff] %vm3342, %v5092
  %5102 = vst.msk [vmem:[#allocation11 + $0x70] sm:$0xff] %vm3342, %v5094
  %s5103 = scalar_lea.vmem [#allocation4], 74
  %v5104 = vld [vmem:[%s5103] ss:$2 sm:$0xff]
  %s5105 = scalar_lea.vmem [#allocation4], 90
  %v5106 = vld [vmem:[%s5105] ss:$2 sm:$0xff]
  %s5107 = scalar_lea.vmem [#allocation4], 106
  %v5108 = vld [vmem:[%s5107] ss:$2 sm:$0xff]
  %s5109 = scalar_lea.vmem [#allocation4], 122
  %v5110 = vld [vmem:[%s5109] ss:$2 sm:$0xff]
  %5115 = vrot.lane.b32.xlu0 %v5104, 32
  %v5116 = vpop.permute.xlu0 %5115
  %5117 = vrot.lane.b32.xlu0 %v5106, 32
  %v5118 = vpop.permute.xlu0 %5117
  %5119 = vrot.lane.b32.xlu0 %v5108, 32
  %v5120 = vpop.permute.xlu0 %5119
  %5121 = vrot.lane.b32.xlu0 %v5110, 32
  %v5122 = vpop.permute.xlu0 %5121
  %5127 = vst.msk [vmem:[#allocation11 + $0x40] sm:$0xff] %vm3399, %v5116
  %5128 = vst.msk [vmem:[#allocation11 + $0x50] sm:$0xff] %vm3399, %v5118
  %5129 = vst.msk [vmem:[#allocation11 + $0x60] sm:$0xff] %vm3399, %v5120
  %5130 = vst.msk [vmem:[#allocation11 + $0x70] sm:$0xff] %vm3399, %v5122
  %s5131 = scalar_lea.vmem [#allocation4], 75
  %v5132 = vld [vmem:[%s5131] ss:$2 sm:$0xff]
  %s5133 = scalar_lea.vmem [#allocation4], 91
  %v5134 = vld [vmem:[%s5133] ss:$2 sm:$0xff]
  %s5135 = scalar_lea.vmem [#allocation4], 107
  %v5136 = vld [vmem:[%s5135] ss:$2 sm:$0xff]
  %s5137 = scalar_lea.vmem [#allocation4], 123
  %v5138 = vld [vmem:[%s5137] ss:$2 sm:$0xff]
  %5143 = vrot.lane.b32.xlu0 %v5132, 48
  %v5144 = vpop.permute.xlu0 %5143
  %5145 = vrot.lane.b32.xlu0 %v5134, 48
  %v5146 = vpop.permute.xlu0 %5145
  %5147 = vrot.lane.b32.xlu0 %v5136, 48
  %v5148 = vpop.permute.xlu0 %5147
  %5149 = vrot.lane.b32.xlu0 %v5138, 48
  %v5150 = vpop.permute.xlu0 %5149
  %5155 = vst.msk [vmem:[#allocation11 + $0x40] sm:$0xff] %vm3456, %v5144
  %5156 = vst.msk [vmem:[#allocation11 + $0x50] sm:$0xff] %vm3456, %v5146
  %5157 = vst.msk [vmem:[#allocation11 + $0x60] sm:$0xff] %vm3456, %v5148
  %5158 = vst.msk [vmem:[#allocation11 + $0x70] sm:$0xff] %vm3456, %v5150
  %s5159 = scalar_lea.vmem [#allocation4], 76
  %v5160 = vld [vmem:[%s5159] ss:$2 sm:$0xff]
  %s5161 = scalar_lea.vmem [#allocation4], 92
  %v5162 = vld [vmem:[%s5161] ss:$2 sm:$0xff]
  %s5163 = scalar_lea.vmem [#allocation4], 108
  %v5164 = vld [vmem:[%s5163] ss:$2 sm:$0xff]
  %s5165 = scalar_lea.vmem [#allocation4], 124
  %v5166 = vld [vmem:[%s5165] ss:$2 sm:$0xff]
  %5171 = vrot.lane.b32.xlu0 %v5160, 64
  %v5172 = vpop.permute.xlu0 %5171
  %5173 = vrot.lane.b32.xlu0 %v5162, 64
  %v5174 = vpop.permute.xlu0 %5173
  %5175 = vrot.lane.b32.xlu0 %v5164, 64
  %v5176 = vpop.permute.xlu0 %5175
  %5177 = vrot.lane.b32.xlu0 %v5166, 64
  %v5178 = vpop.permute.xlu0 %5177
  %5183 = vst.msk [vmem:[#allocation11 + $0x40] sm:$0xff] %vm3513, %v5172
  %5184 = vst.msk [vmem:[#allocation11 + $0x50] sm:$0xff] %vm3513, %v5174
  %5185 = vst.msk [vmem:[#allocation11 + $0x60] sm:$0xff] %vm3513, %v5176
  %5186 = vst.msk [vmem:[#allocation11 + $0x70] sm:$0xff] %vm3513, %v5178
  %s5187 = scalar_lea.vmem [#allocation4], 77
  %v5188 = vld [vmem:[%s5187] ss:$2 sm:$0xff]
  %s5189 = scalar_lea.vmem [#allocation4], 93
  %v5190 = vld [vmem:[%s5189] ss:$2 sm:$0xff]
  %s5191 = scalar_lea.vmem [#allocation4], 109
  %v5192 = vld [vmem:[%s5191] ss:$2 sm:$0xff]
  %s5193 = scalar_lea.vmem [#allocation4], 125
  %v5194 = vld [vmem:[%s5193] ss:$2 sm:$0xff]
  %5199 = vrot.lane.b32.xlu0 %v5188, 80
  %v5200 = vpop.permute.xlu0 %5199
  %5201 = vrot.lane.b32.xlu0 %v5190, 80
  %v5202 = vpop.permute.xlu0 %5201
  %5203 = vrot.lane.b32.xlu0 %v5192, 80
  %v5204 = vpop.permute.xlu0 %5203
  %5205 = vrot.lane.b32.xlu0 %v5194, 80
  %v5206 = vpop.permute.xlu0 %5205
  %5211 = vst.msk [vmem:[#allocation11 + $0x40] sm:$0xff] %vm3570, %v5200
  %5212 = vst.msk [vmem:[#allocation11 + $0x50] sm:$0xff] %vm3570, %v5202
  %5213 = vst.msk [vmem:[#allocation11 + $0x60] sm:$0xff] %vm3570, %v5204
  %5214 = vst.msk [vmem:[#allocation11 + $0x70] sm:$0xff] %vm3570, %v5206
  %s5215 = scalar_lea.vmem [#allocation4], 78
  %v5216 = vld [vmem:[%s5215] ss:$2 sm:$0xff]
  %s5217 = scalar_lea.vmem [#allocation4], 94
  %v5218 = vld [vmem:[%s5217] ss:$2 sm:$0xff]
  %s5219 = scalar_lea.vmem [#allocation4], 110
  %v5220 = vld [vmem:[%s5219] ss:$2 sm:$0xff]
  %s5221 = scalar_lea.vmem [#allocation4], 126
  %v5222 = vld [vmem:[%s5221] ss:$2 sm:$0xff]
  %5227 = vrot.lane.b32.xlu0 %v5216, 96
  %v5228 = vpop.permute.xlu0 %5227
  %5229 = vrot.lane.b32.xlu0 %v5218, 96
  %v5230 = vpop.permute.xlu0 %5229
  %5231 = vrot.lane.b32.xlu0 %v5220, 96
  %v5232 = vpop.permute.xlu0 %5231
  %5233 = vrot.lane.b32.xlu0 %v5222, 96
  %v5234 = vpop.permute.xlu0 %5233
  %5239 = vst.msk [vmem:[#allocation11 + $0x40] sm:$0xff] %vm3627, %v5228
  %5240 = vst.msk [vmem:[#allocation11 + $0x50] sm:$0xff] %vm3627, %v5230
  %5241 = vst.msk [vmem:[#allocation11 + $0x60] sm:$0xff] %vm3627, %v5232
  %5242 = vst.msk [vmem:[#allocation11 + $0x70] sm:$0xff] %vm3627, %v5234
  %s5243 = scalar_lea.vmem [#allocation4], 79
  %v5244 = vld [vmem:[%s5243] ss:$2 sm:$0xff]
  %s5245 = scalar_lea.vmem [#allocation4], 95
  %v5246 = vld [vmem:[%s5245] ss:$2 sm:$0xff]
  %s5247 = scalar_lea.vmem [#allocation4], 111
  %v5248 = vld [vmem:[%s5247] ss:$2 sm:$0xff]
  %s5249 = scalar_lea.vmem [#allocation4], 127
  %v5250 = vld [vmem:[%s5249] ss:$2 sm:$0xff]
  %5255 = vrot.lane.b32.xlu0 %v5244, 112
  %v5256 = vpop.permute.xlu0 %5255
  %5257 = vrot.lane.b32.xlu0 %v5246, 112
  %v5258 = vpop.permute.xlu0 %5257
  %5259 = vrot.lane.b32.xlu0 %v5248, 112
  %v5260 = vpop.permute.xlu0 %5259
  %5261 = vrot.lane.b32.xlu0 %v5250, 112
  %v5262 = vpop.permute.xlu0 %5261
  %5267 = vst.msk [vmem:[#allocation11 + $0x40] sm:$0xff] %vm3684, %v5256
  %5268 = vst.msk [vmem:[#allocation11 + $0x50] sm:$0xff] %vm3684, %v5258
  %5269 = vst.msk [vmem:[#allocation11 + $0x60] sm:$0xff] %vm3684, %v5260
  %5270 = vst.msk [vmem:[#allocation11 + $0x70] sm:$0xff] %vm3684, %v5262
  %s5271 = scalar_lea.vmem [#allocation4], 80
  %v5272 = vld [vmem:[%s5271] ss:$2 sm:$0xff]
  %s5273 = scalar_lea.vmem [#allocation4], 96
  %v5274 = vld [vmem:[%s5273] ss:$2 sm:$0xff]
  %s5275 = scalar_lea.vmem [#allocation4], 112
  %v5276 = vld [vmem:[%s5275] ss:$2 sm:$0xff]
  %s5277 = scalar_lea.vmem [#allocation4], 128
  %v5278 = vld [vmem:[%s5277] ss:$2 sm:$0xff]
  %5279 = vst.msk [vmem:[#allocation11 + $0x48] sm:$0xff] %vm3254, %v5272
  %5280 = vst.msk [vmem:[#allocation11 + $0x58] sm:$0xff] %vm3254, %v5274
  %5281 = vst.msk [vmem:[#allocation11 + $0x68] sm:$0xff] %vm3254, %v5276
  %5282 = vst.msk [vmem:[#allocation11 + $0x78] sm:$0xff] %vm3254, %v5278
  %v5283 = vld [vmem:[#allocation11] sm:$0xff]
  %v5284 = vld [vmem:[#allocation11 + $0x8] sm:$0xff]
  %v5285 = vld [vmem:[#allocation11 + $0x10] sm:$0xff]
  %v5286 = vld [vmem:[#allocation11 + $0x18] sm:$0xff]
  %v5287 = vld [vmem:[#allocation11 + $0x20] sm:$0xff]
  %v5288 = vld [vmem:[#allocation11 + $0x28] sm:$0xff]
  %v5289 = vld [vmem:[#allocation11 + $0x30] sm:$0xff]
  %v5290 = vld [vmem:[#allocation11 + $0x38] sm:$0xff]
  %v5291 = vld [vmem:[#allocation11 + $0x40] sm:$0xff]
  %v5292 = vld [vmem:[#allocation11 + $0x48] sm:$0xff]
  %v5293 = vld [vmem:[#allocation11 + $0x50] sm:$0xff]
  %v5294 = vld [vmem:[#allocation11 + $0x58] sm:$0xff]
  %v5295 = vld [vmem:[#allocation11 + $0x60] sm:$0xff]
  %v5296 = vld [vmem:[#allocation11 + $0x68] sm:$0xff]
  %v5297 = vld [vmem:[#allocation11 + $0x70] sm:$0xff]
  %v5298 = vld [vmem:[#allocation11 + $0x78] sm:$0xff]
  %v5299 = vld [vmem:[%s7] sm:$0xff]
  %v5300 = vld [vmem:[%s7 + $0x8] sm:$0xff]
  %v5301 = vld [vmem:[%s7 + $0x10] sm:$0xff]
  %v5302 = vld [vmem:[%s7 + $0x18] sm:$0xff]
  %v5303 = vld [vmem:[%s7 + $0x20] sm:$0xff]
  %v5304 = vld [vmem:[%s7 + $0x28] sm:$0xff]
  %v5305 = vld [vmem:[%s7 + $0x30] sm:$0xff]
  %v5306 = vld [vmem:[%s7 + $0x38] sm:$0xff]
  %v5307 = vld [vmem:[%s7 + $0x40] sm:$0xff]
  %v5308 = vld [vmem:[%s7 + $0x48] sm:$0xff]
  %v5309 = vld [vmem:[%s7 + $0x50] sm:$0xff]
  %v5310 = vld [vmem:[%s7 + $0x58] sm:$0xff]
  %v5311 = vld [vmem:[%s7 + $0x60] sm:$0xff]
  %v5312 = vld [vmem:[%s7 + $0x68] sm:$0xff]
  %v5313 = vld [vmem:[%s7 + $0x70] sm:$0xff]
  %v5314 = vld [vmem:[%s7 + $0x78] sm:$0xff]
  %v5315 = vld [vmem:[%s7 + $0x80] sm:$0xff]
  %v5316 = vld [vmem:[%s7 + $0x88] sm:$0xff]
  %v5318 = vsel %vm3254, %v5284, 0
  %v5321 = vsel %vm3254, %v5286, 0
  %v5324 = vsel %vm3254, %v5288, 0
  %v5327 = vsel %vm3254, %v5290, 0
  %v5330 = vsel %vm3254, %v5292, 0
  %v5333 = vsel %vm3254, %v5294, 0
  %v5336 = vsel %vm3254, %v5296, 0
  %v5339 = vsel %vm3254, %v5298, 0
  %5341 = vmatprep.subr.mxu0 0.0
  %5342 = vmatpush1.msra.mxu0 %v5299
  %5343 = vmatprep.subr.mxu0 0.0
  %5344 = vmatpush1.msra.mxu0 %v5300
  %5345 = vmatprep.subr.mxu0 0.0
  %5346 = vmatpush1.msra.mxu0 %v5301
  %5347 = vmatprep.subr.mxu0 0.0
  %5348 = vmatpush1.msra.mxu0 %v5302
  %5349 = vmatprep.subr.mxu0 0.0
  %5350 = vmatpush1.msra.mxu0 %v5303
  %5351 = vmatprep.subr.mxu0 0.0
  %5352 = vmatpush1.msra.mxu0 %v5304
  %5353 = vmatprep.subr.mxu0 0.0
  %5354 = vmatpush1.msra.mxu0 %v5305
  %5355 = vmatprep.subr.mxu0 0.0
  %5356 = vmatpush1.msra.mxu0 %v5306
  %5357 = vmatprep.subr.mxu0 0.0
  %5358 = vmatpush1.msra.mxu0 %v5307
  %5359 = vmatprep.subr.mxu0 0.0
  %5360 = vmatpush1.msra.mxu0 %v5308
  %5361 = vmatprep.subr.mxu0 0.0
  %5362 = vmatpush1.msra.mxu0 %v5309
  %5363 = vmatprep.subr.mxu0 0.0
  %5364 = vmatpush1.msra.mxu0 %v5310
  %5365 = vmatprep.subr.mxu0 0.0
  %5366 = vmatpush1.msra.mxu0 %v5311
  %5367 = vmatprep.subr.mxu0 0.0
  %5368 = vmatpush1.msra.mxu0 %v5312
  %5369 = vmatprep.subr.mxu0 0.0
  %5370 = vmatpush1.msra.mxu0 %v5313
  %5371 = vmatprep.subr.mxu0 0.0
  %5372 = vmatpush1.msra.mxu0 %v5314
  %5373 = vmatprep.subr.mxu0 0.0
  %5374 = vmatpush1.msra.mxu0 %v5315
  %5375 = vmatprep.subr.mxu0 0.0
  %5376 = vmatpush1.msra.mxu0 %v5316
  %5377 = vmatprep.subr.mxu0 0.0
  %5378 = vmatpush1.msra.mxu0 0.0
  %5379 = vmatprep.subr.mxu0 0.0
  %5380 = vmatpush1.msra.mxu0 0.0
  %5381 = vmatprep.subr.mxu0 0.0
  %5382 = vmatpush1.msra.mxu0 0.0
  %5383 = vmatprep.subr.mxu0 0.0
  %5384 = vmatpush1.msra.mxu0 0.0
  %5385 = vmatprep.subr.mxu0 0.0
  %5386 = vmatpush1.msra.mxu0 0.0
  %5387 = vmatprep.subr.mxu0 0.0
  %5388 = vmatpush1.msra.mxu0 0.0
  %5389 = vmatprep.subr.mxu0 0.0
  %5390 = vmatpush1.msra.mxu0 0.0
  %5391 = vmatprep.subr.mxu0 0.0
  %5392 = vmatpush1.msra.mxu0 0.0
  %5393 = vmatprep.subr.mxu0 0.0
  %5394 = vmatpush1.msra.mxu0 0.0
  %5395 = vmatprep.subr.mxu0 0.0
  %5396 = vmatpush1.msra.mxu0 0.0
  %5397 = vmatprep.subr.mxu0 0.0
  %5398 = vmatpush1.msra.mxu0 0.0
  %5399 = vmatprep.subr.mxu0 0.0
  %5400 = vmatpush1.msra.mxu0 0.0
  %5401 = vmatprep.subr.mxu0 0.0
  %5402 = vmatpush1.msra.mxu0 0.0
  %5403 = vmatprep.subr.mxu0 0.0
  %5404 = vmatpush1.msra.mxu0 0.0
  %5405 = vmatprep.mubr.f32.mxu0 %v5318
  %5406 = vmatmul.mubr.f32.gmra.mrb[0].mxu0 %v5283
  %v5407 = vpop.f32.mrb[0].mxu0
  %v5408 = vadd.f32 0.0, %v5407
  %v5409 = vpop.f32.mrb[0].mxu0
  %5410 = vmatprep.mubr.f32.mxu0 %v5321
  %5411 = vmatmul.mubr.f32.gmra.mrb[0].mxu0 %v5285
  %v5412 = vpop.f32.mrb[0].mxu0
  %v5413 = vadd.f32 0.0, %v5412
  %v5414 = vpop.f32.mrb[0].mxu0
  %5415 = vmatprep.mubr.f32.mxu0 %v5324
  %5416 = vmatmul.mubr.f32.gmra.mrb[0].mxu0 %v5287
  %v5417 = vpop.f32.mrb[0].mxu0
  %v5418 = vadd.f32 0.0, %v5417
  %v5419 = vpop.f32.mrb[0].mxu0
  %5420 = vmatprep.mubr.f32.mxu0 %v5327
  %5421 = vmatmul.mubr.f32.gmra.mrb[0].mxu0 %v5289
  %v5422 = vpop.f32.mrb[0].mxu0
  %v5423 = vadd.f32 0.0, %v5422
  %v5424 = vpop.f32.mrb[0].mxu0
  %5425 = vmatprep.mubr.f32.mxu0 %v5330
  %5426 = vmatmul.mubr.f32.gmra.mrb[0].mxu0 %v5291
  %v5427 = vpop.f32.mrb[0].mxu0
  %v5428 = vadd.f32 0.0, %v5427
  %v5429 = vpop.f32.mrb[0].mxu0
  %5430 = vmatprep.mubr.f32.mxu0 %v5333
  %5431 = vmatmul.mubr.f32.gmra.mrb[0].mxu0 %v5293
  %v5432 = vpop.f32.mrb[0].mxu0
  %v5433 = vadd.f32 0.0, %v5432
  %v5434 = vpop.f32.mrb[0].mxu0
  %5435 = vmatprep.mubr.f32.mxu0 %v5336
  %5436 = vmatmul.mubr.f32.gmra.mrb[0].mxu0 %v5295
  %v5437 = vpop.f32.mrb[0].mxu0
  %v5438 = vadd.f32 0.0, %v5437
  %v5439 = vpop.f32.mrb[0].mxu0
  %5440 = vmatprep.mubr.f32.mxu0 %v5339
  %5441 = vmatmul.mubr.f32.gmra.mrb[0].mxu0 %v5297
  %v5442 = vpop.f32.mrb[0].mxu0
  %v5443 = vadd.f32 0.0, %v5442
  %v5444 = vpop.f32.mrb[0].mxu0
  %5445 = vdwg.mxu0
  %v5446 = vld [vmem:[%s8] sm:$0x1]
  %v5448 = vlaneseq
  %v5449 = vshrl.u32 %v5448, 7
  %v5450 = vsub.s32 0, %v5449
  %v5451 = vrot.slane %v5446, %v5450
  %v5453 = vmul.f32 %v5408, %v5451
  %v5454 = vmul.f32 %v5413, %v5451
  %v5455 = vmul.f32 %v5418, %v5451
  %v5456 = vmul.f32 %v5423, %v5451
  %v5457 = vmul.f32 %v5428, %v5451
  %v5458 = vmul.f32 %v5433, %v5451
  %v5459 = vmul.f32 %v5438, %v5451
  %v5460 = vmul.f32 %v5443, %v5451
  %v5461 = vld [vmem:[%s9] sm:$0x1]
  %v5463 = vlaneseq
  %v5464 = vshrl.u32 %v5463, 7
  %v5465 = vsub.s32 0, %v5464
  %v5466 = vrot.slane %v5461, %v5465
  %v5468 = vadd.f32 %v5453, %v5466
  %v5469 = vadd.f32 %v5454, %v5466
  %v5470 = vadd.f32 %v5455, %v5466
  %v5471 = vadd.f32 %v5456, %v5466
  %v5472 = vadd.f32 %v5457, %v5466
  %v5473 = vadd.f32 %v5458, %v5466
  %v5474 = vadd.f32 %v5459, %v5466
  %v5475 = vadd.f32 %v5460, %v5466
  %v5476 = vmax.f32 %v5468, 0.0
  %v5477 = vmax.f32 %v5469, 0.0
  %v5478 = vmax.f32 %v5470, 0.0
  %v5479 = vmax.f32 %v5471, 0.0
  %v5480 = vmax.f32 %v5472, 0.0
  %v5481 = vmax.f32 %v5473, 0.0
  %v5482 = vmax.f32 %v5474, 0.0
  %v5483 = vmax.f32 %v5475, 0.0
  %vm5484 = vcmask 191488
  %5485 = vst.msk [vmem:[#allocation5] sm:$0xf] %vm5484, 0.0
  %5486 = vst.msk [vmem:[#allocation5 + $0x24] sm:$0xf] %vm5484, 0.0
  %vm5487 = vcmask 195584
  %5488 = vst.msk [vmem:[#allocation5 + $0x4] sm:$0xff] %vm5487, %v5476
  %5489 = vst.msk [vmem:[#allocation5 + $0xc] sm:$0xff] %vm5487, %v5477
  %5490 = vst.msk [vmem:[#allocation5 + $0x14] sm:$0xff] %vm5487, %v5478
  %5491 = vst.msk [vmem:[#allocation5 + $0x1c] sm:$0xff] %vm5487, %v5479
  %v5492 = vld [vmem:[#allocation5] ss:$2 sm:$0xff]
  %s5493 = scalar_lea.vmem [#allocation5], 16
  %v5494 = vld [vmem:[%s5493] ss:$2 sm:$0xff]
  %5495 = vst.msk [vmem:[#allocation12] sm:$0xff] %vm5487, %v5492
  %5496 = vst.msk [vmem:[#allocation12 + $0x10] sm:$0xff] %vm5487, %v5494
  %s5497 = scalar_lea.vmem [#allocation5], 1
  %v5498 = vld [vmem:[%s5497] ss:$2 sm:$0xff]
  %s5499 = scalar_lea.vmem [#allocation5], 17
  %v5500 = vld [vmem:[%s5499] ss:$2 sm:$0xff]
  %5503 = vrot.lane.b32.xlu0 %v5498, 24
  %v5504 = vpop.permute.xlu0 %5503
  %5505 = vrot.lane.b32.xlu0 %v5500, 24
  %v5506 = vpop.permute.xlu0 %5505
  %vm5509 = vcmask 392384
  %5510 = vst.msk [vmem:[#allocation12] sm:$0xff] %vm5509, %v5504
  %5511 = vst.msk [vmem:[#allocation12 + $0x10] sm:$0xff] %vm5509, %v5506
  %s5512 = scalar_lea.vmem [#allocation5], 2
  %v5513 = vld [vmem:[%s5512] ss:$2 sm:$0xff]
  %s5514 = scalar_lea.vmem [#allocation5], 18
  %v5515 = vld [vmem:[%s5514] ss:$2 sm:$0xff]
  %5518 = vrot.lane.b32.xlu0 %v5513, 48
  %v5519 = vpop.permute.xlu0 %5518
  %5520 = vrot.lane.b32.xlu0 %v5515, 48
  %v5521 = vpop.permute.xlu0 %5520
  %vm5524 = vcmask 589184
  %5525 = vst.msk [vmem:[#allocation12] sm:$0xff] %vm5524, %v5519
  %5526 = vst.msk [vmem:[#allocation12 + $0x10] sm:$0xff] %vm5524, %v5521
  %s5527 = scalar_lea.vmem [#allocation5], 3
  %v5528 = vld [vmem:[%s5527] ss:$2 sm:$0xff]
  %s5529 = scalar_lea.vmem [#allocation5], 19
  %v5530 = vld [vmem:[%s5529] ss:$2 sm:$0xff]
  %5533 = vrot.lane.b32.xlu0 %v5528, 72
  %v5534 = vpop.permute.xlu0 %5533
  %5535 = vrot.lane.b32.xlu0 %v5530, 72
  %v5536 = vpop.permute.xlu0 %5535
  %vm5539 = vcmask 785984
  %5540 = vst.msk [vmem:[#allocation12] sm:$0xff] %vm5539, %v5534
  %5541 = vst.msk [vmem:[#allocation12 + $0x10] sm:$0xff] %vm5539, %v5536
  %s5542 = scalar_lea.vmem [#allocation5], 4
  %v5543 = vld [vmem:[%s5542] ss:$2 sm:$0xff]
  %s5544 = scalar_lea.vmem [#allocation5], 20
  %v5545 = vld [vmem:[%s5544] ss:$2 sm:$0xff]
  %5548 = vrot.lane.b32.xlu0 %v5543, 96
  %v5549 = vpop.permute.xlu0 %5548
  %5550 = vrot.lane.b32.xlu0 %v5545, 96
  %v5551 = vpop.permute.xlu0 %5550
  %vm5554 = vcmask 982784
  %5555 = vst.msk [vmem:[#allocation12] sm:$0xff] %vm5554, %v5549
  %5556 = vst.msk [vmem:[#allocation12 + $0x10] sm:$0xff] %vm5554, %v5551
  %s5557 = scalar_lea.vmem [#allocation5], 5
  %v5558 = vld [vmem:[%s5557] ss:$2 sm:$0xff]
  %s5559 = scalar_lea.vmem [#allocation5], 21
  %v5560 = vld [vmem:[%s5559] ss:$2 sm:$0xff]
  %5563 = vrot.lane.b32.xlu0 %v5558, 120
  %v5564 = vpop.permute.xlu0 %5563
  %5565 = vrot.lane.b32.xlu0 %v5560, 120
  %v5566 = vpop.permute.xlu0 %5565
  %vm5569 = vcmask 1048512
  %5570 = vst.msk [vmem:[#allocation12] sm:$0xff] %vm5569, %v5564
  %5571 = vst.msk [vmem:[#allocation12 + $0x8] sm:$0xff] %vm3254, %v5564
  %5572 = vst.msk [vmem:[#allocation12 + $0x10] sm:$0xff] %vm5569, %v5566
  %5573 = vst.msk [vmem:[#allocation12 + $0x18] sm:$0xff] %vm3254, %v5566
  %s5574 = scalar_lea.vmem [#allocation5], 6
  %v5575 = vld [vmem:[%s5574] ss:$2 sm:$0xff]
  %s5576 = scalar_lea.vmem [#allocation5], 22
  %v5577 = vld [vmem:[%s5576] ss:$2 sm:$0xff]
  %5580 = vrot.lane.b32.xlu0 %v5575, 16
  %v5581 = vpop.permute.xlu0 %5580
  %5582 = vrot.lane.b32.xlu0 %v5577, 16
  %v5583 = vpop.permute.xlu0 %5582
  %vm5586 = vcmask 326784
  %5587 = vst.msk [vmem:[#allocation12 + $0x8] sm:$0xff] %vm5586, %v5581
  %5588 = vst.msk [vmem:[#allocation12 + $0x18] sm:$0xff] %vm5586, %v5583
  %s5589 = scalar_lea.vmem [#allocation5], 7
  %v5590 = vld [vmem:[%s5589] ss:$2 sm:$0xff]
  %s5591 = scalar_lea.vmem [#allocation5], 23
  %v5592 = vld [vmem:[%s5591] ss:$2 sm:$0xff]
  %5595 = vrot.lane.b32.xlu0 %v5590, 40
  %v5596 = vpop.permute.xlu0 %5595
  %5597 = vrot.lane.b32.xlu0 %v5592, 40
  %v5598 = vpop.permute.xlu0 %5597
  %vm5601 = vcmask 523584
  %5602 = vst.msk [vmem:[#allocation12 + $0x8] sm:$0xff] %vm5601, %v5596
  %5603 = vst.msk [vmem:[#allocation12 + $0x18] sm:$0xff] %vm5601, %v5598
  %s5604 = scalar_lea.vmem [#allocation5], 8
  %v5605 = vld [vmem:[%s5604] ss:$2 sm:$0xff]
  %s5606 = scalar_lea.vmem [#allocation5], 24
  %v5607 = vld [vmem:[%s5606] ss:$2 sm:$0xff]
  %5610 = vrot.lane.b32.xlu0 %v5605, 64
  %v5611 = vpop.permute.xlu0 %5610
  %5612 = vrot.lane.b32.xlu0 %v5607, 64
  %v5613 = vpop.permute.xlu0 %5612
  %vm5616 = vcmask 720384
  %5617 = vst.msk [vmem:[#allocation12 + $0x8] sm:$0xff] %vm5616, %v5611
  %5618 = vst.msk [vmem:[#allocation12 + $0x18] sm:$0xff] %vm5616, %v5613
  %5619 = vst.msk [vmem:[#allocation5 + $0x28] sm:$0xf] %vm5484, 0.0
  %5620 = vst.msk [vmem:[#allocation5 + $0x4c] sm:$0xf] %vm5484, 0.0
  %5621 = vst.msk [vmem:[#allocation5 + $0x2c] sm:$0xff] %vm5487, %v5480
  %5622 = vst.msk [vmem:[#allocation5 + $0x34] sm:$0xff] %vm5487, %v5481
  %5623 = vst.msk [vmem:[#allocation5 + $0x3c] sm:$0xff] %vm5487, %v5482
  %5624 = vst.msk [vmem:[#allocation5 + $0x44] sm:$0xff] %vm5487, %v5483
  %s5625 = scalar_lea.vmem [#allocation5], 40
  %v5626 = vld [vmem:[%s5625] ss:$2 sm:$0xff]
  %s5627 = scalar_lea.vmem [#allocation5], 56
  %v5628 = vld [vmem:[%s5627] ss:$2 sm:$0xff]
  %5629 = vst.msk [vmem:[#allocation12 + $0x20] sm:$0xff] %vm5487, %v5626
  %5630 = vst.msk [vmem:[#allocation12 + $0x30] sm:$0xff] %vm5487, %v5628
  %s5631 = scalar_lea.vmem [#allocation5], 41
  %v5632 = vld [vmem:[%s5631] ss:$2 sm:$0xff]
  %s5633 = scalar_lea.vmem [#allocation5], 57
  %v5634 = vld [vmem:[%s5633] ss:$2 sm:$0xff]
  %5637 = vrot.lane.b32.xlu0 %v5632, 24
  %v5638 = vpop.permute.xlu0 %5637
  %5639 = vrot.lane.b32.xlu0 %v5634, 24
  %v5640 = vpop.permute.xlu0 %5639
  %5643 = vst.msk [vmem:[#allocation12 + $0x20] sm:$0xff] %vm5509, %v5638
  %5644 = vst.msk [vmem:[#allocation12 + $0x30] sm:$0xff] %vm5509, %v5640
  %s5645 = scalar_lea.vmem [#allocation5], 42
  %v5646 = vld [vmem:[%s5645] ss:$2 sm:$0xff]
  %s5647 = scalar_lea.vmem [#allocation5], 58
  %v5648 = vld [vmem:[%s5647] ss:$2 sm:$0xff]
  %5651 = vrot.lane.b32.xlu0 %v5646, 48
  %v5652 = vpop.permute.xlu0 %5651
  %5653 = vrot.lane.b32.xlu0 %v5648, 48
  %v5654 = vpop.permute.xlu0 %5653
  %5657 = vst.msk [vmem:[#allocation12 + $0x20] sm:$0xff] %vm5524, %v5652
  %5658 = vst.msk [vmem:[#allocation12 + $0x30] sm:$0xff] %vm5524, %v5654
  %s5659 = scalar_lea.vmem [#allocation5], 43
  %v5660 = vld [vmem:[%s5659] ss:$2 sm:$0xff]
  %s5661 = scalar_lea.vmem [#allocation5], 59
  %v5662 = vld [vmem:[%s5661] ss:$2 sm:$0xff]
  %5665 = vrot.lane.b32.xlu0 %v5660, 72
  %v5666 = vpop.permute.xlu0 %5665
  %5667 = vrot.lane.b32.xlu0 %v5662, 72
  %v5668 = vpop.permute.xlu0 %5667
  %5671 = vst.msk [vmem:[#allocation12 + $0x20] sm:$0xff] %vm5539, %v5666
  %5672 = vst.msk [vmem:[#allocation12 + $0x30] sm:$0xff] %vm5539, %v5668
  %s5673 = scalar_lea.vmem [#allocation5], 44
  %v5674 = vld [vmem:[%s5673] ss:$2 sm:$0xff]
  %s5675 = scalar_lea.vmem [#allocation5], 60
  %v5676 = vld [vmem:[%s5675] ss:$2 sm:$0xff]
  %5679 = vrot.lane.b32.xlu0 %v5674, 96
  %v5680 = vpop.permute.xlu0 %5679
  %5681 = vrot.lane.b32.xlu0 %v5676, 96
  %v5682 = vpop.permute.xlu0 %5681
  %5685 = vst.msk [vmem:[#allocation12 + $0x20] sm:$0xff] %vm5554, %v5680
  %5686 = vst.msk [vmem:[#allocation12 + $0x30] sm:$0xff] %vm5554, %v5682
  %s5687 = scalar_lea.vmem [#allocation5], 45
  %v5688 = vld [vmem:[%s5687] ss:$2 sm:$0xff]
  %s5689 = scalar_lea.vmem [#allocation5], 61
  %v5690 = vld [vmem:[%s5689] ss:$2 sm:$0xff]
  %5693 = vrot.lane.b32.xlu0 %v5688, 120
  %v5694 = vpop.permute.xlu0 %5693
  %5695 = vrot.lane.b32.xlu0 %v5690, 120
  %v5696 = vpop.permute.xlu0 %5695
  %5699 = vst.msk [vmem:[#allocation12 + $0x20] sm:$0xff] %vm5569, %v5694
  %5700 = vst.msk [vmem:[#allocation12 + $0x28] sm:$0xff] %vm3254, %v5694
  %5701 = vst.msk [vmem:[#allocation12 + $0x30] sm:$0xff] %vm5569, %v5696
  %5702 = vst.msk [vmem:[#allocation12 + $0x38] sm:$0xff] %vm3254, %v5696
  %s5703 = scalar_lea.vmem [#allocation5], 46
  %v5704 = vld [vmem:[%s5703] ss:$2 sm:$0xff]
  %s5705 = scalar_lea.vmem [#allocation5], 62
  %v5706 = vld [vmem:[%s5705] ss:$2 sm:$0xff]
  %5709 = vrot.lane.b32.xlu0 %v5704, 16
  %v5710 = vpop.permute.xlu0 %5709
  %5711 = vrot.lane.b32.xlu0 %v5706, 16
  %v5712 = vpop.permute.xlu0 %5711
  %5715 = vst.msk [vmem:[#allocation12 + $0x28] sm:$0xff] %vm5586, %v5710
  %5716 = vst.msk [vmem:[#allocation12 + $0x38] sm:$0xff] %vm5586, %v5712
  %s5717 = scalar_lea.vmem [#allocation5], 47
  %v5718 = vld [vmem:[%s5717] ss:$2 sm:$0xff]
  %s5719 = scalar_lea.vmem [#allocation5], 63
  %v5720 = vld [vmem:[%s5719] ss:$2 sm:$0xff]
  %5723 = vrot.lane.b32.xlu0 %v5718, 40
  %v5724 = vpop.permute.xlu0 %5723
  %5725 = vrot.lane.b32.xlu0 %v5720, 40
  %v5726 = vpop.permute.xlu0 %5725
  %5729 = vst.msk [vmem:[#allocation12 + $0x28] sm:$0xff] %vm5601, %v5724
  %5730 = vst.msk [vmem:[#allocation12 + $0x38] sm:$0xff] %vm5601, %v5726
  %s5731 = scalar_lea.vmem [#allocation5], 48
  %v5732 = vld [vmem:[%s5731] ss:$2 sm:$0xff]
  %s5733 = scalar_lea.vmem [#allocation5], 64
  %v5734 = vld [vmem:[%s5733] ss:$2 sm:$0xff]
  %5737 = vrot.lane.b32.xlu0 %v5732, 64
  %v5738 = vpop.permute.xlu0 %5737
  %5739 = vrot.lane.b32.xlu0 %v5734, 64
  %v5740 = vpop.permute.xlu0 %5739
  %5743 = vst.msk [vmem:[#allocation12 + $0x28] sm:$0xff] %vm5616, %v5738
  %5744 = vst.msk [vmem:[#allocation12 + $0x38] sm:$0xff] %vm5616, %v5740
  %v5745 = vld [vmem:[#allocation12] sm:$0xff]
  %v5746 = vld [vmem:[#allocation12 + $0x8] sm:$0xff]
  %v5747 = vld [vmem:[#allocation12 + $0x10] sm:$0xff]
  %v5748 = vld [vmem:[#allocation12 + $0x18] sm:$0xff]
  %v5749 = vld [vmem:[#allocation12 + $0x20] sm:$0xff]
  %v5750 = vld [vmem:[#allocation12 + $0x28] sm:$0xff]
  %v5751 = vld [vmem:[#allocation12 + $0x30] sm:$0xff]
  %v5752 = vld [vmem:[#allocation12 + $0x38] sm:$0xff]
  %v5753 = vld [vmem:[%s10] sm:$0xff]
  %v5754 = vld [vmem:[%s10 + $0x8] sm:$0xff]
  %v5755 = vld [vmem:[%s10 + $0x10] sm:$0xff]
  %v5756 = vld [vmem:[%s10 + $0x18] sm:$0xff]
  %v5757 = vld [vmem:[%s10 + $0x20] sm:$0xff]
  %v5758 = vld [vmem:[%s10 + $0x28] sm:$0xff]
  %v5759 = vld [vmem:[%s10 + $0x30] sm:$0xff]
  %v5760 = vld [vmem:[%s10 + $0x38] sm:$0xff]
  %v5761 = vld [vmem:[%s10 + $0x40] sm:$0xff]
  %v5762 = vld [vmem:[%s10 + $0x48] sm:$0xff]
  %v5763 = vld [vmem:[%s10 + $0x50] sm:$0xff]
  %v5764 = vld [vmem:[%s10 + $0x58] sm:$0xff]
  %v5765 = vld [vmem:[%s10 + $0x60] sm:$0xff]
  %v5766 = vld [vmem:[%s10 + $0x68] sm:$0xff]
  %v5767 = vld [vmem:[%s10 + $0x70] sm:$0xff]
  %v5768 = vld [vmem:[%s10 + $0x78] sm:$0xff]
  %v5769 = vld [vmem:[%s10 + $0x80] sm:$0xff]
  %v5770 = vld [vmem:[%s10 + $0x88] sm:$0xff]
  %v5771 = vld [vmem:[%s10 + $0x90] sm:$0xff]
  %v5772 = vld [vmem:[%s10 + $0x98] sm:$0xff]
  %v5773 = vld [vmem:[%s10 + $0xa0] sm:$0xff]
  %v5774 = vld [vmem:[%s10 + $0xa8] sm:$0xff]
  %v5775 = vld [vmem:[%s10 + $0xb0] sm:$0xff]
  %v5776 = vld [vmem:[%s10 + $0xb8] sm:$0xff]
  %v5777 = vld [vmem:[%s10 + $0xc0] sm:$0xff]
  %v5778 = vld [vmem:[%s10 + $0xc8] sm:$0xff]
  %v5779 = vld [vmem:[%s10 + $0xd0] sm:$0xff]
  %vm5780 = vcmask 719872
  %v5782 = vsel %vm5780, %v5746, 0
  %v5785 = vsel %vm5780, %v5748, 0
  %v5788 = vsel %vm5780, %v5750, 0
  %v5791 = vsel %vm5780, %v5752, 0
  %5793 = vmatprep.subr.mxu0 0.0
  %5794 = vmatpush1.msra.mxu0 %v5753
  %5795 = vmatprep.subr.mxu0 0.0
  %5796 = vmatpush1.msra.mxu0 %v5754
  %5797 = vmatprep.subr.mxu0 0.0
  %5798 = vmatpush1.msra.mxu0 %v5755
  %5799 = vmatprep.subr.mxu0 0.0
  %5800 = vmatpush1.msra.mxu0 %v5756
  %5801 = vmatprep.subr.mxu0 0.0
  %5802 = vmatpush1.msra.mxu0 %v5757
  %5803 = vmatprep.subr.mxu0 0.0
  %5804 = vmatpush1.msra.mxu0 %v5758
  %5805 = vmatprep.subr.mxu0 0.0
  %5806 = vmatpush1.msra.mxu0 %v5759
  %5807 = vmatprep.subr.mxu0 0.0
  %5808 = vmatpush1.msra.mxu0 %v5760
  %5809 = vmatprep.subr.mxu0 0.0
  %5810 = vmatpush1.msra.mxu0 %v5761
  %5811 = vmatprep.subr.mxu0 0.0
  %5812 = vmatpush1.msra.mxu0 %v5762
  %5813 = vmatprep.subr.mxu0 0.0
  %5814 = vmatpush1.msra.mxu0 %v5763
  %5815 = vmatprep.subr.mxu0 0.0
  %5816 = vmatpush1.msra.mxu0 %v5764
  %5817 = vmatprep.subr.mxu0 0.0
  %5818 = vmatpush1.msra.mxu0 %v5765
  %5819 = vmatprep.subr.mxu0 0.0
  %5820 = vmatpush1.msra.mxu0 %v5766
  %5821 = vmatprep.subr.mxu0 0.0
  %5822 = vmatpush1.msra.mxu0 %v5767
  %5823 = vmatprep.subr.mxu0 0.0
  %5824 = vmatpush1.msra.mxu0 %v5768
  %5825 = vmatprep.subr.mxu0 0.0
  %5826 = vmatpush1.msra.mxu0 %v5769
  %5827 = vmatprep.subr.mxu0 0.0
  %5828 = vmatpush1.msra.mxu0 %v5770
  %5829 = vmatprep.subr.mxu0 0.0
  %5830 = vmatpush1.msra.mxu0 %v5771
  %5831 = vmatprep.subr.mxu0 0.0
  %5832 = vmatpush1.msra.mxu0 %v5772
  %5833 = vmatprep.subr.mxu0 0.0
  %5834 = vmatpush1.msra.mxu0 %v5773
  %5835 = vmatprep.subr.mxu0 0.0
  %5836 = vmatpush1.msra.mxu0 %v5774
  %5837 = vmatprep.subr.mxu0 0.0
  %5838 = vmatpush1.msra.mxu0 %v5775
  %5839 = vmatprep.subr.mxu0 0.0
  %5840 = vmatpush1.msra.mxu0 %v5776
  %5841 = vmatprep.subr.mxu0 0.0
  %5842 = vmatpush1.msra.mxu0 %v5777
  %5843 = vmatprep.subr.mxu0 0.0
  %5844 = vmatpush1.msra.mxu0 %v5778
  %5845 = vmatprep.subr.mxu0 0.0
  %5846 = vmatpush1.msra.mxu0 %v5779
  %5847 = vmatprep.subr.mxu0 0.0
  %5848 = vmatpush1.msra.mxu0 0.0
  %5849 = vmatprep.subr.mxu0 0.0
  %5850 = vmatpush1.msra.mxu0 0.0
  %5851 = vmatprep.subr.mxu0 0.0
  %5852 = vmatpush1.msra.mxu0 0.0
  %5853 = vmatprep.subr.mxu0 0.0
  %5854 = vmatpush1.msra.mxu0 0.0
  %5855 = vmatprep.subr.mxu0 0.0
  %5856 = vmatpush1.msra.mxu0 0.0
  %5857 = vmatprep.mubr.f32.mxu0 %v5782
  %5858 = vmatmul.mubr.f32.gmra.mrb[0].mxu0 %v5745
  %v5859 = vpop.f32.mrb[0].mxu0
  %v5860 = vadd.f32 0.0, %v5859
  %v5861 = vpop.f32.mrb[0].mxu0
  %5862 = vmatprep.mubr.f32.mxu0 %v5785
  %5863 = vmatmul.mubr.f32.gmra.mrb[0].mxu0 %v5747
  %v5864 = vpop.f32.mrb[0].mxu0
  %v5865 = vadd.f32 0.0, %v5864
  %v5866 = vpop.f32.mrb[0].mxu0
  %5867 = vmatprep.mubr.f32.mxu0 %v5788
  %5868 = vmatmul.mubr.f32.gmra.mrb[0].mxu0 %v5749
  %v5869 = vpop.f32.mrb[0].mxu0
  %v5870 = vadd.f32 0.0, %v5869
  %v5871 = vpop.f32.mrb[0].mxu0
  %5872 = vmatprep.mubr.f32.mxu0 %v5791
  %5873 = vmatmul.mubr.f32.gmra.mrb[0].mxu0 %v5751
  %v5874 = vpop.f32.mrb[0].mxu0
  %v5875 = vadd.f32 0.0, %v5874
  %v5876 = vpop.f32.mrb[0].mxu0
  %5877 = vdwg.mxu0
  %v5878 = vld [vmem:[%s11] sm:$0x1]
  %v5880 = vlaneseq
  %v5881 = vshrl.u32 %v5880, 7
  %v5882 = vsub.s32 0, %v5881
  %v5883 = vrot.slane %v5878, %v5882
  %v5885 = vmul.f32 %v5860, %v5883
  %v5886 = vmul.f32 %v5865, %v5883
  %v5887 = vmul.f32 %v5870, %v5883
  %v5888 = vmul.f32 %v5875, %v5883
  %v5889 = vld [vmem:[%s12] sm:$0x1]
  %v5891 = vlaneseq
  %v5892 = vshrl.u32 %v5891, 7
  %v5893 = vsub.s32 0, %v5892
  %v5894 = vrot.slane %v5889, %v5893
  %v5896 = vadd.f32 %v5885, %v5894
  %v5897 = vadd.f32 %v5886, %v5894
  %v5898 = vadd.f32 %v5887, %v5894
  %v5899 = vadd.f32 %v5888, %v5894
  %v5900 = vmax.f32 %v5896, 0.0
  %v5901 = vmax.f32 %v5897, 0.0
  %v5902 = vmax.f32 %v5898, 0.0
  %v5903 = vmax.f32 %v5899, 0.0
  %vm5904 = vcmask 189440
  %5905 = vst.msk [vmem:[#allocation6] sm:$0x3] %vm5904, 0.0
  %5906 = vst.msk [vmem:[#allocation6 + $0x12] sm:$0x3] %vm5904, 0.0
  %5907 = vst.msk [vmem:[#allocation6 + $0x2] sm:$0xff] %vm5487, %v5900
  %5908 = vst.msk [vmem:[#allocation6 + $0xa] sm:$0xff] %vm5487, %v5901
  %v5909 = vld [vmem:[#allocation6] ss:$2 sm:$0xff]
  %5910 = vst.msk [vmem:[#allocation13] sm:$0xff] %vm5487, %v5909
  %s5911 = scalar_lea.vmem [#allocation6], 1
  %v5912 = vld [vmem:[%s5911] ss:$2 sm:$0xff]
  %5914 = vrot.lane.b32.xlu0 %v5912, 24
  %v5915 = vpop.permute.xlu0 %5914
  %5917 = vst.msk [vmem:[#allocation13] sm:$0xff] %vm5509, %v5915
  %s5918 = scalar_lea.vmem [#allocation6], 2
  %v5919 = vld [vmem:[%s5918] ss:$2 sm:$0xff]
  %5921 = vrot.lane.b32.xlu0 %v5919, 48
  %v5922 = vpop.permute.xlu0 %5921
  %5924 = vst.msk [vmem:[#allocation13] sm:$0xff] %vm5524, %v5922
  %s5925 = scalar_lea.vmem [#allocation6], 3
  %v5926 = vld [vmem:[%s5925] ss:$2 sm:$0xff]
  %5928 = vrot.lane.b32.xlu0 %v5926, 72
  %v5929 = vpop.permute.xlu0 %5928
  %5931 = vst.msk [vmem:[#allocation13] sm:$0xff] %vm5539, %v5929
  %s5932 = scalar_lea.vmem [#allocation6], 4
  %v5933 = vld [vmem:[%s5932] ss:$2 sm:$0xff]
  %5935 = vrot.lane.b32.xlu0 %v5933, 96
  %v5936 = vpop.permute.xlu0 %5935
  %5938 = vst.msk [vmem:[#allocation13] sm:$0xff] %vm5554, %v5936
  %s5939 = scalar_lea.vmem [#allocation6], 5
  %v5940 = vld [vmem:[%s5939] ss:$2 sm:$0xff]
  %5942 = vrot.lane.b32.xlu0 %v5940, 120
  %v5943 = vpop.permute.xlu0 %5942
  %5945 = vst.msk [vmem:[#allocation13] sm:$0xff] %vm5569, %v5943
  %5946 = vst.msk [vmem:[#allocation13 + $0x8] sm:$0xff] %vm3254, %v5943
  %5947 = vst.msk [vmem:[#allocation6 + $0x14] sm:$0x3] %vm5904, 0.0
  %5948 = vst.msk [vmem:[#allocation6 + $0x26] sm:$0x3] %vm5904, 0.0
  %5949 = vst.msk [vmem:[#allocation6 + $0x16] sm:$0xff] %vm5487, %v5902
  %5950 = vst.msk [vmem:[#allocation6 + $0x1e] sm:$0xff] %vm5487, %v5903
  %s5951 = scalar_lea.vmem [#allocation6], 20
  %v5952 = vld [vmem:[%s5951] ss:$2 sm:$0xff]
  %5953 = vst.msk [vmem:[#allocation13 + $0x10] sm:$0xff] %vm5487, %v5952
  %s5954 = scalar_lea.vmem [#allocation6], 21
  %v5955 = vld [vmem:[%s5954] ss:$2 sm:$0xff]
  %5957 = vrot.lane.b32.xlu0 %v5955, 24
  %v5958 = vpop.permute.xlu0 %5957
  %5960 = vst.msk [vmem:[#allocation13 + $0x10] sm:$0xff] %vm5509, %v5958
  %s5961 = scalar_lea.vmem [#allocation6], 22
  %v5962 = vld [vmem:[%s5961] ss:$2 sm:$0xff]
  %5964 = vrot.lane.b32.xlu0 %v5962, 48
  %v5965 = vpop.permute.xlu0 %5964
  %5967 = vst.msk [vmem:[#allocation13 + $0x10] sm:$0xff] %vm5524, %v5965
  %s5968 = scalar_lea.vmem [#allocation6], 23
  %v5969 = vld [vmem:[%s5968] ss:$2 sm:$0xff]
  %5971 = vrot.lane.b32.xlu0 %v5969, 72
  %v5972 = vpop.permute.xlu0 %5971
  %5974 = vst.msk [vmem:[#allocation13 + $0x10] sm:$0xff] %vm5539, %v5972
  %s5975 = scalar_lea.vmem [#allocation6], 24
  %v5976 = vld [vmem:[%s5975] ss:$2 sm:$0xff]
  %5978 = vrot.lane.b32.xlu0 %v5976, 96
  %v5979 = vpop.permute.xlu0 %5978
  %5981 = vst.msk [vmem:[#allocation13 + $0x10] sm:$0xff] %vm5554, %v5979
  %s5982 = scalar_lea.vmem [#allocation6], 25
  %v5983 = vld [vmem:[%s5982] ss:$2 sm:$0xff]
  %5985 = vrot.lane.b32.xlu0 %v5983, 120
  %v5986 = vpop.permute.xlu0 %5985
  %5988 = vst.msk [vmem:[#allocation13 + $0x10] sm:$0xff] %vm5569, %v5986
  %5989 = vst.msk [vmem:[#allocation13 + $0x18] sm:$0xff] %vm3254, %v5986
  %v5990 = vld [vmem:[#allocation13] sm:$0xff]
  %v5991 = vld [vmem:[#allocation13 + $0x8] sm:$0xff]
  %v5992 = vld [vmem:[#allocation13 + $0x10] sm:$0xff]
  %v5993 = vld [vmem:[#allocation13 + $0x18] sm:$0xff]
  %v5994 = vld [vmem:[%s13] sm:$0xff]
  %v5995 = vld [vmem:[%s13 + $0x8] sm:$0xff]
  %v5996 = vld [vmem:[%s13 + $0x10] sm:$0xff]
  %v5997 = vld [vmem:[%s13 + $0x18] sm:$0xff]
  %v5998 = vld [vmem:[%s13 + $0x20] sm:$0xff]
  %v5999 = vld [vmem:[%s13 + $0x28] sm:$0xff]
  %v6000 = vld [vmem:[%s13 + $0x30] sm:$0xff]
  %v6001 = vld [vmem:[%s13 + $0x38] sm:$0xff]
  %v6002 = vld [vmem:[%s13 + $0x40] sm:$0xff]
  %v6003 = vld [vmem:[%s13 + $0x48] sm:$0xff]
  %v6004 = vld [vmem:[%s13 + $0x50] sm:$0xff]
  %v6005 = vld [vmem:[%s13 + $0x58] sm:$0xff]
  %v6006 = vld [vmem:[%s13 + $0x60] sm:$0xff]
  %v6007 = vld [vmem:[%s13 + $0x68] sm:$0xff]
  %v6008 = vld [vmem:[%s13 + $0x70] sm:$0xff]
  %v6009 = vld [vmem:[%s13 + $0x78] sm:$0xff]
  %v6010 = vld [vmem:[%s13 + $0x80] sm:$0xff]
  %v6011 = vld [vmem:[%s13 + $0x88] sm:$0xff]
  %v6013 = vsel %vm3254, %v5991, 0
  %v6016 = vsel %vm3254, %v5993, 0
  %6018 = vmatprep.subr.mxu0 0.0
  %6019 = vmatpush1.msra.mxu0 %v5994
  %6020 = vmatprep.subr.mxu0 0.0
  %6021 = vmatpush1.msra.mxu0 %v5995
  %6022 = vmatprep.subr.mxu0 0.0
  %6023 = vmatpush1.msra.mxu0 %v5996
  %6024 = vmatprep.subr.mxu0 0.0
  %6025 = vmatpush1.msra.mxu0 %v5997
  %6026 = vmatprep.subr.mxu0 0.0
  %6027 = vmatpush1.msra.mxu0 %v5998
  %6028 = vmatprep.subr.mxu0 0.0
  %6029 = vmatpush1.msra.mxu0 %v5999
  %6030 = vmatprep.subr.mxu0 0.0
  %6031 = vmatpush1.msra.mxu0 %v6000
  %6032 = vmatprep.subr.mxu0 0.0
  %6033 = vmatpush1.msra.mxu0 %v6001
  %6034 = vmatprep.subr.mxu0 0.0
  %6035 = vmatpush1.msra.mxu0 %v6002
  %6036 = vmatprep.subr.mxu0 0.0
  %6037 = vmatpush1.msra.mxu0 %v6003
  %6038 = vmatprep.subr.mxu0 0.0
  %6039 = vmatpush1.msra.mxu0 %v6004
  %6040 = vmatprep.subr.mxu0 0.0
  %6041 = vmatpush1.msra.mxu0 %v6005
  %6042 = vmatprep.subr.mxu0 0.0
  %6043 = vmatpush1.msra.mxu0 %v6006
  %6044 = vmatprep.subr.mxu0 0.0
  %6045 = vmatpush1.msra.mxu0 %v6007
  %6046 = vmatprep.subr.mxu0 0.0
  %6047 = vmatpush1.msra.mxu0 %v6008
  %6048 = vmatprep.subr.mxu0 0.0
  %6049 = vmatpush1.msra.mxu0 %v6009
  %6050 = vmatprep.subr.mxu0 0.0
  %6051 = vmatpush1.msra.mxu0 %v6010
  %6052 = vmatprep.subr.mxu0 0.0
  %6053 = vmatpush1.msra.mxu0 %v6011
  %6054 = vmatprep.subr.mxu0 0.0
  %6055 = vmatpush1.msra.mxu0 0.0
  %6056 = vmatprep.subr.mxu0 0.0
  %6057 = vmatpush1.msra.mxu0 0.0
  %6058 = vmatprep.subr.mxu0 0.0
  %6059 = vmatpush1.msra.mxu0 0.0
  %6060 = vmatprep.subr.mxu0 0.0
  %6061 = vmatpush1.msra.mxu0 0.0
  %6062 = vmatprep.subr.mxu0 0.0
  %6063 = vmatpush1.msra.mxu0 0.0
  %6064 = vmatprep.subr.mxu0 0.0
  %6065 = vmatpush1.msra.mxu0 0.0
  %6066 = vmatprep.subr.mxu0 0.0
  %6067 = vmatpush1.msra.mxu0 0.0
  %6068 = vmatprep.subr.mxu0 0.0
  %6069 = vmatpush1.msra.mxu0 0.0
  %6070 = vmatprep.subr.mxu0 0.0
  %6071 = vmatpush1.msra.mxu0 0.0
  %6072 = vmatprep.subr.mxu0 0.0
  %6073 = vmatpush1.msra.mxu0 0.0
  %6074 = vmatprep.subr.mxu0 0.0
  %6075 = vmatpush1.msra.mxu0 0.0
  %6076 = vmatprep.subr.mxu0 0.0
  %6077 = vmatpush1.msra.mxu0 0.0
  %6078 = vmatprep.subr.mxu0 0.0
  %6079 = vmatpush1.msra.mxu0 0.0
  %6080 = vmatprep.subr.mxu0 0.0
  %6081 = vmatpush1.msra.mxu0 0.0
  %6082 = vmatprep.mubr.f32.mxu0 %v6013
  %6083 = vmatmul.mubr.f32.gmra.mrb[0].mxu0 %v5990
  %v6084 = vpop.f32.mrb[0].mxu0
  %v6085 = vadd.f32 0.0, %v6084
  %v6086 = vpop.f32.mrb[0].mxu0
  %6087 = vmatprep.mubr.f32.mxu0 %v6016
  %6088 = vmatmul.mubr.f32.gmra.mrb[0].mxu0 %v5992
  %v6089 = vpop.f32.mrb[0].mxu0
  %v6090 = vadd.f32 0.0, %v6089
  %v6091 = vpop.f32.mrb[0].mxu0
  %6092 = vdwg.mxu0
  %v6093 = vld [vmem:[%s14] sm:$0x1]
  %v6095 = vlaneseq
  %v6096 = vshrl.u32 %v6095, 7
  %v6097 = vsub.s32 0, %v6096
  %v6098 = vrot.slane %v6093, %v6097
  %v6100 = vmul.f32 %v6085, %v6098
  %v6101 = vmul.f32 %v6090, %v6098
  %v6102 = vld [vmem:[%s15] sm:$0x1]
  %v6104 = vlaneseq
  %v6105 = vshrl.u32 %v6104, 7
  %v6106 = vsub.s32 0, %v6105
  %v6107 = vrot.slane %v6102, %v6106
  %v6109 = vadd.f32 %v6100, %v6107
  %v6110 = vadd.f32 %v6101, %v6107
  %v6111 = vmax.f32 %v6109, 0.0
  %v6112 = vmax.f32 %v6110, 0.0
  %vm6113 = vcmask 254976
  %6114 = vst.msk [vmem:[#allocation7] sm:$0x3] %vm6113, 0.0
  %6115 = vst.msk [vmem:[#allocation7 + $0xa] sm:$0x3] %vm6113, 0.0
  %vm6116 = vcmask 261120
  %6117 = vst.msk [vmem:[#allocation7 + $0x2] sm:$0xff] %vm6116, %v6111
  %v6118 = vld [vmem:[#allocation7] ss:$2 sm:$0xf]
  %vm6119 = vcmask 257024
  %6120 = vst.msk [vmem:[#allocation14] sm:$0xf] %vm6119, %v6118
  %s6121 = scalar_lea.vmem [#allocation7], 1
  %v6122 = vld [vmem:[%s6121] ss:$2 sm:$0xf]
  %6124 = vrot.lane.b32.xlu0 %v6122, 32
  %v6125 = vpop.permute.xlu0 %6124
  %vm6127 = vcmask 519424
  %6128 = vst.msk [vmem:[#allocation14] sm:$0xf] %vm6127, %v6125
  %s6129 = scalar_lea.vmem [#allocation7], 2
  %v6130 = vld [vmem:[%s6129] ss:$2 sm:$0xf]
  %6132 = vrot.lane.b32.xlu0 %v6130, 64
  %v6133 = vpop.permute.xlu0 %6132
  %vm6135 = vcmask 781824
  %6136 = vst.msk [vmem:[#allocation14] sm:$0xf] %vm6135, %v6133
  %s6137 = scalar_lea.vmem [#allocation7], 3
  %v6138 = vld [vmem:[%s6137] ss:$2 sm:$0xf]
  %6140 = vrot.lane.b32.xlu0 %v6138, 96
  %v6141 = vpop.permute.xlu0 %6140
  %vm6143 = vcmask 1044224
  %6144 = vst.msk [vmem:[#allocation14] sm:$0xf] %vm6143, %v6141
  %s6145 = scalar_lea.vmem [#allocation7], 4
  %v6146 = vld [vmem:[%s6145] ss:$2 sm:$0xf]
  %6147 = vst.msk [vmem:[#allocation14 + $0x8] sm:$0xf] %vm6119, %v6146
  %s6148 = scalar_lea.vmem [#allocation7], 5
  %v6149 = vld [vmem:[%s6148] ss:$2 sm:$0xf]
  %6151 = vrot.lane.b32.xlu0 %v6149, 32
  %v6152 = vpop.permute.xlu0 %6151
  %6154 = vst.msk [vmem:[#allocation14 + $0x8] sm:$0xf] %vm6127, %v6152
  %6155 = vst.msk [vmem:[#allocation7 + $0xc] sm:$0x3] %vm6113, 0.0
  %6156 = vst.msk [vmem:[#allocation7 + $0x16] sm:$0x3] %vm6113, 0.0
  %6157 = vst.msk [vmem:[#allocation7 + $0xe] sm:$0xff] %vm6116, %v6112
  %s6158 = scalar_lea.vmem [#allocation7], 12
  %v6159 = vld [vmem:[%s6158] ss:$2 sm:$0xf]
  %v6161 = vrot.slane %v6159, 4
  %vm6163 = vcmask 261124
  %6164 = vst.msk [vmem:[#allocation14] sm:$0xf0] %vm6163, %v6161
  %s6165 = scalar_lea.vmem [#allocation7], 13
  %v6166 = vld [vmem:[%s6165] ss:$2 sm:$0xf]
  %v6168 = vrot.slane %v6166, 4
  %6169 = vrot.lane.b32.xlu0 %v6168, 32
  %v6170 = vpop.permute.xlu0 %6169
  %vm6172 = vcmask 523524
  %6173 = vst.msk [vmem:[#allocation14] sm:$0xf0] %vm6172, %v6170
  %s6174 = scalar_lea.vmem [#allocation7], 14
  %v6175 = vld [vmem:[%s6174] ss:$2 sm:$0xf]
  %v6177 = vrot.slane %v6175, 4
  %6178 = vrot.lane.b32.xlu0 %v6177, 64
  %v6179 = vpop.permute.xlu0 %6178
  %vm6181 = vcmask 785924
  %6182 = vst.msk [vmem:[#allocation14] sm:$0xf0] %vm6181, %v6179
  %s6183 = scalar_lea.vmem [#allocation7], 15
  %v6184 = vld [vmem:[%s6183] ss:$2 sm:$0xf]
  %v6186 = vrot.slane %v6184, 4
  %6187 = vrot.lane.b32.xlu0 %v6186, 96
  %v6188 = vpop.permute.xlu0 %6187
  %vm6190 = vcmask 1048324
  %6191 = vst.msk [vmem:[#allocation14] sm:$0xf0] %vm6190, %v6188
  %s6192 = scalar_lea.vmem [#allocation7], 16
  %v6193 = vld [vmem:[%s6192] ss:$2 sm:$0xf]
  %v6195 = vrot.slane %v6193, 4
  %6197 = vst.msk [vmem:[#allocation14 + $0x8] sm:$0xf0] %vm6163, %v6195
  %s6198 = scalar_lea.vmem [#allocation7], 17
  %v6199 = vld [vmem:[%s6198] ss:$2 sm:$0xf]
  %v6201 = vrot.slane %v6199, 4
  %6202 = vrot.lane.b32.xlu0 %v6201, 32
  %v6203 = vpop.permute.xlu0 %6202
  %6205 = vst.msk [vmem:[#allocation14 + $0x8] sm:$0xf0] %vm6172, %v6203
  %v6206 = vld [vmem:[#allocation14] sm:$0xff]
  %v6207 = vld [vmem:[#allocation14 + $0x8] sm:$0xff]
  %v6208 = vld [vmem:[%s16] sm:$0xff]
  %v6209 = vld [vmem:[%s16 + $0x8] sm:$0xff]
  %v6210 = vld [vmem:[%s16 + $0x10] sm:$0xff]
  %v6211 = vld [vmem:[%s16 + $0x18] sm:$0xff]
  %v6212 = vld [vmem:[%s16 + $0x20] sm:$0xff]
  %v6213 = vld [vmem:[%s16 + $0x28] sm:$0xff]
  %v6214 = vld [vmem:[%s16 + $0x30] sm:$0xff]
  %v6215 = vld [vmem:[%s16 + $0x38] sm:$0xff]
  %v6216 = vld [vmem:[%s16 + $0x40] sm:$0xff]
  %v6217 = vld [vmem:[%s16 + $0x48] sm:$0xff]
  %v6218 = vld [vmem:[%s16 + $0x50] sm:$0xff]
  %v6219 = vld [vmem:[%s16 + $0x58] sm:$0xff]
  %v6220 = vld [vmem:[%s16 + $0x60] sm:$0xff]
  %v6221 = vld [vmem:[%s16 + $0x68] sm:$0xff]
  %v6222 = vld [vmem:[%s16 + $0x70] sm:$0xff]
  %v6223 = vld [vmem:[%s16 + $0x78] sm:$0xff]
  %v6224 = vld [vmem:[%s16 + $0x80] sm:$0xff]
  %v6225 = vld [vmem:[%s16 + $0x88] sm:$0xff]
  %v6226 = vld [vmem:[%s16 + $0x90] sm:$0xff]
  %v6227 = vld [vmem:[%s16 + $0x98] sm:$0xff]
  %v6228 = vld [vmem:[%s16 + $0xa0] sm:$0xff]
  %v6229 = vld [vmem:[%s16 + $0xa8] sm:$0xff]
  %v6230 = vld [vmem:[%s16 + $0xb0] sm:$0xff]
  %v6231 = vld [vmem:[%s16 + $0xb8] sm:$0xff]
  %v6233 = vsel %vm4567, %v6207, 0
  %6235 = vmatprep.subr.mxu0 0.0
  %6236 = vmatpush1.msra.mxu0 %v6208
  %6237 = vmatprep.subr.mxu0 0.0
  %6238 = vmatpush1.msra.mxu0 %v6209
  %6239 = vmatprep.subr.mxu0 0.0
  %6240 = vmatpush1.msra.mxu0 %v6210
  %6241 = vmatprep.subr.mxu0 0.0
  %6242 = vmatpush1.msra.mxu0 %v6211
  %6243 = vmatprep.subr.mxu0 0.0
  %6244 = vmatpush1.msra.mxu0 %v6212
  %6245 = vmatprep.subr.mxu0 0.0
  %6246 = vmatpush1.msra.mxu0 %v6213
  %6247 = vmatprep.subr.mxu0 0.0
  %6248 = vmatpush1.msra.mxu0 %v6214
  %6249 = vmatprep.subr.mxu0 0.0
  %6250 = vmatpush1.msra.mxu0 %v6215
  %6251 = vmatprep.subr.mxu0 0.0
  %6252 = vmatpush1.msra.mxu0 %v6216
  %6253 = vmatprep.subr.mxu0 0.0
  %6254 = vmatpush1.msra.mxu0 %v6217
  %6255 = vmatprep.subr.mxu0 0.0
  %6256 = vmatpush1.msra.mxu0 %v6218
  %6257 = vmatprep.subr.mxu0 0.0
  %6258 = vmatpush1.msra.mxu0 %v6219
  %6259 = vmatprep.subr.mxu0 0.0
  %6260 = vmatpush1.msra.mxu0 %v6220
  %6261 = vmatprep.subr.mxu0 0.0
  %6262 = vmatpush1.msra.mxu0 %v6221
  %6263 = vmatprep.subr.mxu0 0.0
  %6264 = vmatpush1.msra.mxu0 %v6222
  %6265 = vmatprep.subr.mxu0 0.0
  %6266 = vmatpush1.msra.mxu0 %v6223
  %6267 = vmatprep.subr.mxu0 0.0
  %6268 = vmatpush1.msra.mxu0 %v6224
  %6269 = vmatprep.subr.mxu0 0.0
  %6270 = vmatpush1.msra.mxu0 %v6225
  %6271 = vmatprep.subr.mxu0 0.0
  %6272 = vmatpush1.msra.mxu0 %v6226
  %6273 = vmatprep.subr.mxu0 0.0
  %6274 = vmatpush1.msra.mxu0 %v6227
  %6275 = vmatprep.subr.mxu0 0.0
  %6276 = vmatpush1.msra.mxu0 %v6228
  %6277 = vmatprep.subr.mxu0 0.0
  %6278 = vmatpush1.msra.mxu0 %v6229
  %6279 = vmatprep.subr.mxu0 0.0
  %6280 = vmatpush1.msra.mxu0 %v6230
  %6281 = vmatprep.subr.mxu0 0.0
  %6282 = vmatpush1.msra.mxu0 %v6231
  %6283 = vmatprep.subr.mxu0 0.0
  %6284 = vmatpush1.msra.mxu0 0.0
  %6285 = vmatprep.subr.mxu0 0.0
  %6286 = vmatpush1.msra.mxu0 0.0
  %6287 = vmatprep.subr.mxu0 0.0
  %6288 = vmatpush1.msra.mxu0 0.0
  %6289 = vmatprep.subr.mxu0 0.0
  %6290 = vmatpush1.msra.mxu0 0.0
  %6291 = vmatprep.subr.mxu0 0.0
  %6292 = vmatpush1.msra.mxu0 0.0
  %6293 = vmatprep.subr.mxu0 0.0
  %6294 = vmatpush1.msra.mxu0 0.0
  %6295 = vmatprep.subr.mxu0 0.0
  %6296 = vmatpush1.msra.mxu0 0.0
  %6297 = vmatprep.subr.mxu0 0.0
  %6298 = vmatpush1.msra.mxu0 0.0
  %6299 = vmatprep.mubr.f32.mxu0 %v6233
  %6300 = vmatmul.mubr.f32.gmra.mrb[0].mxu0 %v6206
  %v6301 = vpop.f32.mrb[0].mxu0
  %v6302 = vadd.f32 0.0, %v6301
  %v6303 = vpop.f32.mrb[0].mxu0
  %6304 = vdwg.mxu0
  %v6305 = vld [vmem:[%s17] sm:$0x1]
  %v6307 = vlaneseq
  %v6308 = vshrl.u32 %v6307, 7
  %v6309 = vsub.s32 0, %v6308
  %v6310 = vrot.slane %v6305, %v6309
  %v6312 = vmul.f32 %v6302, %v6310
  %v6313 = vld [vmem:[%s18] sm:$0x1]
  %v6315 = vlaneseq
  %v6316 = vshrl.u32 %v6315, 7
  %v6317 = vsub.s32 0, %v6316
  %v6318 = vrot.slane %v6313, %v6317
  %v6320 = vadd.f32 %v6312, %v6318
  %v6321 = vmax.f32 %v6320, 0.0
  %vm6322 = vcmask 516096
  %6323 = vst.msk [vmem:[#allocation8] sm:$0x1] %vm6322, 0.0
  %6324 = vst.msk [vmem:[#allocation8 + $0x5] sm:$0x1] %vm6322, 0.0
  %vm6325 = vcmask 519168
  %6326 = vst.msk [vmem:[#allocation8 + $0x1] sm:$0xf] %vm6325, %v6321
  %v6327 = vld [vmem:[#allocation8] ss:$2 sm:$0x3]
  %vm6328 = vcmask 517120
  %6329 = vst.msk [vmem:[#allocation15] sm:$0x3] %vm6328, %v6327
  %s6330 = scalar_lea.vmem [#allocation8], 1
  %v6331 = vld [vmem:[%s6330] ss:$2 sm:$0x3]
  %6333 = vrot.lane.b32.xlu0 %v6331, 64
  %v6334 = vpop.permute.xlu0 %6333
  %vm6336 = vcmask 1041920
  %6337 = vst.msk [vmem:[#allocation15] sm:$0x3] %vm6336, %v6334
  %s6338 = scalar_lea.vmem [#allocation8], 2
  %v6339 = vld [vmem:[%s6338] ss:$2 sm:$0x3]
  %6340 = vst.msk [vmem:[#allocation15 + $0x4] sm:$0x3] %vm6328, %v6339
  %6341 = vst.msk [vmem:[#allocation8 + $0x6] sm:$0x1] %vm6322, 0.0
  %6342 = vst.msk [vmem:[#allocation8 + $0xb] sm:$0x1] %vm6322, 0.0
  %vm6343 = vcmask 523268
  %6344 = vst.msk [vmem:[#allocation8 + $0x3] sm:$0xf0] %vm6343, %v6321
  %s6345 = scalar_lea.vmem [#allocation8], 6
  %v6346 = vld [vmem:[%s6345] ss:$2 sm:$0x3]
  %v6348 = vrot.slane %v6346, 6
  %vm6350 = vcmask 519170
  %6351 = vst.msk [vmem:[#allocation15] sm:$0xc] %vm6350, %v6348
  %s6352 = scalar_lea.vmem [#allocation8], 7
  %v6353 = vld [vmem:[%s6352] ss:$2 sm:$0x3]
  %v6355 = vrot.slane %v6353, 6
  %6356 = vrot.lane.b32.xlu0 %v6355, 64
  %v6357 = vpop.permute.xlu0 %6356
  %vm6359 = vcmask 1043970
  %6360 = vst.msk [vmem:[#allocation15] sm:$0xc] %vm6359, %v6357
  %s6361 = scalar_lea.vmem [#allocation8], 8
  %v6362 = vld [vmem:[%s6361] ss:$2 sm:$0x3]
  %v6364 = vrot.slane %v6362, 6
  %6366 = vst.msk [vmem:[#allocation15 + $0x4] sm:$0xc] %vm6350, %v6364
  %v6367 = vld [vmem:[#allocation15] sm:$0xff]
  %v6368 = vld [vmem:[%s19] sm:$0xff]
  %v6369 = vld [vmem:[%s19 + $0x8] sm:$0xff]
  %v6370 = vld [vmem:[%s19 + $0x10] sm:$0xff]
  %v6371 = vld [vmem:[%s19 + $0x18] sm:$0xff]
  %v6372 = vld [vmem:[%s19 + $0x20] sm:$0xff]
  %v6373 = vld [vmem:[%s19 + $0x28] sm:$0xff]
  %v6374 = vld [vmem:[%s19 + $0x30] sm:$0xff]
  %v6375 = vld [vmem:[%s19 + $0x38] sm:$0xff]
  %v6376 = vld [vmem:[%s19 + $0x40] sm:$0xff]
  %v6377 = vld [vmem:[%s19 + $0x48] sm:$0xff]
  %v6378 = vld [vmem:[%s19 + $0x50] sm:$0xff]
  %v6379 = vld [vmem:[%s19 + $0x58] sm:$0xff]
  %v6380 = vld [vmem:[%s19 + $0x60] sm:$0xff]
  %v6381 = vld [vmem:[%s19 + $0x68] sm:$0xff]
  %v6382 = vld [vmem:[%s19 + $0x70] sm:$0xff]
  %v6383 = vld [vmem:[%s19 + $0x78] sm:$0xff]
  %v6384 = vld [vmem:[%s19 + $0x80] sm:$0xff]
  %v6385 = vld [vmem:[%s19 + $0x88] sm:$0xff]
  %v6386 = vld [vmem:[%s19 + $0x90] sm:$0xff]
  %v6387 = vld [vmem:[%s19 + $0x98] sm:$0xff]
  %v6388 = vld [vmem:[%s19 + $0xa0] sm:$0xff]
  %v6389 = vld [vmem:[%s19 + $0xa8] sm:$0xff]
  %v6390 = vld [vmem:[%s19 + $0xb0] sm:$0xff]
  %v6391 = vld [vmem:[%s19 + $0xb8] sm:$0xff]
  %v6393 = vcombine.high %v6367, %v6367
  %v6394 = vsel %vm4567, %v6393, 0
  %6396 = vmatprep.subr.mxu0 0.0
  %6397 = vmatpush1.msra.mxu0 %v6368
  %6398 = vmatprep.subr.mxu0 0.0
  %6399 = vmatpush1.msra.mxu0 %v6369
  %6400 = vmatprep.subr.mxu0 0.0
  %6401 = vmatpush1.msra.mxu0 %v6370
  %6402 = vmatprep.subr.mxu0 0.0
  %6403 = vmatpush1.msra.mxu0 %v6371
  %6404 = vmatprep.subr.mxu0 0.0
  %6405 = vmatpush1.msra.mxu0 %v6372
  %6406 = vmatprep.subr.mxu0 0.0
  %6407 = vmatpush1.msra.mxu0 %v6373
  %6408 = vmatprep.subr.mxu0 0.0
  %6409 = vmatpush1.msra.mxu0 %v6374
  %6410 = vmatprep.subr.mxu0 0.0
  %6411 = vmatpush1.msra.mxu0 %v6375
  %6412 = vmatprep.subr.mxu0 0.0
  %6413 = vmatpush1.msra.mxu0 %v6376
  %6414 = vmatprep.subr.mxu0 0.0
  %6415 = vmatpush1.msra.mxu0 %v6377
  %6416 = vmatprep.subr.mxu0 0.0
  %6417 = vmatpush1.msra.mxu0 %v6378
  %6418 = vmatprep.subr.mxu0 0.0
  %6419 = vmatpush1.msra.mxu0 %v6379
  %6420 = vmatprep.subr.mxu0 0.0
  %6421 = vmatpush1.msra.mxu0 %v6380
  %6422 = vmatprep.subr.mxu0 0.0
  %6423 = vmatpush1.msra.mxu0 %v6381
  %6424 = vmatprep.subr.mxu0 0.0
  %6425 = vmatpush1.msra.mxu0 %v6382
  %6426 = vmatprep.subr.mxu0 0.0
  %6427 = vmatpush1.msra.mxu0 %v6383
  %6428 = vmatprep.subr.mxu0 0.0
  %6429 = vmatpush1.msra.mxu0 %v6384
  %6430 = vmatprep.subr.mxu0 0.0
  %6431 = vmatpush1.msra.mxu0 %v6385
  %6432 = vmatprep.subr.mxu0 0.0
  %6433 = vmatpush1.msra.mxu0 %v6386
  %6434 = vmatprep.subr.mxu0 0.0
  %6435 = vmatpush1.msra.mxu0 %v6387
  %6436 = vmatprep.subr.mxu0 0.0
  %6437 = vmatpush1.msra.mxu0 %v6388
  %6438 = vmatprep.subr.mxu0 0.0
  %6439 = vmatpush1.msra.mxu0 %v6389
  %6440 = vmatprep.subr.mxu0 0.0
  %6441 = vmatpush1.msra.mxu0 %v6390
  %6442 = vmatprep.subr.mxu0 0.0
  %6443 = vmatpush1.msra.mxu0 %v6391
  %6444 = vmatprep.subr.mxu0 0.0
  %6445 = vmatpush1.msra.mxu0 0.0
  %6446 = vmatprep.subr.mxu0 0.0
  %6447 = vmatpush1.msra.mxu0 0.0
  %6448 = vmatprep.subr.mxu0 0.0
  %6449 = vmatpush1.msra.mxu0 0.0
  %6450 = vmatprep.subr.mxu0 0.0
  %6451 = vmatpush1.msra.mxu0 0.0
  %6452 = vmatprep.subr.mxu0 0.0
  %6453 = vmatpush1.msra.mxu0 0.0
  %6454 = vmatprep.subr.mxu0 0.0
  %6455 = vmatpush1.msra.mxu0 0.0
  %6456 = vmatprep.subr.mxu0 0.0
  %6457 = vmatpush1.msra.mxu0 0.0
  %6458 = vmatprep.subr.mxu0 0.0
  %6459 = vmatpush1.msra.mxu0 0.0
  %6460 = vmatprep.mubr.f32.mxu0 %v6394
  %6461 = vmatmul.mubr.f32.gmra.mrb[0].mxu0 %v6367
  %v6462 = vpop.f32.mrb[0].mxu0
  %v6463 = vadd.f32 0.0, %v6462
  %v6464 = vpop.f32.mrb[0].mxu0
  %6465 = vdwg.mxu0
  %v6466 = vld [vmem:[%s20] sm:$0x1]
  %v6468 = vlaneseq
  %v6469 = vshrl.u32 %v6468, 7
  %v6470 = vsub.s32 0, %v6469
  %v6471 = vrot.slane %v6466, %v6470
  %v6473 = vmul.f32 %v6463, %v6471
  %v6474 = vld [vmem:[%s21] sm:$0x1]
  %v6476 = vlaneseq
  %v6477 = vshrl.u32 %v6476, 7
  %v6478 = vsub.s32 0, %v6477
  %v6479 = vrot.slane %v6474, %v6478
  %v6481 = vadd.f32 %v6473, %v6479
  %v6482 = vmax.f32 %v6481, 0.0
  %vm6483 = vcmask 1041408
  %v6484 = vsel %vm6483, %v6482, 0.0
  %v6485 = vrot.slane %v6484, 4
  %v6486 = vadd.f32 %v6484, %v6485
  %v6487 = vrot.slane %v6486, 2
  %v6488 = vadd.f32 %v6486, %v6487
  %v6489 = vrot.slane %v6488, 1
  %v6490 = vadd.f32 %v6488, %v6489
  %v6491 = vrcp.pop 2.0
  %v6492 = vmul.f32 %v6490, %v6491
  %v6494 = vrot.slane %v6482, 2
  %v6496 = vsel %vm6483, %v6494, 0.0
  %v6497 = vrot.slane %v6496, 4
  %v6498 = vadd.f32 %v6496, %v6497
  %v6499 = vrot.slane %v6498, 2
  %v6500 = vadd.f32 %v6498, %v6499
  %v6501 = vrot.slane %v6500, 1
  %v6502 = vadd.f32 %v6500, %v6501
  %v6503 = vmul.f32 %v6502, %v6491
  %vm6504 = vcmask 1040384
  %v6505 = vsel %vm6504, %v6492, %v6503
  %v6506 = vld [vmem:[%s22] sm:$0xff]
  %v6507 = vld [vmem:[%s22 + $0x8] sm:$0xff]
  %v6508 = vld [vmem:[%s22 + $0x10] sm:$0xff]
  %v6509 = vld [vmem:[%s22 + $0x18] sm:$0xff]
  %v6510 = vld [vmem:[%s22 + $0x20] sm:$0xff]
  %v6511 = vld [vmem:[%s22 + $0x28] sm:$0xff]
  %v6512 = vld [vmem:[%s22 + $0x30] sm:$0xff]
  %v6513 = vld [vmem:[%s22 + $0x38] sm:$0xff]
  %v6514 = vld [vmem:[%s22 + $0x40] sm:$0xff]
  %v6515 = vld [vmem:[%s22 + $0x48] sm:$0xff]
  %v6516 = vld [vmem:[%s22 + $0x50] sm:$0xff]
  %v6517 = vld [vmem:[%s22 + $0x58] sm:$0xff]
  %v6518 = vld [vmem:[%s22 + $0x60] sm:$0xff]
  %v6519 = vld [vmem:[%s22 + $0x68] sm:$0xff]
  %v6520 = vld [vmem:[%s22 + $0x70] sm:$0xff]
  %v6521 = vld [vmem:[%s22 + $0x78] sm:$0xff]
  %v6522 = vld [vmem:[%s23] sm:$0x1]
  %v6524 = vlaneseq
  %v6525 = vshrl.u32 %v6524, 7
  %v6526 = vsub.s32 0, %v6525
  %v6527 = vrot.slane %v6522, %v6526
  %6529 = vmatprep.subr.mxu0 0.0
  %6530 = vmatpush1.msra.mxu0 %v6506
  %6531 = vmatprep.subr.mxu0 0.0
  %6532 = vmatpush1.msra.mxu0 %v6507
  %6533 = vmatprep.subr.mxu0 0.0
  %6534 = vmatpush1.msra.mxu0 %v6508
  %6535 = vmatprep.subr.mxu0 0.0
  %6536 = vmatpush1.msra.mxu0 %v6509
  %6537 = vmatprep.subr.mxu0 0.0
  %6538 = vmatpush1.msra.mxu0 %v6510
  %6539 = vmatprep.subr.mxu0 0.0
  %6540 = vmatpush1.msra.mxu0 %v6511
  %6541 = vmatprep.subr.mxu0 0.0
  %6542 = vmatpush1.msra.mxu0 %v6512
  %6543 = vmatprep.subr.mxu0 0.0
  %6544 = vmatpush1.msra.mxu0 %v6513
  %6545 = vmatprep.subr.mxu0 0.0
  %6546 = vmatpush1.msra.mxu0 %v6514
  %6547 = vmatprep.subr.mxu0 0.0
  %6548 = vmatpush1.msra.mxu0 %v6515
  %6549 = vmatprep.subr.mxu0 0.0
  %6550 = vmatpush1.msra.mxu0 %v6516
  %6551 = vmatprep.subr.mxu0 0.0
  %6552 = vmatpush1.msra.mxu0 %v6517
  %6553 = vmatprep.subr.mxu0 0.0
  %6554 = vmatpush1.msra.mxu0 %v6518
  %6555 = vmatprep.subr.mxu0 0.0
  %6556 = vmatpush1.msra.mxu0 %v6519
  %6557 = vmatprep.subr.mxu0 0.0
  %6558 = vmatpush1.msra.mxu0 %v6520
  %6559 = vmatprep.subr.mxu0 0.0
  %6560 = vmatpush1.msra.mxu0 %v6521
  %6561 = vmatprep.subr.mxu0 0.0
  %6562 = vmatpush1.msra.mxu0 0.0
  %6563 = vmatprep.subr.mxu0 0.0
  %6564 = vmatpush1.msra.mxu0 0.0
  %6565 = vmatprep.subr.mxu0 0.0
  %6566 = vmatpush1.msra.mxu0 0.0
  %6567 = vmatprep.subr.mxu0 0.0
  %6568 = vmatpush1.msra.mxu0 0.0
  %6569 = vmatprep.subr.mxu0 0.0
  %6570 = vmatpush1.msra.mxu0 0.0
  %6571 = vmatprep.subr.mxu0 0.0
  %6572 = vmatpush1.msra.mxu0 0.0
  %6573 = vmatprep.subr.mxu0 0.0
  %6574 = vmatpush1.msra.mxu0 0.0
  %6575 = vmatprep.subr.mxu0 0.0
  %6576 = vmatpush1.msra.mxu0 0.0
  %6577 = vmatprep.subr.mxu0 0.0
  %6578 = vmatpush1.msra.mxu0 0.0
  %6579 = vmatprep.subr.mxu0 0.0
  %6580 = vmatpush1.msra.mxu0 0.0
  %6581 = vmatprep.subr.mxu0 0.0
  %6582 = vmatpush1.msra.mxu0 0.0
  %6583 = vmatprep.subr.mxu0 0.0
  %6584 = vmatpush1.msra.mxu0 0.0
  %6585 = vmatprep.subr.mxu0 0.0
  %6586 = vmatpush1.msra.mxu0 0.0
  %6587 = vmatprep.subr.mxu0 0.0
  %6588 = vmatpush1.msra.mxu0 0.0
  %6589 = vmatprep.subr.mxu0 0.0
  %6590 = vmatpush1.msra.mxu0 0.0
  %6591 = vmatprep.subr.mxu0 0.0
  %6592 = vmatpush1.msra.mxu0 0.0
  %6593 = vmatprep.mubr.f32.mxu0 0.0
  %6594 = vmatmul.mubr.f32.gmra.mrb[0].mxu0 %v6505
  %v6595 = vpop.f32.mrb[0].mxu0
  %v6596 = vadd.f32 %v6527, %v6595
  %v6597 = vpop.f32.mrb[0].mxu0
  %6598 = vdwg.mxu0
  %vm6599 = vcmask 58368
  %6600 = vst.msk [vmem:[%s24] sm:$0x3] %vm6599, %v6596
  // Predicated region
  $region98: #{mt1dcnn_forward.1} parent=0 // pred_check
    _
  $region99: #{mt1dcnn_forward.1} parent=0 // pred_check_branch
    %6602 = sbr.rel (0) target = $region101
  $region100: #{mt1dcnn_forward.1} parent=0 // pred_region
    _
  $region101: #{mt1dcnn_forward.1} parent=0 // pred_fallthru
    _
  // Predicated region
  $region102: #{mt1dcnn_forward.1} parent=0 // pred_check
    _
  $region103: #{mt1dcnn_forward.1} parent=0 // pred_check_branch
    %6604 = sbr.rel (0) target = $region105
  $region104: #{mt1dcnn_forward.1} parent=0 // pred_region
    _
  $region105: #{mt1dcnn_forward.1} parent=0 // pred_fallthru
    _

</llo_original>
